<compile_context>
chip_gen: v7x
topology: tpu7x:2x2x1
jax: 0.10.0
libtpu: 0.0.40
codegen_flags: <defaults>
</compile_context>

<pallas_src>
import jax
import jax.numpy as jnp
from jax import lax
from jax.experimental import pallas as pl
from jax.experimental.pallas import tpu as pltpu

EPS = 1e-5


def _residual_se_kernel(x_ref,                # (B, H, W, C) f32 unpadded input (VMEM)
                        w1_hbm, w2_hbm,       # (9, C, C) bf16 conv weights (HBM, manual DMA)
                        g1_ref, b1_ref,       # (1, C) bn1 gamma / beta
                        g2_ref, b2_ref,       # (1, C) bn2 gamma / beta
                        sew1t_ref, seb1_ref,  # (Cr, C), (1, Cr) SE fc1 (weight pre-transposed)
                        sew2_ref, seb2_ref,   # (Cr, C), (1, C)  SE fc2
                        out_ref,              # (B, H, W, C) f32
                        pad_ref,              # VMEM scratch (B, H+2, W+2, C) f32, reused by both convs
                        w1v_ref, w2v_ref,     # VMEM scratch (9, C, C) bf16
                        sem):                 # DMA semaphores (2,)
    B, H, W, C = x_ref.shape
    N = B * H * W

    # ---- kick off both weight DMAs immediately; they overlap SE + pad build ----
    cp1 = pltpu.make_async_copy(w1_hbm, w1v_ref, sem.at[0])
    cp2 = pltpu.make_async_copy(w2_hbm, w2v_ref, sem.at[1])
    cp1.start()
    cp2.start()

    # ---------------- Squeeze-and-Excitation (aligned, unpadded reads) ----------------
    x = x_ref[...]                                                      # (B, H, W, C) f32
    pooled = jnp.sum(jnp.sum(x, axis=1), axis=1) * (1.0 / (H * W))      # (B, C)
    # Tiny FC layers on the VPU (exact f32); C stays on the lane axis throughout.
    h = jnp.sum(pooled[:, None, :] * sew1t_ref[...][None, :, :], axis=-1) + seb1_ref[...]
    h = jnp.maximum(h, 0.0)                                             # (B, Cr)
    z = jnp.sum(h[:, :, None] * sew2_ref[...][None, :, :], axis=1) + seb2_ref[...]
    gate = 1.0 / (1.0 + jnp.exp(-z))                                    # sigmoid, (B, C)

    # Zero-padded conv input built fully in-kernel (no host-side jnp.pad).
    # Halo is zeroed here ONCE and must stay zero for conv2's reuse (see header).
    pad_ref[...] = jnp.zeros_like(pad_ref)
    pad_ref[:, 1:H + 1, 1:W + 1, :] = x * gate[:, None, None, :]

    def conv3x3(w_ref):
        # 3x3 conv = 9 accumulated MXU matmuls with K = C (no im2col concat).
        # Tap slabs are cast to bf16 at load; accumulation is f32.
        acc = None
        for dh in range(3):
            for dw in range(3):
                tap = pad_ref[:, dh:dh + H, dw:dw + W, :].astype(jnp.bfloat16)
                part = jnp.dot(tap.reshape(N, C), w_ref[dh * 3 + dw],
                               preferred_element_type=jnp.float32)
                acc = part if acc is None else acc + part
        return acc                                                      # (N, C) f32

    def batchnorm(acc, g_ref, b_ref):
        # Training-mode BN forward (biased variance).  Both moments from one
        # traversal; f32 stats.  (E[x^2]-E[x]^2 is adequate here; switch to a
        # shifted/two-pass form if trained weights push activation means up.)
        inv_n = 1.0 / N
        mean = jnp.sum(acc, axis=0, keepdims=True) * inv_n
        mean_sq = jnp.sum(acc * acc, axis=0, keepdims=True) * inv_n
        var = jnp.maximum(mean_sq - mean * mean, 0.0)
        return (acc - mean) * lax.rsqrt(var + EPS) * g_ref[...] + b_ref[...]

    # ---------------- conv1 -> bn1 -> ReLU ----------------
    cp1.wait()
    y1 = jnp.maximum(batchnorm(conv3x3(w1v_ref), g1_ref, b1_ref), 0.0)

    # Reuse pad_ref as conv2's zero-padded input: only the interior is rewritten,
    # the halo is still zero from the single memset above.
    pad_ref[:, 1:H + 1, 1:W + 1, :] = y1.reshape(B, H, W, C)

    # ---------------- conv2 -> bn2 ----------------
    cp2.wait()
    y2 = batchnorm(conv3x3(w2v_ref), g2_ref, b2_ref)

    # ---------------- residual add (aligned re-read of the identity) ----------------
    out_ref[...] = y2.reshape(B, H, W, C) + x_ref[...]


def residual_se_block(x_nchw, params):
    """PyTorch-semantics forward of ResidualSEBlock. Input/output are NCHW."""
    x = jnp.transpose(x_nchw, (0, 2, 3, 1)).astype(jnp.float32)        # -> NHWC (unpadded)
    B, H, W, C = x.shape
    # HWIO (3,3,Cin,Cout) -> (tap = dh*3+dw, Cin, Cout); bf16 halves the
    # (manually overlapped) weight DMA and feeds the MXU natively.
    w1 = params["conv1_w"].reshape(9, C, C).astype(jnp.bfloat16)
    w2 = params["conv2_w"].reshape(9, C, C).astype(jnp.bfloat16)
    se_w1t = jnp.transpose(params["se_w1"])                             # (Cr, C): C on lanes in-kernel

    vmem = pl.BlockSpec(memory_space=pltpu.MemorySpace.VMEM)
    hbm = pl.BlockSpec(memory_space=pl.ANY)                             # weights: manual DMA in kernel
    out = pl.pallas_call(
        _residual_se_kernel,
        out_shape=jax.ShapeDtypeStruct((B, H, W, C), jnp.float32),
        in_specs=[vmem, hbm, hbm] + [vmem] * 8,
        out_specs=vmem,
        scratch_shapes=[
            pltpu.VMEM((B, H + 2, W + 2, C), jnp.float32),              # padded conv input (both convs)
            pltpu.VMEM((9, C, C), jnp.bfloat16),                        # w1 landing buffer
            pltpu.VMEM((9, C, C), jnp.bfloat16),                        # w2 landing buffer
            pltpu.SemaphoreType.DMA((2,)),
        ],
        # Footprint is ~3-4 MiB; 32 MiB is within every generation's scoped/physical
        # limit (v5e scoped default 16 MiB, v7x physical 64 MiB) with ample headroom.
        compiler_params=pltpu.CompilerParams(vmem_limit_bytes=32 * 1024 * 1024),
    )(x, w1, w2,
      params["bn1_gamma"], params["bn1_beta"],
      params["bn2_gamma"], params["bn2_beta"],
      se_w1t, params["se_b1"],
      params["se_w2"], params["se_b2"])
    return jnp.transpose(out, (0, 3, 1, 2))                             # -> NCHW


def make_params(key, channels, reduction):
    c, cr = channels, channels // reduction
    ks = jax.random.split(key, 10)

    def u(k, shape, scale):
        return (jax.random.uniform(k, shape, jnp.float32) - 0.5) * 2.0 * scale

    return dict(
        conv1_w=u(ks[0], (3, 3, c, c), 0.2),
        conv2_w=u(ks[1], (3, 3, c, c), 0.2),
        bn1_gamma=1.0 + u(ks[2], (1, c), 0.1),
        bn1_beta=u(ks[3], (1, c), 0.1),
        bn2_gamma=1.0 + u(ks[4], (1, c), 0.1),
        bn2_beta=u(ks[5], (1, c), 0.1),
        se_w1=u(ks[6], (c, cr), 0.3),
        se_b1=u(ks[7], (1, cr), 0.1),
        se_w2=u(ks[8], (cr, c), 0.3),
        se_b2=u(ks[9], (1, c), 0.1),
    )


def reference_forward(x_nchw, params, conv_dtype):
    """Plain-JAX reference mirroring the PyTorch forward.

    conv_dtype=float32  -> full-precision reference (module semantics).
    conv_dtype=bfloat16 -> conv operands rounded to bf16 with f32 accumulation,
                           matching the kernel's MXU math exactly.
    """
    hp = lax.Precision.HIGHEST
    x = jnp.transpose(x_nchw, (0, 2, 3, 1)).astype(jnp.float32)
    B, H, W, C = x.shape
    pooled = jnp.mean(x, axis=(1, 2))
    h = jnp.maximum(jnp.dot(pooled, params["se_w1"], precision=hp) + params["se_b1"], 0.0)
    wch = jax.nn.sigmoid(jnp.dot(h, params["se_w2"], precision=hp) + params["se_b2"])
    xs = x * wch[:, None, None, :]

    def conv(inp, w):
        kwargs = dict(dimension_numbers=("NHWC", "HWIO", "NHWC"),
                      preferred_element_type=jnp.float32)
        if conv_dtype == jnp.float32:
            kwargs["precision"] = hp
        return lax.conv_general_dilated(inp.astype(conv_dtype), w.astype(conv_dtype),
                                        (1, 1), "SAME", **kwargs)

    def bn(inp, g, b):
        m = jnp.mean(inp, axis=(0, 1, 2), keepdims=True)
        v = jnp.mean((inp - m) ** 2, axis=(0, 1, 2), keepdims=True)
        return (inp - m) * lax.rsqrt(v + EPS) * g.reshape(1, 1, 1, C) + b.reshape(1, 1, 1, C)

    y = jnp.maximum(bn(conv(xs, params["conv1_w"]), params["bn1_gamma"], params["bn1_beta"]), 0.0)
    y2 = bn(conv(y, params["conv2_w"]), params["bn2_gamma"], params["bn2_beta"])
    return jnp.transpose(y2 + x, (0, 3, 1, 2))


if __name__ == "__main__":
    key = jax.random.PRNGKey(0)
    kx, kp = jax.random.split(key)

    # C=128 puts the channel axis exactly on the 128-wide lane dimension
    # (module-default reduction=16 -> SE hidden width 8).
    B, C, H, W = 2, 128, 16, 16
    x = jax.random.normal(kx, (B, C, H, W), dtype=jnp.float32)
    params = make_params(kp, channels=C, reduction=16)

    out = jax.block_until_ready(residual_se_block(x, params))
    assert out.shape == (B, C, H, W)

    # Tight check vs a reference using the SAME conv math as the kernel
    # (bf16 operands, f32 accumulation): validates the kernel logic.
    ref_bf16 = reference_forward(x, params, jnp.bfloat16)
    err_bf16 = float(jnp.max(jnp.abs(out - ref_bf16)))
    if err_bf16 > 2e-3:
        raise AssertionError(f"mismatch vs bf16-matched reference: max abs err = {err_bf16}")

    # Loose check vs the full-f32 reference: bounds the expected bf16-operand
    # drift of two stacked 3x3 convs (analytically ~1-2e-2 max at these scales).
    ref_f32 = reference_forward(x, params, jnp.float32)
    err_f32 = float(jnp.max(jnp.abs(out - ref_f32)))
    if err_f32 > 6e-2:
        raise AssertionError(f"mismatch vs f32 reference: max abs err = {err_f32}")

    print("KERNEL_OK")
</pallas_src>

<mosaic_0001>
module attributes {stable_mosaic.version = 11 : i64} {
  func.func @_residual_se_kernel(%arg0: memref<2x16x16x128xf32, #tpu.memory_space<vmem>>, %arg1: memref<9x128x128xbf16, #tpu.memory_space<any>>, %arg2: memref<9x128x128xbf16, #tpu.memory_space<any>>, %arg3: memref<1x128xf32, #tpu.memory_space<vmem>>, %arg4: memref<1x128xf32, #tpu.memory_space<vmem>>, %arg5: memref<1x128xf32, #tpu.memory_space<vmem>>, %arg6: memref<1x128xf32, #tpu.memory_space<vmem>>, %arg7: memref<8x128xf32, #tpu.memory_space<vmem>>, %arg8: memref<1x8xf32, #tpu.memory_space<vmem>>, %arg9: memref<8x128xf32, #tpu.memory_space<vmem>>, %arg10: memref<1x128xf32, #tpu.memory_space<vmem>>, %arg11: memref<2x16x16x128xf32, #tpu.memory_space<vmem>>, %arg12: memref<2x18x18x128xf32, #tpu.memory_space<vmem>>, %arg13: memref<9x128x128xbf16, #tpu.memory_space<vmem>>, %arg14: memref<9x128x128xbf16, #tpu.memory_space<vmem>>, %arg15: memref<2x!tpu.dma_semaphore, #tpu.memory_space<semaphore_mem>>) attributes {dimension_semantics = [], scalar_prefetch = 0 : i64, scratch_operands = 4 : i64, tpu.core_type = #tpu.core_type<tc>} {
    %c0_i32 = arith.constant 0 : i32
    %0 = tpu.memref_slice %arg15[%c0_i32] : memref<2x!tpu.dma_semaphore, #tpu.memory_space<semaphore_mem>> -> memref<1x!tpu.dma_semaphore, #tpu.memory_space<semaphore_mem>>
    %1 = tpu.memref_squeeze %0 : memref<1x!tpu.dma_semaphore, #tpu.memory_space<semaphore_mem>> -> memref<!tpu.dma_semaphore, #tpu.memory_space<semaphore_mem>>
    tpu.enqueue_dma source(%arg1 : memref<9x128x128xbf16, #tpu.memory_space<any>>) target(%arg13 : memref<9x128x128xbf16, #tpu.memory_space<vmem>>) target_semaphore(%1 : memref<!tpu.dma_semaphore, #tpu.memory_space<semaphore_mem>>)
    %c1_i32 = arith.constant 1 : i32
    %2 = tpu.memref_slice %arg15[%c1_i32] : memref<2x!tpu.dma_semaphore, #tpu.memory_space<semaphore_mem>> -> memref<1x!tpu.dma_semaphore, #tpu.memory_space<semaphore_mem>>
    %3 = tpu.memref_squeeze %2 : memref<1x!tpu.dma_semaphore, #tpu.memory_space<semaphore_mem>> -> memref<!tpu.dma_semaphore, #tpu.memory_space<semaphore_mem>>
    tpu.enqueue_dma source(%arg2 : memref<9x128x128xbf16, #tpu.memory_space<any>>) target(%arg14 : memref<9x128x128xbf16, #tpu.memory_space<vmem>>) target_semaphore(%3 : memref<!tpu.dma_semaphore, #tpu.memory_space<semaphore_mem>>)
    %c0 = arith.constant 0 : index
    %c0_0 = arith.constant 0 : index
    %c0_1 = arith.constant 0 : index
    %c0_2 = arith.constant 0 : index
    %4 = vector.load %arg0[%c0, %c0_0, %c0_1, %c0_2] : memref<2x16x16x128xf32, #tpu.memory_space<vmem>>, vector<2x16x16x128xf32>
    %cst = arith.constant dense<0.000000e+00> : vector<2x16x128xf32>
    %5 = vector.multi_reduction <add>, %4, %cst [1] : vector<2x16x16x128xf32> to vector<2x16x128xf32>
    %cst_3 = arith.constant dense<0.000000e+00> : vector<2x128xf32>
    %6 = vector.multi_reduction <add>, %5, %cst_3 [1] : vector<2x16x128xf32> to vector<2x128xf32>
    %cst_4 = arith.constant 3.906250e-03 : f32
    %7 = vector.broadcast %cst_4 : f32 to vector<2x128xf32>
    %8 = arith.mulf %6, %7 : vector<2x128xf32>
    %9 = vector.shape_cast %8 : vector<2x128xf32> to vector<2x1x128xf32>
    %c0_5 = arith.constant 0 : index
    %c0_6 = arith.constant 0 : index
    %10 = vector.load %arg7[%c0_5, %c0_6] : memref<8x128xf32, #tpu.memory_space<vmem>>, vector<8x128xf32>
    %11 = vector.shape_cast %10 : vector<8x128xf32> to vector<1x8x128xf32>
    %12 = vector.broadcast %9 : vector<2x1x128xf32> to vector<2x8x128xf32>
    %13 = vector.broadcast %11 : vector<1x8x128xf32> to vector<2x8x128xf32>
    %14 = arith.mulf %12, %13 : vector<2x8x128xf32>
    %cst_7 = arith.constant dense<0.000000e+00> : vector<2x8xf32>
    %15 = vector.multi_reduction <add>, %14, %cst_7 [2] : vector<2x8x128xf32> to vector<2x8xf32>
    %c0_8 = arith.constant 0 : index
    %c0_9 = arith.constant 0 : index
    %16 = vector.load %arg8[%c0_8, %c0_9] : memref<1x8xf32, #tpu.memory_space<vmem>>, vector<1x8xf32>
    %17 = vector.broadcast %16 : vector<1x8xf32> to vector<2x8xf32>
    %18 = arith.addf %15, %17 : vector<2x8xf32>
    %cst_10 = arith.constant 0.000000e+00 : f32
    %19 = vector.broadcast %cst_10 : f32 to vector<2x8xf32>
    %20 = arith.maximumf %18, %19 : vector<2x8xf32>
    %21 = vector.shape_cast %20 : vector<2x8xf32> to vector<2x8x1xf32>
    %c0_11 = arith.constant 0 : index
    %c0_12 = arith.constant 0 : index
    %22 = vector.load %arg9[%c0_11, %c0_12] : memref<8x128xf32, #tpu.memory_space<vmem>>, vector<8x128xf32>
    %23 = vector.shape_cast %22 : vector<8x128xf32> to vector<1x8x128xf32>
    %24 = vector.broadcast %21 : vector<2x8x1xf32> to vector<2x8x128xf32>
    %25 = vector.broadcast %23 : vector<1x8x128xf32> to vector<2x8x128xf32>
    %26 = arith.mulf %24, %25 : vector<2x8x128xf32>
    %cst_13 = arith.constant dense<0.000000e+00> : vector<2x128xf32>
    %27 = vector.multi_reduction <add>, %26, %cst_13 [1] : vector<2x8x128xf32> to vector<2x128xf32>
    %c0_14 = arith.constant 0 : index
    %c0_15 = arith.constant 0 : index
    %28 = vector.load %arg10[%c0_14, %c0_15] : memref<1x128xf32, #tpu.memory_space<vmem>>, vector<1x128xf32>
    %29 = vector.broadcast %28 : vector<1x128xf32> to vector<2x128xf32>
    %30 = arith.addf %27, %29 : vector<2x128xf32>
    %cst_16 = arith.constant 0.000000e+00 : f32
    %31 = vector.broadcast %cst_16 : f32 to vector<2x128xf32>
    %32 = arith.subf %31, %30 : vector<2x128xf32>
    %33 = math.exp %32 : vector<2x128xf32>
    %cst_17 = arith.constant 1.000000e+00 : f32
    %34 = vector.broadcast %cst_17 : f32 to vector<2x128xf32>
    %35 = arith.addf %34, %33 : vector<2x128xf32>
    %cst_18 = arith.constant 1.000000e+00 : f32
    %36 = vector.broadcast %cst_18 : f32 to vector<2x128xf32>
    %37 = arith.divf %36, %35 : vector<2x128xf32>
    %cst_19 = arith.constant 0.000000e+00 : f32
    %38 = vector.broadcast %cst_19 : f32 to vector<2x18x18x128xf32>
    %c0_20 = arith.constant 0 : index
    %c0_21 = arith.constant 0 : index
    %c0_22 = arith.constant 0 : index
    %c0_23 = arith.constant 0 : index
    %39 = vector.load %arg12[%c0_20, %c0_21, %c0_22, %c0_23] : memref<2x18x18x128xf32, #tpu.memory_space<vmem>>, vector<2x18x18x128xf32>
    tpu.vector_store %arg12[%c0_20, %c0_21, %c0_22, %c0_23], %38 {strides = array<i32>} : memref<2x18x18x128xf32, #tpu.memory_space<vmem>>, vector<2x18x18x128xf32>,
    %40 = vector.shape_cast %37 : vector<2x128xf32> to vector<2x1x1x128xf32>
    %41 = vector.broadcast %40 : vector<2x1x1x128xf32> to vector<2x16x16x128xf32>
    %42 = arith.mulf %4, %41 : vector<2x16x16x128xf32>
    %c0_24 = arith.constant 0 : index
    %c1 = arith.constant 1 : index
    %c1_25 = arith.constant 1 : index
    %c0_26 = arith.constant 0 : index
    %43 = vector.load %arg12[%c0_24, %c1, %c1_25, %c0_26] : memref<2x18x18x128xf32, #tpu.memory_space<vmem>>, vector<2x16x16x128xf32>
    tpu.vector_store %arg12[%c0_24, %c1, %c1_25, %c0_26], %42 {strides = array<i32>} : memref<2x18x18x128xf32, #tpu.memory_space<vmem>>, vector<2x16x16x128xf32>,
    %c0_i32_27 = arith.constant 0 : i32
    %44 = tpu.memref_slice %arg15[%c0_i32_27] : memref<2x!tpu.dma_semaphore, #tpu.memory_space<semaphore_mem>> -> memref<1x!tpu.dma_semaphore, #tpu.memory_space<semaphore_mem>>
    %45 = tpu.memref_squeeze %44 : memref<1x!tpu.dma_semaphore, #tpu.memory_space<semaphore_mem>> -> memref<!tpu.dma_semaphore, #tpu.memory_space<semaphore_mem>>
    tpu.wait_dma2 semaphore(%45 : memref<!tpu.dma_semaphore, #tpu.memory_space<semaphore_mem>>) src(%arg1 : memref<9x128x128xbf16, #tpu.memory_space<any>>) dst(%arg13 : memref<9x128x128xbf16, #tpu.memory_space<vmem>>)
    %c0_28 = arith.constant 0 : index
    %c0_29 = arith.constant 0 : index
    %c0_30 = arith.constant 0 : index
    %c0_31 = arith.constant 0 : index
    %46 = vector.load %arg12[%c0_28, %c0_29, %c0_30, %c0_31] : memref<2x18x18x128xf32, #tpu.memory_space<vmem>>, vector<2x16x16x128xf32>
    %47 = arith.truncf %46 : vector<2x16x16x128xf32> to vector<2x16x16x128xbf16>
    %48 = vector.shape_cast %47 : vector<2x16x16x128xbf16> to vector<512x128xbf16>
    %c0_32 = arith.constant 0 : index
    %c0_33 = arith.constant 0 : index
    %c0_34 = arith.constant 0 : index
    %49 = vector.load %arg13[%c0_32, %c0_33, %c0_34] : memref<9x128x128xbf16, #tpu.memory_space<vmem>>, vector<1x128x128xbf16>
    %50 = vector.shape_cast %49 : vector<1x128x128xbf16> to vector<128x128xbf16>
    %cst_35 = arith.constant dense<0.000000e+00> : vector<512x128xf32>
    %51 = tpu.matmul %48, %50, %cst_35 {dimension_numbers = #tpu.dot_dimension_numbers<[1], [0], [0], [1], [0, 0, 1, 1], [], []>} : vector<512x128xbf16>, vector<128x128xbf16>, vector<512x128xf32> -> vector<512x128xf32>
    %c0_36 = arith.constant 0 : index
    %c0_37 = arith.constant 0 : index
    %c1_38 = arith.constant 1 : index
    %c0_39 = arith.constant 0 : index
    %52 = vector.load %arg12[%c0_36, %c0_37, %c1_38, %c0_39] : memref<2x18x18x128xf32, #tpu.memory_space<vmem>>, vector<2x16x16x128xf32>
    %53 = arith.truncf %52 : vector<2x16x16x128xf32> to vector<2x16x16x128xbf16>
    %54 = vector.shape_cast %53 : vector<2x16x16x128xbf16> to vector<512x128xbf16>
    %c1_40 = arith.constant 1 : index
    %c0_41 = arith.constant 0 : index
    %c0_42 = arith.constant 0 : index
    %55 = vector.load %arg13[%c1_40, %c0_41, %c0_42] : memref<9x128x128xbf16, #tpu.memory_space<vmem>>, vector<1x128x128xbf16>
    %56 = vector.shape_cast %55 : vector<1x128x128xbf16> to vector<128x128xbf16>
    %cst_43 = arith.constant dense<0.000000e+00> : vector<512x128xf32>
    %57 = tpu.matmul %54, %56, %cst_43 {dimension_numbers = #tpu.dot_dimension_numbers<[1], [0], [0], [1], [0, 0, 1, 1], [], []>} : vector<512x128xbf16>, vector<128x128xbf16>, vector<512x128xf32> -> vector<512x128xf32>
    %58 = arith.addf %51, %57 : vector<512x128xf32>
    %c0_44 = arith.constant 0 : index
    %c0_45 = arith.constant 0 : index
    %c2 = arith.constant 2 : index
    %c0_46 = arith.constant 0 : index
    %59 = vector.load %arg12[%c0_44, %c0_45, %c2, %c0_46] : memref<2x18x18x128xf32, #tpu.memory_space<vmem>>, vector<2x16x16x128xf32>
    %60 = arith.truncf %59 : vector<2x16x16x128xf32> to vector<2x16x16x128xbf16>
    %61 = vector.shape_cast %60 : vector<2x16x16x128xbf16> to vector<512x128xbf16>
    %c2_47 = arith.constant 2 : index
    %c0_48 = arith.constant 0 : index
    %c0_49 = arith.constant 0 : index
    %62 = vector.load %arg13[%c2_47, %c0_48, %c0_49] : memref<9x128x128xbf16, #tpu.memory_space<vmem>>, vector<1x128x128xbf16>
    %63 = vector.shape_cast %62 : vector<1x128x128xbf16> to vector<128x128xbf16>
    %cst_50 = arith.constant dense<0.000000e+00> : vector<512x128xf32>
    %64 = tpu.matmul %61, %63, %cst_50 {dimension_numbers = #tpu.dot_dimension_numbers<[1], [0], [0], [1], [0, 0, 1, 1], [], []>} : vector<512x128xbf16>, vector<128x128xbf16>, vector<512x128xf32> -> vector<512x128xf32>
    %65 = arith.addf %58, %64 : vector<512x128xf32>
    %c0_51 = arith.constant 0 : index
    %c1_52 = arith.constant 1 : index
    %c0_53 = arith.constant 0 : index
    %c0_54 = arith.constant 0 : index
    %66 = vector.load %arg12[%c0_51, %c1_52, %c0_53, %c0_54] : memref<2x18x18x128xf32, #tpu.memory_space<vmem>>, vector<2x16x16x128xf32>
    %67 = arith.truncf %66 : vector<2x16x16x128xf32> to vector<2x16x16x128xbf16>
    %68 = vector.shape_cast %67 : vector<2x16x16x128xbf16> to vector<512x128xbf16>
    %c3 = arith.constant 3 : index
    %c0_55 = arith.constant 0 : index
    %c0_56 = arith.constant 0 : index
    %69 = vector.load %arg13[%c3, %c0_55, %c0_56] : memref<9x128x128xbf16, #tpu.memory_space<vmem>>, vector<1x128x128xbf16>
    %70 = vector.shape_cast %69 : vector<1x128x128xbf16> to vector<128x128xbf16>
    %cst_57 = arith.constant dense<0.000000e+00> : vector<512x128xf32>
    %71 = tpu.matmul %68, %70, %cst_57 {dimension_numbers = #tpu.dot_dimension_numbers<[1], [0], [0], [1], [0, 0, 1, 1], [], []>} : vector<512x128xbf16>, vector<128x128xbf16>, vector<512x128xf32> -> vector<512x128xf32>
    %72 = arith.addf %65, %71 : vector<512x128xf32>
    %c0_58 = arith.constant 0 : index
    %c1_59 = arith.constant 1 : index
    %c1_60 = arith.constant 1 : index
    %c0_61 = arith.constant 0 : index
    %73 = vector.load %arg12[%c0_58, %c1_59, %c1_60, %c0_61] : memref<2x18x18x128xf32, #tpu.memory_space<vmem>>, vector<2x16x16x128xf32>
    %74 = arith.truncf %73 : vector<2x16x16x128xf32> to vector<2x16x16x128xbf16>
    %75 = vector.shape_cast %74 : vector<2x16x16x128xbf16> to vector<512x128xbf16>
    %c4 = arith.constant 4 : index
    %c0_62 = arith.constant 0 : index
    %c0_63 = arith.constant 0 : index
    %76 = vector.load %arg13[%c4, %c0_62, %c0_63] : memref<9x128x128xbf16, #tpu.memory_space<vmem>>, vector<1x128x128xbf16>
    %77 = vector.shape_cast %76 : vector<1x128x128xbf16> to vector<128x128xbf16>
    %cst_64 = arith.constant dense<0.000000e+00> : vector<512x128xf32>
    %78 = tpu.matmul %75, %77, %cst_64 {dimension_numbers = #tpu.dot_dimension_numbers<[1], [0], [0], [1], [0, 0, 1, 1], [], []>} : vector<512x128xbf16>, vector<128x128xbf16>, vector<512x128xf32> -> vector<512x128xf32>
    %79 = arith.addf %72, %78 : vector<512x128xf32>
    %c0_65 = arith.constant 0 : index
    %c1_66 = arith.constant 1 : index
    %c2_67 = arith.constant 2 : index
    %c0_68 = arith.constant 0 : index
    %80 = vector.load %arg12[%c0_65, %c1_66, %c2_67, %c0_68] : memref<2x18x18x128xf32, #tpu.memory_space<vmem>>, vector<2x16x16x128xf32>
    %81 = arith.truncf %80 : vector<2x16x16x128xf32> to vector<2x16x16x128xbf16>
    %82 = vector.shape_cast %81 : vector<2x16x16x128xbf16> to vector<512x128xbf16>
    %c5 = arith.constant 5 : index
    %c0_69 = arith.constant 0 : index
    %c0_70 = arith.constant 0 : index
    %83 = vector.load %arg13[%c5, %c0_69, %c0_70] : memref<9x128x128xbf16, #tpu.memory_space<vmem>>, vector<1x128x128xbf16>
    %84 = vector.shape_cast %83 : vector<1x128x128xbf16> to vector<128x128xbf16>
    %cst_71 = arith.constant dense<0.000000e+00> : vector<512x128xf32>
    %85 = tpu.matmul %82, %84, %cst_71 {dimension_numbers = #tpu.dot_dimension_numbers<[1], [0], [0], [1], [0, 0, 1, 1], [], []>} : vector<512x128xbf16>, vector<128x128xbf16>, vector<512x128xf32> -> vector<512x128xf32>
    %86 = arith.addf %79, %85 : vector<512x128xf32>
    %c0_72 = arith.constant 0 : index
    %c2_73 = arith.constant 2 : index
    %c0_74 = arith.constant 0 : index
    %c0_75 = arith.constant 0 : index
    %87 = vector.load %arg12[%c0_72, %c2_73, %c0_74, %c0_75] : memref<2x18x18x128xf32, #tpu.memory_space<vmem>>, vector<2x16x16x128xf32>
    %88 = arith.truncf %87 : vector<2x16x16x128xf32> to vector<2x16x16x128xbf16>
    %89 = vector.shape_cast %88 : vector<2x16x16x128xbf16> to vector<512x128xbf16>
    %c6 = arith.constant 6 : index
    %c0_76 = arith.constant 0 : index
    %c0_77 = arith.constant 0 : index
    %90 = vector.load %arg13[%c6, %c0_76, %c0_77] : memref<9x128x128xbf16, #tpu.memory_space<vmem>>, vector<1x128x128xbf16>
    %91 = vector.shape_cast %90 : vector<1x128x128xbf16> to vector<128x128xbf16>
    %cst_78 = arith.constant dense<0.000000e+00> : vector<512x128xf32>
    %92 = tpu.matmul %89, %91, %cst_78 {dimension_numbers = #tpu.dot_dimension_numbers<[1], [0], [0], [1], [0, 0, 1, 1], [], []>} : vector<512x128xbf16>, vector<128x128xbf16>, vector<512x128xf32> -> vector<512x128xf32>
    %93 = arith.addf %86, %92 : vector<512x128xf32>
    %c0_79 = arith.constant 0 : index
    %c2_80 = arith.constant 2 : index
    %c1_81 = arith.constant 1 : index
    %c0_82 = arith.constant 0 : index
    %94 = vector.load %arg12[%c0_79, %c2_80, %c1_81, %c0_82] : memref<2x18x18x128xf32, #tpu.memory_space<vmem>>, vector<2x16x16x128xf32>
    %95 = arith.truncf %94 : vector<2x16x16x128xf32> to vector<2x16x16x128xbf16>
    %96 = vector.shape_cast %95 : vector<2x16x16x128xbf16> to vector<512x128xbf16>
    %c7 = arith.constant 7 : index
    %c0_83 = arith.constant 0 : index
    %c0_84 = arith.constant 0 : index
    %97 = vector.load %arg13[%c7, %c0_83, %c0_84] : memref<9x128x128xbf16, #tpu.memory_space<vmem>>, vector<1x128x128xbf16>
    %98 = vector.shape_cast %97 : vector<1x128x128xbf16> to vector<128x128xbf16>
    %cst_85 = arith.constant dense<0.000000e+00> : vector<512x128xf32>
    %99 = tpu.matmul %96, %98, %cst_85 {dimension_numbers = #tpu.dot_dimension_numbers<[1], [0], [0], [1], [0, 0, 1, 1], [], []>} : vector<512x128xbf16>, vector<128x128xbf16>, vector<512x128xf32> -> vector<512x128xf32>
    %100 = arith.addf %93, %99 : vector<512x128xf32>
    %c0_86 = arith.constant 0 : index
    %c2_87 = arith.constant 2 : index
    %c2_88 = arith.constant 2 : index
    %c0_89 = arith.constant 0 : index
    %101 = vector.load %arg12[%c0_86, %c2_87, %c2_88, %c0_89] : memref<2x18x18x128xf32, #tpu.memory_space<vmem>>, vector<2x16x16x128xf32>
    %102 = arith.truncf %101 : vector<2x16x16x128xf32> to vector<2x16x16x128xbf16>
    %103 = vector.shape_cast %102 : vector<2x16x16x128xbf16> to vector<512x128xbf16>
    %c8 = arith.constant 8 : index
    %c0_90 = arith.constant 0 : index
    %c0_91 = arith.constant 0 : index
    %104 = vector.load %arg13[%c8, %c0_90, %c0_91] : memref<9x128x128xbf16, #tpu.memory_space<vmem>>, vector<1x128x128xbf16>
    %105 = vector.shape_cast %104 : vector<1x128x128xbf16> to vector<128x128xbf16>
    %cst_92 = arith.constant dense<0.000000e+00> : vector<512x128xf32>
    %106 = tpu.matmul %103, %105, %cst_92 {dimension_numbers = #tpu.dot_dimension_numbers<[1], [0], [0], [1], [0, 0, 1, 1], [], []>} : vector<512x128xbf16>, vector<128x128xbf16>, vector<512x128xf32> -> vector<512x128xf32>
    %107 = arith.addf %100, %106 : vector<512x128xf32>
    %cst_93 = arith.constant dense<0.000000e+00> : vector<128xf32>
    %108 = vector.multi_reduction <add>, %107, %cst_93 [0] : vector<512x128xf32> to vector<128xf32>
    %109 = vector.shape_cast %108 : vector<128xf32> to vector<1x128xf32>
    %cst_94 = arith.constant 0.001953125 : f32
    %110 = vector.broadcast %cst_94 : f32 to vector<1x128xf32>
    %111 = arith.mulf %109, %110 : vector<1x128xf32>
    %112 = arith.mulf %107, %107 : vector<512x128xf32>
    %cst_95 = arith.constant dense<0.000000e+00> : vector<128xf32>
    %113 = vector.multi_reduction <add>, %112, %cst_95 [0] : vector<512x128xf32> to vector<128xf32>
    %114 = vector.shape_cast %113 : vector<128xf32> to vector<1x128xf32>
    %cst_96 = arith.constant 0.001953125 : f32
    %115 = vector.broadcast %cst_96 : f32 to vector<1x128xf32>
    %116 = arith.mulf %114, %115 : vector<1x128xf32>
    %117 = arith.mulf %111, %111 : vector<1x128xf32>
    %118 = arith.subf %116, %117 : vector<1x128xf32>
    %cst_97 = arith.constant 0.000000e+00 : f32
    %119 = vector.broadcast %cst_97 : f32 to vector<1x128xf32>
    %120 = arith.maximumf %118, %119 : vector<1x128xf32>
    %121 = vector.broadcast %111 : vector<1x128xf32> to vector<512x128xf32>
    %122 = arith.subf %107, %121 : vector<512x128xf32>
    %cst_98 = arith.constant 9.99999974E-6 : f32
    %123 = vector.broadcast %cst_98 : f32 to vector<1x128xf32>
    %124 = arith.addf %120, %123 : vector<1x128xf32>
    %125 = math.rsqrt %124 : vector<1x128xf32>
    %126 = vector.broadcast %125 : vector<1x128xf32> to vector<512x128xf32>
    %127 = arith.mulf %122, %126 : vector<512x128xf32>
    %c0_99 = arith.constant 0 : index
    %c0_100 = arith.constant 0 : index
    %128 = vector.load %arg3[%c0_99, %c0_100] : memref<1x128xf32, #tpu.memory_space<vmem>>, vector<1x128xf32>
    %129 = vector.broadcast %128 : vector<1x128xf32> to vector<512x128xf32>
    %130 = arith.mulf %127, %129 : vector<512x128xf32>
    %c0_101 = arith.constant 0 : index
    %c0_102 = arith.constant 0 : index
    %131 = vector.load %arg4[%c0_101, %c0_102] : memref<1x128xf32, #tpu.memory_space<vmem>>, vector<1x128xf32>
    %132 = vector.broadcast %131 : vector<1x128xf32> to vector<512x128xf32>
    %133 = arith.addf %130, %132 : vector<512x128xf32>
    %cst_103 = arith.constant 0.000000e+00 : f32
    %134 = vector.broadcast %cst_103 : f32 to vector<512x128xf32>
    %135 = arith.maximumf %133, %134 : vector<512x128xf32>
    %136 = vector.shape_cast %135 : vector<512x128xf32> to vector<2x16x16x128xf32>
    %c0_104 = arith.constant 0 : index
    %c1_105 = arith.constant 1 : index
    %c1_106 = arith.constant 1 : index
    %c0_107 = arith.constant 0 : index
    %137 = vector.load %arg12[%c0_104, %c1_105, %c1_106, %c0_107] : memref<2x18x18x128xf32, #tpu.memory_space<vmem>>, vector<2x16x16x128xf32>
    tpu.vector_store %arg12[%c0_104, %c1_105, %c1_106, %c0_107], %136 {strides = array<i32>} : memref<2x18x18x128xf32, #tpu.memory_space<vmem>>, vector<2x16x16x128xf32>,
    %c1_i32_108 = arith.constant 1 : i32
    %138 = tpu.memref_slice %arg15[%c1_i32_108] : memref<2x!tpu.dma_semaphore, #tpu.memory_space<semaphore_mem>> -> memref<1x!tpu.dma_semaphore, #tpu.memory_space<semaphore_mem>>
    %139 = tpu.memref_squeeze %138 : memref<1x!tpu.dma_semaphore, #tpu.memory_space<semaphore_mem>> -> memref<!tpu.dma_semaphore, #tpu.memory_space<semaphore_mem>>
    tpu.wait_dma2 semaphore(%139 : memref<!tpu.dma_semaphore, #tpu.memory_space<semaphore_mem>>) src(%arg2 : memref<9x128x128xbf16, #tpu.memory_space<any>>) dst(%arg14 : memref<9x128x128xbf16, #tpu.memory_space<vmem>>)
    %c0_109 = arith.constant 0 : index
    %c0_110 = arith.constant 0 : index
    %c0_111 = arith.constant 0 : index
    %c0_112 = arith.constant 0 : index
    %140 = vector.load %arg12[%c0_109, %c0_110, %c0_111, %c0_112] : memref<2x18x18x128xf32, #tpu.memory_space<vmem>>, vector<2x16x16x128xf32>
    %141 = arith.truncf %140 : vector<2x16x16x128xf32> to vector<2x16x16x128xbf16>
    %142 = vector.shape_cast %141 : vector<2x16x16x128xbf16> to vector<512x128xbf16>
    %c0_113 = arith.constant 0 : index
    %c0_114 = arith.constant 0 : index
    %c0_115 = arith.constant 0 : index
    %143 = vector.load %arg14[%c0_113, %c0_114, %c0_115] : memref<9x128x128xbf16, #tpu.memory_space<vmem>>, vector<1x128x128xbf16>
    %144 = vector.shape_cast %143 : vector<1x128x128xbf16> to vector<128x128xbf16>
    %cst_116 = arith.constant dense<0.000000e+00> : vector<512x128xf32>
    %145 = tpu.matmul %142, %144, %cst_116 {dimension_numbers = #tpu.dot_dimension_numbers<[1], [0], [0], [1], [0, 0, 1, 1], [], []>} : vector<512x128xbf16>, vector<128x128xbf16>, vector<512x128xf32> -> vector<512x128xf32>
    %c0_117 = arith.constant 0 : index
    %c0_118 = arith.constant 0 : index
    %c1_119 = arith.constant 1 : index
    %c0_120 = arith.constant 0 : index
    %146 = vector.load %arg12[%c0_117, %c0_118, %c1_119, %c0_120] : memref<2x18x18x128xf32, #tpu.memory_space<vmem>>, vector<2x16x16x128xf32>
    %147 = arith.truncf %146 : vector<2x16x16x128xf32> to vector<2x16x16x128xbf16>
    %148 = vector.shape_cast %147 : vector<2x16x16x128xbf16> to vector<512x128xbf16>
    %c1_121 = arith.constant 1 : index
    %c0_122 = arith.constant 0 : index
    %c0_123 = arith.constant 0 : index
    %149 = vector.load %arg14[%c1_121, %c0_122, %c0_123] : memref<9x128x128xbf16, #tpu.memory_space<vmem>>, vector<1x128x128xbf16>
    %150 = vector.shape_cast %149 : vector<1x128x128xbf16> to vector<128x128xbf16>
    %cst_124 = arith.constant dense<0.000000e+00> : vector<512x128xf32>
    %151 = tpu.matmul %148, %150, %cst_124 {dimension_numbers = #tpu.dot_dimension_numbers<[1], [0], [0], [1], [0, 0, 1, 1], [], []>} : vector<512x128xbf16>, vector<128x128xbf16>, vector<512x128xf32> -> vector<512x128xf32>
    %152 = arith.addf %145, %151 : vector<512x128xf32>
    %c0_125 = arith.constant 0 : index
    %c0_126 = arith.constant 0 : index
    %c2_127 = arith.constant 2 : index
    %c0_128 = arith.constant 0 : index
    %153 = vector.load %arg12[%c0_125, %c0_126, %c2_127, %c0_128] : memref<2x18x18x128xf32, #tpu.memory_space<vmem>>, vector<2x16x16x128xf32>
    %154 = arith.truncf %153 : vector<2x16x16x128xf32> to vector<2x16x16x128xbf16>
    %155 = vector.shape_cast %154 : vector<2x16x16x128xbf16> to vector<512x128xbf16>
    %c2_129 = arith.constant 2 : index
    %c0_130 = arith.constant 0 : index
    %c0_131 = arith.constant 0 : index
    %156 = vector.load %arg14[%c2_129, %c0_130, %c0_131] : memref<9x128x128xbf16, #tpu.memory_space<vmem>>, vector<1x128x128xbf16>
    %157 = vector.shape_cast %156 : vector<1x128x128xbf16> to vector<128x128xbf16>
    %cst_132 = arith.constant dense<0.000000e+00> : vector<512x128xf32>
    %158 = tpu.matmul %155, %157, %cst_132 {dimension_numbers = #tpu.dot_dimension_numbers<[1], [0], [0], [1], [0, 0, 1, 1], [], []>} : vector<512x128xbf16>, vector<128x128xbf16>, vector<512x128xf32> -> vector<512x128xf32>
    %159 = arith.addf %152, %158 : vector<512x128xf32>
    %c0_133 = arith.constant 0 : index
    %c1_134 = arith.constant 1 : index
    %c0_135 = arith.constant 0 : index
    %c0_136 = arith.constant 0 : index
    %160 = vector.load %arg12[%c0_133, %c1_134, %c0_135, %c0_136] : memref<2x18x18x128xf32, #tpu.memory_space<vmem>>, vector<2x16x16x128xf32>
    %161 = arith.truncf %160 : vector<2x16x16x128xf32> to vector<2x16x16x128xbf16>
    %162 = vector.shape_cast %161 : vector<2x16x16x128xbf16> to vector<512x128xbf16>
    %c3_137 = arith.constant 3 : index
    %c0_138 = arith.constant 0 : index
    %c0_139 = arith.constant 0 : index
    %163 = vector.load %arg14[%c3_137, %c0_138, %c0_139] : memref<9x128x128xbf16, #tpu.memory_space<vmem>>, vector<1x128x128xbf16>
    %164 = vector.shape_cast %163 : vector<1x128x128xbf16> to vector<128x128xbf16>
    %cst_140 = arith.constant dense<0.000000e+00> : vector<512x128xf32>
    %165 = tpu.matmul %162, %164, %cst_140 {dimension_numbers = #tpu.dot_dimension_numbers<[1], [0], [0], [1], [0, 0, 1, 1], [], []>} : vector<512x128xbf16>, vector<128x128xbf16>, vector<512x128xf32> -> vector<512x128xf32>
    %166 = arith.addf %159, %165 : vector<512x128xf32>
    %c0_141 = arith.constant 0 : index
    %c1_142 = arith.constant 1 : index
    %c1_143 = arith.constant 1 : index
    %c0_144 = arith.constant 0 : index
    %167 = vector.load %arg12[%c0_141, %c1_142, %c1_143, %c0_144] : memref<2x18x18x128xf32, #tpu.memory_space<vmem>>, vector<2x16x16x128xf32>
    %168 = arith.truncf %167 : vector<2x16x16x128xf32> to vector<2x16x16x128xbf16>
    %169 = vector.shape_cast %168 : vector<2x16x16x128xbf16> to vector<512x128xbf16>
    %c4_145 = arith.constant 4 : index
    %c0_146 = arith.constant 0 : index
    %c0_147 = arith.constant 0 : index
    %170 = vector.load %arg14[%c4_145, %c0_146, %c0_147] : memref<9x128x128xbf16, #tpu.memory_space<vmem>>, vector<1x128x128xbf16>
    %171 = vector.shape_cast %170 : vector<1x128x128xbf16> to vector<128x128xbf16>
    %cst_148 = arith.constant dense<0.000000e+00> : vector<512x128xf32>
    %172 = tpu.matmul %169, %171, %cst_148 {dimension_numbers = #tpu.dot_dimension_numbers<[1], [0], [0], [1], [0, 0, 1, 1], [], []>} : vector<512x128xbf16>, vector<128x128xbf16>, vector<512x128xf32> -> vector<512x128xf32>
    %173 = arith.addf %166, %172 : vector<512x128xf32>
    %c0_149 = arith.constant 0 : index
    %c1_150 = arith.constant 1 : index
    %c2_151 = arith.constant 2 : index
    %c0_152 = arith.constant 0 : index
    %174 = vector.load %arg12[%c0_149, %c1_150, %c2_151, %c0_152] : memref<2x18x18x128xf32, #tpu.memory_space<vmem>>, vector<2x16x16x128xf32>
    %175 = arith.truncf %174 : vector<2x16x16x128xf32> to vector<2x16x16x128xbf16>
    %176 = vector.shape_cast %175 : vector<2x16x16x128xbf16> to vector<512x128xbf16>
    %c5_153 = arith.constant 5 : index
    %c0_154 = arith.constant 0 : index
    %c0_155 = arith.constant 0 : index
    %177 = vector.load %arg14[%c5_153, %c0_154, %c0_155] : memref<9x128x128xbf16, #tpu.memory_space<vmem>>, vector<1x128x128xbf16>
    %178 = vector.shape_cast %177 : vector<1x128x128xbf16> to vector<128x128xbf16>
    %cst_156 = arith.constant dense<0.000000e+00> : vector<512x128xf32>
    %179 = tpu.matmul %176, %178, %cst_156 {dimension_numbers = #tpu.dot_dimension_numbers<[1], [0], [0], [1], [0, 0, 1, 1], [], []>} : vector<512x128xbf16>, vector<128x128xbf16>, vector<512x128xf32> -> vector<512x128xf32>
    %180 = arith.addf %173, %179 : vector<512x128xf32>
    %c0_157 = arith.constant 0 : index
    %c2_158 = arith.constant 2 : index
    %c0_159 = arith.constant 0 : index
    %c0_160 = arith.constant 0 : index
    %181 = vector.load %arg12[%c0_157, %c2_158, %c0_159, %c0_160] : memref<2x18x18x128xf32, #tpu.memory_space<vmem>>, vector<2x16x16x128xf32>
    %182 = arith.truncf %181 : vector<2x16x16x128xf32> to vector<2x16x16x128xbf16>
    %183 = vector.shape_cast %182 : vector<2x16x16x128xbf16> to vector<512x128xbf16>
    %c6_161 = arith.constant 6 : index
    %c0_162 = arith.constant 0 : index
    %c0_163 = arith.constant 0 : index
    %184 = vector.load %arg14[%c6_161, %c0_162, %c0_163] : memref<9x128x128xbf16, #tpu.memory_space<vmem>>, vector<1x128x128xbf16>
    %185 = vector.shape_cast %184 : vector<1x128x128xbf16> to vector<128x128xbf16>
    %cst_164 = arith.constant dense<0.000000e+00> : vector<512x128xf32>
    %186 = tpu.matmul %183, %185, %cst_164 {dimension_numbers = #tpu.dot_dimension_numbers<[1], [0], [0], [1], [0, 0, 1, 1], [], []>} : vector<512x128xbf16>, vector<128x128xbf16>, vector<512x128xf32> -> vector<512x128xf32>
    %187 = arith.addf %180, %186 : vector<512x128xf32>
    %c0_165 = arith.constant 0 : index
    %c2_166 = arith.constant 2 : index
    %c1_167 = arith.constant 1 : index
    %c0_168 = arith.constant 0 : index
    %188 = vector.load %arg12[%c0_165, %c2_166, %c1_167, %c0_168] : memref<2x18x18x128xf32, #tpu.memory_space<vmem>>, vector<2x16x16x128xf32>
    %189 = arith.truncf %188 : vector<2x16x16x128xf32> to vector<2x16x16x128xbf16>
    %190 = vector.shape_cast %189 : vector<2x16x16x128xbf16> to vector<512x128xbf16>
    %c7_169 = arith.constant 7 : index
    %c0_170 = arith.constant 0 : index
    %c0_171 = arith.constant 0 : index
    %191 = vector.load %arg14[%c7_169, %c0_170, %c0_171] : memref<9x128x128xbf16, #tpu.memory_space<vmem>>, vector<1x128x128xbf16>
    %192 = vector.shape_cast %191 : vector<1x128x128xbf16> to vector<128x128xbf16>
    %cst_172 = arith.constant dense<0.000000e+00> : vector<512x128xf32>
    %193 = tpu.matmul %190, %192, %cst_172 {dimension_numbers = #tpu.dot_dimension_numbers<[1], [0], [0], [1], [0, 0, 1, 1], [], []>} : vector<512x128xbf16>, vector<128x128xbf16>, vector<512x128xf32> -> vector<512x128xf32>
    %194 = arith.addf %187, %193 : vector<512x128xf32>
    %c0_173 = arith.constant 0 : index
    %c2_174 = arith.constant 2 : index
    %c2_175 = arith.constant 2 : index
    %c0_176 = arith.constant 0 : index
    %195 = vector.load %arg12[%c0_173, %c2_174, %c2_175, %c0_176] : memref<2x18x18x128xf32, #tpu.memory_space<vmem>>, vector<2x16x16x128xf32>
    %196 = arith.truncf %195 : vector<2x16x16x128xf32> to vector<2x16x16x128xbf16>
    %197 = vector.shape_cast %196 : vector<2x16x16x128xbf16> to vector<512x128xbf16>
    %c8_177 = arith.constant 8 : index
    %c0_178 = arith.constant 0 : index
    %c0_179 = arith.constant 0 : index
    %198 = vector.load %arg14[%c8_177, %c0_178, %c0_179] : memref<9x128x128xbf16, #tpu.memory_space<vmem>>, vector<1x128x128xbf16>
    %199 = vector.shape_cast %198 : vector<1x128x128xbf16> to vector<128x128xbf16>
    %cst_180 = arith.constant dense<0.000000e+00> : vector<512x128xf32>
    %200 = tpu.matmul %197, %199, %cst_180 {dimension_numbers = #tpu.dot_dimension_numbers<[1], [0], [0], [1], [0, 0, 1, 1], [], []>} : vector<512x128xbf16>, vector<128x128xbf16>, vector<512x128xf32> -> vector<512x128xf32>
    %201 = arith.addf %194, %200 : vector<512x128xf32>
    %cst_181 = arith.constant dense<0.000000e+00> : vector<128xf32>
    %202 = vector.multi_reduction <add>, %201, %cst_181 [0] : vector<512x128xf32> to vector<128xf32>
    %203 = vector.shape_cast %202 : vector<128xf32> to vector<1x128xf32>
    %cst_182 = arith.constant 0.001953125 : f32
    %204 = vector.broadcast %cst_182 : f32 to vector<1x128xf32>
    %205 = arith.mulf %203, %204 : vector<1x128xf32>
    %206 = arith.mulf %201, %201 : vector<512x128xf32>
    %cst_183 = arith.constant dense<0.000000e+00> : vector<128xf32>
    %207 = vector.multi_reduction <add>, %206, %cst_183 [0] : vector<512x128xf32> to vector<128xf32>
    %208 = vector.shape_cast %207 : vector<128xf32> to vector<1x128xf32>
    %cst_184 = arith.constant 0.001953125 : f32
    %209 = vector.broadcast %cst_184 : f32 to vector<1x128xf32>
    %210 = arith.mulf %208, %209 : vector<1x128xf32>
    %211 = arith.mulf %205, %205 : vector<1x128xf32>
    %212 = arith.subf %210, %211 : vector<1x128xf32>
    %cst_185 = arith.constant 0.000000e+00 : f32
    %213 = vector.broadcast %cst_185 : f32 to vector<1x128xf32>
    %214 = arith.maximumf %212, %213 : vector<1x128xf32>
    %215 = vector.broadcast %205 : vector<1x128xf32> to vector<512x128xf32>
    %216 = arith.subf %201, %215 : vector<512x128xf32>
    %cst_186 = arith.constant 9.99999974E-6 : f32
    %217 = vector.broadcast %cst_186 : f32 to vector<1x128xf32>
    %218 = arith.addf %214, %217 : vector<1x128xf32>
    %219 = math.rsqrt %218 : vector<1x128xf32>
    %220 = vector.broadcast %219 : vector<1x128xf32> to vector<512x128xf32>
    %221 = arith.mulf %216, %220 : vector<512x128xf32>
    %c0_187 = arith.constant 0 : index
    %c0_188 = arith.constant 0 : index
    %222 = vector.load %arg5[%c0_187, %c0_188] : memref<1x128xf32, #tpu.memory_space<vmem>>, vector<1x128xf32>
    %223 = vector.broadcast %222 : vector<1x128xf32> to vector<512x128xf32>
    %224 = arith.mulf %221, %223 : vector<512x128xf32>
    %c0_189 = arith.constant 0 : index
    %c0_190 = arith.constant 0 : index
    %225 = vector.load %arg6[%c0_189, %c0_190] : memref<1x128xf32, #tpu.memory_space<vmem>>, vector<1x128xf32>
    %226 = vector.broadcast %225 : vector<1x128xf32> to vector<512x128xf32>
    %227 = arith.addf %224, %226 : vector<512x128xf32>
    %228 = vector.shape_cast %227 : vector<512x128xf32> to vector<2x16x16x128xf32>
    %c0_191 = arith.constant 0 : index
    %c0_192 = arith.constant 0 : index
    %c0_193 = arith.constant 0 : index
    %c0_194 = arith.constant 0 : index
    %229 = vector.load %arg0[%c0_191, %c0_192, %c0_193, %c0_194] : memref<2x16x16x128xf32, #tpu.memory_space<vmem>>, vector<2x16x16x128xf32>
    %230 = arith.addf %228, %229 : vector<2x16x16x128xf32>
    %c0_195 = arith.constant 0 : index
    %c0_196 = arith.constant 0 : index
    %c0_197 = arith.constant 0 : index
    %c0_198 = arith.constant 0 : index
    %231 = vector.load %arg11[%c0_195, %c0_196, %c0_197, %c0_198] : memref<2x16x16x128xf32, #tpu.memory_space<vmem>>, vector<2x16x16x128xf32>
    tpu.vector_store %arg11[%c0_195, %c0_196, %c0_197, %c0_198], %230 {strides = array<i32>} : memref<2x16x16x128xf32, #tpu.memory_space<vmem>>, vector<2x16x16x128xf32>,
    return
  }
}

</mosaic_0001>

<llo_original>
// kernel: tpu_custom_call.1
$region0: #{tpu_custom_call.1}
  #allocation0 [shape = 'u32[]', space=smem, size = 0x4, offset = 0x4, fixed_abs, tag = 'smem constant byte address 0x4 - core index']
  #allocation1 [shape = 'u32[144,128]{1,0:T(1,128)}', space=vmem, size = 0x12000, scoped, tag = 'internal scratch']
  #allocation2 [shape = 'f32[2,18,18,128]{3,2,1,0:T(8,128)}', space=vmem, size = 0x6c000, scoped, tag = 'scratch operand']
  #allocation3 [shape = 'bf16[9,128,128]{2,1,0:T(16,128)(2,1)}', space=vmem, size = 0x48000, scoped, tag = 'scratch operand']
  #allocation4 [shape = 'bf16[9,128,128]{2,1,0:T(16,128)(2,1)}', space=vmem, size = 0x48000, scoped, tag = 'scratch operand']
  #allocation5 [shape = 's32[2]{0}', space=sflag, size = 0x8, scoped, tag = 'scratch operand']
  #allocation12 [shape = 's32[]', space=sflag, size = 0x4, offset = 0, fixed_abs, tag = 'sflag constant byte address 0x0 - dummy sync flag']
  #allocation13 [shape = 's32[]', space=sflag, size = 0x4, offset = 0, fixed_abs, tag = 'sflag constant byte address 0x0 - dummy sync flag']
  #allocation14 [shape = 'u32[]', space=smem, size = 0x4, offset = 0x44, fixed_abs, tag = 'smem constant byte address 0x44 - assertion arg 0']
  #allocation15 [shape = 'u32[]', space=smem, size = 0x4, offset = 0x48, fixed_abs, tag = 'smem constant byte address 0x48 - assertion arg 1']
  #allocation16 [shape = 's32[]', space=sflag, size = 0x4, offset = 0, fixed_abs, tag = 'sflag constant byte address 0x0 - dummy sync flag']
  #allocation17 [shape = 's32[]', space=sflag, size = 0x4, offset = 0, fixed_abs, tag = 'sflag constant byte address 0x0 - dummy sync flag']
  %s0 = inlined_call_operand.hbm [shape: f32[2,16,16,128], index: 0, kind: input, shape index: {}]
  %s1 = inlined_call_operand.hbm [shape: bf16[9,128,128], index: 1, kind: input, shape index: {}]
  %s2 = inlined_call_operand.hbm [shape: bf16[9,128,128], index: 2, kind: input, shape index: {}]
  %s3 = inlined_call_operand.vmem [shape: f32[1,128], index: 3, kind: input, shape index: {}]
  %s4 = inlined_call_operand.vmem [shape: f32[1,128], index: 4, kind: input, shape index: {}]
  %s5 = inlined_call_operand.hbm [shape: f32[1,128], index: 5, kind: input, shape index: {}]
  %s6 = inlined_call_operand.vmem [shape: f32[1,128], index: 6, kind: input, shape index: {}]
  %s7 = inlined_call_operand.vmem [shape: f32[8,128], index: 7, kind: input, shape index: {}]
  %s8 = inlined_call_operand.vmem [shape: f32[1,8], index: 8, kind: input, shape index: {}]
  %s9 = inlined_call_operand.vmem [shape: f32[8,128], index: 9, kind: input, shape index: {}]
  %s10 = inlined_call_operand.vmem [shape: f32[1,128], index: 10, kind: input, shape index: {}]
  %s11 = inlined_call_operand.hbm [shape: f32[2,16,16,128], index: 11, kind: output, shape index: {}]
  %s12 = sld [smem:[#allocation0]]
  $region62: #{tpu_custom_call.1} parent=0
    _
  %s14 = ssub.s32 1, %s12
  %s15 = scalar_select 0, %s14, %s12
  $region1: #{tpu_custom_call.1} parent=0
    #allocation6 [shape = 'u8[262144]{0}', space=vmem, size = 0x40000, scoped, tag = 'input window, operand 0, single buffered']
    #allocation7 [shape = 's32[1]{0}', space=sflag, size = 0x4, scoped, tag = 'scoped memory for tpu_custom_call.1']
    #allocation8 [shape = 's32[1]{0}', space=sflag, size = 0x4, scoped, tag = 'scoped memory for tpu_custom_call.1']
    #allocation9 [shape = 'u8[512]{0}', space=vmem, size = 0x400, scoped, tag = 'input window, operand 5, single buffered']
    #allocation10 [shape = 's32[1]{0}', space=sflag, size = 0x4, scoped, tag = 'scoped memory for tpu_custom_call.1']
    #allocation11 [shape = 'u8[262144]{0}', space=vmem, size = 0x40000, scoped, tag = 'output window, operand 0, single buffered']
    %16 = vsyncpa [#allocation7], 0
    %17 = vsyncpa [#allocation10], 0
    %18 = vsyncpa [#allocation8], 0
    // Predicated region
    $region2: #{tpu_custom_call.1} parent=1 // pred_check
      _
    $region3: #{tpu_custom_call.1} parent=1 // pred_check_branch
      %20 = sbr.rel (0) target = $region5
    $region4: #{tpu_custom_call.1} parent=1 // pred_region
      %s22 = ssub.s32 8192, 8192
      %23 = vsyncadd [#allocation7], %s22
      %s24 = sshll.u32 [#allocation6], 4
      %s25 = int_to_ptr.vmem [resolvable:$true] %s24
      %30 = dma.hbm_to_vmem [thread:$0]  %s0, 8192, %s25, [#allocation7], 128, 128, 8
    $region5: #{tpu_custom_call.1} parent=1 // pred_fallthru
      _
    // Predicated region
    $region6: #{tpu_custom_call.1} parent=1 // pred_check
      _
    $region7: #{tpu_custom_call.1} parent=1 // pred_check_branch
      %32 = sbr.rel (0) target = $region9
    $region8: #{tpu_custom_call.1} parent=1 // pred_region
      _
    $region9: #{tpu_custom_call.1} parent=1 // pred_fallthru
      _
    // Predicated region
    $region10: #{tpu_custom_call.1} parent=1 // pred_check
      _
    $region11: #{tpu_custom_call.1} parent=1 // pred_check_branch
      %34 = sbr.rel (0) target = $region13
    $region12: #{tpu_custom_call.1} parent=1 // pred_region
      _
    $region13: #{tpu_custom_call.1} parent=1 // pred_fallthru
      _
    // Predicated region
    $region14: #{tpu_custom_call.1} parent=1 // pred_check
      _
    $region15: #{tpu_custom_call.1} parent=1 // pred_check_branch
      %36 = sbr.rel (0) target = $region17
    $region16: #{tpu_custom_call.1} parent=1 // pred_region
      %s38 = ssub.s32 16, 16
      %39 = vsyncadd [#allocation10], %s38
      %s41 = sshll.u32 [#allocation9], 4
      %s42 = int_to_ptr.vmem [resolvable:$true] %s41
      %44 = dma.hbm_to_vmem [thread:$0]  %s5, 16, %s42, [#allocation10]
    $region17: #{tpu_custom_call.1} parent=1 // pred_fallthru
      _
    // Predicated region
    $region18: #{tpu_custom_call.1} parent=1 // pred_check
      _
    $region19: #{tpu_custom_call.1} parent=1 // pred_check_branch
      %46 = sbr.rel (0) target = $region21
    $region20: #{tpu_custom_call.1} parent=1 // pred_region
      _
    $region21: #{tpu_custom_call.1} parent=1 // pred_fallthru
      _
    // Predicated region
    $region22: #{tpu_custom_call.1} parent=1 // pred_check
      _
    $region23: #{tpu_custom_call.1} parent=1 // pred_check_branch
      %48 = sbr.rel (0) target = $region25
    $region24: #{tpu_custom_call.1} parent=1 // pred_region
      _
    $region25: #{tpu_custom_call.1} parent=1 // pred_fallthru
      _
    // Predicated region
    $region26: #{tpu_custom_call.1} parent=1 // pred_check
      _
    $region27: #{tpu_custom_call.1} parent=1 // pred_check_branch
      %50 = sbr.rel (0) target = $region29
    $region28: #{tpu_custom_call.1} parent=1 // pred_region
      _
    $region29: #{tpu_custom_call.1} parent=1 // pred_fallthru
      _
    // Predicated region
    $region30: #{tpu_custom_call.1} parent=1 // pred_check
      _
    $region31: #{tpu_custom_call.1} parent=1 // pred_check_branch
      %52 = sbr.rel (0) target = $region33
    $region32: #{tpu_custom_call.1} parent=1 // pred_region
      _
    $region33: #{tpu_custom_call.1} parent=1 // pred_fallthru
      _
    // Predicated region
    $region34: #{tpu_custom_call.1} parent=1 // pred_check
      _
    $region35: #{tpu_custom_call.1} parent=1 // pred_check_branch
      %54 = sbr.rel (0) target = $region37
    $region36: #{tpu_custom_call.1} parent=1 // pred_region
      _
    $region37: #{tpu_custom_call.1} parent=1 // pred_fallthru
      _
    // Predicated region
    $region38: #{tpu_custom_call.1} parent=1 // pred_check
      _
    $region39: #{tpu_custom_call.1} parent=1 // pred_check_branch
      %56 = sbr.rel (0) target = $region41
    $region40: #{tpu_custom_call.1} parent=1 // pred_region
      %57 = dma.done [#allocation7], 8192
    $region41: #{tpu_custom_call.1} parent=1 // pred_fallthru
      _
    // Predicated region
    $region42: #{tpu_custom_call.1} parent=1 // pred_check
      _
    $region43: #{tpu_custom_call.1} parent=1 // pred_check_branch
      %59 = sbr.rel (0) target = $region45
    $region44: #{tpu_custom_call.1} parent=1 // pred_region
      %60 = dma.done [#allocation10], 16
    $region45: #{tpu_custom_call.1} parent=1 // pred_fallthru
      _
    // Predicated region
    $region46: #{tpu_custom_call.1} parent=1 // pred_check
      _
    $region47: #{tpu_custom_call.1} parent=1 // pred_check_branch
      %63 = sbr.rel target = $region49
    $region48: #{tpu_custom_call.1} parent=1 // pred_region
      %64 = sst [smem:[#allocation14]] [#allocation13]
      %65 = sst [smem:[#allocation15]] [#allocation12]
    $region49: #{tpu_custom_call.1} parent=1 // pred_fallthru
      _
    %67 = shalt.err (0)
    %s69 = sshll.u32 [#allocation3], 4
    %s70 = int_to_ptr.vmem [resolvable:$true] %s69
    %72 = dma.hbm_to_vmem [thread:$0]  %s1, 9216, %s70, [#allocation5]
    %s73 = scalar_lea.sflag [#allocation5], 1
    // Predicated region
    $region50: #{tpu_custom_call.1} parent=1 // pred_check
      _
    $region51: #{tpu_custom_call.1} parent=1 // pred_check_branch
      %75 = sbr.rel target = $region53
    $region52: #{tpu_custom_call.1} parent=1 // pred_region
      %76 = sst [smem:[#allocation14]] [#allocation17]
      %77 = sst [smem:[#allocation15]] [#allocation16]
    $region53: #{tpu_custom_call.1} parent=1 // pred_fallthru
      _
    %79 = shalt.err (0)
    %s81 = sshll.u32 [#allocation4], 4
    %s82 = int_to_ptr.vmem [resolvable:$true] %s81
    %84 = dma.hbm_to_vmem [thread:$0]  %s2, 9216, %s82, %s73
    %v85 = vld [vmem:[#allocation6] sm:$0xff]
    %v86 = vld [vmem:[#allocation6 + $0x8] sm:$0xff]
    %v87 = vld [vmem:[#allocation6 + $0x10] sm:$0xff]
    %v88 = vld [vmem:[#allocation6 + $0x18] sm:$0xff]
    %v89 = vld [vmem:[#allocation6 + $0x20] sm:$0xff]
    %v90 = vld [vmem:[#allocation6 + $0x28] sm:$0xff]
    %v91 = vld [vmem:[#allocation6 + $0x30] sm:$0xff]
    %v92 = vld [vmem:[#allocation6 + $0x38] sm:$0xff]
    %v93 = vld [vmem:[#allocation6 + $0x40] sm:$0xff]
    %v94 = vld [vmem:[#allocation6 + $0x48] sm:$0xff]
    %v95 = vld [vmem:[#allocation6 + $0x50] sm:$0xff]
    %v96 = vld [vmem:[#allocation6 + $0x58] sm:$0xff]
    %v97 = vld [vmem:[#allocation6 + $0x60] sm:$0xff]
    %v98 = vld [vmem:[#allocation6 + $0x68] sm:$0xff]
    %v99 = vld [vmem:[#allocation6 + $0x70] sm:$0xff]
    %v100 = vld [vmem:[#allocation6 + $0x78] sm:$0xff]
    %v101 = vld [vmem:[#allocation6 + $0x80] sm:$0xff]
    %v102 = vld [vmem:[#allocation6 + $0x88] sm:$0xff]
    %v103 = vld [vmem:[#allocation6 + $0x90] sm:$0xff]
    %v104 = vld [vmem:[#allocation6 + $0x98] sm:$0xff]
    %v105 = vld [vmem:[#allocation6 + $0xa0] sm:$0xff]
    %v106 = vld [vmem:[#allocation6 + $0xa8] sm:$0xff]
    %v107 = vld [vmem:[#allocation6 + $0xb0] sm:$0xff]
    %v108 = vld [vmem:[#allocation6 + $0xb8] sm:$0xff]
    %v109 = vld [vmem:[#allocation6 + $0xc0] sm:$0xff]
    %v110 = vld [vmem:[#allocation6 + $0xc8] sm:$0xff]
    %v111 = vld [vmem:[#allocation6 + $0xd0] sm:$0xff]
    %v112 = vld [vmem:[#allocation6 + $0xd8] sm:$0xff]
    %v113 = vld [vmem:[#allocation6 + $0xe0] sm:$0xff]
    %v114 = vld [vmem:[#allocation6 + $0xe8] sm:$0xff]
    %v115 = vld [vmem:[#allocation6 + $0xf0] sm:$0xff]
    %v116 = vld [vmem:[#allocation6 + $0xf8] sm:$0xff]
    %v117 = vld [vmem:[#allocation6 + $0x100] sm:$0xff]
    %v118 = vld [vmem:[#allocation6 + $0x108] sm:$0xff]
    %v119 = vld [vmem:[#allocation6 + $0x110] sm:$0xff]
    %v120 = vld [vmem:[#allocation6 + $0x118] sm:$0xff]
    %v121 = vld [vmem:[#allocation6 + $0x120] sm:$0xff]
    %v122 = vld [vmem:[#allocation6 + $0x128] sm:$0xff]
    %v123 = vld [vmem:[#allocation6 + $0x130] sm:$0xff]
    %v124 = vld [vmem:[#allocation6 + $0x138] sm:$0xff]
    %v125 = vld [vmem:[#allocation6 + $0x140] sm:$0xff]
    %v126 = vld [vmem:[#allocation6 + $0x148] sm:$0xff]
    %v127 = vld [vmem:[#allocation6 + $0x150] sm:$0xff]
    %v128 = vld [vmem:[#allocation6 + $0x158] sm:$0xff]
    %v129 = vld [vmem:[#allocation6 + $0x160] sm:$0xff]
    %v130 = vld [vmem:[#allocation6 + $0x168] sm:$0xff]
    %v131 = vld [vmem:[#allocation6 + $0x170] sm:$0xff]
    %v132 = vld [vmem:[#allocation6 + $0x178] sm:$0xff]
    %v133 = vld [vmem:[#allocation6 + $0x180] sm:$0xff]
    %v134 = vld [vmem:[#allocation6 + $0x188] sm:$0xff]
    %v135 = vld [vmem:[#allocation6 + $0x190] sm:$0xff]
    %v136 = vld [vmem:[#allocation6 + $0x198] sm:$0xff]
    %v137 = vld [vmem:[#allocation6 + $0x1a0] sm:$0xff]
    %v138 = vld [vmem:[#allocation6 + $0x1a8] sm:$0xff]
    %v139 = vld [vmem:[#allocation6 + $0x1b0] sm:$0xff]
    %v140 = vld [vmem:[#allocation6 + $0x1b8] sm:$0xff]
    %v141 = vld [vmem:[#allocation6 + $0x1c0] sm:$0xff]
    %v142 = vld [vmem:[#allocation6 + $0x1c8] sm:$0xff]
    %v143 = vld [vmem:[#allocation6 + $0x1d0] sm:$0xff]
    %v144 = vld [vmem:[#allocation6 + $0x1d8] sm:$0xff]
    %v145 = vld [vmem:[#allocation6 + $0x1e0] sm:$0xff]
    %v146 = vld [vmem:[#allocation6 + $0x1e8] sm:$0xff]
    %v147 = vld [vmem:[#allocation6 + $0x1f0] sm:$0xff]
    %v148 = vld [vmem:[#allocation6 + $0x1f8] sm:$0xff]
    %v149 = vadd.f32 %v85, %v87
    %v150 = vadd.f32 %v149, %v89
    %v151 = vadd.f32 %v150, %v91
    %v152 = vadd.f32 %v151, %v93
    %v153 = vadd.f32 %v152, %v95
    %v154 = vadd.f32 %v153, %v97
    %v155 = vadd.f32 %v154, %v99
    %v156 = vadd.f32 %v155, %v101
    %v157 = vadd.f32 %v156, %v103
    %v158 = vadd.f32 %v157, %v105
    %v159 = vadd.f32 %v158, %v107
    %v160 = vadd.f32 %v159, %v109
    %v161 = vadd.f32 %v160, %v111
    %v162 = vadd.f32 %v161, %v113
    %v163 = vadd.f32 %v162, %v115
    %v164 = vadd.f32 %v86, %v88
    %v165 = vadd.f32 %v164, %v90
    %v166 = vadd.f32 %v165, %v92
    %v167 = vadd.f32 %v166, %v94
    %v168 = vadd.f32 %v167, %v96
    %v169 = vadd.f32 %v168, %v98
    %v170 = vadd.f32 %v169, %v100
    %v171 = vadd.f32 %v170, %v102
    %v172 = vadd.f32 %v171, %v104
    %v173 = vadd.f32 %v172, %v106
    %v174 = vadd.f32 %v173, %v108
    %v175 = vadd.f32 %v174, %v110
    %v176 = vadd.f32 %v175, %v112
    %v177 = vadd.f32 %v176, %v114
    %v178 = vadd.f32 %v177, %v116
    %v179 = vadd.f32 %v117, %v119
    %v180 = vadd.f32 %v179, %v121
    %v181 = vadd.f32 %v180, %v123
    %v182 = vadd.f32 %v181, %v125
    %v183 = vadd.f32 %v182, %v127
    %v184 = vadd.f32 %v183, %v129
    %v185 = vadd.f32 %v184, %v131
    %v186 = vadd.f32 %v185, %v133
    %v187 = vadd.f32 %v186, %v135
    %v188 = vadd.f32 %v187, %v137
    %v189 = vadd.f32 %v188, %v139
    %v190 = vadd.f32 %v189, %v141
    %v191 = vadd.f32 %v190, %v143
    %v192 = vadd.f32 %v191, %v145
    %v193 = vadd.f32 %v192, %v147
    %v194 = vadd.f32 %v118, %v120
    %v195 = vadd.f32 %v194, %v122
    %v196 = vadd.f32 %v195, %v124
    %v197 = vadd.f32 %v196, %v126
    %v198 = vadd.f32 %v197, %v128
    %v199 = vadd.f32 %v198, %v130
    %v200 = vadd.f32 %v199, %v132
    %v201 = vadd.f32 %v200, %v134
    %v202 = vadd.f32 %v201, %v136
    %v203 = vadd.f32 %v202, %v138
    %v204 = vadd.f32 %v203, %v140
    %v205 = vadd.f32 %v204, %v142
    %v206 = vadd.f32 %v205, %v144
    %v207 = vadd.f32 %v206, %v146
    %v208 = vadd.f32 %v207, %v148
    %v209 = vadd.f32 %v163, %v178
    %v210 = vrot.slane %v209, 4
    %v211 = vadd.f32 %v209, %v210
    %v212 = vrot.slane %v211, 2
    %v213 = vadd.f32 %v211, %v212
    %v214 = vrot.slane %v213, 1
    %v215 = vadd.f32 %v213, %v214
    %v216 = vadd.f32 %v193, %v208
    %v217 = vrot.slane %v216, 4
    %v218 = vadd.f32 %v216, %v217
    %v219 = vrot.slane %v218, 2
    %v220 = vadd.f32 %v218, %v219
    %v221 = vrot.slane %v220, 1
    %v222 = vadd.f32 %v220, %v221
    %v223 = vmul.f32 %v215, 0.00390625
    %v224 = vmul.f32 %v222, 0.00390625
    %v225 = vld [vmem:[%s7] sm:$0xff]
    %v226 = vmul.f32 %v223, %v225
    %v227 = vmul.f32 %v224, %v225
    %228 = vadd.xlane.f32.xlu0 %v226
    %v229 = vpop.xlane.xlu0 %228
    %230 = vadd.xlane.f32.xlu0 %v227
    %v231 = vpop.xlane.xlu0 %230
    %v232 = vld [vmem:[%s8] sm:$0x1]
    %v234 = vlaneseq
    %v235 = vshrl.u32 %v234, 7
    %v236 = vsub.s32 0, %v235
    %v237 = vrot.slane %v232, %v236
    %239 = vbcast.lane.b32.xlu0 %v237, 256
    %v240 = vpop.permute.xlu0 %239
    %v242 = vadd.f32 %v229, %v240
    %v243 = vadd.f32 %v231, %v240
    %v244 = vmax.f32 %v242, 0.0
    %v245 = vmax.f32 %v243, 0.0
    %v246 = vld [vmem:[%s9] sm:$0xff]
    %248 = vset.pattern.permute.xlu0 0
    %249 = vperm.xlu0 %248, %v244
    %v250 = vpop.permute.xlu0 %249
    %253 = vset.pattern.permute.xlu0 0
    %254 = vperm.xlu0 %253, %v245
    %v255 = vpop.permute.xlu0 %254
    %v257 = vmul.f32 %v250, %v246
    %v258 = vmul.f32 %v255, %v246
    %v259 = vrot.slane %v257, 4
    %v260 = vadd.f32 %v257, %v259
    %v261 = vrot.slane %v260, 2
    %v262 = vadd.f32 %v260, %v261
    %v263 = vrot.slane %v262, 1
    %v264 = vadd.f32 %v262, %v263
    %v265 = vrot.slane %v258, 4
    %v266 = vadd.f32 %v258, %v265
    %v267 = vrot.slane %v266, 2
    %v268 = vadd.f32 %v266, %v267
    %v269 = vrot.slane %v268, 1
    %v270 = vadd.f32 %v268, %v269
    %v271 = vld [vmem:[%s10] sm:$0x1]
    %v273 = vlaneseq
    %v274 = vshrl.u32 %v273, 7
    %v275 = vsub.s32 0, %v274
    %v276 = vrot.slane %v271, %v275
    %v278 = vadd.f32 %v264, %v276
    %v279 = vadd.f32 %v270, %v276
    %v280 = vsub.f32 0.0, %v278
    %v281 = vsub.f32 0.0, %v279
    %v282 = vmul.f32 %v280, 1.442695
    %v283 = vpow.pop %v282
    %v284 = vmul.f32 %v281, 1.442695
    %v285 = vpow.pop %v284
    %v286 = vadd.f32 %v283, 1.0
    %v287 = vadd.f32 %v285, 1.0
    %v288 = vrcp.pop %v286
    %v289 = vmul.f32 1.0, %v288
    %v290 = vrcp.pop %v287
    %v291 = vmul.f32 1.0, %v290
    %292 = vst [vmem:[#allocation2] sm:$0xff] 0.0
    %293 = vst [vmem:[#allocation2 + $0x8] sm:$0xff] 0.0
    %294 = vst [vmem:[#allocation2 + $0x10] sm:$0x3] 0.0
    %295 = vst [vmem:[#allocation2 + $0x18] sm:$0xff] 0.0
    %296 = vst [vmem:[#allocation2 + $0x20] sm:$0xff] 0.0
    %297 = vst [vmem:[#allocation2 + $0x28] sm:$0x3] 0.0
    %298 = vst [vmem:[#allocation2 + $0x30] sm:$0xff] 0.0
    %299 = vst [vmem:[#allocation2 + $0x38] sm:$0xff] 0.0
    %300 = vst [vmem:[#allocation2 + $0x40] sm:$0x3] 0.0
    %301 = vst [vmem:[#allocation2 + $0x48] sm:$0xff] 0.0
    %302 = vst [vmem:[#allocation2 + $0x50] sm:$0xff] 0.0
    %303 = vst [vmem:[#allocation2 + $0x58] sm:$0x3] 0.0
    %304 = vst [vmem:[#allocation2 + $0x60] sm:$0xff] 0.0
    %305 = vst [vmem:[#allocation2 + $0x68] sm:$0xff] 0.0
    %306 = vst [vmem:[#allocation2 + $0x70] sm:$0x3] 0.0
    %307 = vst [vmem:[#allocation2 + $0x78] sm:$0xff] 0.0
    %308 = vst [vmem:[#allocation2 + $0x80] sm:$0xff] 0.0
    %309 = vst [vmem:[#allocation2 + $0x88] sm:$0x3] 0.0
    %310 = vst [vmem:[#allocation2 + $0x90] sm:$0xff] 0.0
    %311 = vst [vmem:[#allocation2 + $0x98] sm:$0xff] 0.0
    %312 = vst [vmem:[#allocation2 + $0xa0] sm:$0x3] 0.0
    %313 = vst [vmem:[#allocation2 + $0xa8] sm:$0xff] 0.0
    %314 = vst [vmem:[#allocation2 + $0xb0] sm:$0xff] 0.0
    %315 = vst [vmem:[#allocation2 + $0xb8] sm:$0x3] 0.0
    %316 = vst [vmem:[#allocation2 + $0xc0] sm:$0xff] 0.0
    %317 = vst [vmem:[#allocation2 + $0xc8] sm:$0xff] 0.0
    %318 = vst [vmem:[#allocation2 + $0xd0] sm:$0x3] 0.0
    %319 = vst [vmem:[#allocation2 + $0xd8] sm:$0xff] 0.0
    %320 = vst [vmem:[#allocation2 + $0xe0] sm:$0xff] 0.0
    %321 = vst [vmem:[#allocation2 + $0xe8] sm:$0x3] 0.0
    %322 = vst [vmem:[#allocation2 + $0xf0] sm:$0xff] 0.0
    %323 = vst [vmem:[#allocation2 + $0xf8] sm:$0xff] 0.0
    %324 = vst [vmem:[#allocation2 + $0x100] sm:$0x3] 0.0
    %325 = vst [vmem:[#allocation2 + $0x108] sm:$0xff] 0.0
    %326 = vst [vmem:[#allocation2 + $0x110] sm:$0xff] 0.0
    %327 = vst [vmem:[#allocation2 + $0x118] sm:$0x3] 0.0
    %328 = vst [vmem:[#allocation2 + $0x120] sm:$0xff] 0.0
    %329 = vst [vmem:[#allocation2 + $0x128] sm:$0xff] 0.0
    %330 = vst [vmem:[#allocation2 + $0x130] sm:$0x3] 0.0
    %331 = vst [vmem:[#allocation2 + $0x138] sm:$0xff] 0.0
    %332 = vst [vmem:[#allocation2 + $0x140] sm:$0xff] 0.0
    %333 = vst [vmem:[#allocation2 + $0x148] sm:$0x3] 0.0
    %334 = vst [vmem:[#allocation2 + $0x150] sm:$0xff] 0.0
    %335 = vst [vmem:[#allocation2 + $0x158] sm:$0xff] 0.0
    %336 = vst [vmem:[#allocation2 + $0x160] sm:$0x3] 0.0
    %337 = vst [vmem:[#allocation2 + $0x168] sm:$0xff] 0.0
    %338 = vst [vmem:[#allocation2 + $0x170] sm:$0xff] 0.0
    %339 = vst [vmem:[#allocation2 + $0x178] sm:$0x3] 0.0
    %340 = vst [vmem:[#allocation2 + $0x180] sm:$0xff] 0.0
    %341 = vst [vmem:[#allocation2 + $0x188] sm:$0xff] 0.0
    %342 = vst [vmem:[#allocation2 + $0x190] sm:$0x3] 0.0
    %343 = vst [vmem:[#allocation2 + $0x198] sm:$0xff] 0.0
    %344 = vst [vmem:[#allocation2 + $0x1a0] sm:$0xff] 0.0
    %345 = vst [vmem:[#allocation2 + $0x1a8] sm:$0x3] 0.0
    %346 = vst [vmem:[#allocation2 + $0x1b0] sm:$0xff] 0.0
    %347 = vst [vmem:[#allocation2 + $0x1b8] sm:$0xff] 0.0
    %348 = vst [vmem:[#allocation2 + $0x1c0] sm:$0x3] 0.0
    %349 = vst [vmem:[#allocation2 + $0x1c8] sm:$0xff] 0.0
    %350 = vst [vmem:[#allocation2 + $0x1d0] sm:$0xff] 0.0
    %351 = vst [vmem:[#allocation2 + $0x1d8] sm:$0x3] 0.0
    %352 = vst [vmem:[#allocation2 + $0x1e0] sm:$0xff] 0.0
    %353 = vst [vmem:[#allocation2 + $0x1e8] sm:$0xff] 0.0
    %354 = vst [vmem:[#allocation2 + $0x1f0] sm:$0x3] 0.0
    %355 = vst [vmem:[#allocation2 + $0x1f8] sm:$0xff] 0.0
    %356 = vst [vmem:[#allocation2 + $0x200] sm:$0xff] 0.0
    %357 = vst [vmem:[#allocation2 + $0x208] sm:$0x3] 0.0
    %358 = vst [vmem:[#allocation2 + $0x210] sm:$0xff] 0.0
    %359 = vst [vmem:[#allocation2 + $0x218] sm:$0xff] 0.0
    %360 = vst [vmem:[#allocation2 + $0x220] sm:$0x3] 0.0
    %361 = vst [vmem:[#allocation2 + $0x228] sm:$0xff] 0.0
    %362 = vst [vmem:[#allocation2 + $0x230] sm:$0xff] 0.0
    %363 = vst [vmem:[#allocation2 + $0x238] sm:$0x3] 0.0
    %364 = vst [vmem:[#allocation2 + $0x240] sm:$0xff] 0.0
    %365 = vst [vmem:[#allocation2 + $0x248] sm:$0xff] 0.0
    %366 = vst [vmem:[#allocation2 + $0x250] sm:$0x3] 0.0
    %367 = vst [vmem:[#allocation2 + $0x258] sm:$0xff] 0.0
    %368 = vst [vmem:[#allocation2 + $0x260] sm:$0xff] 0.0
    %369 = vst [vmem:[#allocation2 + $0x268] sm:$0x3] 0.0
    %370 = vst [vmem:[#allocation2 + $0x270] sm:$0xff] 0.0
    %371 = vst [vmem:[#allocation2 + $0x278] sm:$0xff] 0.0
    %372 = vst [vmem:[#allocation2 + $0x280] sm:$0x3] 0.0
    %373 = vst [vmem:[#allocation2 + $0x288] sm:$0xff] 0.0
    %374 = vst [vmem:[#allocation2 + $0x290] sm:$0xff] 0.0
    %375 = vst [vmem:[#allocation2 + $0x298] sm:$0x3] 0.0
    %376 = vst [vmem:[#allocation2 + $0x2a0] sm:$0xff] 0.0
    %377 = vst [vmem:[#allocation2 + $0x2a8] sm:$0xff] 0.0
    %378 = vst [vmem:[#allocation2 + $0x2b0] sm:$0x3] 0.0
    %379 = vst [vmem:[#allocation2 + $0x2b8] sm:$0xff] 0.0
    %380 = vst [vmem:[#allocation2 + $0x2c0] sm:$0xff] 0.0
    %381 = vst [vmem:[#allocation2 + $0x2c8] sm:$0x3] 0.0
    %382 = vst [vmem:[#allocation2 + $0x2d0] sm:$0xff] 0.0
    %383 = vst [vmem:[#allocation2 + $0x2d8] sm:$0xff] 0.0
    %384 = vst [vmem:[#allocation2 + $0x2e0] sm:$0x3] 0.0
    %385 = vst [vmem:[#allocation2 + $0x2e8] sm:$0xff] 0.0
    %386 = vst [vmem:[#allocation2 + $0x2f0] sm:$0xff] 0.0
    %387 = vst [vmem:[#allocation2 + $0x2f8] sm:$0x3] 0.0
    %388 = vst [vmem:[#allocation2 + $0x300] sm:$0xff] 0.0
    %389 = vst [vmem:[#allocation2 + $0x308] sm:$0xff] 0.0
    %390 = vst [vmem:[#allocation2 + $0x310] sm:$0x3] 0.0
    %391 = vst [vmem:[#allocation2 + $0x318] sm:$0xff] 0.0
    %392 = vst [vmem:[#allocation2 + $0x320] sm:$0xff] 0.0
    %393 = vst [vmem:[#allocation2 + $0x328] sm:$0x3] 0.0
    %394 = vst [vmem:[#allocation2 + $0x330] sm:$0xff] 0.0
    %395 = vst [vmem:[#allocation2 + $0x338] sm:$0xff] 0.0
    %396 = vst [vmem:[#allocation2 + $0x340] sm:$0x3] 0.0
    %397 = vst [vmem:[#allocation2 + $0x348] sm:$0xff] 0.0
    %398 = vst [vmem:[#allocation2 + $0x350] sm:$0xff] 0.0
    %399 = vst [vmem:[#allocation2 + $0x358] sm:$0x3] 0.0
    %v400 = vlaneseq
    %v401 = vshrl.u32 %v400, 7
    %v402 = vsub.s32 0, %v401
    %v403 = vrot.slane %v289, %v402
    %v404 = vlaneseq
    %v405 = vshrl.u32 %v404, 7
    %v406 = vsub.s32 0, %v405
    %v407 = vrot.slane %v291, %v406
    %v408 = vmul.f32 %v85, %v403
    %v409 = vmul.f32 %v86, %v403
    %v410 = vmul.f32 %v87, %v403
    %v411 = vmul.f32 %v88, %v403
    %v412 = vmul.f32 %v89, %v403
    %v413 = vmul.f32 %v90, %v403
    %v414 = vmul.f32 %v91, %v403
    %v415 = vmul.f32 %v92, %v403
    %v416 = vmul.f32 %v93, %v403
    %v417 = vmul.f32 %v94, %v403
    %v418 = vmul.f32 %v95, %v403
    %v419 = vmul.f32 %v96, %v403
    %v420 = vmul.f32 %v97, %v403
    %v421 = vmul.f32 %v98, %v403
    %v422 = vmul.f32 %v99, %v403
    %v423 = vmul.f32 %v100, %v403
    %v424 = vmul.f32 %v101, %v403
    %v425 = vmul.f32 %v102, %v403
    %v426 = vmul.f32 %v103, %v403
    %v427 = vmul.f32 %v104, %v403
    %v428 = vmul.f32 %v105, %v403
    %v429 = vmul.f32 %v106, %v403
    %v430 = vmul.f32 %v107, %v403
    %v431 = vmul.f32 %v108, %v403
    %v432 = vmul.f32 %v109, %v403
    %v433 = vmul.f32 %v110, %v403
    %v434 = vmul.f32 %v111, %v403
    %v435 = vmul.f32 %v112, %v403
    %v436 = vmul.f32 %v113, %v403
    %v437 = vmul.f32 %v114, %v403
    %v438 = vmul.f32 %v115, %v403
    %v439 = vmul.f32 %v116, %v403
    %v440 = vmul.f32 %v117, %v407
    %v441 = vmul.f32 %v118, %v407
    %v442 = vmul.f32 %v119, %v407
    %v443 = vmul.f32 %v120, %v407
    %v444 = vmul.f32 %v121, %v407
    %v445 = vmul.f32 %v122, %v407
    %v446 = vmul.f32 %v123, %v407
    %v447 = vmul.f32 %v124, %v407
    %v448 = vmul.f32 %v125, %v407
    %v449 = vmul.f32 %v126, %v407
    %v450 = vmul.f32 %v127, %v407
    %v451 = vmul.f32 %v128, %v407
    %v452 = vmul.f32 %v129, %v407
    %v453 = vmul.f32 %v130, %v407
    %v454 = vmul.f32 %v131, %v407
    %v455 = vmul.f32 %v132, %v407
    %v456 = vmul.f32 %v133, %v407
    %v457 = vmul.f32 %v134, %v407
    %v458 = vmul.f32 %v135, %v407
    %v459 = vmul.f32 %v136, %v407
    %v460 = vmul.f32 %v137, %v407
    %v461 = vmul.f32 %v138, %v407
    %v462 = vmul.f32 %v139, %v407
    %v463 = vmul.f32 %v140, %v407
    %v464 = vmul.f32 %v141, %v407
    %v465 = vmul.f32 %v142, %v407
    %v466 = vmul.f32 %v143, %v407
    %v467 = vmul.f32 %v144, %v407
    %v468 = vmul.f32 %v145, %v407
    %v469 = vmul.f32 %v146, %v407
    %v470 = vmul.f32 %v147, %v407
    %v471 = vmul.f32 %v148, %v407
    %s472 = scalar_lea.vmem [#allocation2], 24
    %473 = vst [vmem:[%s472 + $0x1] sm:$0xff] %v408
    %474 = vst [vmem:[%s472 + $0x9] sm:$0xff] %v409
    %475 = vst [vmem:[%s472 + $0x19] sm:$0xff] %v410
    %476 = vst [vmem:[%s472 + $0x21] sm:$0xff] %v411
    %477 = vst [vmem:[%s472 + $0x31] sm:$0xff] %v412
    %478 = vst [vmem:[%s472 + $0x39] sm:$0xff] %v413
    %479 = vst [vmem:[%s472 + $0x49] sm:$0xff] %v414
    %480 = vst [vmem:[%s472 + $0x51] sm:$0xff] %v415
    %481 = vst [vmem:[%s472 + $0x61] sm:$0xff] %v416
    %482 = vst [vmem:[%s472 + $0x69] sm:$0xff] %v417
    %483 = vst [vmem:[%s472 + $0x79] sm:$0xff] %v418
    %484 = vst [vmem:[%s472 + $0x81] sm:$0xff] %v419
    %485 = vst [vmem:[%s472 + $0x91] sm:$0xff] %v420
    %486 = vst [vmem:[%s472 + $0x99] sm:$0xff] %v421
    %487 = vst [vmem:[%s472 + $0xa9] sm:$0xff] %v422
    %488 = vst [vmem:[%s472 + $0xb1] sm:$0xff] %v423
    %489 = vst [vmem:[%s472 + $0xc1] sm:$0xff] %v424
    %490 = vst [vmem:[%s472 + $0xc9] sm:$0xff] %v425
    %491 = vst [vmem:[%s472 + $0xd9] sm:$0xff] %v426
    %492 = vst [vmem:[%s472 + $0xe1] sm:$0xff] %v427
    %493 = vst [vmem:[%s472 + $0xf1] sm:$0xff] %v428
    %494 = vst [vmem:[%s472 + $0xf9] sm:$0xff] %v429
    %495 = vst [vmem:[%s472 + $0x109] sm:$0xff] %v430
    %496 = vst [vmem:[%s472 + $0x111] sm:$0xff] %v431
    %497 = vst [vmem:[%s472 + $0x121] sm:$0xff] %v432
    %498 = vst [vmem:[%s472 + $0x129] sm:$0xff] %v433
    %499 = vst [vmem:[%s472 + $0x139] sm:$0xff] %v434
    %500 = vst [vmem:[%s472 + $0x141] sm:$0xff] %v435
    %501 = vst [vmem:[%s472 + $0x151] sm:$0xff] %v436
    %502 = vst [vmem:[%s472 + $0x159] sm:$0xff] %v437
    %503 = vst [vmem:[%s472 + $0x169] sm:$0xff] %v438
    %504 = vst [vmem:[%s472 + $0x171] sm:$0xff] %v439
    %505 = vst [vmem:[%s472 + $0x1b1] sm:$0xff] %v440
    %506 = vst [vmem:[%s472 + $0x1b9] sm:$0xff] %v441
    %507 = vst [vmem:[%s472 + $0x1c9] sm:$0xff] %v442
    %508 = vst [vmem:[%s472 + $0x1d1] sm:$0xff] %v443
    %509 = vst [vmem:[%s472 + $0x1e1] sm:$0xff] %v444
    %510 = vst [vmem:[%s472 + $0x1e9] sm:$0xff] %v445
    %511 = vst [vmem:[%s472 + $0x1f9] sm:$0xff] %v446
    %512 = vst [vmem:[%s472 + $0x201] sm:$0xff] %v447
    %513 = vst [vmem:[%s472 + $0x211] sm:$0xff] %v448
    %514 = vst [vmem:[%s472 + $0x219] sm:$0xff] %v449
    %515 = vst [vmem:[%s472 + $0x229] sm:$0xff] %v450
    %516 = vst [vmem:[%s472 + $0x231] sm:$0xff] %v451
    %517 = vst [vmem:[%s472 + $0x241] sm:$0xff] %v452
    %518 = vst [vmem:[%s472 + $0x249] sm:$0xff] %v453
    %519 = vst [vmem:[%s472 + $0x259] sm:$0xff] %v454
    %520 = vst [vmem:[%s472 + $0x261] sm:$0xff] %v455
    %521 = vst [vmem:[%s472 + $0x271] sm:$0xff] %v456
    %522 = vst [vmem:[%s472 + $0x279] sm:$0xff] %v457
    %523 = vst [vmem:[%s472 + $0x289] sm:$0xff] %v458
    %524 = vst [vmem:[%s472 + $0x291] sm:$0xff] %v459
    %525 = vst [vmem:[%s472 + $0x2a1] sm:$0xff] %v460
    %526 = vst [vmem:[%s472 + $0x2a9] sm:$0xff] %v461
    %527 = vst [vmem:[%s472 + $0x2b9] sm:$0xff] %v462
    %528 = vst [vmem:[%s472 + $0x2c1] sm:$0xff] %v463
    %529 = vst [vmem:[%s472 + $0x2d1] sm:$0xff] %v464
    %530 = vst [vmem:[%s472 + $0x2d9] sm:$0xff] %v465
    %531 = vst [vmem:[%s472 + $0x2e9] sm:$0xff] %v466
    %532 = vst [vmem:[%s472 + $0x2f1] sm:$0xff] %v467
    %533 = vst [vmem:[%s472 + $0x301] sm:$0xff] %v468
    %534 = vst [vmem:[%s472 + $0x309] sm:$0xff] %v469
    %535 = vst [vmem:[%s472 + $0x319] sm:$0xff] %v470
    %536 = vst [vmem:[%s472 + $0x321] sm:$0xff] %v471
    %s537 = smul.u32 4, 9
    %s538 = smul.u32 %s537, 16
    %s539 = smul.u32 %s538, 1
    %s540 = sshll.u32 %s539, 4
    %541 = dma.done [#allocation5], %s540
    %v542 = vld [vmem:[#allocation2] sm:$0xff]
    %v543 = vld [vmem:[#allocation2 + $0x8] sm:$0xff]
    %v544 = vld [vmem:[#allocation2 + $0x18] sm:$0xff]
    %v545 = vld [vmem:[#allocation2 + $0x20] sm:$0xff]
    %v546 = vld [vmem:[#allocation2 + $0x30] sm:$0xff]
    %v547 = vld [vmem:[#allocation2 + $0x38] sm:$0xff]
    %v548 = vld [vmem:[#allocation2 + $0x48] sm:$0xff]
    %v549 = vld [vmem:[#allocation2 + $0x50] sm:$0xff]
    %v550 = vld [vmem:[#allocation2 + $0x60] sm:$0xff]
    %v551 = vld [vmem:[#allocation2 + $0x68] sm:$0xff]
    %v552 = vld [vmem:[#allocation2 + $0x78] sm:$0xff]
    %v553 = vld [vmem:[#allocation2 + $0x80] sm:$0xff]
    %v554 = vld [vmem:[#allocation2 + $0x90] sm:$0xff]
    %v555 = vld [vmem:[#allocation2 + $0x98] sm:$0xff]
    %v556 = vld [vmem:[#allocation2 + $0xa8] sm:$0xff]
    %v557 = vld [vmem:[#allocation2 + $0xb0] sm:$0xff]
    %v558 = vld [vmem:[#allocation2 + $0xc0] sm:$0xff]
    %v559 = vld [vmem:[#allocation2 + $0xc8] sm:$0xff]
    %v560 = vld [vmem:[#allocation2 + $0xd8] sm:$0xff]
    %v561 = vld [vmem:[#allocation2 + $0xe0] sm:$0xff]
    %v562 = vld [vmem:[#allocation2 + $0xf0] sm:$0xff]
    %v563 = vld [vmem:[#allocation2 + $0xf8] sm:$0xff]
    %v564 = vld [vmem:[#allocation2 + $0x108] sm:$0xff]
    %v565 = vld [vmem:[#allocation2 + $0x110] sm:$0xff]
    %v566 = vld [vmem:[#allocation2 + $0x120] sm:$0xff]
    %v567 = vld [vmem:[#allocation2 + $0x128] sm:$0xff]
    %v568 = vld [vmem:[#allocation2 + $0x138] sm:$0xff]
    %v569 = vld [vmem:[#allocation2 + $0x140] sm:$0xff]
    %v570 = vld [vmem:[#allocation2 + $0x150] sm:$0xff]
    %v571 = vld [vmem:[#allocation2 + $0x158] sm:$0xff]
    %v572 = vld [vmem:[#allocation2 + $0x168] sm:$0xff]
    %v573 = vld [vmem:[#allocation2 + $0x170] sm:$0xff]
    %v574 = vld [vmem:[#allocation2 + $0x1b0] sm:$0xff]
    %v575 = vld [vmem:[#allocation2 + $0x1b8] sm:$0xff]
    %v576 = vld [vmem:[#allocation2 + $0x1c8] sm:$0xff]
    %v577 = vld [vmem:[#allocation2 + $0x1d0] sm:$0xff]
    %v578 = vld [vmem:[#allocation2 + $0x1e0] sm:$0xff]
    %v579 = vld [vmem:[#allocation2 + $0x1e8] sm:$0xff]
    %v580 = vld [vmem:[#allocation2 + $0x1f8] sm:$0xff]
    %v581 = vld [vmem:[#allocation2 + $0x200] sm:$0xff]
    %v582 = vld [vmem:[#allocation2 + $0x210] sm:$0xff]
    %v583 = vld [vmem:[#allocation2 + $0x218] sm:$0xff]
    %v584 = vld [vmem:[#allocation2 + $0x228] sm:$0xff]
    %v585 = vld [vmem:[#allocation2 + $0x230] sm:$0xff]
    %v586 = vld [vmem:[#allocation2 + $0x240] sm:$0xff]
    %v587 = vld [vmem:[#allocation2 + $0x248] sm:$0xff]
    %v588 = vld [vmem:[#allocation2 + $0x258] sm:$0xff]
    %v589 = vld [vmem:[#allocation2 + $0x260] sm:$0xff]
    %v590 = vld [vmem:[#allocation2 + $0x270] sm:$0xff]
    %v591 = vld [vmem:[#allocation2 + $0x278] sm:$0xff]
    %v592 = vld [vmem:[#allocation2 + $0x288] sm:$0xff]
    %v593 = vld [vmem:[#allocation2 + $0x290] sm:$0xff]
    %v594 = vld [vmem:[#allocation2 + $0x2a0] sm:$0xff]
    %v595 = vld [vmem:[#allocation2 + $0x2a8] sm:$0xff]
    %v596 = vld [vmem:[#allocation2 + $0x2b8] sm:$0xff]
    %v597 = vld [vmem:[#allocation2 + $0x2c0] sm:$0xff]
    %v598 = vld [vmem:[#allocation2 + $0x2d0] sm:$0xff]
    %v599 = vld [vmem:[#allocation2 + $0x2d8] sm:$0xff]
    %v600 = vld [vmem:[#allocation2 + $0x2e8] sm:$0xff]
    %v601 = vld [vmem:[#allocation2 + $0x2f0] sm:$0xff]
    %v602 = vld [vmem:[#allocation2 + $0x300] sm:$0xff]
    %v603 = vld [vmem:[#allocation2 + $0x308] sm:$0xff]
    %v604 = vld [vmem:[#allocation2 + $0x318] sm:$0xff]
    %v605 = vld [vmem:[#allocation2 + $0x320] sm:$0xff]
    %v606 = vpack.c.bf16 %v543, %v542
    %v607 = vpack.c.bf16 %v545, %v544
    %v608 = vpack.c.bf16 %v547, %v546
    %v609 = vpack.c.bf16 %v549, %v548
    %v610 = vpack.c.bf16 %v551, %v550
    %v611 = vpack.c.bf16 %v553, %v552
    %v612 = vpack.c.bf16 %v555, %v554
    %v613 = vpack.c.bf16 %v557, %v556
    %v614 = vpack.c.bf16 %v559, %v558
    %v615 = vpack.c.bf16 %v561, %v560
    %v616 = vpack.c.bf16 %v563, %v562
    %v617 = vpack.c.bf16 %v565, %v564
    %v618 = vpack.c.bf16 %v567, %v566
    %v619 = vpack.c.bf16 %v569, %v568
    %v620 = vpack.c.bf16 %v571, %v570
    %v621 = vpack.c.bf16 %v573, %v572
    %v622 = vpack.c.bf16 %v575, %v574
    %v623 = vpack.c.bf16 %v577, %v576
    %v624 = vpack.c.bf16 %v579, %v578
    %v625 = vpack.c.bf16 %v581, %v580
    %v626 = vpack.c.bf16 %v583, %v582
    %v627 = vpack.c.bf16 %v585, %v584
    %v628 = vpack.c.bf16 %v587, %v586
    %v629 = vpack.c.bf16 %v589, %v588
    %v630 = vpack.c.bf16 %v591, %v590
    %v631 = vpack.c.bf16 %v593, %v592
    %v632 = vpack.c.bf16 %v595, %v594
    %v633 = vpack.c.bf16 %v597, %v596
    %v634 = vpack.c.bf16 %v599, %v598
    %v635 = vpack.c.bf16 %v601, %v600
    %v636 = vpack.c.bf16 %v603, %v602
    %v637 = vpack.c.bf16 %v605, %v604
    %v638 = vld [vmem:[#allocation3] sm:$0xff]
    %v639 = vld [vmem:[#allocation3 + $0x8] sm:$0xff]
    %v640 = vld [vmem:[#allocation3 + $0x10] sm:$0xff]
    %v641 = vld [vmem:[#allocation3 + $0x18] sm:$0xff]
    %v642 = vld [vmem:[#allocation3 + $0x20] sm:$0xff]
    %v643 = vld [vmem:[#allocation3 + $0x28] sm:$0xff]
    %v644 = vld [vmem:[#allocation3 + $0x30] sm:$0xff]
    %v645 = vld [vmem:[#allocation3 + $0x38] sm:$0xff]
    %v646 = vld [vmem:[#allocation2 + $0x1] sm:$0xff]
    %v647 = vld [vmem:[#allocation2 + $0x9] sm:$0xff]
    %v648 = vld [vmem:[#allocation2 + $0x19] sm:$0xff]
    %v649 = vld [vmem:[#allocation2 + $0x21] sm:$0xff]
    %v650 = vld [vmem:[#allocation2 + $0x31] sm:$0xff]
    %v651 = vld [vmem:[#allocation2 + $0x39] sm:$0xff]
    %v652 = vld [vmem:[#allocation2 + $0x49] sm:$0xff]
    %v653 = vld [vmem:[#allocation2 + $0x51] sm:$0xff]
    %v654 = vld [vmem:[#allocation2 + $0x61] sm:$0xff]
    %v655 = vld [vmem:[#allocation2 + $0x69] sm:$0xff]
    %v656 = vld [vmem:[#allocation2 + $0x79] sm:$0xff]
    %v657 = vld [vmem:[#allocation2 + $0x81] sm:$0xff]
    %v658 = vld [vmem:[#allocation2 + $0x91] sm:$0xff]
    %v659 = vld [vmem:[#allocation2 + $0x99] sm:$0xff]
    %v660 = vld [vmem:[#allocation2 + $0xa9] sm:$0xff]
    %v661 = vld [vmem:[#allocation2 + $0xb1] sm:$0xff]
    %v662 = vld [vmem:[#allocation2 + $0xc1] sm:$0xff]
    %v663 = vld [vmem:[#allocation2 + $0xc9] sm:$0xff]
    %v664 = vld [vmem:[#allocation2 + $0xd9] sm:$0xff]
    %v665 = vld [vmem:[#allocation2 + $0xe1] sm:$0xff]
    %v666 = vld [vmem:[#allocation2 + $0xf1] sm:$0xff]
    %v667 = vld [vmem:[#allocation2 + $0xf9] sm:$0xff]
    %v668 = vld [vmem:[#allocation2 + $0x109] sm:$0xff]
    %v669 = vld [vmem:[#allocation2 + $0x111] sm:$0xff]
    %v670 = vld [vmem:[#allocation2 + $0x121] sm:$0xff]
    %v671 = vld [vmem:[#allocation2 + $0x129] sm:$0xff]
    %v672 = vld [vmem:[#allocation2 + $0x139] sm:$0xff]
    %v673 = vld [vmem:[#allocation2 + $0x141] sm:$0xff]
    %v674 = vld [vmem:[#allocation2 + $0x151] sm:$0xff]
    %v675 = vld [vmem:[#allocation2 + $0x159] sm:$0xff]
    %v676 = vld [vmem:[#allocation2 + $0x169] sm:$0xff]
    %v677 = vld [vmem:[#allocation2 + $0x171] sm:$0xff]
    %v678 = vld [vmem:[#allocation2 + $0x1b1] sm:$0xff]
    %v679 = vld [vmem:[#allocation2 + $0x1b9] sm:$0xff]
    %v680 = vld [vmem:[#allocation2 + $0x1c9] sm:$0xff]
    %v681 = vld [vmem:[#allocation2 + $0x1d1] sm:$0xff]
    %v682 = vld [vmem:[#allocation2 + $0x1e1] sm:$0xff]
    %v683 = vld [vmem:[#allocation2 + $0x1e9] sm:$0xff]
    %v684 = vld [vmem:[#allocation2 + $0x1f9] sm:$0xff]
    %v685 = vld [vmem:[#allocation2 + $0x201] sm:$0xff]
    %v686 = vld [vmem:[#allocation2 + $0x211] sm:$0xff]
    %v687 = vld [vmem:[#allocation2 + $0x219] sm:$0xff]
    %v688 = vld [vmem:[#allocation2 + $0x229] sm:$0xff]
    %v689 = vld [vmem:[#allocation2 + $0x231] sm:$0xff]
    %v690 = vld [vmem:[#allocation2 + $0x241] sm:$0xff]
    %v691 = vld [vmem:[#allocation2 + $0x249] sm:$0xff]
    %v692 = vld [vmem:[#allocation2 + $0x259] sm:$0xff]
    %v693 = vld [vmem:[#allocation2 + $0x261] sm:$0xff]
    %v694 = vld [vmem:[#allocation2 + $0x271] sm:$0xff]
    %v695 = vld [vmem:[#allocation2 + $0x279] sm:$0xff]
    %v696 = vld [vmem:[#allocation2 + $0x289] sm:$0xff]
    %v697 = vld [vmem:[#allocation2 + $0x291] sm:$0xff]
    %v698 = vld [vmem:[#allocation2 + $0x2a1] sm:$0xff]
    %v699 = vld [vmem:[#allocation2 + $0x2a9] sm:$0xff]
    %v700 = vld [vmem:[#allocation2 + $0x2b9] sm:$0xff]
    %v701 = vld [vmem:[#allocation2 + $0x2c1] sm:$0xff]
    %v702 = vld [vmem:[#allocation2 + $0x2d1] sm:$0xff]
    %v703 = vld [vmem:[#allocation2 + $0x2d9] sm:$0xff]
    %v704 = vld [vmem:[#allocation2 + $0x2e9] sm:$0xff]
    %v705 = vld [vmem:[#allocation2 + $0x2f1] sm:$0xff]
    %v706 = vld [vmem:[#allocation2 + $0x301] sm:$0xff]
    %v707 = vld [vmem:[#allocation2 + $0x309] sm:$0xff]
    %v708 = vld [vmem:[#allocation2 + $0x319] sm:$0xff]
    %v709 = vld [vmem:[#allocation2 + $0x321] sm:$0xff]
    %v710 = vpack.c.bf16 %v647, %v646
    %v711 = vpack.c.bf16 %v649, %v648
    %v712 = vpack.c.bf16 %v651, %v650
    %v713 = vpack.c.bf16 %v653, %v652
    %v714 = vpack.c.bf16 %v655, %v654
    %v715 = vpack.c.bf16 %v657, %v656
    %v716 = vpack.c.bf16 %v659, %v658
    %v717 = vpack.c.bf16 %v661, %v660
    %v718 = vpack.c.bf16 %v663, %v662
    %v719 = vpack.c.bf16 %v665, %v664
    %v720 = vpack.c.bf16 %v667, %v666
    %v721 = vpack.c.bf16 %v669, %v668
    %v722 = vpack.c.bf16 %v671, %v670
    %v723 = vpack.c.bf16 %v673, %v672
    %v724 = vpack.c.bf16 %v675, %v674
    %v725 = vpack.c.bf16 %v677, %v676
    %v726 = vpack.c.bf16 %v679, %v678
    %v727 = vpack.c.bf16 %v681, %v680
    %v728 = vpack.c.bf16 %v683, %v682
    %v729 = vpack.c.bf16 %v685, %v684
    %v730 = vpack.c.bf16 %v687, %v686
    %v731 = vpack.c.bf16 %v689, %v688
    %v732 = vpack.c.bf16 %v691, %v690
    %v733 = vpack.c.bf16 %v693, %v692
    %v734 = vpack.c.bf16 %v695, %v694
    %v735 = vpack.c.bf16 %v697, %v696
    %v736 = vpack.c.bf16 %v699, %v698
    %v737 = vpack.c.bf16 %v701, %v700
    %v738 = vpack.c.bf16 %v703, %v702
    %v739 = vpack.c.bf16 %v705, %v704
    %v740 = vpack.c.bf16 %v707, %v706
    %v741 = vpack.c.bf16 %v709, %v708
    %s742 = scalar_lea.vmem [#allocation3], 64
    %v743 = vld [vmem:[%s742] sm:$0xff]
    %v744 = vld [vmem:[%s742 + $0x8] sm:$0xff]
    %v745 = vld [vmem:[%s742 + $0x10] sm:$0xff]
    %v746 = vld [vmem:[%s742 + $0x18] sm:$0xff]
    %v747 = vld [vmem:[%s742 + $0x20] sm:$0xff]
    %v748 = vld [vmem:[%s742 + $0x28] sm:$0xff]
    %v749 = vld [vmem:[%s742 + $0x30] sm:$0xff]
    %v750 = vld [vmem:[%s742 + $0x38] sm:$0xff]
    %751 = vmatprep.subr.bf16.mxu0 0
    %752 = vmatpush1.bf16.msra.mxu0 %v743
    %753 = vmatprep.subr.bf16.mxu0 0
    %754 = vmatpush1.bf16.msra.mxu0 %v744
    %755 = vmatprep.subr.bf16.mxu0 0
    %756 = vmatpush1.bf16.msra.mxu0 %v745
    %757 = vmatprep.subr.bf16.mxu0 0
    %758 = vmatpush1.bf16.msra.mxu0 %v746
    %759 = vmatprep.subr.bf16.mxu0 0
    %760 = vmatpush1.bf16.msra.mxu0 %v747
    %761 = vmatprep.subr.bf16.mxu0 0
    %762 = vmatpush1.bf16.msra.mxu0 %v748
    %763 = vmatprep.subr.bf16.mxu0 0
    %764 = vmatpush1.bf16.msra.mxu0 %v749
    %765 = vmatprep.subr.bf16.mxu0 0
    %766 = vmatpush1.bf16.msra.mxu0 %v750
    %767 = vmatprep.subr.bf16.mxu0 0
    %768 = vmatpush1.bf16.msra.mxu0 0
    %769 = vmatprep.subr.bf16.mxu0 0
    %770 = vmatpush1.bf16.msra.mxu0 0
    %771 = vmatprep.subr.bf16.mxu0 0
    %772 = vmatpush1.bf16.msra.mxu0 0
    %773 = vmatprep.subr.bf16.mxu0 0
    %774 = vmatpush1.bf16.msra.mxu0 0
    %775 = vmatprep.subr.bf16.mxu0 0
    %776 = vmatpush1.bf16.msra.mxu0 0
    %777 = vmatprep.subr.bf16.mxu0 0
    %778 = vmatpush1.bf16.msra.mxu0 0
    %779 = vmatprep.subr.bf16.mxu0 0
    %780 = vmatpush1.bf16.msra.mxu0 0
    %781 = vmatprep.subr.bf16.mxu0 0
    %782 = vmatpush1.bf16.msra.mxu0 0
    %783 = vmatprep.mubr.bf16.mxu0 0
    %784 = vmatmul.mubr.bf16.gmra.mrb[0].mxu0 %v710
    %v785 = vpop.f32.mrb[0].mxu0
    %v786 = vadd.f32 0.0, %v785
    %v787 = vpop.f32.mrb[0].mxu0
    %v788 = vpop.f32.mrb[0].mxu0
    %v789 = vadd.f32 0.0, %v788
    %v790 = vpop.f32.mrb[0].mxu0
    %791 = vmatprep.mubr.bf16.mxu0 0
    %792 = vmatmul.mubr.bf16.gmra.mrb[0].mxu0 %v711
    %v793 = vpop.f32.mrb[0].mxu0
    %v794 = vadd.f32 0.0, %v793
    %v795 = vpop.f32.mrb[0].mxu0
    %v796 = vpop.f32.mrb[0].mxu0
    %v797 = vadd.f32 0.0, %v796
    %v798 = vpop.f32.mrb[0].mxu0
    %799 = vmatprep.mubr.bf16.mxu0 0
    %800 = vmatmul.mubr.bf16.gmra.mrb[0].mxu0 %v712
    %v801 = vpop.f32.mrb[0].mxu0
    %v802 = vadd.f32 0.0, %v801
    %v803 = vpop.f32.mrb[0].mxu0
    %v804 = vpop.f32.mrb[0].mxu0
    %v805 = vadd.f32 0.0, %v804
    %v806 = vpop.f32.mrb[0].mxu0
    %807 = vmatprep.mubr.bf16.mxu0 0
    %808 = vmatmul.mubr.bf16.gmra.mrb[0].mxu0 %v713
    %v809 = vpop.f32.mrb[0].mxu0
    %v810 = vadd.f32 0.0, %v809
    %v811 = vpop.f32.mrb[0].mxu0
    %v812 = vpop.f32.mrb[0].mxu0
    %v813 = vadd.f32 0.0, %v812
    %v814 = vpop.f32.mrb[0].mxu0
    %815 = vmatprep.mubr.bf16.mxu0 0
    %816 = vmatmul.mubr.bf16.gmra.mrb[0].mxu0 %v714
    %v817 = vpop.f32.mrb[0].mxu0
    %v818 = vadd.f32 0.0, %v817
    %v819 = vpop.f32.mrb[0].mxu0
    %v820 = vpop.f32.mrb[0].mxu0
    %v821 = vadd.f32 0.0, %v820
    %v822 = vpop.f32.mrb[0].mxu0
    %823 = vmatprep.mubr.bf16.mxu0 0
    %824 = vmatmul.mubr.bf16.gmra.mrb[0].mxu0 %v715
    %v825 = vpop.f32.mrb[0].mxu0
    %v826 = vadd.f32 0.0, %v825
    %v827 = vpop.f32.mrb[0].mxu0
    %v828 = vpop.f32.mrb[0].mxu0
    %v829 = vadd.f32 0.0, %v828
    %v830 = vpop.f32.mrb[0].mxu0
    %831 = vmatprep.mubr.bf16.mxu0 0
    %832 = vmatmul.mubr.bf16.gmra.mrb[0].mxu0 %v716
    %v833 = vpop.f32.mrb[0].mxu0
    %v834 = vadd.f32 0.0, %v833
    %v835 = vpop.f32.mrb[0].mxu0
    %v836 = vpop.f32.mrb[0].mxu0
    %v837 = vadd.f32 0.0, %v836
    %v838 = vpop.f32.mrb[0].mxu0
    %839 = vmatprep.mubr.bf16.mxu0 0
    %840 = vmatmul.mubr.bf16.gmra.mrb[0].mxu0 %v717
    %v841 = vpop.f32.mrb[0].mxu0
    %v842 = vadd.f32 0.0, %v841
    %v843 = vpop.f32.mrb[0].mxu0
    %v844 = vpop.f32.mrb[0].mxu0
    %v845 = vadd.f32 0.0, %v844
    %v846 = vpop.f32.mrb[0].mxu0
    %847 = vmatprep.mubr.bf16.mxu0 0
    %848 = vmatmul.mubr.bf16.gmra.mrb[0].mxu0 %v718
    %v849 = vpop.f32.mrb[0].mxu0
    %v850 = vadd.f32 0.0, %v849
    %v851 = vpop.f32.mrb[0].mxu0
    %v852 = vpop.f32.mrb[0].mxu0
    %v853 = vadd.f32 0.0, %v852
    %v854 = vpop.f32.mrb[0].mxu0
    %855 = vmatprep.mubr.bf16.mxu0 0
    %856 = vmatmul.mubr.bf16.gmra.mrb[0].mxu0 %v719
    %v857 = vpop.f32.mrb[0].mxu0
    %v858 = vadd.f32 0.0, %v857
    %v859 = vpop.f32.mrb[0].mxu0
    %v860 = vpop.f32.mrb[0].mxu0
    %v861 = vadd.f32 0.0, %v860
    %v862 = vpop.f32.mrb[0].mxu0
    %863 = vmatprep.mubr.bf16.mxu0 0
    %864 = vmatmul.mubr.bf16.gmra.mrb[0].mxu0 %v720
    %v865 = vpop.f32.mrb[0].mxu0
    %v866 = vadd.f32 0.0, %v865
    %v867 = vpop.f32.mrb[0].mxu0
    %v868 = vpop.f32.mrb[0].mxu0
    %v869 = vadd.f32 0.0, %v868
    %v870 = vpop.f32.mrb[0].mxu0
    %871 = vmatprep.mubr.bf16.mxu0 0
    %872 = vmatmul.mubr.bf16.gmra.mrb[0].mxu0 %v721
    %v873 = vpop.f32.mrb[0].mxu0
    %v874 = vadd.f32 0.0, %v873
    %v875 = vpop.f32.mrb[0].mxu0
    %v876 = vpop.f32.mrb[0].mxu0
    %v877 = vadd.f32 0.0, %v876
    %v878 = vpop.f32.mrb[0].mxu0
    %879 = vmatprep.mubr.bf16.mxu0 0
    %880 = vmatmul.mubr.bf16.gmra.mrb[0].mxu0 %v722
    %v881 = vpop.f32.mrb[0].mxu0
    %v882 = vadd.f32 0.0, %v881
    %v883 = vpop.f32.mrb[0].mxu0
    %v884 = vpop.f32.mrb[0].mxu0
    %v885 = vadd.f32 0.0, %v884
    %v886 = vpop.f32.mrb[0].mxu0
    %887 = vmatprep.mubr.bf16.mxu0 0
    %888 = vmatmul.mubr.bf16.gmra.mrb[0].mxu0 %v723
    %v889 = vpop.f32.mrb[0].mxu0
    %v890 = vadd.f32 0.0, %v889
    %v891 = vpop.f32.mrb[0].mxu0
    %v892 = vpop.f32.mrb[0].mxu0
    %v893 = vadd.f32 0.0, %v892
    %v894 = vpop.f32.mrb[0].mxu0
    %895 = vmatprep.mubr.bf16.mxu0 0
    %896 = vmatmul.mubr.bf16.gmra.mrb[0].mxu0 %v724
    %v897 = vpop.f32.mrb[0].mxu0
    %v898 = vadd.f32 0.0, %v897
    %v899 = vpop.f32.mrb[0].mxu0
    %v900 = vpop.f32.mrb[0].mxu0
    %v901 = vadd.f32 0.0, %v900
    %v902 = vpop.f32.mrb[0].mxu0
    %903 = vmatprep.mubr.bf16.mxu0 0
    %904 = vmatmul.mubr.bf16.gmra.mrb[0].mxu0 %v725
    %v905 = vpop.f32.mrb[0].mxu0
    %v906 = vadd.f32 0.0, %v905
    %v907 = vpop.f32.mrb[0].mxu0
    %v908 = vpop.f32.mrb[0].mxu0
    %v909 = vadd.f32 0.0, %v908
    %v910 = vpop.f32.mrb[0].mxu0
    %911 = vmatprep.mubr.bf16.mxu0 0
    %912 = vmatmul.mubr.bf16.gmra.mrb[0].mxu0 %v726
    %v913 = vpop.f32.mrb[0].mxu0
    %v914 = vadd.f32 0.0, %v913
    %v915 = vpop.f32.mrb[0].mxu0
    %v916 = vpop.f32.mrb[0].mxu0
    %v917 = vadd.f32 0.0, %v916
    %v918 = vpop.f32.mrb[0].mxu0
    %919 = vmatprep.mubr.bf16.mxu0 0
    %920 = vmatmul.mubr.bf16.gmra.mrb[0].mxu0 %v727
    %v921 = vpop.f32.mrb[0].mxu0
    %v922 = vadd.f32 0.0, %v921
    %v923 = vpop.f32.mrb[0].mxu0
    %v924 = vpop.f32.mrb[0].mxu0
    %v925 = vadd.f32 0.0, %v924
    %v926 = vpop.f32.mrb[0].mxu0
    %927 = vmatprep.mubr.bf16.mxu0 0
    %928 = vmatmul.mubr.bf16.gmra.mrb[0].mxu0 %v728
    %v929 = vpop.f32.mrb[0].mxu0
    %v930 = vadd.f32 0.0, %v929
    %v931 = vpop.f32.mrb[0].mxu0
    %v932 = vpop.f32.mrb[0].mxu0
    %v933 = vadd.f32 0.0, %v932
    %v934 = vpop.f32.mrb[0].mxu0
    %935 = vmatprep.mubr.bf16.mxu0 0
    %936 = vmatmul.mubr.bf16.gmra.mrb[0].mxu0 %v729
    %v937 = vpop.f32.mrb[0].mxu0
    %v938 = vadd.f32 0.0, %v937
    %v939 = vpop.f32.mrb[0].mxu0
    %v940 = vpop.f32.mrb[0].mxu0
    %v941 = vadd.f32 0.0, %v940
    %v942 = vpop.f32.mrb[0].mxu0
    %943 = vmatprep.mubr.bf16.mxu0 0
    %944 = vmatmul.mubr.bf16.gmra.mrb[0].mxu0 %v730
    %v945 = vpop.f32.mrb[0].mxu0
    %v946 = vadd.f32 0.0, %v945
    %v947 = vpop.f32.mrb[0].mxu0
    %v948 = vpop.f32.mrb[0].mxu0
    %v949 = vadd.f32 0.0, %v948
    %v950 = vpop.f32.mrb[0].mxu0
    %951 = vmatprep.mubr.bf16.mxu0 0
    %952 = vmatmul.mubr.bf16.gmra.mrb[0].mxu0 %v731
    %v953 = vpop.f32.mrb[0].mxu0
    %v954 = vadd.f32 0.0, %v953
    %v955 = vpop.f32.mrb[0].mxu0
    %v956 = vpop.f32.mrb[0].mxu0
    %v957 = vadd.f32 0.0, %v956
    %v958 = vpop.f32.mrb[0].mxu0
    %959 = vmatprep.mubr.bf16.mxu0 0
    %960 = vmatmul.mubr.bf16.gmra.mrb[0].mxu0 %v732
    %v961 = vpop.f32.mrb[0].mxu0
    %v962 = vadd.f32 0.0, %v961
    %v963 = vpop.f32.mrb[0].mxu0
    %v964 = vpop.f32.mrb[0].mxu0
    %v965 = vadd.f32 0.0, %v964
    %v966 = vpop.f32.mrb[0].mxu0
    %967 = vmatprep.mubr.bf16.mxu0 0
    %968 = vmatmul.mubr.bf16.gmra.mrb[0].mxu0 %v733
    %v969 = vpop.f32.mrb[0].mxu0
    %v970 = vadd.f32 0.0, %v969
    %v971 = vpop.f32.mrb[0].mxu0
    %v972 = vpop.f32.mrb[0].mxu0
    %v973 = vadd.f32 0.0, %v972
    %v974 = vpop.f32.mrb[0].mxu0
    %975 = vmatprep.mubr.bf16.mxu0 0
    %976 = vmatmul.mubr.bf16.gmra.mrb[0].mxu0 %v734
    %v977 = vpop.f32.mrb[0].mxu0
    %v978 = vadd.f32 0.0, %v977
    %v979 = vpop.f32.mrb[0].mxu0
    %v980 = vpop.f32.mrb[0].mxu0
    %v981 = vadd.f32 0.0, %v980
    %v982 = vpop.f32.mrb[0].mxu0
    %983 = vmatprep.mubr.bf16.mxu0 0
    %984 = vmatmul.mubr.bf16.gmra.mrb[0].mxu0 %v735
    %v985 = vpop.f32.mrb[0].mxu0
    %v986 = vadd.f32 0.0, %v985
    %v987 = vpop.f32.mrb[0].mxu0
    %v988 = vpop.f32.mrb[0].mxu0
    %v989 = vadd.f32 0.0, %v988
    %v990 = vpop.f32.mrb[0].mxu0
    %991 = vmatprep.mubr.bf16.mxu0 0
    %992 = vmatmul.mubr.bf16.gmra.mrb[0].mxu0 %v736
    %v993 = vpop.f32.mrb[0].mxu0
    %v994 = vadd.f32 0.0, %v993
    %v995 = vpop.f32.mrb[0].mxu0
    %v996 = vpop.f32.mrb[0].mxu0
    %v997 = vadd.f32 0.0, %v996
    %v998 = vpop.f32.mrb[0].mxu0
    %999 = vmatprep.mubr.bf16.mxu0 0
    %1000 = vmatmul.mubr.bf16.gmra.mrb[0].mxu0 %v737
    %v1001 = vpop.f32.mrb[0].mxu0
    %v1002 = vadd.f32 0.0, %v1001
    %v1003 = vpop.f32.mrb[0].mxu0
    %v1004 = vpop.f32.mrb[0].mxu0
    %v1005 = vadd.f32 0.0, %v1004
    %v1006 = vpop.f32.mrb[0].mxu0
    %1007 = vmatprep.mubr.bf16.mxu0 0
    %1008 = vmatmul.mubr.bf16.gmra.mrb[0].mxu0 %v738
    %v1009 = vpop.f32.mrb[0].mxu0
    %v1010 = vadd.f32 0.0, %v1009
    %v1011 = vpop.f32.mrb[0].mxu0
    %v1012 = vpop.f32.mrb[0].mxu0
    %v1013 = vadd.f32 0.0, %v1012
    %v1014 = vpop.f32.mrb[0].mxu0
    %1015 = vmatprep.mubr.bf16.mxu0 0
    %1016 = vmatmul.mubr.bf16.gmra.mrb[0].mxu0 %v739
    %v1017 = vpop.f32.mrb[0].mxu0
    %v1018 = vadd.f32 0.0, %v1017
    %v1019 = vpop.f32.mrb[0].mxu0
    %v1020 = vpop.f32.mrb[0].mxu0
    %v1021 = vadd.f32 0.0, %v1020
    %v1022 = vpop.f32.mrb[0].mxu0
    %1023 = vmatprep.mubr.bf16.mxu0 0
    %1024 = vmatmul.mubr.bf16.gmra.mrb[0].mxu0 %v740
    %v1025 = vpop.f32.mrb[0].mxu0
    %v1026 = vadd.f32 0.0, %v1025
    %v1027 = vpop.f32.mrb[0].mxu0
    %v1028 = vpop.f32.mrb[0].mxu0
    %v1029 = vadd.f32 0.0, %v1028
    %v1030 = vpop.f32.mrb[0].mxu0
    %1031 = vmatprep.mubr.bf16.mxu0 0
    %1032 = vmatmul.mubr.bf16.gmra.mrb[0].mxu0 %v741
    %v1033 = vpop.f32.mrb[0].mxu0
    %v1034 = vadd.f32 0.0, %v1033
    %v1035 = vpop.f32.mrb[0].mxu0
    %v1036 = vpop.f32.mrb[0].mxu0
    %v1037 = vadd.f32 0.0, %v1036
    %v1038 = vpop.f32.mrb[0].mxu0
    %1039 = vdwg.mxu0
    %1040 = vmatprep.subr.bf16.mxu0 0
    %1041 = vmatpush1.bf16.msra.mxu0 %v638
    %1042 = vmatprep.subr.bf16.mxu0 0
    %1043 = vmatpush1.bf16.msra.mxu0 %v639
    %1044 = vmatprep.subr.bf16.mxu0 0
    %1045 = vmatpush1.bf16.msra.mxu0 %v640
    %1046 = vmatprep.subr.bf16.mxu0 0
    %1047 = vmatpush1.bf16.msra.mxu0 %v641
    %1048 = vmatprep.subr.bf16.mxu0 0
    %1049 = vmatpush1.bf16.msra.mxu0 %v642
    %1050 = vmatprep.subr.bf16.mxu0 0
    %1051 = vmatpush1.bf16.msra.mxu0 %v643
    %1052 = vmatprep.subr.bf16.mxu0 0
    %1053 = vmatpush1.bf16.msra.mxu0 %v644
    %1054 = vmatprep.subr.bf16.mxu0 0
    %1055 = vmatpush1.bf16.msra.mxu0 %v645
    %1056 = vmatprep.subr.bf16.mxu0 0
    %1057 = vmatpush1.bf16.msra.mxu0 0
    %1058 = vmatprep.subr.bf16.mxu0 0
    %1059 = vmatpush1.bf16.msra.mxu0 0
    %1060 = vmatprep.subr.bf16.mxu0 0
    %1061 = vmatpush1.bf16.msra.mxu0 0
    %1062 = vmatprep.subr.bf16.mxu0 0
    %1063 = vmatpush1.bf16.msra.mxu0 0
    %1064 = vmatprep.subr.bf16.mxu0 0
    %1065 = vmatpush1.bf16.msra.mxu0 0
    %1066 = vmatprep.subr.bf16.mxu0 0
    %1067 = vmatpush1.bf16.msra.mxu0 0
    %1068 = vmatprep.subr.bf16.mxu0 0
    %1069 = vmatpush1.bf16.msra.mxu0 0
    %1070 = vmatprep.subr.bf16.mxu0 0
    %1071 = vmatpush1.bf16.msra.mxu0 0
    %1072 = vmatprep.mubr.bf16.mxu0 0
    %1073 = vmatmul.mubr.bf16.gmra.mrb[0].mxu0 %v606
    %v1074 = vpop.f32.mrb[0].mxu0
    %v1075 = vadd.f32 %v786, %v1074
    %v1076 = vpop.f32.mrb[0].mxu0
    %v1077 = vpop.f32.mrb[0].mxu0
    %v1078 = vadd.f32 %v789, %v1077
    %v1079 = vpop.f32.mrb[0].mxu0
    %1080 = vmatprep.mubr.bf16.mxu0 0
    %1081 = vmatmul.mubr.bf16.gmra.mrb[0].mxu0 %v607
    %v1082 = vpop.f32.mrb[0].mxu0
    %v1083 = vadd.f32 %v794, %v1082
    %v1084 = vpop.f32.mrb[0].mxu0
    %v1085 = vpop.f32.mrb[0].mxu0
    %v1086 = vadd.f32 %v797, %v1085
    %v1087 = vpop.f32.mrb[0].mxu0
    %1088 = vmatprep.mubr.bf16.mxu0 0
    %1089 = vmatmul.mubr.bf16.gmra.mrb[0].mxu0 %v608
    %v1090 = vpop.f32.mrb[0].mxu0
    %v1091 = vadd.f32 %v802, %v1090
    %v1092 = vpop.f32.mrb[0].mxu0
    %v1093 = vpop.f32.mrb[0].mxu0
    %v1094 = vadd.f32 %v805, %v1093
    %v1095 = vpop.f32.mrb[0].mxu0
    %1096 = vmatprep.mubr.bf16.mxu0 0
    %1097 = vmatmul.mubr.bf16.gmra.mrb[0].mxu0 %v609
    %v1098 = vpop.f32.mrb[0].mxu0
    %v1099 = vadd.f32 %v810, %v1098
    %v1100 = vpop.f32.mrb[0].mxu0
    %v1101 = vpop.f32.mrb[0].mxu0
    %v1102 = vadd.f32 %v813, %v1101
    %v1103 = vpop.f32.mrb[0].mxu0
    %1104 = vmatprep.mubr.bf16.mxu0 0
    %1105 = vmatmul.mubr.bf16.gmra.mrb[0].mxu0 %v610
    %v1106 = vpop.f32.mrb[0].mxu0
    %v1107 = vadd.f32 %v818, %v1106
    %v1108 = vpop.f32.mrb[0].mxu0
    %v1109 = vpop.f32.mrb[0].mxu0
    %v1110 = vadd.f32 %v821, %v1109
    %v1111 = vpop.f32.mrb[0].mxu0
    %1112 = vmatprep.mubr.bf16.mxu0 0
    %1113 = vmatmul.mubr.bf16.gmra.mrb[0].mxu0 %v611
    %v1114 = vpop.f32.mrb[0].mxu0
    %v1115 = vadd.f32 %v826, %v1114
    %v1116 = vpop.f32.mrb[0].mxu0
    %v1117 = vpop.f32.mrb[0].mxu0
    %v1118 = vadd.f32 %v829, %v1117
    %v1119 = vpop.f32.mrb[0].mxu0
    %1120 = vmatprep.mubr.bf16.mxu0 0
    %1121 = vmatmul.mubr.bf16.gmra.mrb[0].mxu0 %v612
    %v1122 = vpop.f32.mrb[0].mxu0
    %v1123 = vadd.f32 %v834, %v1122
    %v1124 = vpop.f32.mrb[0].mxu0
    %v1125 = vpop.f32.mrb[0].mxu0
    %v1126 = vadd.f32 %v837, %v1125
    %v1127 = vpop.f32.mrb[0].mxu0
    %1128 = vmatprep.mubr.bf16.mxu0 0
    %1129 = vmatmul.mubr.bf16.gmra.mrb[0].mxu0 %v613
    %v1130 = vpop.f32.mrb[0].mxu0
    %v1131 = vadd.f32 %v842, %v1130
    %v1132 = vpop.f32.mrb[0].mxu0
    %v1133 = vpop.f32.mrb[0].mxu0
    %v1134 = vadd.f32 %v845, %v1133
    %v1135 = vpop.f32.mrb[0].mxu0
    %1136 = vmatprep.mubr.bf16.mxu0 0
    %1137 = vmatmul.mubr.bf16.gmra.mrb[0].mxu0 %v614
    %v1138 = vpop.f32.mrb[0].mxu0
    %v1139 = vadd.f32 %v850, %v1138
    %v1140 = vpop.f32.mrb[0].mxu0
    %v1141 = vpop.f32.mrb[0].mxu0
    %v1142 = vadd.f32 %v853, %v1141
    %v1143 = vpop.f32.mrb[0].mxu0
    %1144 = vmatprep.mubr.bf16.mxu0 0
    %1145 = vmatmul.mubr.bf16.gmra.mrb[0].mxu0 %v615
    %v1146 = vpop.f32.mrb[0].mxu0
    %v1147 = vadd.f32 %v858, %v1146
    %v1148 = vpop.f32.mrb[0].mxu0
    %v1149 = vpop.f32.mrb[0].mxu0
    %v1150 = vadd.f32 %v861, %v1149
    %v1151 = vpop.f32.mrb[0].mxu0
    %1152 = vmatprep.mubr.bf16.mxu0 0
    %1153 = vmatmul.mubr.bf16.gmra.mrb[0].mxu0 %v616
    %v1154 = vpop.f32.mrb[0].mxu0
    %v1155 = vadd.f32 %v866, %v1154
    %v1156 = vpop.f32.mrb[0].mxu0
    %v1157 = vpop.f32.mrb[0].mxu0
    %v1158 = vadd.f32 %v869, %v1157
    %v1159 = vpop.f32.mrb[0].mxu0
    %1160 = vmatprep.mubr.bf16.mxu0 0
    %1161 = vmatmul.mubr.bf16.gmra.mrb[0].mxu0 %v617
    %v1162 = vpop.f32.mrb[0].mxu0
    %v1163 = vadd.f32 %v874, %v1162
    %v1164 = vpop.f32.mrb[0].mxu0
    %v1165 = vpop.f32.mrb[0].mxu0
    %v1166 = vadd.f32 %v877, %v1165
    %v1167 = vpop.f32.mrb[0].mxu0
    %1168 = vmatprep.mubr.bf16.mxu0 0
    %1169 = vmatmul.mubr.bf16.gmra.mrb[0].mxu0 %v618
    %v1170 = vpop.f32.mrb[0].mxu0
    %v1171 = vadd.f32 %v882, %v1170
    %v1172 = vpop.f32.mrb[0].mxu0
    %v1173 = vpop.f32.mrb[0].mxu0
    %v1174 = vadd.f32 %v885, %v1173
    %v1175 = vpop.f32.mrb[0].mxu0
    %1176 = vmatprep.mubr.bf16.mxu0 0
    %1177 = vmatmul.mubr.bf16.gmra.mrb[0].mxu0 %v619
    %v1178 = vpop.f32.mrb[0].mxu0
    %v1179 = vadd.f32 %v890, %v1178
    %v1180 = vpop.f32.mrb[0].mxu0
    %v1181 = vpop.f32.mrb[0].mxu0
    %v1182 = vadd.f32 %v893, %v1181
    %v1183 = vpop.f32.mrb[0].mxu0
    %1184 = vmatprep.mubr.bf16.mxu0 0
    %1185 = vmatmul.mubr.bf16.gmra.mrb[0].mxu0 %v620
    %v1186 = vpop.f32.mrb[0].mxu0
    %v1187 = vadd.f32 %v898, %v1186
    %v1188 = vpop.f32.mrb[0].mxu0
    %v1189 = vpop.f32.mrb[0].mxu0
    %v1190 = vadd.f32 %v901, %v1189
    %v1191 = vpop.f32.mrb[0].mxu0
    %1192 = vmatprep.mubr.bf16.mxu0 0
    %1193 = vmatmul.mubr.bf16.gmra.mrb[0].mxu0 %v621
    %v1194 = vpop.f32.mrb[0].mxu0
    %v1195 = vadd.f32 %v906, %v1194
    %v1196 = vpop.f32.mrb[0].mxu0
    %v1197 = vpop.f32.mrb[0].mxu0
    %v1198 = vadd.f32 %v909, %v1197
    %v1199 = vpop.f32.mrb[0].mxu0
    %1200 = vmatprep.mubr.bf16.mxu0 0
    %1201 = vmatmul.mubr.bf16.gmra.mrb[0].mxu0 %v622
    %v1202 = vpop.f32.mrb[0].mxu0
    %v1203 = vadd.f32 %v914, %v1202
    %v1204 = vpop.f32.mrb[0].mxu0
    %v1205 = vpop.f32.mrb[0].mxu0
    %v1206 = vadd.f32 %v917, %v1205
    %v1207 = vpop.f32.mrb[0].mxu0
    %1208 = vmatprep.mubr.bf16.mxu0 0
    %1209 = vmatmul.mubr.bf16.gmra.mrb[0].mxu0 %v623
    %v1210 = vpop.f32.mrb[0].mxu0
    %v1211 = vadd.f32 %v922, %v1210
    %v1212 = vpop.f32.mrb[0].mxu0
    %v1213 = vpop.f32.mrb[0].mxu0
    %v1214 = vadd.f32 %v925, %v1213
    %v1215 = vpop.f32.mrb[0].mxu0
    %1216 = vmatprep.mubr.bf16.mxu0 0
    %1217 = vmatmul.mubr.bf16.gmra.mrb[0].mxu0 %v624
    %v1218 = vpop.f32.mrb[0].mxu0
    %v1219 = vadd.f32 %v930, %v1218
    %v1220 = vpop.f32.mrb[0].mxu0
    %v1221 = vpop.f32.mrb[0].mxu0
    %v1222 = vadd.f32 %v933, %v1221
    %v1223 = vpop.f32.mrb[0].mxu0
    %1224 = vmatprep.mubr.bf16.mxu0 0
    %1225 = vmatmul.mubr.bf16.gmra.mrb[0].mxu0 %v625
    %v1226 = vpop.f32.mrb[0].mxu0
    %v1227 = vadd.f32 %v938, %v1226
    %v1228 = vpop.f32.mrb[0].mxu0
    %v1229 = vpop.f32.mrb[0].mxu0
    %v1230 = vadd.f32 %v941, %v1229
    %v1231 = vpop.f32.mrb[0].mxu0
    %1232 = vmatprep.mubr.bf16.mxu0 0
    %1233 = vmatmul.mubr.bf16.gmra.mrb[0].mxu0 %v626
    %v1234 = vpop.f32.mrb[0].mxu0
    %v1235 = vadd.f32 %v946, %v1234
    %v1236 = vpop.f32.mrb[0].mxu0
    %v1237 = vpop.f32.mrb[0].mxu0
    %v1238 = vadd.f32 %v949, %v1237
    %v1239 = vpop.f32.mrb[0].mxu0
    %1240 = vmatprep.mubr.bf16.mxu0 0
    %1241 = vmatmul.mubr.bf16.gmra.mrb[0].mxu0 %v627
    %v1242 = vpop.f32.mrb[0].mxu0
    %v1243 = vadd.f32 %v954, %v1242
    %v1244 = vpop.f32.mrb[0].mxu0
    %v1245 = vpop.f32.mrb[0].mxu0
    %v1246 = vadd.f32 %v957, %v1245
    %v1247 = vpop.f32.mrb[0].mxu0
    %1248 = vmatprep.mubr.bf16.mxu0 0
    %1249 = vmatmul.mubr.bf16.gmra.mrb[0].mxu0 %v628
    %v1250 = vpop.f32.mrb[0].mxu0
    %v1251 = vadd.f32 %v962, %v1250
    %v1252 = vpop.f32.mrb[0].mxu0
    %v1253 = vpop.f32.mrb[0].mxu0
    %v1254 = vadd.f32 %v965, %v1253
    %v1255 = vpop.f32.mrb[0].mxu0
    %1256 = vmatprep.mubr.bf16.mxu0 0
    %1257 = vmatmul.mubr.bf16.gmra.mrb[0].mxu0 %v629
    %v1258 = vpop.f32.mrb[0].mxu0
    %v1259 = vadd.f32 %v970, %v1258
    %v1260 = vpop.f32.mrb[0].mxu0
    %v1261 = vpop.f32.mrb[0].mxu0
    %v1262 = vadd.f32 %v973, %v1261
    %v1263 = vpop.f32.mrb[0].mxu0
    %1264 = vmatprep.mubr.bf16.mxu0 0
    %1265 = vmatmul.mubr.bf16.gmra.mrb[0].mxu0 %v630
    %v1266 = vpop.f32.mrb[0].mxu0
    %v1267 = vadd.f32 %v978, %v1266
    %v1268 = vpop.f32.mrb[0].mxu0
    %v1269 = vpop.f32.mrb[0].mxu0
    %v1270 = vadd.f32 %v981, %v1269
    %v1271 = vpop.f32.mrb[0].mxu0
    %1272 = vmatprep.mubr.bf16.mxu0 0
    %1273 = vmatmul.mubr.bf16.gmra.mrb[0].mxu0 %v631
    %v1274 = vpop.f32.mrb[0].mxu0
    %v1275 = vadd.f32 %v986, %v1274
    %v1276 = vpop.f32.mrb[0].mxu0
    %v1277 = vpop.f32.mrb[0].mxu0
    %v1278 = vadd.f32 %v989, %v1277
    %v1279 = vpop.f32.mrb[0].mxu0
    %1280 = vmatprep.mubr.bf16.mxu0 0
    %1281 = vmatmul.mubr.bf16.gmra.mrb[0].mxu0 %v632
    %v1282 = vpop.f32.mrb[0].mxu0
    %v1283 = vadd.f32 %v994, %v1282
    %v1284 = vpop.f32.mrb[0].mxu0
    %v1285 = vpop.f32.mrb[0].mxu0
    %v1286 = vadd.f32 %v997, %v1285
    %v1287 = vpop.f32.mrb[0].mxu0
    %1288 = vmatprep.mubr.bf16.mxu0 0
    %1289 = vmatmul.mubr.bf16.gmra.mrb[0].mxu0 %v633
    %v1290 = vpop.f32.mrb[0].mxu0
    %v1291 = vadd.f32 %v1002, %v1290
    %v1292 = vpop.f32.mrb[0].mxu0
    %v1293 = vpop.f32.mrb[0].mxu0
    %v1294 = vadd.f32 %v1005, %v1293
    %v1295 = vpop.f32.mrb[0].mxu0
    %1296 = vmatprep.mubr.bf16.mxu0 0
    %1297 = vmatmul.mubr.bf16.gmra.mrb[0].mxu0 %v634
    %v1298 = vpop.f32.mrb[0].mxu0
    %v1299 = vadd.f32 %v1010, %v1298
    %v1300 = vpop.f32.mrb[0].mxu0
    %v1301 = vpop.f32.mrb[0].mxu0
    %v1302 = vadd.f32 %v1013, %v1301
    %v1303 = vpop.f32.mrb[0].mxu0
    %1304 = vmatprep.mubr.bf16.mxu0 0
    %1305 = vmatmul.mubr.bf16.gmra.mrb[0].mxu0 %v635
    %v1306 = vpop.f32.mrb[0].mxu0
    %v1307 = vadd.f32 %v1018, %v1306
    %v1308 = vpop.f32.mrb[0].mxu0
    %v1309 = vpop.f32.mrb[0].mxu0
    %v1310 = vadd.f32 %v1021, %v1309
    %v1311 = vpop.f32.mrb[0].mxu0
    %1312 = vmatprep.mubr.bf16.mxu0 0
    %1313 = vmatmul.mubr.bf16.gmra.mrb[0].mxu0 %v636
    %v1314 = vpop.f32.mrb[0].mxu0
    %v1315 = vadd.f32 %v1026, %v1314
    %v1316 = vpop.f32.mrb[0].mxu0
    %v1317 = vpop.f32.mrb[0].mxu0
    %v1318 = vadd.f32 %v1029, %v1317
    %v1319 = vpop.f32.mrb[0].mxu0
    %1320 = vmatprep.mubr.bf16.mxu0 0
    %1321 = vmatmul.mubr.bf16.gmra.mrb[0].mxu0 %v637
    %v1322 = vpop.f32.mrb[0].mxu0
    %v1323 = vadd.f32 %v1034, %v1322
    %v1324 = vpop.f32.mrb[0].mxu0
    %v1325 = vpop.f32.mrb[0].mxu0
    %v1326 = vadd.f32 %v1037, %v1325
    %v1327 = vpop.f32.mrb[0].mxu0
    %1328 = vdwg.mxu0
    %v1329 = vld [vmem:[#allocation2 + $0x2] sm:$0xff]
    %v1330 = vld [vmem:[#allocation2 + $0xa] sm:$0xff]
    %v1331 = vld [vmem:[#allocation2 + $0x1a] sm:$0xff]
    %v1332 = vld [vmem:[#allocation2 + $0x22] sm:$0xff]
    %v1333 = vld [vmem:[#allocation2 + $0x32] sm:$0xff]
    %v1334 = vld [vmem:[#allocation2 + $0x3a] sm:$0xff]
    %v1335 = vld [vmem:[#allocation2 + $0x4a] sm:$0xff]
    %v1336 = vld [vmem:[#allocation2 + $0x52] sm:$0xff]
    %v1337 = vld [vmem:[#allocation2 + $0x62] sm:$0xff]
    %v1338 = vld [vmem:[#allocation2 + $0x6a] sm:$0xff]
    %v1339 = vld [vmem:[#allocation2 + $0x7a] sm:$0xff]
    %v1340 = vld [vmem:[#allocation2 + $0x82] sm:$0xff]
    %v1341 = vld [vmem:[#allocation2 + $0x92] sm:$0xff]
    %v1342 = vld [vmem:[#allocation2 + $0x9a] sm:$0xff]
    %v1343 = vld [vmem:[#allocation2 + $0xaa] sm:$0xff]
    %v1344 = vld [vmem:[#allocation2 + $0xb2] sm:$0xff]
    %v1345 = vld [vmem:[#allocation2 + $0xc2] sm:$0xff]
    %v1346 = vld [vmem:[#allocation2 + $0xca] sm:$0xff]
    %v1347 = vld [vmem:[#allocation2 + $0xda] sm:$0xff]
    %v1348 = vld [vmem:[#allocation2 + $0xe2] sm:$0xff]
    %v1349 = vld [vmem:[#allocation2 + $0xf2] sm:$0xff]
    %v1350 = vld [vmem:[#allocation2 + $0xfa] sm:$0xff]
    %v1351 = vld [vmem:[#allocation2 + $0x10a] sm:$0xff]
    %v1352 = vld [vmem:[#allocation2 + $0x112] sm:$0xff]
    %v1353 = vld [vmem:[#allocation2 + $0x122] sm:$0xff]
    %v1354 = vld [vmem:[#allocation2 + $0x12a] sm:$0xff]
    %v1355 = vld [vmem:[#allocation2 + $0x13a] sm:$0xff]
    %v1356 = vld [vmem:[#allocation2 + $0x142] sm:$0xff]
    %v1357 = vld [vmem:[#allocation2 + $0x152] sm:$0xff]
    %v1358 = vld [vmem:[#allocation2 + $0x15a] sm:$0xff]
    %v1359 = vld [vmem:[#allocation2 + $0x16a] sm:$0xff]
    %v1360 = vld [vmem:[#allocation2 + $0x172] sm:$0xff]
    %v1361 = vld [vmem:[#allocation2 + $0x1b2] sm:$0xff]
    %v1362 = vld [vmem:[#allocation2 + $0x1ba] sm:$0xff]
    %v1363 = vld [vmem:[#allocation2 + $0x1ca] sm:$0xff]
    %v1364 = vld [vmem:[#allocation2 + $0x1d2] sm:$0xff]
    %v1365 = vld [vmem:[#allocation2 + $0x1e2] sm:$0xff]
    %v1366 = vld [vmem:[#allocation2 + $0x1ea] sm:$0xff]
    %v1367 = vld [vmem:[#allocation2 + $0x1fa] sm:$0xff]
    %v1368 = vld [vmem:[#allocation2 + $0x202] sm:$0xff]
    %v1369 = vld [vmem:[#allocation2 + $0x212] sm:$0xff]
    %v1370 = vld [vmem:[#allocation2 + $0x21a] sm:$0xff]
    %v1371 = vld [vmem:[#allocation2 + $0x22a] sm:$0xff]
    %v1372 = vld [vmem:[#allocation2 + $0x232] sm:$0xff]
    %v1373 = vld [vmem:[#allocation2 + $0x242] sm:$0xff]
    %v1374 = vld [vmem:[#allocation2 + $0x24a] sm:$0xff]
    %v1375 = vld [vmem:[#allocation2 + $0x25a] sm:$0xff]
    %v1376 = vld [vmem:[#allocation2 + $0x262] sm:$0xff]
    %v1377 = vld [vmem:[#allocation2 + $0x272] sm:$0xff]
    %v1378 = vld [vmem:[#allocation2 + $0x27a] sm:$0xff]
    %v1379 = vld [vmem:[#allocation2 + $0x28a] sm:$0xff]
    %v1380 = vld [vmem:[#allocation2 + $0x292] sm:$0xff]
    %v1381 = vld [vmem:[#allocation2 + $0x2a2] sm:$0xff]
    %v1382 = vld [vmem:[#allocation2 + $0x2aa] sm:$0xff]
    %v1383 = vld [vmem:[#allocation2 + $0x2ba] sm:$0xff]
    %v1384 = vld [vmem:[#allocation2 + $0x2c2] sm:$0xff]
    %v1385 = vld [vmem:[#allocation2 + $0x2d2] sm:$0xff]
    %v1386 = vld [vmem:[#allocation2 + $0x2da] sm:$0xff]
    %v1387 = vld [vmem:[#allocation2 + $0x2ea] sm:$0xff]
    %v1388 = vld [vmem:[#allocation2 + $0x2f2] sm:$0xff]
    %v1389 = vld [vmem:[#allocation2 + $0x302] sm:$0xff]
    %v1390 = vld [vmem:[#allocation2 + $0x30a] sm:$0xff]
    %v1391 = vld [vmem:[#allocation2 + $0x31a] sm:$0xff]
    %v1392 = vld [vmem:[#allocation2 + $0x322] sm:$0xff]
    %v1393 = vpack.c.bf16 %v1330, %v1329
    %v1394 = vpack.c.bf16 %v1332, %v1331
    %v1395 = vpack.c.bf16 %v1334, %v1333
    %v1396 = vpack.c.bf16 %v1336, %v1335
    %v1397 = vpack.c.bf16 %v1338, %v1337
    %v1398 = vpack.c.bf16 %v1340, %v1339
    %v1399 = vpack.c.bf16 %v1342, %v1341
    %v1400 = vpack.c.bf16 %v1344, %v1343
    %v1401 = vpack.c.bf16 %v1346, %v1345
    %v1402 = vpack.c.bf16 %v1348, %v1347
    %v1403 = vpack.c.bf16 %v1350, %v1349
    %v1404 = vpack.c.bf16 %v1352, %v1351
    %v1405 = vpack.c.bf16 %v1354, %v1353
    %v1406 = vpack.c.bf16 %v1356, %v1355
    %v1407 = vpack.c.bf16 %v1358, %v1357
    %v1408 = vpack.c.bf16 %v1360, %v1359
    %v1409 = vpack.c.bf16 %v1362, %v1361
    %v1410 = vpack.c.bf16 %v1364, %v1363
    %v1411 = vpack.c.bf16 %v1366, %v1365
    %v1412 = vpack.c.bf16 %v1368, %v1367
    %v1413 = vpack.c.bf16 %v1370, %v1369
    %v1414 = vpack.c.bf16 %v1372, %v1371
    %v1415 = vpack.c.bf16 %v1374, %v1373
    %v1416 = vpack.c.bf16 %v1376, %v1375
    %v1417 = vpack.c.bf16 %v1378, %v1377
    %v1418 = vpack.c.bf16 %v1380, %v1379
    %v1419 = vpack.c.bf16 %v1382, %v1381
    %v1420 = vpack.c.bf16 %v1384, %v1383
    %v1421 = vpack.c.bf16 %v1386, %v1385
    %v1422 = vpack.c.bf16 %v1388, %v1387
    %v1423 = vpack.c.bf16 %v1390, %v1389
    %v1424 = vpack.c.bf16 %v1392, %v1391
    %s1425 = scalar_lea.vmem [#allocation3], 128
    %v1426 = vld [vmem:[%s1425] sm:$0xff]
    %v1427 = vld [vmem:[%s1425 + $0x8] sm:$0xff]
    %v1428 = vld [vmem:[%s1425 + $0x10] sm:$0xff]
    %v1429 = vld [vmem:[%s1425 + $0x18] sm:$0xff]
    %v1430 = vld [vmem:[%s1425 + $0x20] sm:$0xff]
    %v1431 = vld [vmem:[%s1425 + $0x28] sm:$0xff]
    %v1432 = vld [vmem:[%s1425 + $0x30] sm:$0xff]
    %v1433 = vld [vmem:[%s1425 + $0x38] sm:$0xff]
    %1434 = vmatprep.subr.bf16.mxu0 0
    %1435 = vmatpush1.bf16.msra.mxu0 %v1426
    %1436 = vmatprep.subr.bf16.mxu0 0
    %1437 = vmatpush1.bf16.msra.mxu0 %v1427
    %1438 = vmatprep.subr.bf16.mxu0 0
    %1439 = vmatpush1.bf16.msra.mxu0 %v1428
    %1440 = vmatprep.subr.bf16.mxu0 0
    %1441 = vmatpush1.bf16.msra.mxu0 %v1429
    %1442 = vmatprep.subr.bf16.mxu0 0
    %1443 = vmatpush1.bf16.msra.mxu0 %v1430
    %1444 = vmatprep.subr.bf16.mxu0 0
    %1445 = vmatpush1.bf16.msra.mxu0 %v1431
    %1446 = vmatprep.subr.bf16.mxu0 0
    %1447 = vmatpush1.bf16.msra.mxu0 %v1432
    %1448 = vmatprep.subr.bf16.mxu0 0
    %1449 = vmatpush1.bf16.msra.mxu0 %v1433
    %1450 = vmatprep.subr.bf16.mxu0 0
    %1451 = vmatpush1.bf16.msra.mxu0 0
    %1452 = vmatprep.subr.bf16.mxu0 0
    %1453 = vmatpush1.bf16.msra.mxu0 0
    %1454 = vmatprep.subr.bf16.mxu0 0
    %1455 = vmatpush1.bf16.msra.mxu0 0
    %1456 = vmatprep.subr.bf16.mxu0 0
    %1457 = vmatpush1.bf16.msra.mxu0 0
    %1458 = vmatprep.subr.bf16.mxu0 0
    %1459 = vmatpush1.bf16.msra.mxu0 0
    %1460 = vmatprep.subr.bf16.mxu0 0
    %1461 = vmatpush1.bf16.msra.mxu0 0
    %1462 = vmatprep.subr.bf16.mxu0 0
    %1463 = vmatpush1.bf16.msra.mxu0 0
    %1464 = vmatprep.subr.bf16.mxu0 0
    %1465 = vmatpush1.bf16.msra.mxu0 0
    %1466 = vmatprep.mubr.bf16.mxu0 0
    %1467 = vmatmul.mubr.bf16.gmra.mrb[0].mxu0 %v1393
    %v1468 = vpop.f32.mrb[0].mxu0
    %v1469 = vadd.f32 0.0, %v1468
    %v1470 = vpop.f32.mrb[0].mxu0
    %v1471 = vpop.f32.mrb[0].mxu0
    %v1472 = vadd.f32 0.0, %v1471
    %v1473 = vpop.f32.mrb[0].mxu0
    %1474 = vmatprep.mubr.bf16.mxu0 0
    %1475 = vmatmul.mubr.bf16.gmra.mrb[0].mxu0 %v1394
    %v1476 = vpop.f32.mrb[0].mxu0
    %v1477 = vadd.f32 0.0, %v1476
    %v1478 = vpop.f32.mrb[0].mxu0
    %v1479 = vpop.f32.mrb[0].mxu0
    %v1480 = vadd.f32 0.0, %v1479
    %v1481 = vpop.f32.mrb[0].mxu0
    %1482 = vmatprep.mubr.bf16.mxu0 0
    %1483 = vmatmul.mubr.bf16.gmra.mrb[0].mxu0 %v1395
    %v1484 = vpop.f32.mrb[0].mxu0
    %v1485 = vadd.f32 0.0, %v1484
    %v1486 = vpop.f32.mrb[0].mxu0
    %v1487 = vpop.f32.mrb[0].mxu0
    %v1488 = vadd.f32 0.0, %v1487
    %v1489 = vpop.f32.mrb[0].mxu0
    %1490 = vmatprep.mubr.bf16.mxu0 0
    %1491 = vmatmul.mubr.bf16.gmra.mrb[0].mxu0 %v1396
    %v1492 = vpop.f32.mrb[0].mxu0
    %v1493 = vadd.f32 0.0, %v1492
    %v1494 = vpop.f32.mrb[0].mxu0
    %v1495 = vpop.f32.mrb[0].mxu0
    %v1496 = vadd.f32 0.0, %v1495
    %v1497 = vpop.f32.mrb[0].mxu0
    %1498 = vmatprep.mubr.bf16.mxu0 0
    %1499 = vmatmul.mubr.bf16.gmra.mrb[0].mxu0 %v1397
    %v1500 = vpop.f32.mrb[0].mxu0
    %v1501 = vadd.f32 0.0, %v1500
    %v1502 = vpop.f32.mrb[0].mxu0
    %v1503 = vpop.f32.mrb[0].mxu0
    %v1504 = vadd.f32 0.0, %v1503
    %v1505 = vpop.f32.mrb[0].mxu0
    %1506 = vmatprep.mubr.bf16.mxu0 0
    %1507 = vmatmul.mubr.bf16.gmra.mrb[0].mxu0 %v1398
    %v1508 = vpop.f32.mrb[0].mxu0
    %v1509 = vadd.f32 0.0, %v1508
    %v1510 = vpop.f32.mrb[0].mxu0
    %v1511 = vpop.f32.mrb[0].mxu0
    %v1512 = vadd.f32 0.0, %v1511
    %v1513 = vpop.f32.mrb[0].mxu0
    %1514 = vmatprep.mubr.bf16.mxu0 0
    %1515 = vmatmul.mubr.bf16.gmra.mrb[0].mxu0 %v1399
    %v1516 = vpop.f32.mrb[0].mxu0
    %v1517 = vadd.f32 0.0, %v1516
    %v1518 = vpop.f32.mrb[0].mxu0
    %v1519 = vpop.f32.mrb[0].mxu0
    %v1520 = vadd.f32 0.0, %v1519
    %v1521 = vpop.f32.mrb[0].mxu0
    %1522 = vmatprep.mubr.bf16.mxu0 0
    %1523 = vmatmul.mubr.bf16.gmra.mrb[0].mxu0 %v1400
    %v1524 = vpop.f32.mrb[0].mxu0
    %v1525 = vadd.f32 0.0, %v1524
    %v1526 = vpop.f32.mrb[0].mxu0
    %v1527 = vpop.f32.mrb[0].mxu0
    %v1528 = vadd.f32 0.0, %v1527
    %v1529 = vpop.f32.mrb[0].mxu0
    %1530 = vmatprep.mubr.bf16.mxu0 0
    %1531 = vmatmul.mubr.bf16.gmra.mrb[0].mxu0 %v1401
    %v1532 = vpop.f32.mrb[0].mxu0
    %v1533 = vadd.f32 0.0, %v1532
    %v1534 = vpop.f32.mrb[0].mxu0
    %v1535 = vpop.f32.mrb[0].mxu0
    %v1536 = vadd.f32 0.0, %v1535
    %v1537 = vpop.f32.mrb[0].mxu0
    %1538 = vmatprep.mubr.bf16.mxu0 0
    %1539 = vmatmul.mubr.bf16.gmra.mrb[0].mxu0 %v1402
    %v1540 = vpop.f32.mrb[0].mxu0
    %v1541 = vadd.f32 0.0, %v1540
    %v1542 = vpop.f32.mrb[0].mxu0
    %v1543 = vpop.f32.mrb[0].mxu0
    %v1544 = vadd.f32 0.0, %v1543
    %v1545 = vpop.f32.mrb[0].mxu0
    %1546 = vmatprep.mubr.bf16.mxu0 0
    %1547 = vmatmul.mubr.bf16.gmra.mrb[0].mxu0 %v1403
    %v1548 = vpop.f32.mrb[0].mxu0
    %v1549 = vadd.f32 0.0, %v1548
    %v1550 = vpop.f32.mrb[0].mxu0
    %v1551 = vpop.f32.mrb[0].mxu0
    %v1552 = vadd.f32 0.0, %v1551
    %v1553 = vpop.f32.mrb[0].mxu0
    %1554 = vmatprep.mubr.bf16.mxu0 0
    %1555 = vmatmul.mubr.bf16.gmra.mrb[0].mxu0 %v1404
    %v1556 = vpop.f32.mrb[0].mxu0
    %v1557 = vadd.f32 0.0, %v1556
    %v1558 = vpop.f32.mrb[0].mxu0
    %v1559 = vpop.f32.mrb[0].mxu0
    %v1560 = vadd.f32 0.0, %v1559
    %v1561 = vpop.f32.mrb[0].mxu0
    %1562 = vmatprep.mubr.bf16.mxu0 0
    %1563 = vmatmul.mubr.bf16.gmra.mrb[0].mxu0 %v1405
    %v1564 = vpop.f32.mrb[0].mxu0
    %v1565 = vadd.f32 0.0, %v1564
    %v1566 = vpop.f32.mrb[0].mxu0
    %v1567 = vpop.f32.mrb[0].mxu0
    %v1568 = vadd.f32 0.0, %v1567
    %v1569 = vpop.f32.mrb[0].mxu0
    %1570 = vmatprep.mubr.bf16.mxu0 0
    %1571 = vmatmul.mubr.bf16.gmra.mrb[0].mxu0 %v1406
    %v1572 = vpop.f32.mrb[0].mxu0
    %v1573 = vadd.f32 0.0, %v1572
    %v1574 = vpop.f32.mrb[0].mxu0
    %v1575 = vpop.f32.mrb[0].mxu0
    %v1576 = vadd.f32 0.0, %v1575
    %v1577 = vpop.f32.mrb[0].mxu0
    %1578 = vmatprep.mubr.bf16.mxu0 0
    %1579 = vmatmul.mubr.bf16.gmra.mrb[0].mxu0 %v1407
    %v1580 = vpop.f32.mrb[0].mxu0
    %v1581 = vadd.f32 0.0, %v1580
    %v1582 = vpop.f32.mrb[0].mxu0
    %v1583 = vpop.f32.mrb[0].mxu0
    %v1584 = vadd.f32 0.0, %v1583
    %v1585 = vpop.f32.mrb[0].mxu0
    %1586 = vmatprep.mubr.bf16.mxu0 0
    %1587 = vmatmul.mubr.bf16.gmra.mrb[0].mxu0 %v1408
    %v1588 = vpop.f32.mrb[0].mxu0
    %v1589 = vadd.f32 0.0, %v1588
    %v1590 = vpop.f32.mrb[0].mxu0
    %v1591 = vpop.f32.mrb[0].mxu0
    %v1592 = vadd.f32 0.0, %v1591
    %v1593 = vpop.f32.mrb[0].mxu0
    %1594 = vmatprep.mubr.bf16.mxu0 0
    %1595 = vmatmul.mubr.bf16.gmra.mrb[0].mxu0 %v1409
    %v1596 = vpop.f32.mrb[0].mxu0
    %v1597 = vadd.f32 0.0, %v1596
    %v1598 = vpop.f32.mrb[0].mxu0
    %v1599 = vpop.f32.mrb[0].mxu0
    %v1600 = vadd.f32 0.0, %v1599
    %v1601 = vpop.f32.mrb[0].mxu0
    %1602 = vmatprep.mubr.bf16.mxu0 0
    %1603 = vmatmul.mubr.bf16.gmra.mrb[0].mxu0 %v1410
    %v1604 = vpop.f32.mrb[0].mxu0
    %v1605 = vadd.f32 0.0, %v1604
    %v1606 = vpop.f32.mrb[0].mxu0
    %v1607 = vpop.f32.mrb[0].mxu0
    %v1608 = vadd.f32 0.0, %v1607
    %v1609 = vpop.f32.mrb[0].mxu0
    %1610 = vmatprep.mubr.bf16.mxu0 0
    %1611 = vmatmul.mubr.bf16.gmra.mrb[0].mxu0 %v1411
    %v1612 = vpop.f32.mrb[0].mxu0
    %v1613 = vadd.f32 0.0, %v1612
    %v1614 = vpop.f32.mrb[0].mxu0
    %v1615 = vpop.f32.mrb[0].mxu0
    %v1616 = vadd.f32 0.0, %v1615
    %v1617 = vpop.f32.mrb[0].mxu0
    %1618 = vmatprep.mubr.bf16.mxu0 0
    %1619 = vmatmul.mubr.bf16.gmra.mrb[0].mxu0 %v1412
    %v1620 = vpop.f32.mrb[0].mxu0
    %v1621 = vadd.f32 0.0, %v1620
    %v1622 = vpop.f32.mrb[0].mxu0
    %v1623 = vpop.f32.mrb[0].mxu0
    %v1624 = vadd.f32 0.0, %v1623
    %v1625 = vpop.f32.mrb[0].mxu0
    %1626 = vmatprep.mubr.bf16.mxu0 0
    %1627 = vmatmul.mubr.bf16.gmra.mrb[0].mxu0 %v1413
    %v1628 = vpop.f32.mrb[0].mxu0
    %v1629 = vadd.f32 0.0, %v1628
    %v1630 = vpop.f32.mrb[0].mxu0
    %v1631 = vpop.f32.mrb[0].mxu0
    %v1632 = vadd.f32 0.0, %v1631
    %v1633 = vpop.f32.mrb[0].mxu0
    %1634 = vmatprep.mubr.bf16.mxu0 0
    %1635 = vmatmul.mubr.bf16.gmra.mrb[0].mxu0 %v1414
    %v1636 = vpop.f32.mrb[0].mxu0
    %v1637 = vadd.f32 0.0, %v1636
    %v1638 = vpop.f32.mrb[0].mxu0
    %v1639 = vpop.f32.mrb[0].mxu0
    %v1640 = vadd.f32 0.0, %v1639
    %v1641 = vpop.f32.mrb[0].mxu0
    %1642 = vmatprep.mubr.bf16.mxu0 0
    %1643 = vmatmul.mubr.bf16.gmra.mrb[0].mxu0 %v1415
    %v1644 = vpop.f32.mrb[0].mxu0
    %v1645 = vadd.f32 0.0, %v1644
    %v1646 = vpop.f32.mrb[0].mxu0
    %v1647 = vpop.f32.mrb[0].mxu0
    %v1648 = vadd.f32 0.0, %v1647
    %v1649 = vpop.f32.mrb[0].mxu0
    %1650 = vmatprep.mubr.bf16.mxu0 0
    %1651 = vmatmul.mubr.bf16.gmra.mrb[0].mxu0 %v1416
    %v1652 = vpop.f32.mrb[0].mxu0
    %v1653 = vadd.f32 0.0, %v1652
    %v1654 = vpop.f32.mrb[0].mxu0
    %v1655 = vpop.f32.mrb[0].mxu0
    %v1656 = vadd.f32 0.0, %v1655
    %v1657 = vpop.f32.mrb[0].mxu0
    %1658 = vmatprep.mubr.bf16.mxu0 0
    %1659 = vmatmul.mubr.bf16.gmra.mrb[0].mxu0 %v1417
    %v1660 = vpop.f32.mrb[0].mxu0
    %v1661 = vadd.f32 0.0, %v1660
    %v1662 = vpop.f32.mrb[0].mxu0
    %v1663 = vpop.f32.mrb[0].mxu0
    %v1664 = vadd.f32 0.0, %v1663
    %v1665 = vpop.f32.mrb[0].mxu0
    %1666 = vmatprep.mubr.bf16.mxu0 0
    %1667 = vmatmul.mubr.bf16.gmra.mrb[0].mxu0 %v1418
    %v1668 = vpop.f32.mrb[0].mxu0
    %v1669 = vadd.f32 0.0, %v1668
    %v1670 = vpop.f32.mrb[0].mxu0
    %v1671 = vpop.f32.mrb[0].mxu0
    %v1672 = vadd.f32 0.0, %v1671
    %v1673 = vpop.f32.mrb[0].mxu0
    %1674 = vmatprep.mubr.bf16.mxu0 0
    %1675 = vmatmul.mubr.bf16.gmra.mrb[0].mxu0 %v1419
    %v1676 = vpop.f32.mrb[0].mxu0
    %v1677 = vadd.f32 0.0, %v1676
    %v1678 = vpop.f32.mrb[0].mxu0
    %v1679 = vpop.f32.mrb[0].mxu0
    %v1680 = vadd.f32 0.0, %v1679
    %v1681 = vpop.f32.mrb[0].mxu0
    %1682 = vmatprep.mubr.bf16.mxu0 0
    %1683 = vmatmul.mubr.bf16.gmra.mrb[0].mxu0 %v1420
    %v1684 = vpop.f32.mrb[0].mxu0
    %v1685 = vadd.f32 0.0, %v1684
    %v1686 = vpop.f32.mrb[0].mxu0
    %v1687 = vpop.f32.mrb[0].mxu0
    %v1688 = vadd.f32 0.0, %v1687
    %v1689 = vpop.f32.mrb[0].mxu0
    %1690 = vmatprep.mubr.bf16.mxu0 0
    %1691 = vmatmul.mubr.bf16.gmra.mrb[0].mxu0 %v1421
    %v1692 = vpop.f32.mrb[0].mxu0
    %v1693 = vadd.f32 0.0, %v1692
    %v1694 = vpop.f32.mrb[0].mxu0
    %v1695 = vpop.f32.mrb[0].mxu0
    %v1696 = vadd.f32 0.0, %v1695
    %v1697 = vpop.f32.mrb[0].mxu0
    %1698 = vmatprep.mubr.bf16.mxu0 0
    %1699 = vmatmul.mubr.bf16.gmra.mrb[0].mxu0 %v1422
    %v1700 = vpop.f32.mrb[0].mxu0
    %v1701 = vadd.f32 0.0, %v1700
    %v1702 = vpop.f32.mrb[0].mxu0
    %v1703 = vpop.f32.mrb[0].mxu0
    %v1704 = vadd.f32 0.0, %v1703
    %v1705 = vpop.f32.mrb[0].mxu0
    %1706 = vmatprep.mubr.bf16.mxu0 0
    %1707 = vmatmul.mubr.bf16.gmra.mrb[0].mxu0 %v1423
    %v1708 = vpop.f32.mrb[0].mxu0
    %v1709 = vadd.f32 0.0, %v1708
    %v1710 = vpop.f32.mrb[0].mxu0
    %v1711 = vpop.f32.mrb[0].mxu0
    %v1712 = vadd.f32 0.0, %v1711
    %v1713 = vpop.f32.mrb[0].mxu0
    %1714 = vmatprep.mubr.bf16.mxu0 0
    %1715 = vmatmul.mubr.bf16.gmra.mrb[0].mxu0 %v1424
    %v1716 = vpop.f32.mrb[0].mxu0
    %v1717 = vadd.f32 0.0, %v1716
    %v1718 = vpop.f32.mrb[0].mxu0
    %v1719 = vpop.f32.mrb[0].mxu0
    %v1720 = vadd.f32 0.0, %v1719
    %v1721 = vpop.f32.mrb[0].mxu0
    %1722 = vdwg.mxu0
    %v1723 = vadd.f32 %v1075, %v1469
    %v1724 = vadd.f32 %v1078, %v1472
    %v1725 = vadd.f32 %v1083, %v1477
    %v1726 = vadd.f32 %v1086, %v1480
    %v1727 = vadd.f32 %v1091, %v1485
    %v1728 = vadd.f32 %v1094, %v1488
    %v1729 = vadd.f32 %v1099, %v1493
    %v1730 = vadd.f32 %v1102, %v1496
    %v1731 = vadd.f32 %v1107, %v1501
    %v1732 = vadd.f32 %v1110, %v1504
    %v1733 = vadd.f32 %v1115, %v1509
    %v1734 = vadd.f32 %v1118, %v1512
    %v1735 = vadd.f32 %v1123, %v1517
    %v1736 = vadd.f32 %v1126, %v1520
    %v1737 = vadd.f32 %v1131, %v1525
    %v1738 = vadd.f32 %v1134, %v1528
    %v1739 = vadd.f32 %v1139, %v1533
    %v1740 = vadd.f32 %v1142, %v1536
    %v1741 = vadd.f32 %v1147, %v1541
    %v1742 = vadd.f32 %v1150, %v1544
    %v1743 = vadd.f32 %v1155, %v1549
    %v1744 = vadd.f32 %v1158, %v1552
    %v1745 = vadd.f32 %v1163, %v1557
    %v1746 = vadd.f32 %v1166, %v1560
    %v1747 = vadd.f32 %v1171, %v1565
    %v1748 = vadd.f32 %v1174, %v1568
    %v1749 = vadd.f32 %v1179, %v1573
    %v1750 = vadd.f32 %v1182, %v1576
    %v1751 = vadd.f32 %v1187, %v1581
    %v1752 = vadd.f32 %v1190, %v1584
    %v1753 = vadd.f32 %v1195, %v1589
    %v1754 = vadd.f32 %v1198, %v1592
    %v1755 = vadd.f32 %v1203, %v1597
    %v1756 = vadd.f32 %v1206, %v1600
    %v1757 = vadd.f32 %v1211, %v1605
    %v1758 = vadd.f32 %v1214, %v1608
    %v1759 = vadd.f32 %v1219, %v1613
    %v1760 = vadd.f32 %v1222, %v1616
    %v1761 = vadd.f32 %v1227, %v1621
    %v1762 = vadd.f32 %v1230, %v1624
    %v1763 = vadd.f32 %v1235, %v1629
    %v1764 = vadd.f32 %v1238, %v1632
    %v1765 = vadd.f32 %v1243, %v1637
    %v1766 = vadd.f32 %v1246, %v1640
    %v1767 = vadd.f32 %v1251, %v1645
    %v1768 = vadd.f32 %v1254, %v1648
    %v1769 = vadd.f32 %v1259, %v1653
    %v1770 = vadd.f32 %v1262, %v1656
    %v1771 = vadd.f32 %v1267, %v1661
    %v1772 = vadd.f32 %v1270, %v1664
    %v1773 = vadd.f32 %v1275, %v1669
    %v1774 = vadd.f32 %v1278, %v1672
    %v1775 = vadd.f32 %v1283, %v1677
    %v1776 = vadd.f32 %v1286, %v1680
    %v1777 = vadd.f32 %v1291, %v1685
    %v1778 = vadd.f32 %v1294, %v1688
    %v1779 = vadd.f32 %v1299, %v1693
    %v1780 = vadd.f32 %v1302, %v1696
    %v1781 = vadd.f32 %v1307, %v1701
    %v1782 = vadd.f32 %v1310, %v1704
    %v1783 = vadd.f32 %v1315, %v1709
    %v1784 = vadd.f32 %v1318, %v1712
    %v1785 = vadd.f32 %v1323, %v1717
    %v1786 = vadd.f32 %v1326, %v1720
    %v1787 = vld [vmem:[%s472] sm:$0xff]
    %v1788 = vld [vmem:[%s472 + $0x8] sm:$0xff]
    %v1789 = vld [vmem:[%s472 + $0x18] sm:$0xff]
    %v1790 = vld [vmem:[%s472 + $0x20] sm:$0xff]
    %v1791 = vld [vmem:[%s472 + $0x30] sm:$0xff]
    %v1792 = vld [vmem:[%s472 + $0x38] sm:$0xff]
    %v1793 = vld [vmem:[%s472 + $0x48] sm:$0xff]
    %v1794 = vld [vmem:[%s472 + $0x50] sm:$0xff]
    %v1795 = vld [vmem:[%s472 + $0x60] sm:$0xff]
    %v1796 = vld [vmem:[%s472 + $0x68] sm:$0xff]
    %v1797 = vld [vmem:[%s472 + $0x78] sm:$0xff]
    %v1798 = vld [vmem:[%s472 + $0x80] sm:$0xff]
    %v1799 = vld [vmem:[%s472 + $0x90] sm:$0xff]
    %v1800 = vld [vmem:[%s472 + $0x98] sm:$0xff]
    %v1801 = vld [vmem:[%s472 + $0xa8] sm:$0xff]
    %v1802 = vld [vmem:[%s472 + $0xb0] sm:$0xff]
    %v1803 = vld [vmem:[%s472 + $0xc0] sm:$0xff]
    %v1804 = vld [vmem:[%s472 + $0xc8] sm:$0xff]
    %v1805 = vld [vmem:[%s472 + $0xd8] sm:$0xff]
    %v1806 = vld [vmem:[%s472 + $0xe0] sm:$0xff]
    %v1807 = vld [vmem:[%s472 + $0xf0] sm:$0xff]
    %v1808 = vld [vmem:[%s472 + $0xf8] sm:$0xff]
    %v1809 = vld [vmem:[%s472 + $0x108] sm:$0xff]
    %v1810 = vld [vmem:[%s472 + $0x110] sm:$0xff]
    %v1811 = vld [vmem:[%s472 + $0x120] sm:$0xff]
    %v1812 = vld [vmem:[%s472 + $0x128] sm:$0xff]
    %v1813 = vld [vmem:[%s472 + $0x138] sm:$0xff]
    %v1814 = vld [vmem:[%s472 + $0x140] sm:$0xff]
    %v1815 = vld [vmem:[%s472 + $0x150] sm:$0xff]
    %v1816 = vld [vmem:[%s472 + $0x158] sm:$0xff]
    %v1817 = vld [vmem:[%s472 + $0x168] sm:$0xff]
    %v1818 = vld [vmem:[%s472 + $0x170] sm:$0xff]
    %v1819 = vld [vmem:[%s472 + $0x1b0] sm:$0xff]
    %v1820 = vld [vmem:[%s472 + $0x1b8] sm:$0xff]
    %v1821 = vld [vmem:[%s472 + $0x1c8] sm:$0xff]
    %v1822 = vld [vmem:[%s472 + $0x1d0] sm:$0xff]
    %v1823 = vld [vmem:[%s472 + $0x1e0] sm:$0xff]
    %v1824 = vld [vmem:[%s472 + $0x1e8] sm:$0xff]
    %v1825 = vld [vmem:[%s472 + $0x1f8] sm:$0xff]
    %v1826 = vld [vmem:[%s472 + $0x200] sm:$0xff]
    %v1827 = vld [vmem:[%s472 + $0x210] sm:$0xff]
    %v1828 = vld [vmem:[%s472 + $0x218] sm:$0xff]
    %v1829 = vld [vmem:[%s472 + $0x228] sm:$0xff]
    %v1830 = vld [vmem:[%s472 + $0x230] sm:$0xff]
    %v1831 = vld [vmem:[%s472 + $0x240] sm:$0xff]
    %v1832 = vld [vmem:[%s472 + $0x248] sm:$0xff]
    %v1833 = vld [vmem:[%s472 + $0x258] sm:$0xff]
    %v1834 = vld [vmem:[%s472 + $0x260] sm:$0xff]
    %v1835 = vld [vmem:[%s472 + $0x270] sm:$0xff]
    %v1836 = vld [vmem:[%s472 + $0x278] sm:$0xff]
    %v1837 = vld [vmem:[%s472 + $0x288] sm:$0xff]
    %v1838 = vld [vmem:[%s472 + $0x290] sm:$0xff]
    %v1839 = vld [vmem:[%s472 + $0x2a0] sm:$0xff]
    %v1840 = vld [vmem:[%s472 + $0x2a8] sm:$0xff]
    %v1841 = vld [vmem:[%s472 + $0x2b8] sm:$0xff]
    %v1842 = vld [vmem:[%s472 + $0x2c0] sm:$0xff]
    %v1843 = vld [vmem:[%s472 + $0x2d0] sm:$0xff]
    %v1844 = vld [vmem:[%s472 + $0x2d8] sm:$0xff]
    %v1845 = vld [vmem:[%s472 + $0x2e8] sm:$0xff]
    %v1846 = vld [vmem:[%s472 + $0x2f0] sm:$0xff]
    %v1847 = vld [vmem:[%s472 + $0x300] sm:$0xff]
    %v1848 = vld [vmem:[%s472 + $0x308] sm:$0xff]
    %v1849 = vld [vmem:[%s472 + $0x318] sm:$0xff]
    %v1850 = vld [vmem:[%s472 + $0x320] sm:$0xff]
    %v1851 = vpack.c.bf16 %v1788, %v1787
    %v1852 = vpack.c.bf16 %v1790, %v1789
    %v1853 = vpack.c.bf16 %v1792, %v1791
    %v1854 = vpack.c.bf16 %v1794, %v1793
    %v1855 = vpack.c.bf16 %v1796, %v1795
    %v1856 = vpack.c.bf16 %v1798, %v1797
    %v1857 = vpack.c.bf16 %v1800, %v1799
    %v1858 = vpack.c.bf16 %v1802, %v1801
    %v1859 = vpack.c.bf16 %v1804, %v1803
    %v1860 = vpack.c.bf16 %v1806, %v1805
    %v1861 = vpack.c.bf16 %v1808, %v1807
    %v1862 = vpack.c.bf16 %v1810, %v1809
    %v1863 = vpack.c.bf16 %v1812, %v1811
    %v1864 = vpack.c.bf16 %v1814, %v1813
    %v1865 = vpack.c.bf16 %v1816, %v1815
    %v1866 = vpack.c.bf16 %v1818, %v1817
    %v1867 = vpack.c.bf16 %v1820, %v1819
    %v1868 = vpack.c.bf16 %v1822, %v1821
    %v1869 = vpack.c.bf16 %v1824, %v1823
    %v1870 = vpack.c.bf16 %v1826, %v1825
    %v1871 = vpack.c.bf16 %v1828, %v1827
    %v1872 = vpack.c.bf16 %v1830, %v1829
    %v1873 = vpack.c.bf16 %v1832, %v1831
    %v1874 = vpack.c.bf16 %v1834, %v1833
    %v1875 = vpack.c.bf16 %v1836, %v1835
    %v1876 = vpack.c.bf16 %v1838, %v1837
    %v1877 = vpack.c.bf16 %v1840, %v1839
    %v1878 = vpack.c.bf16 %v1842, %v1841
    %v1879 = vpack.c.bf16 %v1844, %v1843
    %v1880 = vpack.c.bf16 %v1846, %v1845
    %v1881 = vpack.c.bf16 %v1848, %v1847
    %v1882 = vpack.c.bf16 %v1850, %v1849
    %s1883 = scalar_lea.vmem [#allocation3], 192
    %v1884 = vld [vmem:[%s1883] sm:$0xff]
    %v1885 = vld [vmem:[%s1883 + $0x8] sm:$0xff]
    %v1886 = vld [vmem:[%s1883 + $0x10] sm:$0xff]
    %v1887 = vld [vmem:[%s1883 + $0x18] sm:$0xff]
    %v1888 = vld [vmem:[%s1883 + $0x20] sm:$0xff]
    %v1889 = vld [vmem:[%s1883 + $0x28] sm:$0xff]
    %v1890 = vld [vmem:[%s1883 + $0x30] sm:$0xff]
    %v1891 = vld [vmem:[%s1883 + $0x38] sm:$0xff]
    %1892 = vmatprep.subr.bf16.mxu0 0
    %1893 = vmatpush1.bf16.msra.mxu0 %v1884
    %1894 = vmatprep.subr.bf16.mxu0 0
    %1895 = vmatpush1.bf16.msra.mxu0 %v1885
    %1896 = vmatprep.subr.bf16.mxu0 0
    %1897 = vmatpush1.bf16.msra.mxu0 %v1886
    %1898 = vmatprep.subr.bf16.mxu0 0
    %1899 = vmatpush1.bf16.msra.mxu0 %v1887
    %1900 = vmatprep.subr.bf16.mxu0 0
    %1901 = vmatpush1.bf16.msra.mxu0 %v1888
    %1902 = vmatprep.subr.bf16.mxu0 0
    %1903 = vmatpush1.bf16.msra.mxu0 %v1889
    %1904 = vmatprep.subr.bf16.mxu0 0
    %1905 = vmatpush1.bf16.msra.mxu0 %v1890
    %1906 = vmatprep.subr.bf16.mxu0 0
    %1907 = vmatpush1.bf16.msra.mxu0 %v1891
    %1908 = vmatprep.subr.bf16.mxu0 0
    %1909 = vmatpush1.bf16.msra.mxu0 0
    %1910 = vmatprep.subr.bf16.mxu0 0
    %1911 = vmatpush1.bf16.msra.mxu0 0
    %1912 = vmatprep.subr.bf16.mxu0 0
    %1913 = vmatpush1.bf16.msra.mxu0 0
    %1914 = vmatprep.subr.bf16.mxu0 0
    %1915 = vmatpush1.bf16.msra.mxu0 0
    %1916 = vmatprep.subr.bf16.mxu0 0
    %1917 = vmatpush1.bf16.msra.mxu0 0
    %1918 = vmatprep.subr.bf16.mxu0 0
    %1919 = vmatpush1.bf16.msra.mxu0 0
    %1920 = vmatprep.subr.bf16.mxu0 0
    %1921 = vmatpush1.bf16.msra.mxu0 0
    %1922 = vmatprep.subr.bf16.mxu0 0
    %1923 = vmatpush1.bf16.msra.mxu0 0
    %1924 = vmatprep.mubr.bf16.mxu0 0
    %1925 = vmatmul.mubr.bf16.gmra.mrb[0].mxu0 %v1851
    %v1926 = vpop.f32.mrb[0].mxu0
    %v1927 = vadd.f32 0.0, %v1926
    %v1928 = vpop.f32.mrb[0].mxu0
    %v1929 = vpop.f32.mrb[0].mxu0
    %v1930 = vadd.f32 0.0, %v1929
    %v1931 = vpop.f32.mrb[0].mxu0
    %1932 = vmatprep.mubr.bf16.mxu0 0
    %1933 = vmatmul.mubr.bf16.gmra.mrb[0].mxu0 %v1852
    %v1934 = vpop.f32.mrb[0].mxu0
    %v1935 = vadd.f32 0.0, %v1934
    %v1936 = vpop.f32.mrb[0].mxu0
    %v1937 = vpop.f32.mrb[0].mxu0
    %v1938 = vadd.f32 0.0, %v1937
    %v1939 = vpop.f32.mrb[0].mxu0
    %1940 = vmatprep.mubr.bf16.mxu0 0
    %1941 = vmatmul.mubr.bf16.gmra.mrb[0].mxu0 %v1853
    %v1942 = vpop.f32.mrb[0].mxu0
    %v1943 = vadd.f32 0.0, %v1942
    %v1944 = vpop.f32.mrb[0].mxu0
    %v1945 = vpop.f32.mrb[0].mxu0
    %v1946 = vadd.f32 0.0, %v1945
    %v1947 = vpop.f32.mrb[0].mxu0
    %1948 = vmatprep.mubr.bf16.mxu0 0
    %1949 = vmatmul.mubr.bf16.gmra.mrb[0].mxu0 %v1854
    %v1950 = vpop.f32.mrb[0].mxu0
    %v1951 = vadd.f32 0.0, %v1950
    %v1952 = vpop.f32.mrb[0].mxu0
    %v1953 = vpop.f32.mrb[0].mxu0
    %v1954 = vadd.f32 0.0, %v1953
    %v1955 = vpop.f32.mrb[0].mxu0
    %1956 = vmatprep.mubr.bf16.mxu0 0
    %1957 = vmatmul.mubr.bf16.gmra.mrb[0].mxu0 %v1855
    %v1958 = vpop.f32.mrb[0].mxu0
    %v1959 = vadd.f32 0.0, %v1958
    %v1960 = vpop.f32.mrb[0].mxu0
    %v1961 = vpop.f32.mrb[0].mxu0
    %v1962 = vadd.f32 0.0, %v1961
    %v1963 = vpop.f32.mrb[0].mxu0
    %1964 = vmatprep.mubr.bf16.mxu0 0
    %1965 = vmatmul.mubr.bf16.gmra.mrb[0].mxu0 %v1856
    %v1966 = vpop.f32.mrb[0].mxu0
    %v1967 = vadd.f32 0.0, %v1966
    %v1968 = vpop.f32.mrb[0].mxu0
    %v1969 = vpop.f32.mrb[0].mxu0
    %v1970 = vadd.f32 0.0, %v1969
    %v1971 = vpop.f32.mrb[0].mxu0
    %1972 = vmatprep.mubr.bf16.mxu0 0
    %1973 = vmatmul.mubr.bf16.gmra.mrb[0].mxu0 %v1857
    %v1974 = vpop.f32.mrb[0].mxu0
    %v1975 = vadd.f32 0.0, %v1974
    %v1976 = vpop.f32.mrb[0].mxu0
    %v1977 = vpop.f32.mrb[0].mxu0
    %v1978 = vadd.f32 0.0, %v1977
    %v1979 = vpop.f32.mrb[0].mxu0
    %1980 = vmatprep.mubr.bf16.mxu0 0
    %1981 = vmatmul.mubr.bf16.gmra.mrb[0].mxu0 %v1858
    %v1982 = vpop.f32.mrb[0].mxu0
    %v1983 = vadd.f32 0.0, %v1982
    %v1984 = vpop.f32.mrb[0].mxu0
    %v1985 = vpop.f32.mrb[0].mxu0
    %v1986 = vadd.f32 0.0, %v1985
    %v1987 = vpop.f32.mrb[0].mxu0
    %1988 = vmatprep.mubr.bf16.mxu0 0
    %1989 = vmatmul.mubr.bf16.gmra.mrb[0].mxu0 %v1859
    %v1990 = vpop.f32.mrb[0].mxu0
    %v1991 = vadd.f32 0.0, %v1990
    %v1992 = vpop.f32.mrb[0].mxu0
    %v1993 = vpop.f32.mrb[0].mxu0
    %v1994 = vadd.f32 0.0, %v1993
    %v1995 = vpop.f32.mrb[0].mxu0
    %1996 = vmatprep.mubr.bf16.mxu0 0
    %1997 = vmatmul.mubr.bf16.gmra.mrb[0].mxu0 %v1860
    %v1998 = vpop.f32.mrb[0].mxu0
    %v1999 = vadd.f32 0.0, %v1998
    %v2000 = vpop.f32.mrb[0].mxu0
    %v2001 = vpop.f32.mrb[0].mxu0
    %v2002 = vadd.f32 0.0, %v2001
    %v2003 = vpop.f32.mrb[0].mxu0
    %2004 = vmatprep.mubr.bf16.mxu0 0
    %2005 = vmatmul.mubr.bf16.gmra.mrb[0].mxu0 %v1861
    %v2006 = vpop.f32.mrb[0].mxu0
    %v2007 = vadd.f32 0.0, %v2006
    %v2008 = vpop.f32.mrb[0].mxu0
    %v2009 = vpop.f32.mrb[0].mxu0
    %v2010 = vadd.f32 0.0, %v2009
    %v2011 = vpop.f32.mrb[0].mxu0
    %2012 = vmatprep.mubr.bf16.mxu0 0
    %2013 = vmatmul.mubr.bf16.gmra.mrb[0].mxu0 %v1862
    %v2014 = vpop.f32.mrb[0].mxu0
    %v2015 = vadd.f32 0.0, %v2014
    %v2016 = vpop.f32.mrb[0].mxu0
    %v2017 = vpop.f32.mrb[0].mxu0
    %v2018 = vadd.f32 0.0, %v2017
    %v2019 = vpop.f32.mrb[0].mxu0
    %2020 = vmatprep.mubr.bf16.mxu0 0
    %2021 = vmatmul.mubr.bf16.gmra.mrb[0].mxu0 %v1863
    %v2022 = vpop.f32.mrb[0].mxu0
    %v2023 = vadd.f32 0.0, %v2022
    %v2024 = vpop.f32.mrb[0].mxu0
    %v2025 = vpop.f32.mrb[0].mxu0
    %v2026 = vadd.f32 0.0, %v2025
    %v2027 = vpop.f32.mrb[0].mxu0
    %2028 = vmatprep.mubr.bf16.mxu0 0
    %2029 = vmatmul.mubr.bf16.gmra.mrb[0].mxu0 %v1864
    %v2030 = vpop.f32.mrb[0].mxu0
    %v2031 = vadd.f32 0.0, %v2030
    %v2032 = vpop.f32.mrb[0].mxu0
    %v2033 = vpop.f32.mrb[0].mxu0
    %v2034 = vadd.f32 0.0, %v2033
    %v2035 = vpop.f32.mrb[0].mxu0
    %2036 = vmatprep.mubr.bf16.mxu0 0
    %2037 = vmatmul.mubr.bf16.gmra.mrb[0].mxu0 %v1865
    %v2038 = vpop.f32.mrb[0].mxu0
    %v2039 = vadd.f32 0.0, %v2038
    %v2040 = vpop.f32.mrb[0].mxu0
    %v2041 = vpop.f32.mrb[0].mxu0
    %v2042 = vadd.f32 0.0, %v2041
    %v2043 = vpop.f32.mrb[0].mxu0
    %2044 = vmatprep.mubr.bf16.mxu0 0
    %2045 = vmatmul.mubr.bf16.gmra.mrb[0].mxu0 %v1866
    %v2046 = vpop.f32.mrb[0].mxu0
    %v2047 = vadd.f32 0.0, %v2046
    %v2048 = vpop.f32.mrb[0].mxu0
    %v2049 = vpop.f32.mrb[0].mxu0
    %v2050 = vadd.f32 0.0, %v2049
    %v2051 = vpop.f32.mrb[0].mxu0
    %2052 = vmatprep.mubr.bf16.mxu0 0
    %2053 = vmatmul.mubr.bf16.gmra.mrb[0].mxu0 %v1867
    %v2054 = vpop.f32.mrb[0].mxu0
    %v2055 = vadd.f32 0.0, %v2054
    %v2056 = vpop.f32.mrb[0].mxu0
    %v2057 = vpop.f32.mrb[0].mxu0
    %v2058 = vadd.f32 0.0, %v2057
    %v2059 = vpop.f32.mrb[0].mxu0
    %2060 = vmatprep.mubr.bf16.mxu0 0
    %2061 = vmatmul.mubr.bf16.gmra.mrb[0].mxu0 %v1868
    %v2062 = vpop.f32.mrb[0].mxu0
    %v2063 = vadd.f32 0.0, %v2062
    %v2064 = vpop.f32.mrb[0].mxu0
    %v2065 = vpop.f32.mrb[0].mxu0
    %v2066 = vadd.f32 0.0, %v2065
    %v2067 = vpop.f32.mrb[0].mxu0
    %2068 = vmatprep.mubr.bf16.mxu0 0
    %2069 = vmatmul.mubr.bf16.gmra.mrb[0].mxu0 %v1869
    %v2070 = vpop.f32.mrb[0].mxu0
    %v2071 = vadd.f32 0.0, %v2070
    %v2072 = vpop.f32.mrb[0].mxu0
    %v2073 = vpop.f32.mrb[0].mxu0
    %v2074 = vadd.f32 0.0, %v2073
    %v2075 = vpop.f32.mrb[0].mxu0
    %2076 = vmatprep.mubr.bf16.mxu0 0
    %2077 = vmatmul.mubr.bf16.gmra.mrb[0].mxu0 %v1870
    %v2078 = vpop.f32.mrb[0].mxu0
    %v2079 = vadd.f32 0.0, %v2078
    %v2080 = vpop.f32.mrb[0].mxu0
    %v2081 = vpop.f32.mrb[0].mxu0
    %v2082 = vadd.f32 0.0, %v2081
    %v2083 = vpop.f32.mrb[0].mxu0
    %2084 = vmatprep.mubr.bf16.mxu0 0
    %2085 = vmatmul.mubr.bf16.gmra.mrb[0].mxu0 %v1871
    %v2086 = vpop.f32.mrb[0].mxu0
    %v2087 = vadd.f32 0.0, %v2086
    %v2088 = vpop.f32.mrb[0].mxu0
    %v2089 = vpop.f32.mrb[0].mxu0
    %v2090 = vadd.f32 0.0, %v2089
    %v2091 = vpop.f32.mrb[0].mxu0
    %2092 = vmatprep.mubr.bf16.mxu0 0
    %2093 = vmatmul.mubr.bf16.gmra.mrb[0].mxu0 %v1872
    %v2094 = vpop.f32.mrb[0].mxu0
    %v2095 = vadd.f32 0.0, %v2094
    %v2096 = vpop.f32.mrb[0].mxu0
    %v2097 = vpop.f32.mrb[0].mxu0
    %v2098 = vadd.f32 0.0, %v2097
    %v2099 = vpop.f32.mrb[0].mxu0
    %2100 = vmatprep.mubr.bf16.mxu0 0
    %2101 = vmatmul.mubr.bf16.gmra.mrb[0].mxu0 %v1873
    %v2102 = vpop.f32.mrb[0].mxu0
    %v2103 = vadd.f32 0.0, %v2102
    %v2104 = vpop.f32.mrb[0].mxu0
    %v2105 = vpop.f32.mrb[0].mxu0
    %v2106 = vadd.f32 0.0, %v2105
    %v2107 = vpop.f32.mrb[0].mxu0
    %2108 = vmatprep.mubr.bf16.mxu0 0
    %2109 = vmatmul.mubr.bf16.gmra.mrb[0].mxu0 %v1874
    %v2110 = vpop.f32.mrb[0].mxu0
    %v2111 = vadd.f32 0.0, %v2110
    %v2112 = vpop.f32.mrb[0].mxu0
    %v2113 = vpop.f32.mrb[0].mxu0
    %v2114 = vadd.f32 0.0, %v2113
    %v2115 = vpop.f32.mrb[0].mxu0
    %2116 = vmatprep.mubr.bf16.mxu0 0
    %2117 = vmatmul.mubr.bf16.gmra.mrb[0].mxu0 %v1875
    %v2118 = vpop.f32.mrb[0].mxu0
    %v2119 = vadd.f32 0.0, %v2118
    %v2120 = vpop.f32.mrb[0].mxu0
    %v2121 = vpop.f32.mrb[0].mxu0
    %v2122 = vadd.f32 0.0, %v2121
    %v2123 = vpop.f32.mrb[0].mxu0
    %2124 = vmatprep.mubr.bf16.mxu0 0
    %2125 = vmatmul.mubr.bf16.gmra.mrb[0].mxu0 %v1876
    %v2126 = vpop.f32.mrb[0].mxu0
    %v2127 = vadd.f32 0.0, %v2126
    %v2128 = vpop.f32.mrb[0].mxu0
    %v2129 = vpop.f32.mrb[0].mxu0
    %v2130 = vadd.f32 0.0, %v2129
    %v2131 = vpop.f32.mrb[0].mxu0
    %2132 = vmatprep.mubr.bf16.mxu0 0
    %2133 = vmatmul.mubr.bf16.gmra.mrb[0].mxu0 %v1877
    %v2134 = vpop.f32.mrb[0].mxu0
    %v2135 = vadd.f32 0.0, %v2134
    %v2136 = vpop.f32.mrb[0].mxu0
    %v2137 = vpop.f32.mrb[0].mxu0
    %v2138 = vadd.f32 0.0, %v2137
    %v2139 = vpop.f32.mrb[0].mxu0
    %2140 = vmatprep.mubr.bf16.mxu0 0
    %2141 = vmatmul.mubr.bf16.gmra.mrb[0].mxu0 %v1878
    %v2142 = vpop.f32.mrb[0].mxu0
    %v2143 = vadd.f32 0.0, %v2142
    %v2144 = vpop.f32.mrb[0].mxu0
    %v2145 = vpop.f32.mrb[0].mxu0
    %v2146 = vadd.f32 0.0, %v2145
    %v2147 = vpop.f32.mrb[0].mxu0
    %2148 = vmatprep.mubr.bf16.mxu0 0
    %2149 = vmatmul.mubr.bf16.gmra.mrb[0].mxu0 %v1879
    %v2150 = vpop.f32.mrb[0].mxu0
    %v2151 = vadd.f32 0.0, %v2150
    %v2152 = vpop.f32.mrb[0].mxu0
    %v2153 = vpop.f32.mrb[0].mxu0
    %v2154 = vadd.f32 0.0, %v2153
    %v2155 = vpop.f32.mrb[0].mxu0
    %2156 = vmatprep.mubr.bf16.mxu0 0
    %2157 = vmatmul.mubr.bf16.gmra.mrb[0].mxu0 %v1880
    %v2158 = vpop.f32.mrb[0].mxu0
    %v2159 = vadd.f32 0.0, %v2158
    %v2160 = vpop.f32.mrb[0].mxu0
    %v2161 = vpop.f32.mrb[0].mxu0
    %v2162 = vadd.f32 0.0, %v2161
    %v2163 = vpop.f32.mrb[0].mxu0
    %2164 = vmatprep.mubr.bf16.mxu0 0
    %2165 = vmatmul.mubr.bf16.gmra.mrb[0].mxu0 %v1881
    %v2166 = vpop.f32.mrb[0].mxu0
    %v2167 = vadd.f32 0.0, %v2166
    %v2168 = vpop.f32.mrb[0].mxu0
    %v2169 = vpop.f32.mrb[0].mxu0
    %v2170 = vadd.f32 0.0, %v2169
    %v2171 = vpop.f32.mrb[0].mxu0
    %2172 = vmatprep.mubr.bf16.mxu0 0
    %2173 = vmatmul.mubr.bf16.gmra.mrb[0].mxu0 %v1882
    %v2174 = vpop.f32.mrb[0].mxu0
    %v2175 = vadd.f32 0.0, %v2174
    %v2176 = vpop.f32.mrb[0].mxu0
    %v2177 = vpop.f32.mrb[0].mxu0
    %v2178 = vadd.f32 0.0, %v2177
    %v2179 = vpop.f32.mrb[0].mxu0
    %2180 = vdwg.mxu0
    %v2181 = vadd.f32 %v1723, %v1927
    %v2182 = vadd.f32 %v1724, %v1930
    %v2183 = vadd.f32 %v1725, %v1935
    %v2184 = vadd.f32 %v1726, %v1938
    %v2185 = vadd.f32 %v1727, %v1943
    %v2186 = vadd.f32 %v1728, %v1946
    %v2187 = vadd.f32 %v1729, %v1951
    %v2188 = vadd.f32 %v1730, %v1954
    %v2189 = vadd.f32 %v1731, %v1959
    %v2190 = vadd.f32 %v1732, %v1962
    %v2191 = vadd.f32 %v1733, %v1967
    %v2192 = vadd.f32 %v1734, %v1970
    %v2193 = vadd.f32 %v1735, %v1975
    %v2194 = vadd.f32 %v1736, %v1978
    %v2195 = vadd.f32 %v1737, %v1983
    %v2196 = vadd.f32 %v1738, %v1986
    %v2197 = vadd.f32 %v1739, %v1991
    %v2198 = vadd.f32 %v1740, %v1994
    %v2199 = vadd.f32 %v1741, %v1999
    %v2200 = vadd.f32 %v1742, %v2002
    %v2201 = vadd.f32 %v1743, %v2007
    %v2202 = vadd.f32 %v1744, %v2010
    %v2203 = vadd.f32 %v1745, %v2015
    %v2204 = vadd.f32 %v1746, %v2018
    %v2205 = vadd.f32 %v1747, %v2023
    %v2206 = vadd.f32 %v1748, %v2026
    %v2207 = vadd.f32 %v1749, %v2031
    %v2208 = vadd.f32 %v1750, %v2034
    %v2209 = vadd.f32 %v1751, %v2039
    %v2210 = vadd.f32 %v1752, %v2042
    %v2211 = vadd.f32 %v1753, %v2047
    %v2212 = vadd.f32 %v1754, %v2050
    %v2213 = vadd.f32 %v1755, %v2055
    %v2214 = vadd.f32 %v1756, %v2058
    %v2215 = vadd.f32 %v1757, %v2063
    %v2216 = vadd.f32 %v1758, %v2066
    %v2217 = vadd.f32 %v1759, %v2071
    %v2218 = vadd.f32 %v1760, %v2074
    %v2219 = vadd.f32 %v1761, %v2079
    %v2220 = vadd.f32 %v1762, %v2082
    %v2221 = vadd.f32 %v1763, %v2087
    %v2222 = vadd.f32 %v1764, %v2090
    %v2223 = vadd.f32 %v1765, %v2095
    %v2224 = vadd.f32 %v1766, %v2098
    %v2225 = vadd.f32 %v1767, %v2103
    %v2226 = vadd.f32 %v1768, %v2106
    %v2227 = vadd.f32 %v1769, %v2111
    %v2228 = vadd.f32 %v1770, %v2114
    %v2229 = vadd.f32 %v1771, %v2119
    %v2230 = vadd.f32 %v1772, %v2122
    %v2231 = vadd.f32 %v1773, %v2127
    %v2232 = vadd.f32 %v1774, %v2130
    %v2233 = vadd.f32 %v1775, %v2135
    %v2234 = vadd.f32 %v1776, %v2138
    %v2235 = vadd.f32 %v1777, %v2143
    %v2236 = vadd.f32 %v1778, %v2146
    %v2237 = vadd.f32 %v1779, %v2151
    %v2238 = vadd.f32 %v1780, %v2154
    %v2239 = vadd.f32 %v1781, %v2159
    %v2240 = vadd.f32 %v1782, %v2162
    %v2241 = vadd.f32 %v1783, %v2167
    %v2242 = vadd.f32 %v1784, %v2170
    %v2243 = vadd.f32 %v1785, %v2175
    %v2244 = vadd.f32 %v1786, %v2178
    %v2245 = vld [vmem:[%s472 + $0x1] sm:$0xff]
    %v2246 = vld [vmem:[%s472 + $0x9] sm:$0xff]
    %v2247 = vld [vmem:[%s472 + $0x19] sm:$0xff]
    %v2248 = vld [vmem:[%s472 + $0x21] sm:$0xff]
    %v2249 = vld [vmem:[%s472 + $0x31] sm:$0xff]
    %v2250 = vld [vmem:[%s472 + $0x39] sm:$0xff]
    %v2251 = vld [vmem:[%s472 + $0x49] sm:$0xff]
    %v2252 = vld [vmem:[%s472 + $0x51] sm:$0xff]
    %v2253 = vld [vmem:[%s472 + $0x61] sm:$0xff]
    %v2254 = vld [vmem:[%s472 + $0x69] sm:$0xff]
    %v2255 = vld [vmem:[%s472 + $0x79] sm:$0xff]
    %v2256 = vld [vmem:[%s472 + $0x81] sm:$0xff]
    %v2257 = vld [vmem:[%s472 + $0x91] sm:$0xff]
    %v2258 = vld [vmem:[%s472 + $0x99] sm:$0xff]
    %v2259 = vld [vmem:[%s472 + $0xa9] sm:$0xff]
    %v2260 = vld [vmem:[%s472 + $0xb1] sm:$0xff]
    %v2261 = vld [vmem:[%s472 + $0xc1] sm:$0xff]
    %v2262 = vld [vmem:[%s472 + $0xc9] sm:$0xff]
    %v2263 = vld [vmem:[%s472 + $0xd9] sm:$0xff]
    %v2264 = vld [vmem:[%s472 + $0xe1] sm:$0xff]
    %v2265 = vld [vmem:[%s472 + $0xf1] sm:$0xff]
    %v2266 = vld [vmem:[%s472 + $0xf9] sm:$0xff]
    %v2267 = vld [vmem:[%s472 + $0x109] sm:$0xff]
    %v2268 = vld [vmem:[%s472 + $0x111] sm:$0xff]
    %v2269 = vld [vmem:[%s472 + $0x121] sm:$0xff]
    %v2270 = vld [vmem:[%s472 + $0x129] sm:$0xff]
    %v2271 = vld [vmem:[%s472 + $0x139] sm:$0xff]
    %v2272 = vld [vmem:[%s472 + $0x141] sm:$0xff]
    %v2273 = vld [vmem:[%s472 + $0x151] sm:$0xff]
    %v2274 = vld [vmem:[%s472 + $0x159] sm:$0xff]
    %v2275 = vld [vmem:[%s472 + $0x169] sm:$0xff]
    %v2276 = vld [vmem:[%s472 + $0x171] sm:$0xff]
    %v2277 = vld [vmem:[%s472 + $0x1b1] sm:$0xff]
    %v2278 = vld [vmem:[%s472 + $0x1b9] sm:$0xff]
    %v2279 = vld [vmem:[%s472 + $0x1c9] sm:$0xff]
    %v2280 = vld [vmem:[%s472 + $0x1d1] sm:$0xff]
    %v2281 = vld [vmem:[%s472 + $0x1e1] sm:$0xff]
    %v2282 = vld [vmem:[%s472 + $0x1e9] sm:$0xff]
    %v2283 = vld [vmem:[%s472 + $0x1f9] sm:$0xff]
    %v2284 = vld [vmem:[%s472 + $0x201] sm:$0xff]
    %v2285 = vld [vmem:[%s472 + $0x211] sm:$0xff]
    %v2286 = vld [vmem:[%s472 + $0x219] sm:$0xff]
    %v2287 = vld [vmem:[%s472 + $0x229] sm:$0xff]
    %v2288 = vld [vmem:[%s472 + $0x231] sm:$0xff]
    %v2289 = vld [vmem:[%s472 + $0x241] sm:$0xff]
    %v2290 = vld [vmem:[%s472 + $0x249] sm:$0xff]
    %v2291 = vld [vmem:[%s472 + $0x259] sm:$0xff]
    %v2292 = vld [vmem:[%s472 + $0x261] sm:$0xff]
    %v2293 = vld [vmem:[%s472 + $0x271] sm:$0xff]
    %v2294 = vld [vmem:[%s472 + $0x279] sm:$0xff]
    %v2295 = vld [vmem:[%s472 + $0x289] sm:$0xff]
    %v2296 = vld [vmem:[%s472 + $0x291] sm:$0xff]
    %v2297 = vld [vmem:[%s472 + $0x2a1] sm:$0xff]
    %v2298 = vld [vmem:[%s472 + $0x2a9] sm:$0xff]
    %v2299 = vld [vmem:[%s472 + $0x2b9] sm:$0xff]
    %v2300 = vld [vmem:[%s472 + $0x2c1] sm:$0xff]
    %v2301 = vld [vmem:[%s472 + $0x2d1] sm:$0xff]
    %v2302 = vld [vmem:[%s472 + $0x2d9] sm:$0xff]
    %v2303 = vld [vmem:[%s472 + $0x2e9] sm:$0xff]
    %v2304 = vld [vmem:[%s472 + $0x2f1] sm:$0xff]
    %v2305 = vld [vmem:[%s472 + $0x301] sm:$0xff]
    %v2306 = vld [vmem:[%s472 + $0x309] sm:$0xff]
    %v2307 = vld [vmem:[%s472 + $0x319] sm:$0xff]
    %v2308 = vld [vmem:[%s472 + $0x321] sm:$0xff]
    %v2309 = vpack.c.bf16 %v2246, %v2245
    %v2310 = vpack.c.bf16 %v2248, %v2247
    %v2311 = vpack.c.bf16 %v2250, %v2249
    %v2312 = vpack.c.bf16 %v2252, %v2251
    %v2313 = vpack.c.bf16 %v2254, %v2253
    %v2314 = vpack.c.bf16 %v2256, %v2255
    %v2315 = vpack.c.bf16 %v2258, %v2257
    %v2316 = vpack.c.bf16 %v2260, %v2259
    %v2317 = vpack.c.bf16 %v2262, %v2261
    %v2318 = vpack.c.bf16 %v2264, %v2263
    %v2319 = vpack.c.bf16 %v2266, %v2265
    %v2320 = vpack.c.bf16 %v2268, %v2267
    %v2321 = vpack.c.bf16 %v2270, %v2269
    %v2322 = vpack.c.bf16 %v2272, %v2271
    %v2323 = vpack.c.bf16 %v2274, %v2273
    %v2324 = vpack.c.bf16 %v2276, %v2275
    %v2325 = vpack.c.bf16 %v2278, %v2277
    %v2326 = vpack.c.bf16 %v2280, %v2279
    %v2327 = vpack.c.bf16 %v2282, %v2281
    %v2328 = vpack.c.bf16 %v2284, %v2283
    %v2329 = vpack.c.bf16 %v2286, %v2285
    %v2330 = vpack.c.bf16 %v2288, %v2287
    %v2331 = vpack.c.bf16 %v2290, %v2289
    %v2332 = vpack.c.bf16 %v2292, %v2291
    %v2333 = vpack.c.bf16 %v2294, %v2293
    %v2334 = vpack.c.bf16 %v2296, %v2295
    %v2335 = vpack.c.bf16 %v2298, %v2297
    %v2336 = vpack.c.bf16 %v2300, %v2299
    %v2337 = vpack.c.bf16 %v2302, %v2301
    %v2338 = vpack.c.bf16 %v2304, %v2303
    %v2339 = vpack.c.bf16 %v2306, %v2305
    %v2340 = vpack.c.bf16 %v2308, %v2307
    %s2341 = scalar_lea.vmem [#allocation3], 256
    %v2342 = vld [vmem:[%s2341] sm:$0xff]
    %v2343 = vld [vmem:[%s2341 + $0x8] sm:$0xff]
    %v2344 = vld [vmem:[%s2341 + $0x10] sm:$0xff]
    %v2345 = vld [vmem:[%s2341 + $0x18] sm:$0xff]
    %v2346 = vld [vmem:[%s2341 + $0x20] sm:$0xff]
    %v2347 = vld [vmem:[%s2341 + $0x28] sm:$0xff]
    %v2348 = vld [vmem:[%s2341 + $0x30] sm:$0xff]
    %v2349 = vld [vmem:[%s2341 + $0x38] sm:$0xff]
    %2350 = vmatprep.subr.bf16.mxu0 0
    %2351 = vmatpush1.bf16.msra.mxu0 %v2342
    %2352 = vmatprep.subr.bf16.mxu0 0
    %2353 = vmatpush1.bf16.msra.mxu0 %v2343
    %2354 = vmatprep.subr.bf16.mxu0 0
    %2355 = vmatpush1.bf16.msra.mxu0 %v2344
    %2356 = vmatprep.subr.bf16.mxu0 0
    %2357 = vmatpush1.bf16.msra.mxu0 %v2345
    %2358 = vmatprep.subr.bf16.mxu0 0
    %2359 = vmatpush1.bf16.msra.mxu0 %v2346
    %2360 = vmatprep.subr.bf16.mxu0 0
    %2361 = vmatpush1.bf16.msra.mxu0 %v2347
    %2362 = vmatprep.subr.bf16.mxu0 0
    %2363 = vmatpush1.bf16.msra.mxu0 %v2348
    %2364 = vmatprep.subr.bf16.mxu0 0
    %2365 = vmatpush1.bf16.msra.mxu0 %v2349
    %2366 = vmatprep.subr.bf16.mxu0 0
    %2367 = vmatpush1.bf16.msra.mxu0 0
    %2368 = vmatprep.subr.bf16.mxu0 0
    %2369 = vmatpush1.bf16.msra.mxu0 0
    %2370 = vmatprep.subr.bf16.mxu0 0
    %2371 = vmatpush1.bf16.msra.mxu0 0
    %2372 = vmatprep.subr.bf16.mxu0 0
    %2373 = vmatpush1.bf16.msra.mxu0 0
    %2374 = vmatprep.subr.bf16.mxu0 0
    %2375 = vmatpush1.bf16.msra.mxu0 0
    %2376 = vmatprep.subr.bf16.mxu0 0
    %2377 = vmatpush1.bf16.msra.mxu0 0
    %2378 = vmatprep.subr.bf16.mxu0 0
    %2379 = vmatpush1.bf16.msra.mxu0 0
    %2380 = vmatprep.subr.bf16.mxu0 0
    %2381 = vmatpush1.bf16.msra.mxu0 0
    %2382 = vmatprep.mubr.bf16.mxu0 0
    %2383 = vmatmul.mubr.bf16.gmra.mrb[0].mxu0 %v2309
    %v2384 = vpop.f32.mrb[0].mxu0
    %v2385 = vadd.f32 0.0, %v2384
    %v2386 = vpop.f32.mrb[0].mxu0
    %v2387 = vpop.f32.mrb[0].mxu0
    %v2388 = vadd.f32 0.0, %v2387
    %v2389 = vpop.f32.mrb[0].mxu0
    %2390 = vmatprep.mubr.bf16.mxu0 0
    %2391 = vmatmul.mubr.bf16.gmra.mrb[0].mxu0 %v2310
    %v2392 = vpop.f32.mrb[0].mxu0
    %v2393 = vadd.f32 0.0, %v2392
    %v2394 = vpop.f32.mrb[0].mxu0
    %v2395 = vpop.f32.mrb[0].mxu0
    %v2396 = vadd.f32 0.0, %v2395
    %v2397 = vpop.f32.mrb[0].mxu0
    %2398 = vmatprep.mubr.bf16.mxu0 0
    %2399 = vmatmul.mubr.bf16.gmra.mrb[0].mxu0 %v2311
    %v2400 = vpop.f32.mrb[0].mxu0
    %v2401 = vadd.f32 0.0, %v2400
    %v2402 = vpop.f32.mrb[0].mxu0
    %v2403 = vpop.f32.mrb[0].mxu0
    %v2404 = vadd.f32 0.0, %v2403
    %v2405 = vpop.f32.mrb[0].mxu0
    %2406 = vmatprep.mubr.bf16.mxu0 0
    %2407 = vmatmul.mubr.bf16.gmra.mrb[0].mxu0 %v2312
    %v2408 = vpop.f32.mrb[0].mxu0
    %v2409 = vadd.f32 0.0, %v2408
    %v2410 = vpop.f32.mrb[0].mxu0
    %v2411 = vpop.f32.mrb[0].mxu0
    %v2412 = vadd.f32 0.0, %v2411
    %v2413 = vpop.f32.mrb[0].mxu0
    %2414 = vmatprep.mubr.bf16.mxu0 0
    %2415 = vmatmul.mubr.bf16.gmra.mrb[0].mxu0 %v2313
    %v2416 = vpop.f32.mrb[0].mxu0
    %v2417 = vadd.f32 0.0, %v2416
    %v2418 = vpop.f32.mrb[0].mxu0
    %v2419 = vpop.f32.mrb[0].mxu0
    %v2420 = vadd.f32 0.0, %v2419
    %v2421 = vpop.f32.mrb[0].mxu0
    %2422 = vmatprep.mubr.bf16.mxu0 0
    %2423 = vmatmul.mubr.bf16.gmra.mrb[0].mxu0 %v2314
    %v2424 = vpop.f32.mrb[0].mxu0
    %v2425 = vadd.f32 0.0, %v2424
    %v2426 = vpop.f32.mrb[0].mxu0
    %v2427 = vpop.f32.mrb[0].mxu0
    %v2428 = vadd.f32 0.0, %v2427
    %v2429 = vpop.f32.mrb[0].mxu0
    %2430 = vmatprep.mubr.bf16.mxu0 0
    %2431 = vmatmul.mubr.bf16.gmra.mrb[0].mxu0 %v2315
    %v2432 = vpop.f32.mrb[0].mxu0
    %v2433 = vadd.f32 0.0, %v2432
    %v2434 = vpop.f32.mrb[0].mxu0
    %v2435 = vpop.f32.mrb[0].mxu0
    %v2436 = vadd.f32 0.0, %v2435
    %v2437 = vpop.f32.mrb[0].mxu0
    %2438 = vmatprep.mubr.bf16.mxu0 0
    %2439 = vmatmul.mubr.bf16.gmra.mrb[0].mxu0 %v2316
    %v2440 = vpop.f32.mrb[0].mxu0
    %v2441 = vadd.f32 0.0, %v2440
    %v2442 = vpop.f32.mrb[0].mxu0
    %v2443 = vpop.f32.mrb[0].mxu0
    %v2444 = vadd.f32 0.0, %v2443
    %v2445 = vpop.f32.mrb[0].mxu0
    %2446 = vmatprep.mubr.bf16.mxu0 0
    %2447 = vmatmul.mubr.bf16.gmra.mrb[0].mxu0 %v2317
    %v2448 = vpop.f32.mrb[0].mxu0
    %v2449 = vadd.f32 0.0, %v2448
    %v2450 = vpop.f32.mrb[0].mxu0
    %v2451 = vpop.f32.mrb[0].mxu0
    %v2452 = vadd.f32 0.0, %v2451
    %v2453 = vpop.f32.mrb[0].mxu0
    %2454 = vmatprep.mubr.bf16.mxu0 0
    %2455 = vmatmul.mubr.bf16.gmra.mrb[0].mxu0 %v2318
    %v2456 = vpop.f32.mrb[0].mxu0
    %v2457 = vadd.f32 0.0, %v2456
    %v2458 = vpop.f32.mrb[0].mxu0
    %v2459 = vpop.f32.mrb[0].mxu0
    %v2460 = vadd.f32 0.0, %v2459
    %v2461 = vpop.f32.mrb[0].mxu0
    %2462 = vmatprep.mubr.bf16.mxu0 0
    %2463 = vmatmul.mubr.bf16.gmra.mrb[0].mxu0 %v2319
    %v2464 = vpop.f32.mrb[0].mxu0
    %v2465 = vadd.f32 0.0, %v2464
    %v2466 = vpop.f32.mrb[0].mxu0
    %v2467 = vpop.f32.mrb[0].mxu0
    %v2468 = vadd.f32 0.0, %v2467
    %v2469 = vpop.f32.mrb[0].mxu0
    %2470 = vmatprep.mubr.bf16.mxu0 0
    %2471 = vmatmul.mubr.bf16.gmra.mrb[0].mxu0 %v2320
    %v2472 = vpop.f32.mrb[0].mxu0
    %v2473 = vadd.f32 0.0, %v2472
    %v2474 = vpop.f32.mrb[0].mxu0
    %v2475 = vpop.f32.mrb[0].mxu0
    %v2476 = vadd.f32 0.0, %v2475
    %v2477 = vpop.f32.mrb[0].mxu0
    %2478 = vmatprep.mubr.bf16.mxu0 0
    %2479 = vmatmul.mubr.bf16.gmra.mrb[0].mxu0 %v2321
    %v2480 = vpop.f32.mrb[0].mxu0
    %v2481 = vadd.f32 0.0, %v2480
    %v2482 = vpop.f32.mrb[0].mxu0
    %v2483 = vpop.f32.mrb[0].mxu0
    %v2484 = vadd.f32 0.0, %v2483
    %v2485 = vpop.f32.mrb[0].mxu0
    %2486 = vmatprep.mubr.bf16.mxu0 0
    %2487 = vmatmul.mubr.bf16.gmra.mrb[0].mxu0 %v2322
    %v2488 = vpop.f32.mrb[0].mxu0
    %v2489 = vadd.f32 0.0, %v2488
    %v2490 = vpop.f32.mrb[0].mxu0
    %v2491 = vpop.f32.mrb[0].mxu0
    %v2492 = vadd.f32 0.0, %v2491
    %v2493 = vpop.f32.mrb[0].mxu0
    %2494 = vmatprep.mubr.bf16.mxu0 0
    %2495 = vmatmul.mubr.bf16.gmra.mrb[0].mxu0 %v2323
    %v2496 = vpop.f32.mrb[0].mxu0
    %v2497 = vadd.f32 0.0, %v2496
    %v2498 = vpop.f32.mrb[0].mxu0
    %v2499 = vpop.f32.mrb[0].mxu0
    %v2500 = vadd.f32 0.0, %v2499
    %v2501 = vpop.f32.mrb[0].mxu0
    %2502 = vmatprep.mubr.bf16.mxu0 0
    %2503 = vmatmul.mubr.bf16.gmra.mrb[0].mxu0 %v2324
    %v2504 = vpop.f32.mrb[0].mxu0
    %v2505 = vadd.f32 0.0, %v2504
    %v2506 = vpop.f32.mrb[0].mxu0
    %v2507 = vpop.f32.mrb[0].mxu0
    %v2508 = vadd.f32 0.0, %v2507
    %v2509 = vpop.f32.mrb[0].mxu0
    %2510 = vmatprep.mubr.bf16.mxu0 0
    %2511 = vmatmul.mubr.bf16.gmra.mrb[0].mxu0 %v2325
    %v2512 = vpop.f32.mrb[0].mxu0
    %v2513 = vadd.f32 0.0, %v2512
    %v2514 = vpop.f32.mrb[0].mxu0
    %v2515 = vpop.f32.mrb[0].mxu0
    %v2516 = vadd.f32 0.0, %v2515
    %v2517 = vpop.f32.mrb[0].mxu0
    %2518 = vmatprep.mubr.bf16.mxu0 0
    %2519 = vmatmul.mubr.bf16.gmra.mrb[0].mxu0 %v2326
    %v2520 = vpop.f32.mrb[0].mxu0
    %v2521 = vadd.f32 0.0, %v2520
    %v2522 = vpop.f32.mrb[0].mxu0
    %v2523 = vpop.f32.mrb[0].mxu0
    %v2524 = vadd.f32 0.0, %v2523
    %v2525 = vpop.f32.mrb[0].mxu0
    %2526 = vmatprep.mubr.bf16.mxu0 0
    %2527 = vmatmul.mubr.bf16.gmra.mrb[0].mxu0 %v2327
    %v2528 = vpop.f32.mrb[0].mxu0
    %v2529 = vadd.f32 0.0, %v2528
    %v2530 = vpop.f32.mrb[0].mxu0
    %v2531 = vpop.f32.mrb[0].mxu0
    %v2532 = vadd.f32 0.0, %v2531
    %v2533 = vpop.f32.mrb[0].mxu0
    %2534 = vmatprep.mubr.bf16.mxu0 0
    %2535 = vmatmul.mubr.bf16.gmra.mrb[0].mxu0 %v2328
    %v2536 = vpop.f32.mrb[0].mxu0
    %v2537 = vadd.f32 0.0, %v2536
    %v2538 = vpop.f32.mrb[0].mxu0
    %v2539 = vpop.f32.mrb[0].mxu0
    %v2540 = vadd.f32 0.0, %v2539
    %v2541 = vpop.f32.mrb[0].mxu0
    %2542 = vmatprep.mubr.bf16.mxu0 0
    %2543 = vmatmul.mubr.bf16.gmra.mrb[0].mxu0 %v2329
    %v2544 = vpop.f32.mrb[0].mxu0
    %v2545 = vadd.f32 0.0, %v2544
    %v2546 = vpop.f32.mrb[0].mxu0
    %v2547 = vpop.f32.mrb[0].mxu0
    %v2548 = vadd.f32 0.0, %v2547
    %v2549 = vpop.f32.mrb[0].mxu0
    %2550 = vmatprep.mubr.bf16.mxu0 0
    %2551 = vmatmul.mubr.bf16.gmra.mrb[0].mxu0 %v2330
    %v2552 = vpop.f32.mrb[0].mxu0
    %v2553 = vadd.f32 0.0, %v2552
    %v2554 = vpop.f32.mrb[0].mxu0
    %v2555 = vpop.f32.mrb[0].mxu0
    %v2556 = vadd.f32 0.0, %v2555
    %v2557 = vpop.f32.mrb[0].mxu0
    %2558 = vmatprep.mubr.bf16.mxu0 0
    %2559 = vmatmul.mubr.bf16.gmra.mrb[0].mxu0 %v2331
    %v2560 = vpop.f32.mrb[0].mxu0
    %v2561 = vadd.f32 0.0, %v2560
    %v2562 = vpop.f32.mrb[0].mxu0
    %v2563 = vpop.f32.mrb[0].mxu0
    %v2564 = vadd.f32 0.0, %v2563
    %v2565 = vpop.f32.mrb[0].mxu0
    %2566 = vmatprep.mubr.bf16.mxu0 0
    %2567 = vmatmul.mubr.bf16.gmra.mrb[0].mxu0 %v2332
    %v2568 = vpop.f32.mrb[0].mxu0
    %v2569 = vadd.f32 0.0, %v2568
    %v2570 = vpop.f32.mrb[0].mxu0
    %v2571 = vpop.f32.mrb[0].mxu0
    %v2572 = vadd.f32 0.0, %v2571
    %v2573 = vpop.f32.mrb[0].mxu0
    %2574 = vmatprep.mubr.bf16.mxu0 0
    %2575 = vmatmul.mubr.bf16.gmra.mrb[0].mxu0 %v2333
    %v2576 = vpop.f32.mrb[0].mxu0
    %v2577 = vadd.f32 0.0, %v2576
    %v2578 = vpop.f32.mrb[0].mxu0
    %v2579 = vpop.f32.mrb[0].mxu0
    %v2580 = vadd.f32 0.0, %v2579
    %v2581 = vpop.f32.mrb[0].mxu0
    %2582 = vmatprep.mubr.bf16.mxu0 0
    %2583 = vmatmul.mubr.bf16.gmra.mrb[0].mxu0 %v2334
    %v2584 = vpop.f32.mrb[0].mxu0
    %v2585 = vadd.f32 0.0, %v2584
    %v2586 = vpop.f32.mrb[0].mxu0
    %v2587 = vpop.f32.mrb[0].mxu0
    %v2588 = vadd.f32 0.0, %v2587
    %v2589 = vpop.f32.mrb[0].mxu0
    %2590 = vmatprep.mubr.bf16.mxu0 0
    %2591 = vmatmul.mubr.bf16.gmra.mrb[0].mxu0 %v2335
    %v2592 = vpop.f32.mrb[0].mxu0
    %v2593 = vadd.f32 0.0, %v2592
    %v2594 = vpop.f32.mrb[0].mxu0
    %v2595 = vpop.f32.mrb[0].mxu0
    %v2596 = vadd.f32 0.0, %v2595
    %v2597 = vpop.f32.mrb[0].mxu0
    %2598 = vmatprep.mubr.bf16.mxu0 0
    %2599 = vmatmul.mubr.bf16.gmra.mrb[0].mxu0 %v2336
    %v2600 = vpop.f32.mrb[0].mxu0
    %v2601 = vadd.f32 0.0, %v2600
    %v2602 = vpop.f32.mrb[0].mxu0
    %v2603 = vpop.f32.mrb[0].mxu0
    %v2604 = vadd.f32 0.0, %v2603
    %v2605 = vpop.f32.mrb[0].mxu0
    %2606 = vmatprep.mubr.bf16.mxu0 0
    %2607 = vmatmul.mubr.bf16.gmra.mrb[0].mxu0 %v2337
    %v2608 = vpop.f32.mrb[0].mxu0
    %v2609 = vadd.f32 0.0, %v2608
    %v2610 = vpop.f32.mrb[0].mxu0
    %v2611 = vpop.f32.mrb[0].mxu0
    %v2612 = vadd.f32 0.0, %v2611
    %v2613 = vpop.f32.mrb[0].mxu0
    %2614 = vmatprep.mubr.bf16.mxu0 0
    %2615 = vmatmul.mubr.bf16.gmra.mrb[0].mxu0 %v2338
    %v2616 = vpop.f32.mrb[0].mxu0
    %v2617 = vadd.f32 0.0, %v2616
    %v2618 = vpop.f32.mrb[0].mxu0
    %v2619 = vpop.f32.mrb[0].mxu0
    %v2620 = vadd.f32 0.0, %v2619
    %v2621 = vpop.f32.mrb[0].mxu0
    %2622 = vmatprep.mubr.bf16.mxu0 0
    %2623 = vmatmul.mubr.bf16.gmra.mrb[0].mxu0 %v2339
    %v2624 = vpop.f32.mrb[0].mxu0
    %v2625 = vadd.f32 0.0, %v2624
    %v2626 = vpop.f32.mrb[0].mxu0
    %v2627 = vpop.f32.mrb[0].mxu0
    %v2628 = vadd.f32 0.0, %v2627
    %v2629 = vpop.f32.mrb[0].mxu0
    %2630 = vmatprep.mubr.bf16.mxu0 0
    %2631 = vmatmul.mubr.bf16.gmra.mrb[0].mxu0 %v2340
    %v2632 = vpop.f32.mrb[0].mxu0
    %v2633 = vadd.f32 0.0, %v2632
    %v2634 = vpop.f32.mrb[0].mxu0
    %v2635 = vpop.f32.mrb[0].mxu0
    %v2636 = vadd.f32 0.0, %v2635
    %v2637 = vpop.f32.mrb[0].mxu0
    %2638 = vdwg.mxu0
    %v2639 = vadd.f32 %v2181, %v2385
    %v2640 = vadd.f32 %v2182, %v2388
    %v2641 = vadd.f32 %v2183, %v2393
    %v2642 = vadd.f32 %v2184, %v2396
    %v2643 = vadd.f32 %v2185, %v2401
    %v2644 = vadd.f32 %v2186, %v2404
    %v2645 = vadd.f32 %v2187, %v2409
    %v2646 = vadd.f32 %v2188, %v2412
    %v2647 = vadd.f32 %v2189, %v2417
    %v2648 = vadd.f32 %v2190, %v2420
    %v2649 = vadd.f32 %v2191, %v2425
    %v2650 = vadd.f32 %v2192, %v2428
    %v2651 = vadd.f32 %v2193, %v2433
    %v2652 = vadd.f32 %v2194, %v2436
    %v2653 = vadd.f32 %v2195, %v2441
    %v2654 = vadd.f32 %v2196, %v2444
    %v2655 = vadd.f32 %v2197, %v2449
    %v2656 = vadd.f32 %v2198, %v2452
    %v2657 = vadd.f32 %v2199, %v2457
    %v2658 = vadd.f32 %v2200, %v2460
    %v2659 = vadd.f32 %v2201, %v2465
    %v2660 = vadd.f32 %v2202, %v2468
    %v2661 = vadd.f32 %v2203, %v2473
    %v2662 = vadd.f32 %v2204, %v2476
    %v2663 = vadd.f32 %v2205, %v2481
    %v2664 = vadd.f32 %v2206, %v2484
    %v2665 = vadd.f32 %v2207, %v2489
    %v2666 = vadd.f32 %v2208, %v2492
    %v2667 = vadd.f32 %v2209, %v2497
    %v2668 = vadd.f32 %v2210, %v2500
    %v2669 = vadd.f32 %v2211, %v2505
    %v2670 = vadd.f32 %v2212, %v2508
    %v2671 = vadd.f32 %v2213, %v2513
    %v2672 = vadd.f32 %v2214, %v2516
    %v2673 = vadd.f32 %v2215, %v2521
    %v2674 = vadd.f32 %v2216, %v2524
    %v2675 = vadd.f32 %v2217, %v2529
    %v2676 = vadd.f32 %v2218, %v2532
    %v2677 = vadd.f32 %v2219, %v2537
    %v2678 = vadd.f32 %v2220, %v2540
    %v2679 = vadd.f32 %v2221, %v2545
    %v2680 = vadd.f32 %v2222, %v2548
    %v2681 = vadd.f32 %v2223, %v2553
    %v2682 = vadd.f32 %v2224, %v2556
    %v2683 = vadd.f32 %v2225, %v2561
    %v2684 = vadd.f32 %v2226, %v2564
    %v2685 = vadd.f32 %v2227, %v2569
    %v2686 = vadd.f32 %v2228, %v2572
    %v2687 = vadd.f32 %v2229, %v2577
    %v2688 = vadd.f32 %v2230, %v2580
    %v2689 = vadd.f32 %v2231, %v2585
    %v2690 = vadd.f32 %v2232, %v2588
    %v2691 = vadd.f32 %v2233, %v2593
    %v2692 = vadd.f32 %v2234, %v2596
    %v2693 = vadd.f32 %v2235, %v2601
    %v2694 = vadd.f32 %v2236, %v2604
    %v2695 = vadd.f32 %v2237, %v2609
    %v2696 = vadd.f32 %v2238, %v2612
    %v2697 = vadd.f32 %v2239, %v2617
    %v2698 = vadd.f32 %v2240, %v2620
    %v2699 = vadd.f32 %v2241, %v2625
    %v2700 = vadd.f32 %v2242, %v2628
    %v2701 = vadd.f32 %v2243, %v2633
    %v2702 = vadd.f32 %v2244, %v2636
    %v2703 = vld [vmem:[%s472 + $0x2] sm:$0xff]
    %v2704 = vld [vmem:[%s472 + $0xa] sm:$0xff]
    %v2705 = vld [vmem:[%s472 + $0x1a] sm:$0xff]
    %v2706 = vld [vmem:[%s472 + $0x22] sm:$0xff]
    %v2707 = vld [vmem:[%s472 + $0x32] sm:$0xff]
    %v2708 = vld [vmem:[%s472 + $0x3a] sm:$0xff]
    %v2709 = vld [vmem:[%s472 + $0x4a] sm:$0xff]
    %v2710 = vld [vmem:[%s472 + $0x52] sm:$0xff]
    %v2711 = vld [vmem:[%s472 + $0x62] sm:$0xff]
    %v2712 = vld [vmem:[%s472 + $0x6a] sm:$0xff]
    %v2713 = vld [vmem:[%s472 + $0x7a] sm:$0xff]
    %v2714 = vld [vmem:[%s472 + $0x82] sm:$0xff]
    %v2715 = vld [vmem:[%s472 + $0x92] sm:$0xff]
    %v2716 = vld [vmem:[%s472 + $0x9a] sm:$0xff]
    %v2717 = vld [vmem:[%s472 + $0xaa] sm:$0xff]
    %v2718 = vld [vmem:[%s472 + $0xb2] sm:$0xff]
    %v2719 = vld [vmem:[%s472 + $0xc2] sm:$0xff]
    %v2720 = vld [vmem:[%s472 + $0xca] sm:$0xff]
    %v2721 = vld [vmem:[%s472 + $0xda] sm:$0xff]
    %v2722 = vld [vmem:[%s472 + $0xe2] sm:$0xff]
    %v2723 = vld [vmem:[%s472 + $0xf2] sm:$0xff]
    %v2724 = vld [vmem:[%s472 + $0xfa] sm:$0xff]
    %v2725 = vld [vmem:[%s472 + $0x10a] sm:$0xff]
    %v2726 = vld [vmem:[%s472 + $0x112] sm:$0xff]
    %v2727 = vld [vmem:[%s472 + $0x122] sm:$0xff]
    %v2728 = vld [vmem:[%s472 + $0x12a] sm:$0xff]
    %v2729 = vld [vmem:[%s472 + $0x13a] sm:$0xff]
    %v2730 = vld [vmem:[%s472 + $0x142] sm:$0xff]
    %v2731 = vld [vmem:[%s472 + $0x152] sm:$0xff]
    %v2732 = vld [vmem:[%s472 + $0x15a] sm:$0xff]
    %v2733 = vld [vmem:[%s472 + $0x16a] sm:$0xff]
    %v2734 = vld [vmem:[%s472 + $0x172] sm:$0xff]
    %v2735 = vld [vmem:[%s472 + $0x1b2] sm:$0xff]
    %v2736 = vld [vmem:[%s472 + $0x1ba] sm:$0xff]
    %v2737 = vld [vmem:[%s472 + $0x1ca] sm:$0xff]
    %v2738 = vld [vmem:[%s472 + $0x1d2] sm:$0xff]
    %v2739 = vld [vmem:[%s472 + $0x1e2] sm:$0xff]
    %v2740 = vld [vmem:[%s472 + $0x1ea] sm:$0xff]
    %v2741 = vld [vmem:[%s472 + $0x1fa] sm:$0xff]
    %v2742 = vld [vmem:[%s472 + $0x202] sm:$0xff]
    %v2743 = vld [vmem:[%s472 + $0x212] sm:$0xff]
    %v2744 = vld [vmem:[%s472 + $0x21a] sm:$0xff]
    %v2745 = vld [vmem:[%s472 + $0x22a] sm:$0xff]
    %v2746 = vld [vmem:[%s472 + $0x232] sm:$0xff]
    %v2747 = vld [vmem:[%s472 + $0x242] sm:$0xff]
    %v2748 = vld [vmem:[%s472 + $0x24a] sm:$0xff]
    %v2749 = vld [vmem:[%s472 + $0x25a] sm:$0xff]
    %v2750 = vld [vmem:[%s472 + $0x262] sm:$0xff]
    %v2751 = vld [vmem:[%s472 + $0x272] sm:$0xff]
    %v2752 = vld [vmem:[%s472 + $0x27a] sm:$0xff]
    %v2753 = vld [vmem:[%s472 + $0x28a] sm:$0xff]
    %v2754 = vld [vmem:[%s472 + $0x292] sm:$0xff]
    %v2755 = vld [vmem:[%s472 + $0x2a2] sm:$0xff]
    %v2756 = vld [vmem:[%s472 + $0x2aa] sm:$0xff]
    %v2757 = vld [vmem:[%s472 + $0x2ba] sm:$0xff]
    %v2758 = vld [vmem:[%s472 + $0x2c2] sm:$0xff]
    %v2759 = vld [vmem:[%s472 + $0x2d2] sm:$0xff]
    %v2760 = vld [vmem:[%s472 + $0x2da] sm:$0xff]
    %v2761 = vld [vmem:[%s472 + $0x2ea] sm:$0xff]
    %v2762 = vld [vmem:[%s472 + $0x2f2] sm:$0xff]
    %v2763 = vld [vmem:[%s472 + $0x302] sm:$0xff]
    %v2764 = vld [vmem:[%s472 + $0x30a] sm:$0xff]
    %v2765 = vld [vmem:[%s472 + $0x31a] sm:$0xff]
    %v2766 = vld [vmem:[%s472 + $0x322] sm:$0xff]
    %v2767 = vpack.c.bf16 %v2704, %v2703
    %v2768 = vpack.c.bf16 %v2706, %v2705
    %v2769 = vpack.c.bf16 %v2708, %v2707
    %v2770 = vpack.c.bf16 %v2710, %v2709
    %v2771 = vpack.c.bf16 %v2712, %v2711
    %v2772 = vpack.c.bf16 %v2714, %v2713
    %v2773 = vpack.c.bf16 %v2716, %v2715
    %v2774 = vpack.c.bf16 %v2718, %v2717
    %v2775 = vpack.c.bf16 %v2720, %v2719
    %v2776 = vpack.c.bf16 %v2722, %v2721
    %v2777 = vpack.c.bf16 %v2724, %v2723
    %v2778 = vpack.c.bf16 %v2726, %v2725
    %v2779 = vpack.c.bf16 %v2728, %v2727
    %v2780 = vpack.c.bf16 %v2730, %v2729
    %v2781 = vpack.c.bf16 %v2732, %v2731
    %v2782 = vpack.c.bf16 %v2734, %v2733
    %v2783 = vpack.c.bf16 %v2736, %v2735
    %v2784 = vpack.c.bf16 %v2738, %v2737
    %v2785 = vpack.c.bf16 %v2740, %v2739
    %v2786 = vpack.c.bf16 %v2742, %v2741
    %v2787 = vpack.c.bf16 %v2744, %v2743
    %v2788 = vpack.c.bf16 %v2746, %v2745
    %v2789 = vpack.c.bf16 %v2748, %v2747
    %v2790 = vpack.c.bf16 %v2750, %v2749
    %v2791 = vpack.c.bf16 %v2752, %v2751
    %v2792 = vpack.c.bf16 %v2754, %v2753
    %v2793 = vpack.c.bf16 %v2756, %v2755
    %v2794 = vpack.c.bf16 %v2758, %v2757
    %v2795 = vpack.c.bf16 %v2760, %v2759
    %v2796 = vpack.c.bf16 %v2762, %v2761
    %v2797 = vpack.c.bf16 %v2764, %v2763
    %v2798 = vpack.c.bf16 %v2766, %v2765
    %s2799 = scalar_lea.vmem [#allocation3], 320
    %v2800 = vld [vmem:[%s2799] sm:$0xff]
    %v2801 = vld [vmem:[%s2799 + $0x8] sm:$0xff]
    %v2802 = vld [vmem:[%s2799 + $0x10] sm:$0xff]
    %v2803 = vld [vmem:[%s2799 + $0x18] sm:$0xff]
    %v2804 = vld [vmem:[%s2799 + $0x20] sm:$0xff]
    %v2805 = vld [vmem:[%s2799 + $0x28] sm:$0xff]
    %v2806 = vld [vmem:[%s2799 + $0x30] sm:$0xff]
    %v2807 = vld [vmem:[%s2799 + $0x38] sm:$0xff]
    %2808 = vmatprep.subr.bf16.mxu0 0
    %2809 = vmatpush1.bf16.msra.mxu0 %v2800
    %2810 = vmatprep.subr.bf16.mxu0 0
    %2811 = vmatpush1.bf16.msra.mxu0 %v2801
    %2812 = vmatprep.subr.bf16.mxu0 0
    %2813 = vmatpush1.bf16.msra.mxu0 %v2802
    %2814 = vmatprep.subr.bf16.mxu0 0
    %2815 = vmatpush1.bf16.msra.mxu0 %v2803
    %2816 = vmatprep.subr.bf16.mxu0 0
    %2817 = vmatpush1.bf16.msra.mxu0 %v2804
    %2818 = vmatprep.subr.bf16.mxu0 0
    %2819 = vmatpush1.bf16.msra.mxu0 %v2805
    %2820 = vmatprep.subr.bf16.mxu0 0
    %2821 = vmatpush1.bf16.msra.mxu0 %v2806
    %2822 = vmatprep.subr.bf16.mxu0 0
    %2823 = vmatpush1.bf16.msra.mxu0 %v2807
    %2824 = vmatprep.subr.bf16.mxu0 0
    %2825 = vmatpush1.bf16.msra.mxu0 0
    %2826 = vmatprep.subr.bf16.mxu0 0
    %2827 = vmatpush1.bf16.msra.mxu0 0
    %2828 = vmatprep.subr.bf16.mxu0 0
    %2829 = vmatpush1.bf16.msra.mxu0 0
    %2830 = vmatprep.subr.bf16.mxu0 0
    %2831 = vmatpush1.bf16.msra.mxu0 0
    %2832 = vmatprep.subr.bf16.mxu0 0
    %2833 = vmatpush1.bf16.msra.mxu0 0
    %2834 = vmatprep.subr.bf16.mxu0 0
    %2835 = vmatpush1.bf16.msra.mxu0 0
    %2836 = vmatprep.subr.bf16.mxu0 0
    %2837 = vmatpush1.bf16.msra.mxu0 0
    %2838 = vmatprep.subr.bf16.mxu0 0
    %2839 = vmatpush1.bf16.msra.mxu0 0
    %2840 = vmatprep.mubr.bf16.mxu0 0
    %2841 = vmatmul.mubr.bf16.gmra.mrb[0].mxu0 %v2767
    %v2842 = vpop.f32.mrb[0].mxu0
    %v2843 = vadd.f32 0.0, %v2842
    %v2844 = vpop.f32.mrb[0].mxu0
    %v2845 = vpop.f32.mrb[0].mxu0
    %v2846 = vadd.f32 0.0, %v2845
    %v2847 = vpop.f32.mrb[0].mxu0
    %2848 = vmatprep.mubr.bf16.mxu0 0
    %2849 = vmatmul.mubr.bf16.gmra.mrb[0].mxu0 %v2768
    %v2850 = vpop.f32.mrb[0].mxu0
    %v2851 = vadd.f32 0.0, %v2850
    %v2852 = vpop.f32.mrb[0].mxu0
    %v2853 = vpop.f32.mrb[0].mxu0
    %v2854 = vadd.f32 0.0, %v2853
    %v2855 = vpop.f32.mrb[0].mxu0
    %2856 = vmatprep.mubr.bf16.mxu0 0
    %2857 = vmatmul.mubr.bf16.gmra.mrb[0].mxu0 %v2769
    %v2858 = vpop.f32.mrb[0].mxu0
    %v2859 = vadd.f32 0.0, %v2858
    %v2860 = vpop.f32.mrb[0].mxu0
    %v2861 = vpop.f32.mrb[0].mxu0
    %v2862 = vadd.f32 0.0, %v2861
    %v2863 = vpop.f32.mrb[0].mxu0
    %2864 = vmatprep.mubr.bf16.mxu0 0
    %2865 = vmatmul.mubr.bf16.gmra.mrb[0].mxu0 %v2770
    %v2866 = vpop.f32.mrb[0].mxu0
    %v2867 = vadd.f32 0.0, %v2866
    %v2868 = vpop.f32.mrb[0].mxu0
    %v2869 = vpop.f32.mrb[0].mxu0
    %v2870 = vadd.f32 0.0, %v2869
    %v2871 = vpop.f32.mrb[0].mxu0
    %2872 = vmatprep.mubr.bf16.mxu0 0
    %2873 = vmatmul.mubr.bf16.gmra.mrb[0].mxu0 %v2771
    %v2874 = vpop.f32.mrb[0].mxu0
    %v2875 = vadd.f32 0.0, %v2874
    %v2876 = vpop.f32.mrb[0].mxu0
    %v2877 = vpop.f32.mrb[0].mxu0
    %v2878 = vadd.f32 0.0, %v2877
    %v2879 = vpop.f32.mrb[0].mxu0
    %2880 = vmatprep.mubr.bf16.mxu0 0
    %2881 = vmatmul.mubr.bf16.gmra.mrb[0].mxu0 %v2772
    %v2882 = vpop.f32.mrb[0].mxu0
    %v2883 = vadd.f32 0.0, %v2882
    %v2884 = vpop.f32.mrb[0].mxu0
    %v2885 = vpop.f32.mrb[0].mxu0
    %v2886 = vadd.f32 0.0, %v2885
    %v2887 = vpop.f32.mrb[0].mxu0
    %2888 = vmatprep.mubr.bf16.mxu0 0
    %2889 = vmatmul.mubr.bf16.gmra.mrb[0].mxu0 %v2773
    %v2890 = vpop.f32.mrb[0].mxu0
    %v2891 = vadd.f32 0.0, %v2890
    %v2892 = vpop.f32.mrb[0].mxu0
    %v2893 = vpop.f32.mrb[0].mxu0
    %v2894 = vadd.f32 0.0, %v2893
    %v2895 = vpop.f32.mrb[0].mxu0
    %2896 = vmatprep.mubr.bf16.mxu0 0
    %2897 = vmatmul.mubr.bf16.gmra.mrb[0].mxu0 %v2774
    %v2898 = vpop.f32.mrb[0].mxu0
    %v2899 = vadd.f32 0.0, %v2898
    %v2900 = vpop.f32.mrb[0].mxu0
    %v2901 = vpop.f32.mrb[0].mxu0
    %v2902 = vadd.f32 0.0, %v2901
    %v2903 = vpop.f32.mrb[0].mxu0
    %2904 = vmatprep.mubr.bf16.mxu0 0
    %2905 = vmatmul.mubr.bf16.gmra.mrb[0].mxu0 %v2775
    %v2906 = vpop.f32.mrb[0].mxu0
    %v2907 = vadd.f32 0.0, %v2906
    %v2908 = vpop.f32.mrb[0].mxu0
    %v2909 = vpop.f32.mrb[0].mxu0
    %v2910 = vadd.f32 0.0, %v2909
    %v2911 = vpop.f32.mrb[0].mxu0
    %2912 = vmatprep.mubr.bf16.mxu0 0
    %2913 = vmatmul.mubr.bf16.gmra.mrb[0].mxu0 %v2776
    %v2914 = vpop.f32.mrb[0].mxu0
    %v2915 = vadd.f32 0.0, %v2914
    %v2916 = vpop.f32.mrb[0].mxu0
    %v2917 = vpop.f32.mrb[0].mxu0
    %v2918 = vadd.f32 0.0, %v2917
    %v2919 = vpop.f32.mrb[0].mxu0
    %2920 = vmatprep.mubr.bf16.mxu0 0
    %2921 = vmatmul.mubr.bf16.gmra.mrb[0].mxu0 %v2777
    %v2922 = vpop.f32.mrb[0].mxu0
    %v2923 = vadd.f32 0.0, %v2922
    %v2924 = vpop.f32.mrb[0].mxu0
    %v2925 = vpop.f32.mrb[0].mxu0
    %v2926 = vadd.f32 0.0, %v2925
    %v2927 = vpop.f32.mrb[0].mxu0
    %2928 = vmatprep.mubr.bf16.mxu0 0
    %2929 = vmatmul.mubr.bf16.gmra.mrb[0].mxu0 %v2778
    %v2930 = vpop.f32.mrb[0].mxu0
    %v2931 = vadd.f32 0.0, %v2930
    %v2932 = vpop.f32.mrb[0].mxu0
    %v2933 = vpop.f32.mrb[0].mxu0
    %v2934 = vadd.f32 0.0, %v2933
    %v2935 = vpop.f32.mrb[0].mxu0
    %2936 = vmatprep.mubr.bf16.mxu0 0
    %2937 = vmatmul.mubr.bf16.gmra.mrb[0].mxu0 %v2779
    %v2938 = vpop.f32.mrb[0].mxu0
    %v2939 = vadd.f32 0.0, %v2938
    %v2940 = vpop.f32.mrb[0].mxu0
    %v2941 = vpop.f32.mrb[0].mxu0
    %v2942 = vadd.f32 0.0, %v2941
    %v2943 = vpop.f32.mrb[0].mxu0
    %2944 = vmatprep.mubr.bf16.mxu0 0
    %2945 = vmatmul.mubr.bf16.gmra.mrb[0].mxu0 %v2780
    %v2946 = vpop.f32.mrb[0].mxu0
    %v2947 = vadd.f32 0.0, %v2946
    %v2948 = vpop.f32.mrb[0].mxu0
    %v2949 = vpop.f32.mrb[0].mxu0
    %v2950 = vadd.f32 0.0, %v2949
    %v2951 = vpop.f32.mrb[0].mxu0
    %2952 = vmatprep.mubr.bf16.mxu0 0
    %2953 = vmatmul.mubr.bf16.gmra.mrb[0].mxu0 %v2781
    %v2954 = vpop.f32.mrb[0].mxu0
    %v2955 = vadd.f32 0.0, %v2954
    %v2956 = vpop.f32.mrb[0].mxu0
    %v2957 = vpop.f32.mrb[0].mxu0
    %v2958 = vadd.f32 0.0, %v2957
    %v2959 = vpop.f32.mrb[0].mxu0
    %2960 = vmatprep.mubr.bf16.mxu0 0
    %2961 = vmatmul.mubr.bf16.gmra.mrb[0].mxu0 %v2782
    %v2962 = vpop.f32.mrb[0].mxu0
    %v2963 = vadd.f32 0.0, %v2962
    %v2964 = vpop.f32.mrb[0].mxu0
    %v2965 = vpop.f32.mrb[0].mxu0
    %v2966 = vadd.f32 0.0, %v2965
    %v2967 = vpop.f32.mrb[0].mxu0
    %2968 = vmatprep.mubr.bf16.mxu0 0
    %2969 = vmatmul.mubr.bf16.gmra.mrb[0].mxu0 %v2783
    %v2970 = vpop.f32.mrb[0].mxu0
    %v2971 = vadd.f32 0.0, %v2970
    %v2972 = vpop.f32.mrb[0].mxu0
    %v2973 = vpop.f32.mrb[0].mxu0
    %v2974 = vadd.f32 0.0, %v2973
    %v2975 = vpop.f32.mrb[0].mxu0
    %2976 = vmatprep.mubr.bf16.mxu0 0
    %2977 = vmatmul.mubr.bf16.gmra.mrb[0].mxu0 %v2784
    %v2978 = vpop.f32.mrb[0].mxu0
    %v2979 = vadd.f32 0.0, %v2978
    %v2980 = vpop.f32.mrb[0].mxu0
    %v2981 = vpop.f32.mrb[0].mxu0
    %v2982 = vadd.f32 0.0, %v2981
    %v2983 = vpop.f32.mrb[0].mxu0
    %2984 = vmatprep.mubr.bf16.mxu0 0
    %2985 = vmatmul.mubr.bf16.gmra.mrb[0].mxu0 %v2785
    %v2986 = vpop.f32.mrb[0].mxu0
    %v2987 = vadd.f32 0.0, %v2986
    %v2988 = vpop.f32.mrb[0].mxu0
    %v2989 = vpop.f32.mrb[0].mxu0
    %v2990 = vadd.f32 0.0, %v2989
    %v2991 = vpop.f32.mrb[0].mxu0
    %2992 = vmatprep.mubr.bf16.mxu0 0
    %2993 = vmatmul.mubr.bf16.gmra.mrb[0].mxu0 %v2786
    %v2994 = vpop.f32.mrb[0].mxu0
    %v2995 = vadd.f32 0.0, %v2994
    %v2996 = vpop.f32.mrb[0].mxu0
    %v2997 = vpop.f32.mrb[0].mxu0
    %v2998 = vadd.f32 0.0, %v2997
    %v2999 = vpop.f32.mrb[0].mxu0
    %3000 = vmatprep.mubr.bf16.mxu0 0
    %3001 = vmatmul.mubr.bf16.gmra.mrb[0].mxu0 %v2787
    %v3002 = vpop.f32.mrb[0].mxu0
    %v3003 = vadd.f32 0.0, %v3002
    %v3004 = vpop.f32.mrb[0].mxu0
    %v3005 = vpop.f32.mrb[0].mxu0
    %v3006 = vadd.f32 0.0, %v3005
    %v3007 = vpop.f32.mrb[0].mxu0
    %3008 = vmatprep.mubr.bf16.mxu0 0
    %3009 = vmatmul.mubr.bf16.gmra.mrb[0].mxu0 %v2788
    %v3010 = vpop.f32.mrb[0].mxu0
    %v3011 = vadd.f32 0.0, %v3010
    %v3012 = vpop.f32.mrb[0].mxu0
    %v3013 = vpop.f32.mrb[0].mxu0
    %v3014 = vadd.f32 0.0, %v3013
    %v3015 = vpop.f32.mrb[0].mxu0
    %3016 = vmatprep.mubr.bf16.mxu0 0
    %3017 = vmatmul.mubr.bf16.gmra.mrb[0].mxu0 %v2789
    %v3018 = vpop.f32.mrb[0].mxu0
    %v3019 = vadd.f32 0.0, %v3018
    %v3020 = vpop.f32.mrb[0].mxu0
    %v3021 = vpop.f32.mrb[0].mxu0
    %v3022 = vadd.f32 0.0, %v3021
    %v3023 = vpop.f32.mrb[0].mxu0
    %3024 = vmatprep.mubr.bf16.mxu0 0
    %3025 = vmatmul.mubr.bf16.gmra.mrb[0].mxu0 %v2790
    %v3026 = vpop.f32.mrb[0].mxu0
    %v3027 = vadd.f32 0.0, %v3026
    %v3028 = vpop.f32.mrb[0].mxu0
    %v3029 = vpop.f32.mrb[0].mxu0
    %v3030 = vadd.f32 0.0, %v3029
    %v3031 = vpop.f32.mrb[0].mxu0
    %3032 = vmatprep.mubr.bf16.mxu0 0
    %3033 = vmatmul.mubr.bf16.gmra.mrb[0].mxu0 %v2791
    %v3034 = vpop.f32.mrb[0].mxu0
    %v3035 = vadd.f32 0.0, %v3034
    %v3036 = vpop.f32.mrb[0].mxu0
    %v3037 = vpop.f32.mrb[0].mxu0
    %v3038 = vadd.f32 0.0, %v3037
    %v3039 = vpop.f32.mrb[0].mxu0
    %3040 = vmatprep.mubr.bf16.mxu0 0
    %3041 = vmatmul.mubr.bf16.gmra.mrb[0].mxu0 %v2792
    %v3042 = vpop.f32.mrb[0].mxu0
    %v3043 = vadd.f32 0.0, %v3042
    %v3044 = vpop.f32.mrb[0].mxu0
    %v3045 = vpop.f32.mrb[0].mxu0
    %v3046 = vadd.f32 0.0, %v3045
    %v3047 = vpop.f32.mrb[0].mxu0
    %3048 = vmatprep.mubr.bf16.mxu0 0
    %3049 = vmatmul.mubr.bf16.gmra.mrb[0].mxu0 %v2793
    %v3050 = vpop.f32.mrb[0].mxu0
    %v3051 = vadd.f32 0.0, %v3050
    %v3052 = vpop.f32.mrb[0].mxu0
    %v3053 = vpop.f32.mrb[0].mxu0
    %v3054 = vadd.f32 0.0, %v3053
    %v3055 = vpop.f32.mrb[0].mxu0
    %3056 = vmatprep.mubr.bf16.mxu0 0
    %3057 = vmatmul.mubr.bf16.gmra.mrb[0].mxu0 %v2794
    %v3058 = vpop.f32.mrb[0].mxu0
    %v3059 = vadd.f32 0.0, %v3058
    %v3060 = vpop.f32.mrb[0].mxu0
    %v3061 = vpop.f32.mrb[0].mxu0
    %v3062 = vadd.f32 0.0, %v3061
    %v3063 = vpop.f32.mrb[0].mxu0
    %3064 = vmatprep.mubr.bf16.mxu0 0
    %3065 = vmatmul.mubr.bf16.gmra.mrb[0].mxu0 %v2795
    %v3066 = vpop.f32.mrb[0].mxu0
    %v3067 = vadd.f32 0.0, %v3066
    %v3068 = vpop.f32.mrb[0].mxu0
    %v3069 = vpop.f32.mrb[0].mxu0
    %v3070 = vadd.f32 0.0, %v3069
    %v3071 = vpop.f32.mrb[0].mxu0
    %3072 = vmatprep.mubr.bf16.mxu0 0
    %3073 = vmatmul.mubr.bf16.gmra.mrb[0].mxu0 %v2796
    %v3074 = vpop.f32.mrb[0].mxu0
    %v3075 = vadd.f32 0.0, %v3074
    %v3076 = vpop.f32.mrb[0].mxu0
    %v3077 = vpop.f32.mrb[0].mxu0
    %v3078 = vadd.f32 0.0, %v3077
    %v3079 = vpop.f32.mrb[0].mxu0
    %3080 = vmatprep.mubr.bf16.mxu0 0
    %3081 = vmatmul.mubr.bf16.gmra.mrb[0].mxu0 %v2797
    %v3082 = vpop.f32.mrb[0].mxu0
    %v3083 = vadd.f32 0.0, %v3082
    %v3084 = vpop.f32.mrb[0].mxu0
    %v3085 = vpop.f32.mrb[0].mxu0
    %v3086 = vadd.f32 0.0, %v3085
    %v3087 = vpop.f32.mrb[0].mxu0
    %3088 = vmatprep.mubr.bf16.mxu0 0
    %3089 = vmatmul.mubr.bf16.gmra.mrb[0].mxu0 %v2798
    %v3090 = vpop.f32.mrb[0].mxu0
    %v3091 = vadd.f32 0.0, %v3090
    %v3092 = vpop.f32.mrb[0].mxu0
    %v3093 = vpop.f32.mrb[0].mxu0
    %v3094 = vadd.f32 0.0, %v3093
    %v3095 = vpop.f32.mrb[0].mxu0
    %3096 = vdwg.mxu0
    %v3097 = vadd.f32 %v2639, %v2843
    %v3098 = vadd.f32 %v2640, %v2846
    %v3099 = vadd.f32 %v2641, %v2851
    %v3100 = vadd.f32 %v2642, %v2854
    %v3101 = vadd.f32 %v2643, %v2859
    %v3102 = vadd.f32 %v2644, %v2862
    %v3103 = vadd.f32 %v2645, %v2867
    %v3104 = vadd.f32 %v2646, %v2870
    %v3105 = vadd.f32 %v2647, %v2875
    %v3106 = vadd.f32 %v2648, %v2878
    %v3107 = vadd.f32 %v2649, %v2883
    %v3108 = vadd.f32 %v2650, %v2886
    %v3109 = vadd.f32 %v2651, %v2891
    %v3110 = vadd.f32 %v2652, %v2894
    %v3111 = vadd.f32 %v2653, %v2899
    %v3112 = vadd.f32 %v2654, %v2902
    %v3113 = vadd.f32 %v2655, %v2907
    %v3114 = vadd.f32 %v2656, %v2910
    %v3115 = vadd.f32 %v2657, %v2915
    %v3116 = vadd.f32 %v2658, %v2918
    %v3117 = vadd.f32 %v2659, %v2923
    %v3118 = vadd.f32 %v2660, %v2926
    %v3119 = vadd.f32 %v2661, %v2931
    %v3120 = vadd.f32 %v2662, %v2934
    %v3121 = vadd.f32 %v2663, %v2939
    %v3122 = vadd.f32 %v2664, %v2942
    %v3123 = vadd.f32 %v2665, %v2947
    %v3124 = vadd.f32 %v2666, %v2950
    %v3125 = vadd.f32 %v2667, %v2955
    %v3126 = vadd.f32 %v2668, %v2958
    %v3127 = vadd.f32 %v2669, %v2963
    %v3128 = vadd.f32 %v2670, %v2966
    %v3129 = vadd.f32 %v2671, %v2971
    %v3130 = vadd.f32 %v2672, %v2974
    %v3131 = vadd.f32 %v2673, %v2979
    %v3132 = vadd.f32 %v2674, %v2982
    %v3133 = vadd.f32 %v2675, %v2987
    %v3134 = vadd.f32 %v2676, %v2990
    %v3135 = vadd.f32 %v2677, %v2995
    %v3136 = vadd.f32 %v2678, %v2998
    %v3137 = vadd.f32 %v2679, %v3003
    %v3138 = vadd.f32 %v2680, %v3006
    %v3139 = vadd.f32 %v2681, %v3011
    %v3140 = vadd.f32 %v2682, %v3014
    %v3141 = vadd.f32 %v2683, %v3019
    %v3142 = vadd.f32 %v2684, %v3022
    %v3143 = vadd.f32 %v2685, %v3027
    %v3144 = vadd.f32 %v2686, %v3030
    %v3145 = vadd.f32 %v2687, %v3035
    %v3146 = vadd.f32 %v2688, %v3038
    %v3147 = vadd.f32 %v2689, %v3043
    %v3148 = vadd.f32 %v2690, %v3046
    %v3149 = vadd.f32 %v2691, %v3051
    %v3150 = vadd.f32 %v2692, %v3054
    %v3151 = vadd.f32 %v2693, %v3059
    %v3152 = vadd.f32 %v2694, %v3062
    %v3153 = vadd.f32 %v2695, %v3067
    %v3154 = vadd.f32 %v2696, %v3070
    %v3155 = vadd.f32 %v2697, %v3075
    %v3156 = vadd.f32 %v2698, %v3078
    %v3157 = vadd.f32 %v2699, %v3083
    %v3158 = vadd.f32 %v2700, %v3086
    %v3159 = vadd.f32 %v2701, %v3091
    %v3160 = vadd.f32 %v2702, %v3094
    %s3161 = scalar_lea.vmem [#allocation2], 48
    %v3162 = vld [vmem:[%s3161] sm:$0xff]
    %v3163 = vld [vmem:[%s3161 + $0x8] sm:$0xff]
    %v3164 = vld [vmem:[%s3161 + $0x18] sm:$0xff]
    %v3165 = vld [vmem:[%s3161 + $0x20] sm:$0xff]
    %v3166 = vld [vmem:[%s3161 + $0x30] sm:$0xff]
    %v3167 = vld [vmem:[%s3161 + $0x38] sm:$0xff]
    %v3168 = vld [vmem:[%s3161 + $0x48] sm:$0xff]
    %v3169 = vld [vmem:[%s3161 + $0x50] sm:$0xff]
    %v3170 = vld [vmem:[%s3161 + $0x60] sm:$0xff]
    %v3171 = vld [vmem:[%s3161 + $0x68] sm:$0xff]
    %v3172 = vld [vmem:[%s3161 + $0x78] sm:$0xff]
    %v3173 = vld [vmem:[%s3161 + $0x80] sm:$0xff]
    %v3174 = vld [vmem:[%s3161 + $0x90] sm:$0xff]
    %v3175 = vld [vmem:[%s3161 + $0x98] sm:$0xff]
    %v3176 = vld [vmem:[%s3161 + $0xa8] sm:$0xff]
    %v3177 = vld [vmem:[%s3161 + $0xb0] sm:$0xff]
    %v3178 = vld [vmem:[%s3161 + $0xc0] sm:$0xff]
    %v3179 = vld [vmem:[%s3161 + $0xc8] sm:$0xff]
    %v3180 = vld [vmem:[%s3161 + $0xd8] sm:$0xff]
    %v3181 = vld [vmem:[%s3161 + $0xe0] sm:$0xff]
    %v3182 = vld [vmem:[%s3161 + $0xf0] sm:$0xff]
    %v3183 = vld [vmem:[%s3161 + $0xf8] sm:$0xff]
    %v3184 = vld [vmem:[%s3161 + $0x108] sm:$0xff]
    %v3185 = vld [vmem:[%s3161 + $0x110] sm:$0xff]
    %v3186 = vld [vmem:[%s3161 + $0x120] sm:$0xff]
    %v3187 = vld [vmem:[%s3161 + $0x128] sm:$0xff]
    %v3188 = vld [vmem:[%s3161 + $0x138] sm:$0xff]
    %v3189 = vld [vmem:[%s3161 + $0x140] sm:$0xff]
    %v3190 = vld [vmem:[%s3161 + $0x150] sm:$0xff]
    %v3191 = vld [vmem:[%s3161 + $0x158] sm:$0xff]
    %v3192 = vld [vmem:[%s3161 + $0x168] sm:$0xff]
    %v3193 = vld [vmem:[%s3161 + $0x170] sm:$0xff]
    %v3194 = vld [vmem:[%s3161 + $0x1b0] sm:$0xff]
    %v3195 = vld [vmem:[%s3161 + $0x1b8] sm:$0xff]
    %v3196 = vld [vmem:[%s3161 + $0x1c8] sm:$0xff]
    %v3197 = vld [vmem:[%s3161 + $0x1d0] sm:$0xff]
    %v3198 = vld [vmem:[%s3161 + $0x1e0] sm:$0xff]
    %v3199 = vld [vmem:[%s3161 + $0x1e8] sm:$0xff]
    %v3200 = vld [vmem:[%s3161 + $0x1f8] sm:$0xff]
    %v3201 = vld [vmem:[%s3161 + $0x200] sm:$0xff]
    %v3202 = vld [vmem:[%s3161 + $0x210] sm:$0xff]
    %v3203 = vld [vmem:[%s3161 + $0x218] sm:$0xff]
    %v3204 = vld [vmem:[%s3161 + $0x228] sm:$0xff]
    %v3205 = vld [vmem:[%s3161 + $0x230] sm:$0xff]
    %v3206 = vld [vmem:[%s3161 + $0x240] sm:$0xff]
    %v3207 = vld [vmem:[%s3161 + $0x248] sm:$0xff]
    %v3208 = vld [vmem:[%s3161 + $0x258] sm:$0xff]
    %v3209 = vld [vmem:[%s3161 + $0x260] sm:$0xff]
    %v3210 = vld [vmem:[%s3161 + $0x270] sm:$0xff]
    %v3211 = vld [vmem:[%s3161 + $0x278] sm:$0xff]
    %v3212 = vld [vmem:[%s3161 + $0x288] sm:$0xff]
    %v3213 = vld [vmem:[%s3161 + $0x290] sm:$0xff]
    %v3214 = vld [vmem:[%s3161 + $0x2a0] sm:$0xff]
    %v3215 = vld [vmem:[%s3161 + $0x2a8] sm:$0xff]
    %v3216 = vld [vmem:[%s3161 + $0x2b8] sm:$0xff]
    %v3217 = vld [vmem:[%s3161 + $0x2c0] sm:$0xff]
    %v3218 = vld [vmem:[%s3161 + $0x2d0] sm:$0xff]
    %v3219 = vld [vmem:[%s3161 + $0x2d8] sm:$0xff]
    %v3220 = vld [vmem:[%s3161 + $0x2e8] sm:$0xff]
    %v3221 = vld [vmem:[%s3161 + $0x2f0] sm:$0xff]
    %v3222 = vld [vmem:[%s3161 + $0x300] sm:$0xff]
    %v3223 = vld [vmem:[%s3161 + $0x308] sm:$0xff]
    %v3224 = vld [vmem:[%s3161 + $0x318] sm:$0xff]
    %v3225 = vld [vmem:[%s3161 + $0x320] sm:$0xff]
    %v3226 = vpack.c.bf16 %v3163, %v3162
    %v3227 = vpack.c.bf16 %v3165, %v3164
    %v3228 = vpack.c.bf16 %v3167, %v3166
    %v3229 = vpack.c.bf16 %v3169, %v3168
    %v3230 = vpack.c.bf16 %v3171, %v3170
    %v3231 = vpack.c.bf16 %v3173, %v3172
    %v3232 = vpack.c.bf16 %v3175, %v3174
    %v3233 = vpack.c.bf16 %v3177, %v3176
    %v3234 = vpack.c.bf16 %v3179, %v3178
    %v3235 = vpack.c.bf16 %v3181, %v3180
    %v3236 = vpack.c.bf16 %v3183, %v3182
    %v3237 = vpack.c.bf16 %v3185, %v3184
    %v3238 = vpack.c.bf16 %v3187, %v3186
    %v3239 = vpack.c.bf16 %v3189, %v3188
    %v3240 = vpack.c.bf16 %v3191, %v3190
    %v3241 = vpack.c.bf16 %v3193, %v3192
    %v3242 = vpack.c.bf16 %v3195, %v3194
    %v3243 = vpack.c.bf16 %v3197, %v3196
    %v3244 = vpack.c.bf16 %v3199, %v3198
    %v3245 = vpack.c.bf16 %v3201, %v3200
    %v3246 = vpack.c.bf16 %v3203, %v3202
    %v3247 = vpack.c.bf16 %v3205, %v3204
    %v3248 = vpack.c.bf16 %v3207, %v3206
    %v3249 = vpack.c.bf16 %v3209, %v3208
    %v3250 = vpack.c.bf16 %v3211, %v3210
    %v3251 = vpack.c.bf16 %v3213, %v3212
    %v3252 = vpack.c.bf16 %v3215, %v3214
    %v3253 = vpack.c.bf16 %v3217, %v3216
    %v3254 = vpack.c.bf16 %v3219, %v3218
    %v3255 = vpack.c.bf16 %v3221, %v3220
    %v3256 = vpack.c.bf16 %v3223, %v3222
    %v3257 = vpack.c.bf16 %v3225, %v3224
    %s3258 = scalar_lea.vmem [#allocation3], 384
    %v3259 = vld [vmem:[%s3258] sm:$0xff]
    %v3260 = vld [vmem:[%s3258 + $0x8] sm:$0xff]
    %v3261 = vld [vmem:[%s3258 + $0x10] sm:$0xff]
    %v3262 = vld [vmem:[%s3258 + $0x18] sm:$0xff]
    %v3263 = vld [vmem:[%s3258 + $0x20] sm:$0xff]
    %v3264 = vld [vmem:[%s3258 + $0x28] sm:$0xff]
    %v3265 = vld [vmem:[%s3258 + $0x30] sm:$0xff]
    %v3266 = vld [vmem:[%s3258 + $0x38] sm:$0xff]
    %3267 = vmatprep.subr.bf16.mxu0 0
    %3268 = vmatpush1.bf16.msra.mxu0 %v3259
    %3269 = vmatprep.subr.bf16.mxu0 0
    %3270 = vmatpush1.bf16.msra.mxu0 %v3260
    %3271 = vmatprep.subr.bf16.mxu0 0
    %3272 = vmatpush1.bf16.msra.mxu0 %v3261
    %3273 = vmatprep.subr.bf16.mxu0 0
    %3274 = vmatpush1.bf16.msra.mxu0 %v3262
    %3275 = vmatprep.subr.bf16.mxu0 0
    %3276 = vmatpush1.bf16.msra.mxu0 %v3263
    %3277 = vmatprep.subr.bf16.mxu0 0
    %3278 = vmatpush1.bf16.msra.mxu0 %v3264
    %3279 = vmatprep.subr.bf16.mxu0 0
    %3280 = vmatpush1.bf16.msra.mxu0 %v3265
    %3281 = vmatprep.subr.bf16.mxu0 0
    %3282 = vmatpush1.bf16.msra.mxu0 %v3266
    %3283 = vmatprep.subr.bf16.mxu0 0
    %3284 = vmatpush1.bf16.msra.mxu0 0
    %3285 = vmatprep.subr.bf16.mxu0 0
    %3286 = vmatpush1.bf16.msra.mxu0 0
    %3287 = vmatprep.subr.bf16.mxu0 0
    %3288 = vmatpush1.bf16.msra.mxu0 0
    %3289 = vmatprep.subr.bf16.mxu0 0
    %3290 = vmatpush1.bf16.msra.mxu0 0
    %3291 = vmatprep.subr.bf16.mxu0 0
    %3292 = vmatpush1.bf16.msra.mxu0 0
    %3293 = vmatprep.subr.bf16.mxu0 0
    %3294 = vmatpush1.bf16.msra.mxu0 0
    %3295 = vmatprep.subr.bf16.mxu0 0
    %3296 = vmatpush1.bf16.msra.mxu0 0
    %3297 = vmatprep.subr.bf16.mxu0 0
    %3298 = vmatpush1.bf16.msra.mxu0 0
    %3299 = vmatprep.mubr.bf16.mxu0 0
    %3300 = vmatmul.mubr.bf16.gmra.mrb[0].mxu0 %v3226
    %v3301 = vpop.f32.mrb[0].mxu0
    %v3302 = vadd.f32 0.0, %v3301
    %v3303 = vpop.f32.mrb[0].mxu0
    %v3304 = vpop.f32.mrb[0].mxu0
    %v3305 = vadd.f32 0.0, %v3304
    %v3306 = vpop.f32.mrb[0].mxu0
    %3307 = vmatprep.mubr.bf16.mxu0 0
    %3308 = vmatmul.mubr.bf16.gmra.mrb[0].mxu0 %v3227
    %v3309 = vpop.f32.mrb[0].mxu0
    %v3310 = vadd.f32 0.0, %v3309
    %v3311 = vpop.f32.mrb[0].mxu0
    %v3312 = vpop.f32.mrb[0].mxu0
    %v3313 = vadd.f32 0.0, %v3312
    %v3314 = vpop.f32.mrb[0].mxu0
    %3315 = vmatprep.mubr.bf16.mxu0 0
    %3316 = vmatmul.mubr.bf16.gmra.mrb[0].mxu0 %v3228
    %v3317 = vpop.f32.mrb[0].mxu0
    %v3318 = vadd.f32 0.0, %v3317
    %v3319 = vpop.f32.mrb[0].mxu0
    %v3320 = vpop.f32.mrb[0].mxu0
    %v3321 = vadd.f32 0.0, %v3320
    %v3322 = vpop.f32.mrb[0].mxu0
    %3323 = vmatprep.mubr.bf16.mxu0 0
    %3324 = vmatmul.mubr.bf16.gmra.mrb[0].mxu0 %v3229
    %v3325 = vpop.f32.mrb[0].mxu0
    %v3326 = vadd.f32 0.0, %v3325
    %v3327 = vpop.f32.mrb[0].mxu0
    %v3328 = vpop.f32.mrb[0].mxu0
    %v3329 = vadd.f32 0.0, %v3328
    %v3330 = vpop.f32.mrb[0].mxu0
    %3331 = vmatprep.mubr.bf16.mxu0 0
    %3332 = vmatmul.mubr.bf16.gmra.mrb[0].mxu0 %v3230
    %v3333 = vpop.f32.mrb[0].mxu0
    %v3334 = vadd.f32 0.0, %v3333
    %v3335 = vpop.f32.mrb[0].mxu0
    %v3336 = vpop.f32.mrb[0].mxu0
    %v3337 = vadd.f32 0.0, %v3336
    %v3338 = vpop.f32.mrb[0].mxu0
    %3339 = vmatprep.mubr.bf16.mxu0 0
    %3340 = vmatmul.mubr.bf16.gmra.mrb[0].mxu0 %v3231
    %v3341 = vpop.f32.mrb[0].mxu0
    %v3342 = vadd.f32 0.0, %v3341
    %v3343 = vpop.f32.mrb[0].mxu0
    %v3344 = vpop.f32.mrb[0].mxu0
    %v3345 = vadd.f32 0.0, %v3344
    %v3346 = vpop.f32.mrb[0].mxu0
    %3347 = vmatprep.mubr.bf16.mxu0 0
    %3348 = vmatmul.mubr.bf16.gmra.mrb[0].mxu0 %v3232
    %v3349 = vpop.f32.mrb[0].mxu0
    %v3350 = vadd.f32 0.0, %v3349
    %v3351 = vpop.f32.mrb[0].mxu0
    %v3352 = vpop.f32.mrb[0].mxu0
    %v3353 = vadd.f32 0.0, %v3352
    %v3354 = vpop.f32.mrb[0].mxu0
    %3355 = vmatprep.mubr.bf16.mxu0 0
    %3356 = vmatmul.mubr.bf16.gmra.mrb[0].mxu0 %v3233
    %v3357 = vpop.f32.mrb[0].mxu0
    %v3358 = vadd.f32 0.0, %v3357
    %v3359 = vpop.f32.mrb[0].mxu0
    %v3360 = vpop.f32.mrb[0].mxu0
    %v3361 = vadd.f32 0.0, %v3360
    %v3362 = vpop.f32.mrb[0].mxu0
    %3363 = vmatprep.mubr.bf16.mxu0 0
    %3364 = vmatmul.mubr.bf16.gmra.mrb[0].mxu0 %v3234
    %v3365 = vpop.f32.mrb[0].mxu0
    %v3366 = vadd.f32 0.0, %v3365
    %v3367 = vpop.f32.mrb[0].mxu0
    %v3368 = vpop.f32.mrb[0].mxu0
    %v3369 = vadd.f32 0.0, %v3368
    %v3370 = vpop.f32.mrb[0].mxu0
    %3371 = vmatprep.mubr.bf16.mxu0 0
    %3372 = vmatmul.mubr.bf16.gmra.mrb[0].mxu0 %v3235
    %v3373 = vpop.f32.mrb[0].mxu0
    %v3374 = vadd.f32 0.0, %v3373
    %v3375 = vpop.f32.mrb[0].mxu0
    %v3376 = vpop.f32.mrb[0].mxu0
    %v3377 = vadd.f32 0.0, %v3376
    %v3378 = vpop.f32.mrb[0].mxu0
    %3379 = vmatprep.mubr.bf16.mxu0 0
    %3380 = vmatmul.mubr.bf16.gmra.mrb[0].mxu0 %v3236
    %v3381 = vpop.f32.mrb[0].mxu0
    %v3382 = vadd.f32 0.0, %v3381
    %v3383 = vpop.f32.mrb[0].mxu0
    %v3384 = vpop.f32.mrb[0].mxu0
    %v3385 = vadd.f32 0.0, %v3384
    %v3386 = vpop.f32.mrb[0].mxu0
    %3387 = vmatprep.mubr.bf16.mxu0 0
    %3388 = vmatmul.mubr.bf16.gmra.mrb[0].mxu0 %v3237
    %v3389 = vpop.f32.mrb[0].mxu0
    %v3390 = vadd.f32 0.0, %v3389
    %v3391 = vpop.f32.mrb[0].mxu0
    %v3392 = vpop.f32.mrb[0].mxu0
    %v3393 = vadd.f32 0.0, %v3392
    %v3394 = vpop.f32.mrb[0].mxu0
    %3395 = vmatprep.mubr.bf16.mxu0 0
    %3396 = vmatmul.mubr.bf16.gmra.mrb[0].mxu0 %v3238
    %v3397 = vpop.f32.mrb[0].mxu0
    %v3398 = vadd.f32 0.0, %v3397
    %v3399 = vpop.f32.mrb[0].mxu0
    %v3400 = vpop.f32.mrb[0].mxu0
    %v3401 = vadd.f32 0.0, %v3400
    %v3402 = vpop.f32.mrb[0].mxu0
    %3403 = vmatprep.mubr.bf16.mxu0 0
    %3404 = vmatmul.mubr.bf16.gmra.mrb[0].mxu0 %v3239
    %v3405 = vpop.f32.mrb[0].mxu0
    %v3406 = vadd.f32 0.0, %v3405
    %v3407 = vpop.f32.mrb[0].mxu0
    %v3408 = vpop.f32.mrb[0].mxu0
    %v3409 = vadd.f32 0.0, %v3408
    %v3410 = vpop.f32.mrb[0].mxu0
    %3411 = vmatprep.mubr.bf16.mxu0 0
    %3412 = vmatmul.mubr.bf16.gmra.mrb[0].mxu0 %v3240
    %v3413 = vpop.f32.mrb[0].mxu0
    %v3414 = vadd.f32 0.0, %v3413
    %v3415 = vpop.f32.mrb[0].mxu0
    %v3416 = vpop.f32.mrb[0].mxu0
    %v3417 = vadd.f32 0.0, %v3416
    %v3418 = vpop.f32.mrb[0].mxu0
    %3419 = vmatprep.mubr.bf16.mxu0 0
    %3420 = vmatmul.mubr.bf16.gmra.mrb[0].mxu0 %v3241
    %v3421 = vpop.f32.mrb[0].mxu0
    %v3422 = vadd.f32 0.0, %v3421
    %v3423 = vpop.f32.mrb[0].mxu0
    %v3424 = vpop.f32.mrb[0].mxu0
    %v3425 = vadd.f32 0.0, %v3424
    %v3426 = vpop.f32.mrb[0].mxu0
    %3427 = vmatprep.mubr.bf16.mxu0 0
    %3428 = vmatmul.mubr.bf16.gmra.mrb[0].mxu0 %v3242
    %v3429 = vpop.f32.mrb[0].mxu0
    %v3430 = vadd.f32 0.0, %v3429
    %v3431 = vpop.f32.mrb[0].mxu0
    %v3432 = vpop.f32.mrb[0].mxu0
    %v3433 = vadd.f32 0.0, %v3432
    %v3434 = vpop.f32.mrb[0].mxu0
    %3435 = vmatprep.mubr.bf16.mxu0 0
    %3436 = vmatmul.mubr.bf16.gmra.mrb[0].mxu0 %v3243
    %v3437 = vpop.f32.mrb[0].mxu0
    %v3438 = vadd.f32 0.0, %v3437
    %v3439 = vpop.f32.mrb[0].mxu0
    %v3440 = vpop.f32.mrb[0].mxu0
    %v3441 = vadd.f32 0.0, %v3440
    %v3442 = vpop.f32.mrb[0].mxu0
    %3443 = vmatprep.mubr.bf16.mxu0 0
    %3444 = vmatmul.mubr.bf16.gmra.mrb[0].mxu0 %v3244
    %v3445 = vpop.f32.mrb[0].mxu0
    %v3446 = vadd.f32 0.0, %v3445
    %v3447 = vpop.f32.mrb[0].mxu0
    %v3448 = vpop.f32.mrb[0].mxu0
    %v3449 = vadd.f32 0.0, %v3448
    %v3450 = vpop.f32.mrb[0].mxu0
    %3451 = vmatprep.mubr.bf16.mxu0 0
    %3452 = vmatmul.mubr.bf16.gmra.mrb[0].mxu0 %v3245
    %v3453 = vpop.f32.mrb[0].mxu0
    %v3454 = vadd.f32 0.0, %v3453
    %v3455 = vpop.f32.mrb[0].mxu0
    %v3456 = vpop.f32.mrb[0].mxu0
    %v3457 = vadd.f32 0.0, %v3456
    %v3458 = vpop.f32.mrb[0].mxu0
    %3459 = vmatprep.mubr.bf16.mxu0 0
    %3460 = vmatmul.mubr.bf16.gmra.mrb[0].mxu0 %v3246
    %v3461 = vpop.f32.mrb[0].mxu0
    %v3462 = vadd.f32 0.0, %v3461
    %v3463 = vpop.f32.mrb[0].mxu0
    %v3464 = vpop.f32.mrb[0].mxu0
    %v3465 = vadd.f32 0.0, %v3464
    %v3466 = vpop.f32.mrb[0].mxu0
    %3467 = vmatprep.mubr.bf16.mxu0 0
    %3468 = vmatmul.mubr.bf16.gmra.mrb[0].mxu0 %v3247
    %v3469 = vpop.f32.mrb[0].mxu0
    %v3470 = vadd.f32 0.0, %v3469
    %v3471 = vpop.f32.mrb[0].mxu0
    %v3472 = vpop.f32.mrb[0].mxu0
    %v3473 = vadd.f32 0.0, %v3472
    %v3474 = vpop.f32.mrb[0].mxu0
    %3475 = vmatprep.mubr.bf16.mxu0 0
    %3476 = vmatmul.mubr.bf16.gmra.mrb[0].mxu0 %v3248
    %v3477 = vpop.f32.mrb[0].mxu0
    %v3478 = vadd.f32 0.0, %v3477
    %v3479 = vpop.f32.mrb[0].mxu0
    %v3480 = vpop.f32.mrb[0].mxu0
    %v3481 = vadd.f32 0.0, %v3480
    %v3482 = vpop.f32.mrb[0].mxu0
    %3483 = vmatprep.mubr.bf16.mxu0 0
    %3484 = vmatmul.mubr.bf16.gmra.mrb[0].mxu0 %v3249
    %v3485 = vpop.f32.mrb[0].mxu0
    %v3486 = vadd.f32 0.0, %v3485
    %v3487 = vpop.f32.mrb[0].mxu0
    %v3488 = vpop.f32.mrb[0].mxu0
    %v3489 = vadd.f32 0.0, %v3488
    %v3490 = vpop.f32.mrb[0].mxu0
    %3491 = vmatprep.mubr.bf16.mxu0 0
    %3492 = vmatmul.mubr.bf16.gmra.mrb[0].mxu0 %v3250
    %v3493 = vpop.f32.mrb[0].mxu0
    %v3494 = vadd.f32 0.0, %v3493
    %v3495 = vpop.f32.mrb[0].mxu0
    %v3496 = vpop.f32.mrb[0].mxu0
    %v3497 = vadd.f32 0.0, %v3496
    %v3498 = vpop.f32.mrb[0].mxu0
    %3499 = vmatprep.mubr.bf16.mxu0 0
    %3500 = vmatmul.mubr.bf16.gmra.mrb[0].mxu0 %v3251
    %v3501 = vpop.f32.mrb[0].mxu0
    %v3502 = vadd.f32 0.0, %v3501
    %v3503 = vpop.f32.mrb[0].mxu0
    %v3504 = vpop.f32.mrb[0].mxu0
    %v3505 = vadd.f32 0.0, %v3504
    %v3506 = vpop.f32.mrb[0].mxu0
    %3507 = vmatprep.mubr.bf16.mxu0 0
    %3508 = vmatmul.mubr.bf16.gmra.mrb[0].mxu0 %v3252
    %v3509 = vpop.f32.mrb[0].mxu0
    %v3510 = vadd.f32 0.0, %v3509
    %v3511 = vpop.f32.mrb[0].mxu0
    %v3512 = vpop.f32.mrb[0].mxu0
    %v3513 = vadd.f32 0.0, %v3512
    %v3514 = vpop.f32.mrb[0].mxu0
    %3515 = vmatprep.mubr.bf16.mxu0 0
    %3516 = vmatmul.mubr.bf16.gmra.mrb[0].mxu0 %v3253
    %v3517 = vpop.f32.mrb[0].mxu0
    %v3518 = vadd.f32 0.0, %v3517
    %v3519 = vpop.f32.mrb[0].mxu0
    %v3520 = vpop.f32.mrb[0].mxu0
    %v3521 = vadd.f32 0.0, %v3520
    %v3522 = vpop.f32.mrb[0].mxu0
    %3523 = vmatprep.mubr.bf16.mxu0 0
    %3524 = vmatmul.mubr.bf16.gmra.mrb[0].mxu0 %v3254
    %v3525 = vpop.f32.mrb[0].mxu0
    %v3526 = vadd.f32 0.0, %v3525
    %v3527 = vpop.f32.mrb[0].mxu0
    %v3528 = vpop.f32.mrb[0].mxu0
    %v3529 = vadd.f32 0.0, %v3528
    %v3530 = vpop.f32.mrb[0].mxu0
    %3531 = vmatprep.mubr.bf16.mxu0 0
    %3532 = vmatmul.mubr.bf16.gmra.mrb[0].mxu0 %v3255
    %v3533 = vpop.f32.mrb[0].mxu0
    %v3534 = vadd.f32 0.0, %v3533
    %v3535 = vpop.f32.mrb[0].mxu0
    %v3536 = vpop.f32.mrb[0].mxu0
    %v3537 = vadd.f32 0.0, %v3536
    %v3538 = vpop.f32.mrb[0].mxu0
    %3539 = vmatprep.mubr.bf16.mxu0 0
    %3540 = vmatmul.mubr.bf16.gmra.mrb[0].mxu0 %v3256
    %v3541 = vpop.f32.mrb[0].mxu0
    %v3542 = vadd.f32 0.0, %v3541
    %v3543 = vpop.f32.mrb[0].mxu0
    %v3544 = vpop.f32.mrb[0].mxu0
    %v3545 = vadd.f32 0.0, %v3544
    %v3546 = vpop.f32.mrb[0].mxu0
    %3547 = vmatprep.mubr.bf16.mxu0 0
    %3548 = vmatmul.mubr.bf16.gmra.mrb[0].mxu0 %v3257
    %v3549 = vpop.f32.mrb[0].mxu0
    %v3550 = vadd.f32 0.0, %v3549
    %v3551 = vpop.f32.mrb[0].mxu0
    %v3552 = vpop.f32.mrb[0].mxu0
    %v3553 = vadd.f32 0.0, %v3552
    %v3554 = vpop.f32.mrb[0].mxu0
    %3555 = vdwg.mxu0
    %v3556 = vadd.f32 %v3097, %v3302
    %v3557 = vadd.f32 %v3098, %v3305
    %v3558 = vadd.f32 %v3099, %v3310
    %v3559 = vadd.f32 %v3100, %v3313
    %v3560 = vadd.f32 %v3101, %v3318
    %v3561 = vadd.f32 %v3102, %v3321
    %v3562 = vadd.f32 %v3103, %v3326
    %v3563 = vadd.f32 %v3104, %v3329
    %v3564 = vadd.f32 %v3105, %v3334
    %v3565 = vadd.f32 %v3106, %v3337
    %v3566 = vadd.f32 %v3107, %v3342
    %v3567 = vadd.f32 %v3108, %v3345
    %v3568 = vadd.f32 %v3109, %v3350
    %v3569 = vadd.f32 %v3110, %v3353
    %v3570 = vadd.f32 %v3111, %v3358
    %v3571 = vadd.f32 %v3112, %v3361
    %v3572 = vadd.f32 %v3113, %v3366
    %v3573 = vadd.f32 %v3114, %v3369
    %v3574 = vadd.f32 %v3115, %v3374
    %v3575 = vadd.f32 %v3116, %v3377
    %v3576 = vadd.f32 %v3117, %v3382
    %v3577 = vadd.f32 %v3118, %v3385
    %v3578 = vadd.f32 %v3119, %v3390
    %v3579 = vadd.f32 %v3120, %v3393
    %v3580 = vadd.f32 %v3121, %v3398
    %v3581 = vadd.f32 %v3122, %v3401
    %v3582 = vadd.f32 %v3123, %v3406
    %v3583 = vadd.f32 %v3124, %v3409
    %v3584 = vadd.f32 %v3125, %v3414
    %v3585 = vadd.f32 %v3126, %v3417
    %v3586 = vadd.f32 %v3127, %v3422
    %v3587 = vadd.f32 %v3128, %v3425
    %v3588 = vadd.f32 %v3129, %v3430
    %v3589 = vadd.f32 %v3130, %v3433
    %v3590 = vadd.f32 %v3131, %v3438
    %v3591 = vadd.f32 %v3132, %v3441
    %v3592 = vadd.f32 %v3133, %v3446
    %v3593 = vadd.f32 %v3134, %v3449
    %v3594 = vadd.f32 %v3135, %v3454
    %v3595 = vadd.f32 %v3136, %v3457
    %v3596 = vadd.f32 %v3137, %v3462
    %v3597 = vadd.f32 %v3138, %v3465
    %v3598 = vadd.f32 %v3139, %v3470
    %v3599 = vadd.f32 %v3140, %v3473
    %v3600 = vadd.f32 %v3141, %v3478
    %v3601 = vadd.f32 %v3142, %v3481
    %v3602 = vadd.f32 %v3143, %v3486
    %v3603 = vadd.f32 %v3144, %v3489
    %v3604 = vadd.f32 %v3145, %v3494
    %v3605 = vadd.f32 %v3146, %v3497
    %v3606 = vadd.f32 %v3147, %v3502
    %v3607 = vadd.f32 %v3148, %v3505
    %v3608 = vadd.f32 %v3149, %v3510
    %v3609 = vadd.f32 %v3150, %v3513
    %v3610 = vadd.f32 %v3151, %v3518
    %v3611 = vadd.f32 %v3152, %v3521
    %v3612 = vadd.f32 %v3153, %v3526
    %v3613 = vadd.f32 %v3154, %v3529
    %v3614 = vadd.f32 %v3155, %v3534
    %v3615 = vadd.f32 %v3156, %v3537
    %v3616 = vadd.f32 %v3157, %v3542
    %v3617 = vadd.f32 %v3158, %v3545
    %v3618 = vadd.f32 %v3159, %v3550
    %v3619 = vadd.f32 %v3160, %v3553
    %v3620 = vld [vmem:[%s3161 + $0x1] sm:$0xff]
    %v3621 = vld [vmem:[%s3161 + $0x9] sm:$0xff]
    %v3622 = vld [vmem:[%s3161 + $0x19] sm:$0xff]
    %v3623 = vld [vmem:[%s3161 + $0x21] sm:$0xff]
    %v3624 = vld [vmem:[%s3161 + $0x31] sm:$0xff]
    %v3625 = vld [vmem:[%s3161 + $0x39] sm:$0xff]
    %v3626 = vld [vmem:[%s3161 + $0x49] sm:$0xff]
    %v3627 = vld [vmem:[%s3161 + $0x51] sm:$0xff]
    %v3628 = vld [vmem:[%s3161 + $0x61] sm:$0xff]
    %v3629 = vld [vmem:[%s3161 + $0x69] sm:$0xff]
    %v3630 = vld [vmem:[%s3161 + $0x79] sm:$0xff]
    %v3631 = vld [vmem:[%s3161 + $0x81] sm:$0xff]
    %v3632 = vld [vmem:[%s3161 + $0x91] sm:$0xff]
    %v3633 = vld [vmem:[%s3161 + $0x99] sm:$0xff]
    %v3634 = vld [vmem:[%s3161 + $0xa9] sm:$0xff]
    %v3635 = vld [vmem:[%s3161 + $0xb1] sm:$0xff]
    %v3636 = vld [vmem:[%s3161 + $0xc1] sm:$0xff]
    %v3637 = vld [vmem:[%s3161 + $0xc9] sm:$0xff]
    %v3638 = vld [vmem:[%s3161 + $0xd9] sm:$0xff]
    %v3639 = vld [vmem:[%s3161 + $0xe1] sm:$0xff]
    %v3640 = vld [vmem:[%s3161 + $0xf1] sm:$0xff]
    %v3641 = vld [vmem:[%s3161 + $0xf9] sm:$0xff]
    %v3642 = vld [vmem:[%s3161 + $0x109] sm:$0xff]
    %v3643 = vld [vmem:[%s3161 + $0x111] sm:$0xff]
    %v3644 = vld [vmem:[%s3161 + $0x121] sm:$0xff]
    %v3645 = vld [vmem:[%s3161 + $0x129] sm:$0xff]
    %v3646 = vld [vmem:[%s3161 + $0x139] sm:$0xff]
    %v3647 = vld [vmem:[%s3161 + $0x141] sm:$0xff]
    %v3648 = vld [vmem:[%s3161 + $0x151] sm:$0xff]
    %v3649 = vld [vmem:[%s3161 + $0x159] sm:$0xff]
    %v3650 = vld [vmem:[%s3161 + $0x169] sm:$0xff]
    %v3651 = vld [vmem:[%s3161 + $0x171] sm:$0xff]
    %v3652 = vld [vmem:[%s3161 + $0x1b1] sm:$0xff]
    %v3653 = vld [vmem:[%s3161 + $0x1b9] sm:$0xff]
    %v3654 = vld [vmem:[%s3161 + $0x1c9] sm:$0xff]
    %v3655 = vld [vmem:[%s3161 + $0x1d1] sm:$0xff]
    %v3656 = vld [vmem:[%s3161 + $0x1e1] sm:$0xff]
    %v3657 = vld [vmem:[%s3161 + $0x1e9] sm:$0xff]
    %v3658 = vld [vmem:[%s3161 + $0x1f9] sm:$0xff]
    %v3659 = vld [vmem:[%s3161 + $0x201] sm:$0xff]
    %v3660 = vld [vmem:[%s3161 + $0x211] sm:$0xff]
    %v3661 = vld [vmem:[%s3161 + $0x219] sm:$0xff]
    %v3662 = vld [vmem:[%s3161 + $0x229] sm:$0xff]
    %v3663 = vld [vmem:[%s3161 + $0x231] sm:$0xff]
    %v3664 = vld [vmem:[%s3161 + $0x241] sm:$0xff]
    %v3665 = vld [vmem:[%s3161 + $0x249] sm:$0xff]
    %v3666 = vld [vmem:[%s3161 + $0x259] sm:$0xff]
    %v3667 = vld [vmem:[%s3161 + $0x261] sm:$0xff]
    %v3668 = vld [vmem:[%s3161 + $0x271] sm:$0xff]
    %v3669 = vld [vmem:[%s3161 + $0x279] sm:$0xff]
    %v3670 = vld [vmem:[%s3161 + $0x289] sm:$0xff]
    %v3671 = vld [vmem:[%s3161 + $0x291] sm:$0xff]
    %v3672 = vld [vmem:[%s3161 + $0x2a1] sm:$0xff]
    %v3673 = vld [vmem:[%s3161 + $0x2a9] sm:$0xff]
    %v3674 = vld [vmem:[%s3161 + $0x2b9] sm:$0xff]
    %v3675 = vld [vmem:[%s3161 + $0x2c1] sm:$0xff]
    %v3676 = vld [vmem:[%s3161 + $0x2d1] sm:$0xff]
    %v3677 = vld [vmem:[%s3161 + $0x2d9] sm:$0xff]
    %v3678 = vld [vmem:[%s3161 + $0x2e9] sm:$0xff]
    %v3679 = vld [vmem:[%s3161 + $0x2f1] sm:$0xff]
    %v3680 = vld [vmem:[%s3161 + $0x301] sm:$0xff]
    %v3681 = vld [vmem:[%s3161 + $0x309] sm:$0xff]
    %v3682 = vld [vmem:[%s3161 + $0x319] sm:$0xff]
    %v3683 = vld [vmem:[%s3161 + $0x321] sm:$0xff]
    %v3684 = vpack.c.bf16 %v3621, %v3620
    %v3685 = vpack.c.bf16 %v3623, %v3622
    %v3686 = vpack.c.bf16 %v3625, %v3624
    %v3687 = vpack.c.bf16 %v3627, %v3626
    %v3688 = vpack.c.bf16 %v3629, %v3628
    %v3689 = vpack.c.bf16 %v3631, %v3630
    %v3690 = vpack.c.bf16 %v3633, %v3632
    %v3691 = vpack.c.bf16 %v3635, %v3634
    %v3692 = vpack.c.bf16 %v3637, %v3636
    %v3693 = vpack.c.bf16 %v3639, %v3638
    %v3694 = vpack.c.bf16 %v3641, %v3640
    %v3695 = vpack.c.bf16 %v3643, %v3642
    %v3696 = vpack.c.bf16 %v3645, %v3644
    %v3697 = vpack.c.bf16 %v3647, %v3646
    %v3698 = vpack.c.bf16 %v3649, %v3648
    %v3699 = vpack.c.bf16 %v3651, %v3650
    %v3700 = vpack.c.bf16 %v3653, %v3652
    %v3701 = vpack.c.bf16 %v3655, %v3654
    %v3702 = vpack.c.bf16 %v3657, %v3656
    %v3703 = vpack.c.bf16 %v3659, %v3658
    %v3704 = vpack.c.bf16 %v3661, %v3660
    %v3705 = vpack.c.bf16 %v3663, %v3662
    %v3706 = vpack.c.bf16 %v3665, %v3664
    %v3707 = vpack.c.bf16 %v3667, %v3666
    %v3708 = vpack.c.bf16 %v3669, %v3668
    %v3709 = vpack.c.bf16 %v3671, %v3670
    %v3710 = vpack.c.bf16 %v3673, %v3672
    %v3711 = vpack.c.bf16 %v3675, %v3674
    %v3712 = vpack.c.bf16 %v3677, %v3676
    %v3713 = vpack.c.bf16 %v3679, %v3678
    %v3714 = vpack.c.bf16 %v3681, %v3680
    %v3715 = vpack.c.bf16 %v3683, %v3682
    %s3716 = scalar_lea.vmem [#allocation3], 448
    %v3717 = vld [vmem:[%s3716] sm:$0xff]
    %v3718 = vld [vmem:[%s3716 + $0x8] sm:$0xff]
    %v3719 = vld [vmem:[%s3716 + $0x10] sm:$0xff]
    %v3720 = vld [vmem:[%s3716 + $0x18] sm:$0xff]
    %v3721 = vld [vmem:[%s3716 + $0x20] sm:$0xff]
    %v3722 = vld [vmem:[%s3716 + $0x28] sm:$0xff]
    %v3723 = vld [vmem:[%s3716 + $0x30] sm:$0xff]
    %v3724 = vld [vmem:[%s3716 + $0x38] sm:$0xff]
    %3725 = vmatprep.subr.bf16.mxu0 0
    %3726 = vmatpush1.bf16.msra.mxu0 %v3717
    %3727 = vmatprep.subr.bf16.mxu0 0
    %3728 = vmatpush1.bf16.msra.mxu0 %v3718
    %3729 = vmatprep.subr.bf16.mxu0 0
    %3730 = vmatpush1.bf16.msra.mxu0 %v3719
    %3731 = vmatprep.subr.bf16.mxu0 0
    %3732 = vmatpush1.bf16.msra.mxu0 %v3720
    %3733 = vmatprep.subr.bf16.mxu0 0
    %3734 = vmatpush1.bf16.msra.mxu0 %v3721
    %3735 = vmatprep.subr.bf16.mxu0 0
    %3736 = vmatpush1.bf16.msra.mxu0 %v3722
    %3737 = vmatprep.subr.bf16.mxu0 0
    %3738 = vmatpush1.bf16.msra.mxu0 %v3723
    %3739 = vmatprep.subr.bf16.mxu0 0
    %3740 = vmatpush1.bf16.msra.mxu0 %v3724
    %3741 = vmatprep.subr.bf16.mxu0 0
    %3742 = vmatpush1.bf16.msra.mxu0 0
    %3743 = vmatprep.subr.bf16.mxu0 0
    %3744 = vmatpush1.bf16.msra.mxu0 0
    %3745 = vmatprep.subr.bf16.mxu0 0
    %3746 = vmatpush1.bf16.msra.mxu0 0
    %3747 = vmatprep.subr.bf16.mxu0 0
    %3748 = vmatpush1.bf16.msra.mxu0 0
    %3749 = vmatprep.subr.bf16.mxu0 0
    %3750 = vmatpush1.bf16.msra.mxu0 0
    %3751 = vmatprep.subr.bf16.mxu0 0
    %3752 = vmatpush1.bf16.msra.mxu0 0
    %3753 = vmatprep.subr.bf16.mxu0 0
    %3754 = vmatpush1.bf16.msra.mxu0 0
    %3755 = vmatprep.subr.bf16.mxu0 0
    %3756 = vmatpush1.bf16.msra.mxu0 0
    %3757 = vmatprep.mubr.bf16.mxu0 0
    %3758 = vmatmul.mubr.bf16.gmra.mrb[0].mxu0 %v3684
    %v3759 = vpop.f32.mrb[0].mxu0
    %v3760 = vadd.f32 0.0, %v3759
    %v3761 = vpop.f32.mrb[0].mxu0
    %v3762 = vpop.f32.mrb[0].mxu0
    %v3763 = vadd.f32 0.0, %v3762
    %v3764 = vpop.f32.mrb[0].mxu0
    %3765 = vmatprep.mubr.bf16.mxu0 0
    %3766 = vmatmul.mubr.bf16.gmra.mrb[0].mxu0 %v3685
    %v3767 = vpop.f32.mrb[0].mxu0
    %v3768 = vadd.f32 0.0, %v3767
    %v3769 = vpop.f32.mrb[0].mxu0
    %v3770 = vpop.f32.mrb[0].mxu0
    %v3771 = vadd.f32 0.0, %v3770
    %v3772 = vpop.f32.mrb[0].mxu0
    %3773 = vmatprep.mubr.bf16.mxu0 0
    %3774 = vmatmul.mubr.bf16.gmra.mrb[0].mxu0 %v3686
    %v3775 = vpop.f32.mrb[0].mxu0
    %v3776 = vadd.f32 0.0, %v3775
    %v3777 = vpop.f32.mrb[0].mxu0
    %v3778 = vpop.f32.mrb[0].mxu0
    %v3779 = vadd.f32 0.0, %v3778
    %v3780 = vpop.f32.mrb[0].mxu0
    %3781 = vmatprep.mubr.bf16.mxu0 0
    %3782 = vmatmul.mubr.bf16.gmra.mrb[0].mxu0 %v3687
    %v3783 = vpop.f32.mrb[0].mxu0
    %v3784 = vadd.f32 0.0, %v3783
    %v3785 = vpop.f32.mrb[0].mxu0
    %v3786 = vpop.f32.mrb[0].mxu0
    %v3787 = vadd.f32 0.0, %v3786
    %v3788 = vpop.f32.mrb[0].mxu0
    %3789 = vmatprep.mubr.bf16.mxu0 0
    %3790 = vmatmul.mubr.bf16.gmra.mrb[0].mxu0 %v3688
    %v3791 = vpop.f32.mrb[0].mxu0
    %v3792 = vadd.f32 0.0, %v3791
    %v3793 = vpop.f32.mrb[0].mxu0
    %v3794 = vpop.f32.mrb[0].mxu0
    %v3795 = vadd.f32 0.0, %v3794
    %v3796 = vpop.f32.mrb[0].mxu0
    %3797 = vmatprep.mubr.bf16.mxu0 0
    %3798 = vmatmul.mubr.bf16.gmra.mrb[0].mxu0 %v3689
    %v3799 = vpop.f32.mrb[0].mxu0
    %v3800 = vadd.f32 0.0, %v3799
    %v3801 = vpop.f32.mrb[0].mxu0
    %v3802 = vpop.f32.mrb[0].mxu0
    %v3803 = vadd.f32 0.0, %v3802
    %v3804 = vpop.f32.mrb[0].mxu0
    %3805 = vmatprep.mubr.bf16.mxu0 0
    %3806 = vmatmul.mubr.bf16.gmra.mrb[0].mxu0 %v3690
    %v3807 = vpop.f32.mrb[0].mxu0
    %v3808 = vadd.f32 0.0, %v3807
    %v3809 = vpop.f32.mrb[0].mxu0
    %v3810 = vpop.f32.mrb[0].mxu0
    %v3811 = vadd.f32 0.0, %v3810
    %v3812 = vpop.f32.mrb[0].mxu0
    %3813 = vmatprep.mubr.bf16.mxu0 0
    %3814 = vmatmul.mubr.bf16.gmra.mrb[0].mxu0 %v3691
    %v3815 = vpop.f32.mrb[0].mxu0
    %v3816 = vadd.f32 0.0, %v3815
    %v3817 = vpop.f32.mrb[0].mxu0
    %v3818 = vpop.f32.mrb[0].mxu0
    %v3819 = vadd.f32 0.0, %v3818
    %v3820 = vpop.f32.mrb[0].mxu0
    %3821 = vmatprep.mubr.bf16.mxu0 0
    %3822 = vmatmul.mubr.bf16.gmra.mrb[0].mxu0 %v3692
    %v3823 = vpop.f32.mrb[0].mxu0
    %v3824 = vadd.f32 0.0, %v3823
    %v3825 = vpop.f32.mrb[0].mxu0
    %v3826 = vpop.f32.mrb[0].mxu0
    %v3827 = vadd.f32 0.0, %v3826
    %v3828 = vpop.f32.mrb[0].mxu0
    %3829 = vmatprep.mubr.bf16.mxu0 0
    %3830 = vmatmul.mubr.bf16.gmra.mrb[0].mxu0 %v3693
    %v3831 = vpop.f32.mrb[0].mxu0
    %v3832 = vadd.f32 0.0, %v3831
    %v3833 = vpop.f32.mrb[0].mxu0
    %v3834 = vpop.f32.mrb[0].mxu0
    %v3835 = vadd.f32 0.0, %v3834
    %v3836 = vpop.f32.mrb[0].mxu0
    %3837 = vmatprep.mubr.bf16.mxu0 0
    %3838 = vmatmul.mubr.bf16.gmra.mrb[0].mxu0 %v3694
    %v3839 = vpop.f32.mrb[0].mxu0
    %v3840 = vadd.f32 0.0, %v3839
    %v3841 = vpop.f32.mrb[0].mxu0
    %v3842 = vpop.f32.mrb[0].mxu0
    %v3843 = vadd.f32 0.0, %v3842
    %v3844 = vpop.f32.mrb[0].mxu0
    %3845 = vmatprep.mubr.bf16.mxu0 0
    %3846 = vmatmul.mubr.bf16.gmra.mrb[0].mxu0 %v3695
    %v3847 = vpop.f32.mrb[0].mxu0
    %v3848 = vadd.f32 0.0, %v3847
    %v3849 = vpop.f32.mrb[0].mxu0
    %v3850 = vpop.f32.mrb[0].mxu0
    %v3851 = vadd.f32 0.0, %v3850
    %v3852 = vpop.f32.mrb[0].mxu0
    %3853 = vmatprep.mubr.bf16.mxu0 0
    %3854 = vmatmul.mubr.bf16.gmra.mrb[0].mxu0 %v3696
    %v3855 = vpop.f32.mrb[0].mxu0
    %v3856 = vadd.f32 0.0, %v3855
    %v3857 = vpop.f32.mrb[0].mxu0
    %v3858 = vpop.f32.mrb[0].mxu0
    %v3859 = vadd.f32 0.0, %v3858
    %v3860 = vpop.f32.mrb[0].mxu0
    %3861 = vmatprep.mubr.bf16.mxu0 0
    %3862 = vmatmul.mubr.bf16.gmra.mrb[0].mxu0 %v3697
    %v3863 = vpop.f32.mrb[0].mxu0
    %v3864 = vadd.f32 0.0, %v3863
    %v3865 = vpop.f32.mrb[0].mxu0
    %v3866 = vpop.f32.mrb[0].mxu0
    %v3867 = vadd.f32 0.0, %v3866
    %v3868 = vpop.f32.mrb[0].mxu0
    %3869 = vmatprep.mubr.bf16.mxu0 0
    %3870 = vmatmul.mubr.bf16.gmra.mrb[0].mxu0 %v3698
    %v3871 = vpop.f32.mrb[0].mxu0
    %v3872 = vadd.f32 0.0, %v3871
    %v3873 = vpop.f32.mrb[0].mxu0
    %v3874 = vpop.f32.mrb[0].mxu0
    %v3875 = vadd.f32 0.0, %v3874
    %v3876 = vpop.f32.mrb[0].mxu0
    %3877 = vmatprep.mubr.bf16.mxu0 0
    %3878 = vmatmul.mubr.bf16.gmra.mrb[0].mxu0 %v3699
    %v3879 = vpop.f32.mrb[0].mxu0
    %v3880 = vadd.f32 0.0, %v3879
    %v3881 = vpop.f32.mrb[0].mxu0
    %v3882 = vpop.f32.mrb[0].mxu0
    %v3883 = vadd.f32 0.0, %v3882
    %v3884 = vpop.f32.mrb[0].mxu0
    %3885 = vmatprep.mubr.bf16.mxu0 0
    %3886 = vmatmul.mubr.bf16.gmra.mrb[0].mxu0 %v3700
    %v3887 = vpop.f32.mrb[0].mxu0
    %v3888 = vadd.f32 0.0, %v3887
    %v3889 = vpop.f32.mrb[0].mxu0
    %v3890 = vpop.f32.mrb[0].mxu0
    %v3891 = vadd.f32 0.0, %v3890
    %v3892 = vpop.f32.mrb[0].mxu0
    %3893 = vmatprep.mubr.bf16.mxu0 0
    %3894 = vmatmul.mubr.bf16.gmra.mrb[0].mxu0 %v3701
    %v3895 = vpop.f32.mrb[0].mxu0
    %v3896 = vadd.f32 0.0, %v3895
    %v3897 = vpop.f32.mrb[0].mxu0
    %v3898 = vpop.f32.mrb[0].mxu0
    %v3899 = vadd.f32 0.0, %v3898
    %v3900 = vpop.f32.mrb[0].mxu0
    %3901 = vmatprep.mubr.bf16.mxu0 0
    %3902 = vmatmul.mubr.bf16.gmra.mrb[0].mxu0 %v3702
    %v3903 = vpop.f32.mrb[0].mxu0
    %v3904 = vadd.f32 0.0, %v3903
    %v3905 = vpop.f32.mrb[0].mxu0
    %v3906 = vpop.f32.mrb[0].mxu0
    %v3907 = vadd.f32 0.0, %v3906
    %v3908 = vpop.f32.mrb[0].mxu0
    %3909 = vmatprep.mubr.bf16.mxu0 0
    %3910 = vmatmul.mubr.bf16.gmra.mrb[0].mxu0 %v3703
    %v3911 = vpop.f32.mrb[0].mxu0
    %v3912 = vadd.f32 0.0, %v3911
    %v3913 = vpop.f32.mrb[0].mxu0
    %v3914 = vpop.f32.mrb[0].mxu0
    %v3915 = vadd.f32 0.0, %v3914
    %v3916 = vpop.f32.mrb[0].mxu0
    %3917 = vmatprep.mubr.bf16.mxu0 0
    %3918 = vmatmul.mubr.bf16.gmra.mrb[0].mxu0 %v3704
    %v3919 = vpop.f32.mrb[0].mxu0
    %v3920 = vadd.f32 0.0, %v3919
    %v3921 = vpop.f32.mrb[0].mxu0
    %v3922 = vpop.f32.mrb[0].mxu0
    %v3923 = vadd.f32 0.0, %v3922
    %v3924 = vpop.f32.mrb[0].mxu0
    %3925 = vmatprep.mubr.bf16.mxu0 0
    %3926 = vmatmul.mubr.bf16.gmra.mrb[0].mxu0 %v3705
    %v3927 = vpop.f32.mrb[0].mxu0
    %v3928 = vadd.f32 0.0, %v3927
    %v3929 = vpop.f32.mrb[0].mxu0
    %v3930 = vpop.f32.mrb[0].mxu0
    %v3931 = vadd.f32 0.0, %v3930
    %v3932 = vpop.f32.mrb[0].mxu0
    %3933 = vmatprep.mubr.bf16.mxu0 0
    %3934 = vmatmul.mubr.bf16.gmra.mrb[0].mxu0 %v3706
    %v3935 = vpop.f32.mrb[0].mxu0
    %v3936 = vadd.f32 0.0, %v3935
    %v3937 = vpop.f32.mrb[0].mxu0
    %v3938 = vpop.f32.mrb[0].mxu0
    %v3939 = vadd.f32 0.0, %v3938
    %v3940 = vpop.f32.mrb[0].mxu0
    %3941 = vmatprep.mubr.bf16.mxu0 0
    %3942 = vmatmul.mubr.bf16.gmra.mrb[0].mxu0 %v3707
    %v3943 = vpop.f32.mrb[0].mxu0
    %v3944 = vadd.f32 0.0, %v3943
    %v3945 = vpop.f32.mrb[0].mxu0
    %v3946 = vpop.f32.mrb[0].mxu0
    %v3947 = vadd.f32 0.0, %v3946
    %v3948 = vpop.f32.mrb[0].mxu0
    %3949 = vmatprep.mubr.bf16.mxu0 0
    %3950 = vmatmul.mubr.bf16.gmra.mrb[0].mxu0 %v3708
    %v3951 = vpop.f32.mrb[0].mxu0
    %v3952 = vadd.f32 0.0, %v3951
    %v3953 = vpop.f32.mrb[0].mxu0
    %v3954 = vpop.f32.mrb[0].mxu0
    %v3955 = vadd.f32 0.0, %v3954
    %v3956 = vpop.f32.mrb[0].mxu0
    %3957 = vmatprep.mubr.bf16.mxu0 0
    %3958 = vmatmul.mubr.bf16.gmra.mrb[0].mxu0 %v3709
    %v3959 = vpop.f32.mrb[0].mxu0
    %v3960 = vadd.f32 0.0, %v3959
    %v3961 = vpop.f32.mrb[0].mxu0
    %v3962 = vpop.f32.mrb[0].mxu0
    %v3963 = vadd.f32 0.0, %v3962
    %v3964 = vpop.f32.mrb[0].mxu0
    %3965 = vmatprep.mubr.bf16.mxu0 0
    %3966 = vmatmul.mubr.bf16.gmra.mrb[0].mxu0 %v3710
    %v3967 = vpop.f32.mrb[0].mxu0
    %v3968 = vadd.f32 0.0, %v3967
    %v3969 = vpop.f32.mrb[0].mxu0
    %v3970 = vpop.f32.mrb[0].mxu0
    %v3971 = vadd.f32 0.0, %v3970
    %v3972 = vpop.f32.mrb[0].mxu0
    %3973 = vmatprep.mubr.bf16.mxu0 0
    %3974 = vmatmul.mubr.bf16.gmra.mrb[0].mxu0 %v3711
    %v3975 = vpop.f32.mrb[0].mxu0
    %v3976 = vadd.f32 0.0, %v3975
    %v3977 = vpop.f32.mrb[0].mxu0
    %v3978 = vpop.f32.mrb[0].mxu0
    %v3979 = vadd.f32 0.0, %v3978
    %v3980 = vpop.f32.mrb[0].mxu0
    %3981 = vmatprep.mubr.bf16.mxu0 0
    %3982 = vmatmul.mubr.bf16.gmra.mrb[0].mxu0 %v3712
    %v3983 = vpop.f32.mrb[0].mxu0
    %v3984 = vadd.f32 0.0, %v3983
    %v3985 = vpop.f32.mrb[0].mxu0
    %v3986 = vpop.f32.mrb[0].mxu0
    %v3987 = vadd.f32 0.0, %v3986
    %v3988 = vpop.f32.mrb[0].mxu0
    %3989 = vmatprep.mubr.bf16.mxu0 0
    %3990 = vmatmul.mubr.bf16.gmra.mrb[0].mxu0 %v3713
    %v3991 = vpop.f32.mrb[0].mxu0
    %v3992 = vadd.f32 0.0, %v3991
    %v3993 = vpop.f32.mrb[0].mxu0
    %v3994 = vpop.f32.mrb[0].mxu0
    %v3995 = vadd.f32 0.0, %v3994
    %v3996 = vpop.f32.mrb[0].mxu0
    %3997 = vmatprep.mubr.bf16.mxu0 0
    %3998 = vmatmul.mubr.bf16.gmra.mrb[0].mxu0 %v3714
    %v3999 = vpop.f32.mrb[0].mxu0
    %v4000 = vadd.f32 0.0, %v3999
    %v4001 = vpop.f32.mrb[0].mxu0
    %v4002 = vpop.f32.mrb[0].mxu0
    %v4003 = vadd.f32 0.0, %v4002
    %v4004 = vpop.f32.mrb[0].mxu0
    %4005 = vmatprep.mubr.bf16.mxu0 0
    %4006 = vmatmul.mubr.bf16.gmra.mrb[0].mxu0 %v3715
    %v4007 = vpop.f32.mrb[0].mxu0
    %v4008 = vadd.f32 0.0, %v4007
    %v4009 = vpop.f32.mrb[0].mxu0
    %v4010 = vpop.f32.mrb[0].mxu0
    %v4011 = vadd.f32 0.0, %v4010
    %v4012 = vpop.f32.mrb[0].mxu0
    %4013 = vdwg.mxu0
    %v4014 = vadd.f32 %v3556, %v3760
    %v4015 = vadd.f32 %v3557, %v3763
    %v4016 = vadd.f32 %v3558, %v3768
    %v4017 = vadd.f32 %v3559, %v3771
    %v4018 = vadd.f32 %v3560, %v3776
    %v4019 = vadd.f32 %v3561, %v3779
    %v4020 = vadd.f32 %v3562, %v3784
    %v4021 = vadd.f32 %v3563, %v3787
    %v4022 = vadd.f32 %v3564, %v3792
    %v4023 = vadd.f32 %v3565, %v3795
    %v4024 = vadd.f32 %v3566, %v3800
    %v4025 = vadd.f32 %v3567, %v3803
    %v4026 = vadd.f32 %v3568, %v3808
    %v4027 = vadd.f32 %v3569, %v3811
    %v4028 = vadd.f32 %v3570, %v3816
    %v4029 = vadd.f32 %v3571, %v3819
    %v4030 = vadd.f32 %v3572, %v3824
    %v4031 = vadd.f32 %v3573, %v3827
    %v4032 = vadd.f32 %v3574, %v3832
    %v4033 = vadd.f32 %v3575, %v3835
    %v4034 = vadd.f32 %v3576, %v3840
    %v4035 = vadd.f32 %v3577, %v3843
    %v4036 = vadd.f32 %v3578, %v3848
    %v4037 = vadd.f32 %v3579, %v3851
    %v4038 = vadd.f32 %v3580, %v3856
    %v4039 = vadd.f32 %v3581, %v3859
    %v4040 = vadd.f32 %v3582, %v3864
    %v4041 = vadd.f32 %v3583, %v3867
    %v4042 = vadd.f32 %v3584, %v3872
    %v4043 = vadd.f32 %v3585, %v3875
    %v4044 = vadd.f32 %v3586, %v3880
    %v4045 = vadd.f32 %v3587, %v3883
    %v4046 = vadd.f32 %v3588, %v3888
    %v4047 = vadd.f32 %v3589, %v3891
    %v4048 = vadd.f32 %v3590, %v3896
    %v4049 = vadd.f32 %v3591, %v3899
    %v4050 = vadd.f32 %v3592, %v3904
    %v4051 = vadd.f32 %v3593, %v3907
    %v4052 = vadd.f32 %v3594, %v3912
    %v4053 = vadd.f32 %v3595, %v3915
    %v4054 = vadd.f32 %v3596, %v3920
    %v4055 = vadd.f32 %v3597, %v3923
    %v4056 = vadd.f32 %v3598, %v3928
    %v4057 = vadd.f32 %v3599, %v3931
    %v4058 = vadd.f32 %v3600, %v3936
    %v4059 = vadd.f32 %v3601, %v3939
    %v4060 = vadd.f32 %v3602, %v3944
    %v4061 = vadd.f32 %v3603, %v3947
    %v4062 = vadd.f32 %v3604, %v3952
    %v4063 = vadd.f32 %v3605, %v3955
    %v4064 = vadd.f32 %v3606, %v3960
    %v4065 = vadd.f32 %v3607, %v3963
    %v4066 = vadd.f32 %v3608, %v3968
    %v4067 = vadd.f32 %v3609, %v3971
    %v4068 = vadd.f32 %v3610, %v3976
    %v4069 = vadd.f32 %v3611, %v3979
    %v4070 = vadd.f32 %v3612, %v3984
    %v4071 = vadd.f32 %v3613, %v3987
    %v4072 = vadd.f32 %v3614, %v3992
    %v4073 = vadd.f32 %v3615, %v3995
    %v4074 = vadd.f32 %v3616, %v4000
    %v4075 = vadd.f32 %v3617, %v4003
    %v4076 = vadd.f32 %v3618, %v4008
    %v4077 = vadd.f32 %v3619, %v4011
    %v4078 = vld [vmem:[%s3161 + $0x2] sm:$0xff]
    %v4079 = vld [vmem:[%s3161 + $0xa] sm:$0xff]
    %v4080 = vld [vmem:[%s3161 + $0x1a] sm:$0xff]
    %v4081 = vld [vmem:[%s3161 + $0x22] sm:$0xff]
    %v4082 = vld [vmem:[%s3161 + $0x32] sm:$0xff]
    %v4083 = vld [vmem:[%s3161 + $0x3a] sm:$0xff]
    %v4084 = vld [vmem:[%s3161 + $0x4a] sm:$0xff]
    %v4085 = vld [vmem:[%s3161 + $0x52] sm:$0xff]
    %v4086 = vld [vmem:[%s3161 + $0x62] sm:$0xff]
    %v4087 = vld [vmem:[%s3161 + $0x6a] sm:$0xff]
    %v4088 = vld [vmem:[%s3161 + $0x7a] sm:$0xff]
    %v4089 = vld [vmem:[%s3161 + $0x82] sm:$0xff]
    %v4090 = vld [vmem:[%s3161 + $0x92] sm:$0xff]
    %v4091 = vld [vmem:[%s3161 + $0x9a] sm:$0xff]
    %v4092 = vld [vmem:[%s3161 + $0xaa] sm:$0xff]
    %v4093 = vld [vmem:[%s3161 + $0xb2] sm:$0xff]
    %v4094 = vld [vmem:[%s3161 + $0xc2] sm:$0xff]
    %v4095 = vld [vmem:[%s3161 + $0xca] sm:$0xff]
    %v4096 = vld [vmem:[%s3161 + $0xda] sm:$0xff]
    %v4097 = vld [vmem:[%s3161 + $0xe2] sm:$0xff]
    %v4098 = vld [vmem:[%s3161 + $0xf2] sm:$0xff]
    %v4099 = vld [vmem:[%s3161 + $0xfa] sm:$0xff]
    %v4100 = vld [vmem:[%s3161 + $0x10a] sm:$0xff]
    %v4101 = vld [vmem:[%s3161 + $0x112] sm:$0xff]
    %v4102 = vld [vmem:[%s3161 + $0x122] sm:$0xff]
    %v4103 = vld [vmem:[%s3161 + $0x12a] sm:$0xff]
    %v4104 = vld [vmem:[%s3161 + $0x13a] sm:$0xff]
    %v4105 = vld [vmem:[%s3161 + $0x142] sm:$0xff]
    %v4106 = vld [vmem:[%s3161 + $0x152] sm:$0xff]
    %v4107 = vld [vmem:[%s3161 + $0x15a] sm:$0xff]
    %v4108 = vld [vmem:[%s3161 + $0x16a] sm:$0xff]
    %v4109 = vld [vmem:[%s3161 + $0x172] sm:$0xff]
    %v4110 = vld [vmem:[%s3161 + $0x1b2] sm:$0xff]
    %v4111 = vld [vmem:[%s3161 + $0x1ba] sm:$0xff]
    %v4112 = vld [vmem:[%s3161 + $0x1ca] sm:$0xff]
    %v4113 = vld [vmem:[%s3161 + $0x1d2] sm:$0xff]
    %v4114 = vld [vmem:[%s3161 + $0x1e2] sm:$0xff]
    %v4115 = vld [vmem:[%s3161 + $0x1ea] sm:$0xff]
    %v4116 = vld [vmem:[%s3161 + $0x1fa] sm:$0xff]
    %v4117 = vld [vmem:[%s3161 + $0x202] sm:$0xff]
    %v4118 = vld [vmem:[%s3161 + $0x212] sm:$0xff]
    %v4119 = vld [vmem:[%s3161 + $0x21a] sm:$0xff]
    %v4120 = vld [vmem:[%s3161 + $0x22a] sm:$0xff]
    %v4121 = vld [vmem:[%s3161 + $0x232] sm:$0xff]
    %v4122 = vld [vmem:[%s3161 + $0x242] sm:$0xff]
    %v4123 = vld [vmem:[%s3161 + $0x24a] sm:$0xff]
    %v4124 = vld [vmem:[%s3161 + $0x25a] sm:$0xff]
    %v4125 = vld [vmem:[%s3161 + $0x262] sm:$0xff]
    %v4126 = vld [vmem:[%s3161 + $0x272] sm:$0xff]
    %v4127 = vld [vmem:[%s3161 + $0x27a] sm:$0xff]
    %v4128 = vld [vmem:[%s3161 + $0x28a] sm:$0xff]
    %v4129 = vld [vmem:[%s3161 + $0x292] sm:$0xff]
    %v4130 = vld [vmem:[%s3161 + $0x2a2] sm:$0xff]
    %v4131 = vld [vmem:[%s3161 + $0x2aa] sm:$0xff]
    %v4132 = vld [vmem:[%s3161 + $0x2ba] sm:$0xff]
    %v4133 = vld [vmem:[%s3161 + $0x2c2] sm:$0xff]
    %v4134 = vld [vmem:[%s3161 + $0x2d2] sm:$0xff]
    %v4135 = vld [vmem:[%s3161 + $0x2da] sm:$0xff]
    %v4136 = vld [vmem:[%s3161 + $0x2ea] sm:$0xff]
    %v4137 = vld [vmem:[%s3161 + $0x2f2] sm:$0xff]
    %v4138 = vld [vmem:[%s3161 + $0x302] sm:$0xff]
    %v4139 = vld [vmem:[%s3161 + $0x30a] sm:$0xff]
    %v4140 = vld [vmem:[%s3161 + $0x31a] sm:$0xff]
    %v4141 = vld [vmem:[%s3161 + $0x322] sm:$0xff]
    %v4142 = vpack.c.bf16 %v4079, %v4078
    %v4143 = vpack.c.bf16 %v4081, %v4080
    %v4144 = vpack.c.bf16 %v4083, %v4082
    %v4145 = vpack.c.bf16 %v4085, %v4084
    %v4146 = vpack.c.bf16 %v4087, %v4086
    %v4147 = vpack.c.bf16 %v4089, %v4088
    %v4148 = vpack.c.bf16 %v4091, %v4090
    %v4149 = vpack.c.bf16 %v4093, %v4092
    %v4150 = vpack.c.bf16 %v4095, %v4094
    %v4151 = vpack.c.bf16 %v4097, %v4096
    %v4152 = vpack.c.bf16 %v4099, %v4098
    %v4153 = vpack.c.bf16 %v4101, %v4100
    %v4154 = vpack.c.bf16 %v4103, %v4102
    %v4155 = vpack.c.bf16 %v4105, %v4104
    %v4156 = vpack.c.bf16 %v4107, %v4106
    %v4157 = vpack.c.bf16 %v4109, %v4108
    %v4158 = vpack.c.bf16 %v4111, %v4110
    %v4159 = vpack.c.bf16 %v4113, %v4112
    %v4160 = vpack.c.bf16 %v4115, %v4114
    %v4161 = vpack.c.bf16 %v4117, %v4116
    %v4162 = vpack.c.bf16 %v4119, %v4118
    %v4163 = vpack.c.bf16 %v4121, %v4120
    %v4164 = vpack.c.bf16 %v4123, %v4122
    %v4165 = vpack.c.bf16 %v4125, %v4124
    %v4166 = vpack.c.bf16 %v4127, %v4126
    %v4167 = vpack.c.bf16 %v4129, %v4128
    %v4168 = vpack.c.bf16 %v4131, %v4130
    %v4169 = vpack.c.bf16 %v4133, %v4132
    %v4170 = vpack.c.bf16 %v4135, %v4134
    %v4171 = vpack.c.bf16 %v4137, %v4136
    %v4172 = vpack.c.bf16 %v4139, %v4138
    %v4173 = vpack.c.bf16 %v4141, %v4140
    %s4174 = scalar_lea.vmem [#allocation3], 512
    %v4175 = vld [vmem:[%s4174] sm:$0xff]
    %v4176 = vld [vmem:[%s4174 + $0x8] sm:$0xff]
    %v4177 = vld [vmem:[%s4174 + $0x10] sm:$0xff]
    %v4178 = vld [vmem:[%s4174 + $0x18] sm:$0xff]
    %v4179 = vld [vmem:[%s4174 + $0x20] sm:$0xff]
    %v4180 = vld [vmem:[%s4174 + $0x28] sm:$0xff]
    %v4181 = vld [vmem:[%s4174 + $0x30] sm:$0xff]
    %v4182 = vld [vmem:[%s4174 + $0x38] sm:$0xff]
    %4183 = vmatprep.subr.bf16.mxu0 0
    %4184 = vmatpush1.bf16.msra.mxu0 %v4175
    %4185 = vmatprep.subr.bf16.mxu0 0
    %4186 = vmatpush1.bf16.msra.mxu0 %v4176
    %4187 = vmatprep.subr.bf16.mxu0 0
    %4188 = vmatpush1.bf16.msra.mxu0 %v4177
    %4189 = vmatprep.subr.bf16.mxu0 0
    %4190 = vmatpush1.bf16.msra.mxu0 %v4178
    %4191 = vmatprep.subr.bf16.mxu0 0
    %4192 = vmatpush1.bf16.msra.mxu0 %v4179
    %4193 = vmatprep.subr.bf16.mxu0 0
    %4194 = vmatpush1.bf16.msra.mxu0 %v4180
    %4195 = vmatprep.subr.bf16.mxu0 0
    %4196 = vmatpush1.bf16.msra.mxu0 %v4181
    %4197 = vmatprep.subr.bf16.mxu0 0
    %4198 = vmatpush1.bf16.msra.mxu0 %v4182
    %4199 = vmatprep.subr.bf16.mxu0 0
    %4200 = vmatpush1.bf16.msra.mxu0 0
    %4201 = vmatprep.subr.bf16.mxu0 0
    %4202 = vmatpush1.bf16.msra.mxu0 0
    %4203 = vmatprep.subr.bf16.mxu0 0
    %4204 = vmatpush1.bf16.msra.mxu0 0
    %4205 = vmatprep.subr.bf16.mxu0 0
    %4206 = vmatpush1.bf16.msra.mxu0 0
    %4207 = vmatprep.subr.bf16.mxu0 0
    %4208 = vmatpush1.bf16.msra.mxu0 0
    %4209 = vmatprep.subr.bf16.mxu0 0
    %4210 = vmatpush1.bf16.msra.mxu0 0
    %4211 = vmatprep.subr.bf16.mxu0 0
    %4212 = vmatpush1.bf16.msra.mxu0 0
    %4213 = vmatprep.subr.bf16.mxu0 0
    %4214 = vmatpush1.bf16.msra.mxu0 0
    %4215 = vmatprep.mubr.bf16.mxu0 0
    %4216 = vmatmul.mubr.bf16.gmra.mrb[0].mxu0 %v4142
    %v4217 = vpop.f32.mrb[0].mxu0
    %v4218 = vadd.f32 0.0, %v4217
    %v4219 = vpop.f32.mrb[0].mxu0
    %v4220 = vpop.f32.mrb[0].mxu0
    %v4221 = vadd.f32 0.0, %v4220
    %v4222 = vpop.f32.mrb[0].mxu0
    %4223 = vmatprep.mubr.bf16.mxu0 0
    %4224 = vmatmul.mubr.bf16.gmra.mrb[0].mxu0 %v4143
    %v4225 = vpop.f32.mrb[0].mxu0
    %v4226 = vadd.f32 0.0, %v4225
    %v4227 = vpop.f32.mrb[0].mxu0
    %v4228 = vpop.f32.mrb[0].mxu0
    %v4229 = vadd.f32 0.0, %v4228
    %v4230 = vpop.f32.mrb[0].mxu0
    %4231 = vmatprep.mubr.bf16.mxu0 0
    %4232 = vmatmul.mubr.bf16.gmra.mrb[0].mxu0 %v4144
    %v4233 = vpop.f32.mrb[0].mxu0
    %v4234 = vadd.f32 0.0, %v4233
    %v4235 = vpop.f32.mrb[0].mxu0
    %v4236 = vpop.f32.mrb[0].mxu0
    %v4237 = vadd.f32 0.0, %v4236
    %v4238 = vpop.f32.mrb[0].mxu0
    %4239 = vmatprep.mubr.bf16.mxu0 0
    %4240 = vmatmul.mubr.bf16.gmra.mrb[0].mxu0 %v4145
    %v4241 = vpop.f32.mrb[0].mxu0
    %v4242 = vadd.f32 0.0, %v4241
    %v4243 = vpop.f32.mrb[0].mxu0
    %v4244 = vpop.f32.mrb[0].mxu0
    %v4245 = vadd.f32 0.0, %v4244
    %v4246 = vpop.f32.mrb[0].mxu0
    %4247 = vmatprep.mubr.bf16.mxu0 0
    %4248 = vmatmul.mubr.bf16.gmra.mrb[0].mxu0 %v4146
    %v4249 = vpop.f32.mrb[0].mxu0
    %v4250 = vadd.f32 0.0, %v4249
    %v4251 = vpop.f32.mrb[0].mxu0
    %v4252 = vpop.f32.mrb[0].mxu0
    %v4253 = vadd.f32 0.0, %v4252
    %v4254 = vpop.f32.mrb[0].mxu0
    %4255 = vmatprep.mubr.bf16.mxu0 0
    %4256 = vmatmul.mubr.bf16.gmra.mrb[0].mxu0 %v4147
    %v4257 = vpop.f32.mrb[0].mxu0
    %v4258 = vadd.f32 0.0, %v4257
    %v4259 = vpop.f32.mrb[0].mxu0
    %v4260 = vpop.f32.mrb[0].mxu0
    %v4261 = vadd.f32 0.0, %v4260
    %v4262 = vpop.f32.mrb[0].mxu0
    %4263 = vmatprep.mubr.bf16.mxu0 0
    %4264 = vmatmul.mubr.bf16.gmra.mrb[0].mxu0 %v4148
    %v4265 = vpop.f32.mrb[0].mxu0
    %v4266 = vadd.f32 0.0, %v4265
    %v4267 = vpop.f32.mrb[0].mxu0
    %v4268 = vpop.f32.mrb[0].mxu0
    %v4269 = vadd.f32 0.0, %v4268
    %v4270 = vpop.f32.mrb[0].mxu0
    %4271 = vmatprep.mubr.bf16.mxu0 0
    %4272 = vmatmul.mubr.bf16.gmra.mrb[0].mxu0 %v4149
    %v4273 = vpop.f32.mrb[0].mxu0
    %v4274 = vadd.f32 0.0, %v4273
    %v4275 = vpop.f32.mrb[0].mxu0
    %v4276 = vpop.f32.mrb[0].mxu0
    %v4277 = vadd.f32 0.0, %v4276
    %v4278 = vpop.f32.mrb[0].mxu0
    %4279 = vmatprep.mubr.bf16.mxu0 0
    %4280 = vmatmul.mubr.bf16.gmra.mrb[0].mxu0 %v4150
    %v4281 = vpop.f32.mrb[0].mxu0
    %v4282 = vadd.f32 0.0, %v4281
    %v4283 = vpop.f32.mrb[0].mxu0
    %v4284 = vpop.f32.mrb[0].mxu0
    %v4285 = vadd.f32 0.0, %v4284
    %v4286 = vpop.f32.mrb[0].mxu0
    %4287 = vmatprep.mubr.bf16.mxu0 0
    %4288 = vmatmul.mubr.bf16.gmra.mrb[0].mxu0 %v4151
    %v4289 = vpop.f32.mrb[0].mxu0
    %v4290 = vadd.f32 0.0, %v4289
    %v4291 = vpop.f32.mrb[0].mxu0
    %v4292 = vpop.f32.mrb[0].mxu0
    %v4293 = vadd.f32 0.0, %v4292
    %v4294 = vpop.f32.mrb[0].mxu0
    %4295 = vmatprep.mubr.bf16.mxu0 0
    %4296 = vmatmul.mubr.bf16.gmra.mrb[0].mxu0 %v4152
    %v4297 = vpop.f32.mrb[0].mxu0
    %v4298 = vadd.f32 0.0, %v4297
    %v4299 = vpop.f32.mrb[0].mxu0
    %v4300 = vpop.f32.mrb[0].mxu0
    %v4301 = vadd.f32 0.0, %v4300
    %v4302 = vpop.f32.mrb[0].mxu0
    %4303 = vmatprep.mubr.bf16.mxu0 0
    %4304 = vmatmul.mubr.bf16.gmra.mrb[0].mxu0 %v4153
    %v4305 = vpop.f32.mrb[0].mxu0
    %v4306 = vadd.f32 0.0, %v4305
    %v4307 = vpop.f32.mrb[0].mxu0
    %v4308 = vpop.f32.mrb[0].mxu0
    %v4309 = vadd.f32 0.0, %v4308
    %v4310 = vpop.f32.mrb[0].mxu0
    %4311 = vmatprep.mubr.bf16.mxu0 0
    %4312 = vmatmul.mubr.bf16.gmra.mrb[0].mxu0 %v4154
    %v4313 = vpop.f32.mrb[0].mxu0
    %v4314 = vadd.f32 0.0, %v4313
    %v4315 = vpop.f32.mrb[0].mxu0
    %v4316 = vpop.f32.mrb[0].mxu0
    %v4317 = vadd.f32 0.0, %v4316
    %v4318 = vpop.f32.mrb[0].mxu0
    %4319 = vmatprep.mubr.bf16.mxu0 0
    %4320 = vmatmul.mubr.bf16.gmra.mrb[0].mxu0 %v4155
    %v4321 = vpop.f32.mrb[0].mxu0
    %v4322 = vadd.f32 0.0, %v4321
    %v4323 = vpop.f32.mrb[0].mxu0
    %v4324 = vpop.f32.mrb[0].mxu0
    %v4325 = vadd.f32 0.0, %v4324
    %v4326 = vpop.f32.mrb[0].mxu0
    %4327 = vmatprep.mubr.bf16.mxu0 0
    %4328 = vmatmul.mubr.bf16.gmra.mrb[0].mxu0 %v4156
    %v4329 = vpop.f32.mrb[0].mxu0
    %v4330 = vadd.f32 0.0, %v4329
    %v4331 = vpop.f32.mrb[0].mxu0
    %v4332 = vpop.f32.mrb[0].mxu0
    %v4333 = vadd.f32 0.0, %v4332
    %v4334 = vpop.f32.mrb[0].mxu0
    %4335 = vmatprep.mubr.bf16.mxu0 0
    %4336 = vmatmul.mubr.bf16.gmra.mrb[0].mxu0 %v4157
    %v4337 = vpop.f32.mrb[0].mxu0
    %v4338 = vadd.f32 0.0, %v4337
    %v4339 = vpop.f32.mrb[0].mxu0
    %v4340 = vpop.f32.mrb[0].mxu0
    %v4341 = vadd.f32 0.0, %v4340
    %v4342 = vpop.f32.mrb[0].mxu0
    %4343 = vmatprep.mubr.bf16.mxu0 0
    %4344 = vmatmul.mubr.bf16.gmra.mrb[0].mxu0 %v4158
    %v4345 = vpop.f32.mrb[0].mxu0
    %v4346 = vadd.f32 0.0, %v4345
    %v4347 = vpop.f32.mrb[0].mxu0
    %v4348 = vpop.f32.mrb[0].mxu0
    %v4349 = vadd.f32 0.0, %v4348
    %v4350 = vpop.f32.mrb[0].mxu0
    %4351 = vmatprep.mubr.bf16.mxu0 0
    %4352 = vmatmul.mubr.bf16.gmra.mrb[0].mxu0 %v4159
    %v4353 = vpop.f32.mrb[0].mxu0
    %v4354 = vadd.f32 0.0, %v4353
    %v4355 = vpop.f32.mrb[0].mxu0
    %v4356 = vpop.f32.mrb[0].mxu0
    %v4357 = vadd.f32 0.0, %v4356
    %v4358 = vpop.f32.mrb[0].mxu0
    %4359 = vmatprep.mubr.bf16.mxu0 0
    %4360 = vmatmul.mubr.bf16.gmra.mrb[0].mxu0 %v4160
    %v4361 = vpop.f32.mrb[0].mxu0
    %v4362 = vadd.f32 0.0, %v4361
    %v4363 = vpop.f32.mrb[0].mxu0
    %v4364 = vpop.f32.mrb[0].mxu0
    %v4365 = vadd.f32 0.0, %v4364
    %v4366 = vpop.f32.mrb[0].mxu0
    %4367 = vmatprep.mubr.bf16.mxu0 0
    %4368 = vmatmul.mubr.bf16.gmra.mrb[0].mxu0 %v4161
    %v4369 = vpop.f32.mrb[0].mxu0
    %v4370 = vadd.f32 0.0, %v4369
    %v4371 = vpop.f32.mrb[0].mxu0
    %v4372 = vpop.f32.mrb[0].mxu0
    %v4373 = vadd.f32 0.0, %v4372
    %v4374 = vpop.f32.mrb[0].mxu0
    %4375 = vmatprep.mubr.bf16.mxu0 0
    %4376 = vmatmul.mubr.bf16.gmra.mrb[0].mxu0 %v4162
    %v4377 = vpop.f32.mrb[0].mxu0
    %v4378 = vadd.f32 0.0, %v4377
    %v4379 = vpop.f32.mrb[0].mxu0
    %v4380 = vpop.f32.mrb[0].mxu0
    %v4381 = vadd.f32 0.0, %v4380
    %v4382 = vpop.f32.mrb[0].mxu0
    %4383 = vmatprep.mubr.bf16.mxu0 0
    %4384 = vmatmul.mubr.bf16.gmra.mrb[0].mxu0 %v4163
    %v4385 = vpop.f32.mrb[0].mxu0
    %v4386 = vadd.f32 0.0, %v4385
    %v4387 = vpop.f32.mrb[0].mxu0
    %v4388 = vpop.f32.mrb[0].mxu0
    %v4389 = vadd.f32 0.0, %v4388
    %v4390 = vpop.f32.mrb[0].mxu0
    %4391 = vmatprep.mubr.bf16.mxu0 0
    %4392 = vmatmul.mubr.bf16.gmra.mrb[0].mxu0 %v4164
    %v4393 = vpop.f32.mrb[0].mxu0
    %v4394 = vadd.f32 0.0, %v4393
    %v4395 = vpop.f32.mrb[0].mxu0
    %v4396 = vpop.f32.mrb[0].mxu0
    %v4397 = vadd.f32 0.0, %v4396
    %v4398 = vpop.f32.mrb[0].mxu0
    %4399 = vmatprep.mubr.bf16.mxu0 0
    %4400 = vmatmul.mubr.bf16.gmra.mrb[0].mxu0 %v4165
    %v4401 = vpop.f32.mrb[0].mxu0
    %v4402 = vadd.f32 0.0, %v4401
    %v4403 = vpop.f32.mrb[0].mxu0
    %v4404 = vpop.f32.mrb[0].mxu0
    %v4405 = vadd.f32 0.0, %v4404
    %v4406 = vpop.f32.mrb[0].mxu0
    %4407 = vmatprep.mubr.bf16.mxu0 0
    %4408 = vmatmul.mubr.bf16.gmra.mrb[0].mxu0 %v4166
    %v4409 = vpop.f32.mrb[0].mxu0
    %v4410 = vadd.f32 0.0, %v4409
    %v4411 = vpop.f32.mrb[0].mxu0
    %v4412 = vpop.f32.mrb[0].mxu0
    %v4413 = vadd.f32 0.0, %v4412
    %v4414 = vpop.f32.mrb[0].mxu0
    %4415 = vmatprep.mubr.bf16.mxu0 0
    %4416 = vmatmul.mubr.bf16.gmra.mrb[0].mxu0 %v4167
    %v4417 = vpop.f32.mrb[0].mxu0
    %v4418 = vadd.f32 0.0, %v4417
    %v4419 = vpop.f32.mrb[0].mxu0
    %v4420 = vpop.f32.mrb[0].mxu0
    %v4421 = vadd.f32 0.0, %v4420
    %v4422 = vpop.f32.mrb[0].mxu0
    %4423 = vmatprep.mubr.bf16.mxu0 0
    %4424 = vmatmul.mubr.bf16.gmra.mrb[0].mxu0 %v4168
    %v4425 = vpop.f32.mrb[0].mxu0
    %v4426 = vadd.f32 0.0, %v4425
    %v4427 = vpop.f32.mrb[0].mxu0
    %v4428 = vpop.f32.mrb[0].mxu0
    %v4429 = vadd.f32 0.0, %v4428
    %v4430 = vpop.f32.mrb[0].mxu0
    %4431 = vmatprep.mubr.bf16.mxu0 0
    %4432 = vmatmul.mubr.bf16.gmra.mrb[0].mxu0 %v4169
    %v4433 = vpop.f32.mrb[0].mxu0
    %v4434 = vadd.f32 0.0, %v4433
    %v4435 = vpop.f32.mrb[0].mxu0
    %v4436 = vpop.f32.mrb[0].mxu0
    %v4437 = vadd.f32 0.0, %v4436
    %v4438 = vpop.f32.mrb[0].mxu0
    %4439 = vmatprep.mubr.bf16.mxu0 0
    %4440 = vmatmul.mubr.bf16.gmra.mrb[0].mxu0 %v4170
    %v4441 = vpop.f32.mrb[0].mxu0
    %v4442 = vadd.f32 0.0, %v4441
    %v4443 = vpop.f32.mrb[0].mxu0
    %v4444 = vpop.f32.mrb[0].mxu0
    %v4445 = vadd.f32 0.0, %v4444
    %v4446 = vpop.f32.mrb[0].mxu0
    %4447 = vmatprep.mubr.bf16.mxu0 0
    %4448 = vmatmul.mubr.bf16.gmra.mrb[0].mxu0 %v4171
    %v4449 = vpop.f32.mrb[0].mxu0
    %v4450 = vadd.f32 0.0, %v4449
    %v4451 = vpop.f32.mrb[0].mxu0
    %v4452 = vpop.f32.mrb[0].mxu0
    %v4453 = vadd.f32 0.0, %v4452
    %v4454 = vpop.f32.mrb[0].mxu0
    %4455 = vmatprep.mubr.bf16.mxu0 0
    %4456 = vmatmul.mubr.bf16.gmra.mrb[0].mxu0 %v4172
    %v4457 = vpop.f32.mrb[0].mxu0
    %v4458 = vadd.f32 0.0, %v4457
    %v4459 = vpop.f32.mrb[0].mxu0
    %v4460 = vpop.f32.mrb[0].mxu0
    %v4461 = vadd.f32 0.0, %v4460
    %v4462 = vpop.f32.mrb[0].mxu0
    %4463 = vmatprep.mubr.bf16.mxu0 0
    %4464 = vmatmul.mubr.bf16.gmra.mrb[0].mxu0 %v4173
    %v4465 = vpop.f32.mrb[0].mxu0
    %v4466 = vadd.f32 0.0, %v4465
    %v4467 = vpop.f32.mrb[0].mxu0
    %v4468 = vpop.f32.mrb[0].mxu0
    %v4469 = vadd.f32 0.0, %v4468
    %v4470 = vpop.f32.mrb[0].mxu0
    %4471 = vdwg.mxu0
    %v4472 = vadd.f32 %v4014, %v4218
    %v4473 = vadd.f32 %v4015, %v4221
    %v4474 = vadd.f32 %v4016, %v4226
    %v4475 = vadd.f32 %v4017, %v4229
    %v4476 = vadd.f32 %v4018, %v4234
    %v4477 = vadd.f32 %v4019, %v4237
    %v4478 = vadd.f32 %v4020, %v4242
    %v4479 = vadd.f32 %v4021, %v4245
    %v4480 = vadd.f32 %v4022, %v4250
    %v4481 = vadd.f32 %v4023, %v4253
    %v4482 = vadd.f32 %v4024, %v4258
    %v4483 = vadd.f32 %v4025, %v4261
    %v4484 = vadd.f32 %v4026, %v4266
    %v4485 = vadd.f32 %v4027, %v4269
    %v4486 = vadd.f32 %v4028, %v4274
    %v4487 = vadd.f32 %v4029, %v4277
    %v4488 = vadd.f32 %v4030, %v4282
    %v4489 = vadd.f32 %v4031, %v4285
    %v4490 = vadd.f32 %v4032, %v4290
    %v4491 = vadd.f32 %v4033, %v4293
    %v4492 = vadd.f32 %v4034, %v4298
    %v4493 = vadd.f32 %v4035, %v4301
    %v4494 = vadd.f32 %v4036, %v4306
    %v4495 = vadd.f32 %v4037, %v4309
    %v4496 = vadd.f32 %v4038, %v4314
    %v4497 = vadd.f32 %v4039, %v4317
    %v4498 = vadd.f32 %v4040, %v4322
    %v4499 = vadd.f32 %v4041, %v4325
    %v4500 = vadd.f32 %v4042, %v4330
    %v4501 = vadd.f32 %v4043, %v4333
    %v4502 = vadd.f32 %v4044, %v4338
    %v4503 = vadd.f32 %v4045, %v4341
    %v4504 = vadd.f32 %v4046, %v4346
    %v4505 = vadd.f32 %v4047, %v4349
    %v4506 = vadd.f32 %v4048, %v4354
    %v4507 = vadd.f32 %v4049, %v4357
    %v4508 = vadd.f32 %v4050, %v4362
    %v4509 = vadd.f32 %v4051, %v4365
    %v4510 = vadd.f32 %v4052, %v4370
    %v4511 = vadd.f32 %v4053, %v4373
    %v4512 = vadd.f32 %v4054, %v4378
    %v4513 = vadd.f32 %v4055, %v4381
    %v4514 = vadd.f32 %v4056, %v4386
    %v4515 = vadd.f32 %v4057, %v4389
    %v4516 = vadd.f32 %v4058, %v4394
    %v4517 = vadd.f32 %v4059, %v4397
    %v4518 = vadd.f32 %v4060, %v4402
    %v4519 = vadd.f32 %v4061, %v4405
    %v4520 = vadd.f32 %v4062, %v4410
    %v4521 = vadd.f32 %v4063, %v4413
    %v4522 = vadd.f32 %v4064, %v4418
    %v4523 = vadd.f32 %v4065, %v4421
    %v4524 = vadd.f32 %v4066, %v4426
    %v4525 = vadd.f32 %v4067, %v4429
    %v4526 = vadd.f32 %v4068, %v4434
    %v4527 = vadd.f32 %v4069, %v4437
    %v4528 = vadd.f32 %v4070, %v4442
    %v4529 = vadd.f32 %v4071, %v4445
    %v4530 = vadd.f32 %v4072, %v4450
    %v4531 = vadd.f32 %v4073, %v4453
    %v4532 = vadd.f32 %v4074, %v4458
    %v4533 = vadd.f32 %v4075, %v4461
    %v4534 = vadd.f32 %v4076, %v4466
    %v4535 = vadd.f32 %v4077, %v4469
    %v4536 = vadd.f32 %v4472, %v4473
    %v4537 = vadd.f32 %v4536, %v4474
    %v4538 = vadd.f32 %v4537, %v4475
    %v4539 = vadd.f32 %v4538, %v4476
    %v4540 = vadd.f32 %v4539, %v4477
    %v4541 = vadd.f32 %v4540, %v4478
    %v4542 = vadd.f32 %v4541, %v4479
    %v4543 = vadd.f32 %v4542, %v4480
    %v4544 = vadd.f32 %v4543, %v4481
    %v4545 = vadd.f32 %v4544, %v4482
    %v4546 = vadd.f32 %v4545, %v4483
    %v4547 = vadd.f32 %v4546, %v4484
    %v4548 = vadd.f32 %v4547, %v4485
    %v4549 = vadd.f32 %v4548, %v4486
    %v4550 = vadd.f32 %v4549, %v4487
    %v4551 = vadd.f32 %v4550, %v4488
    %v4552 = vadd.f32 %v4551, %v4489
    %v4553 = vadd.f32 %v4552, %v4490
    %v4554 = vadd.f32 %v4553, %v4491
    %v4555 = vadd.f32 %v4554, %v4492
    %v4556 = vadd.f32 %v4555, %v4493
    %v4557 = vadd.f32 %v4556, %v4494
    %v4558 = vadd.f32 %v4557, %v4495
    %v4559 = vadd.f32 %v4558, %v4496
    %v4560 = vadd.f32 %v4559, %v4497
    %v4561 = vadd.f32 %v4560, %v4498
    %v4562 = vadd.f32 %v4561, %v4499
    %v4563 = vadd.f32 %v4562, %v4500
    %v4564 = vadd.f32 %v4563, %v4501
    %v4565 = vadd.f32 %v4564, %v4502
    %v4566 = vadd.f32 %v4565, %v4503
    %v4567 = vadd.f32 %v4566, %v4504
    %v4568 = vadd.f32 %v4567, %v4505
    %v4569 = vadd.f32 %v4568, %v4506
    %v4570 = vadd.f32 %v4569, %v4507
    %v4571 = vadd.f32 %v4570, %v4508
    %v4572 = vadd.f32 %v4571, %v4509
    %v4573 = vadd.f32 %v4572, %v4510
    %v4574 = vadd.f32 %v4573, %v4511
    %v4575 = vadd.f32 %v4574, %v4512
    %v4576 = vadd.f32 %v4575, %v4513
    %v4577 = vadd.f32 %v4576, %v4514
    %v4578 = vadd.f32 %v4577, %v4515
    %v4579 = vadd.f32 %v4578, %v4516
    %v4580 = vadd.f32 %v4579, %v4517
    %v4581 = vadd.f32 %v4580, %v4518
    %v4582 = vadd.f32 %v4581, %v4519
    %v4583 = vadd.f32 %v4582, %v4520
    %v4584 = vadd.f32 %v4583, %v4521
    %v4585 = vadd.f32 %v4584, %v4522
    %v4586 = vadd.f32 %v4585, %v4523
    %v4587 = vadd.f32 %v4586, %v4524
    %v4588 = vadd.f32 %v4587, %v4525
    %v4589 = vadd.f32 %v4588, %v4526
    %v4590 = vadd.f32 %v4589, %v4527
    %v4591 = vadd.f32 %v4590, %v4528
    %v4592 = vadd.f32 %v4591, %v4529
    %v4593 = vadd.f32 %v4592, %v4530
    %v4594 = vadd.f32 %v4593, %v4531
    %v4595 = vadd.f32 %v4594, %v4532
    %v4596 = vadd.f32 %v4595, %v4533
    %v4597 = vadd.f32 %v4596, %v4534
    %v4598 = vadd.f32 %v4597, %v4535
    %v4599 = vrot.slane %v4598, 4
    %v4600 = vadd.f32 %v4598, %v4599
    %v4601 = vrot.slane %v4600, 2
    %v4602 = vadd.f32 %v4600, %v4601
    %v4603 = vrot.slane %v4602, 1
    %v4604 = vadd.f32 %v4602, %v4603
    %v4605 = vmul.f32 %v4604, 0.001953125
    %v4606 = vmul.f32 %v4472, %v4472
    %v4607 = vmul.f32 %v4473, %v4473
    %v4608 = vmul.f32 %v4474, %v4474
    %v4609 = vmul.f32 %v4475, %v4475
    %v4610 = vmul.f32 %v4476, %v4476
    %v4611 = vmul.f32 %v4477, %v4477
    %v4612 = vmul.f32 %v4478, %v4478
    %v4613 = vmul.f32 %v4479, %v4479
    %v4614 = vmul.f32 %v4480, %v4480
    %v4615 = vmul.f32 %v4481, %v4481
    %v4616 = vmul.f32 %v4482, %v4482
    %v4617 = vmul.f32 %v4483, %v4483
    %v4618 = vmul.f32 %v4484, %v4484
    %v4619 = vmul.f32 %v4485, %v4485
    %v4620 = vmul.f32 %v4486, %v4486
    %v4621 = vmul.f32 %v4487, %v4487
    %v4622 = vmul.f32 %v4488, %v4488
    %v4623 = vmul.f32 %v4489, %v4489
    %v4624 = vmul.f32 %v4490, %v4490
    %v4625 = vmul.f32 %v4491, %v4491
    %v4626 = vmul.f32 %v4492, %v4492
    %v4627 = vmul.f32 %v4493, %v4493
    %v4628 = vmul.f32 %v4494, %v4494
    %v4629 = vmul.f32 %v4495, %v4495
    %v4630 = vmul.f32 %v4496, %v4496
    %v4631 = vmul.f32 %v4497, %v4497
    %v4632 = vmul.f32 %v4498, %v4498
    %v4633 = vmul.f32 %v4499, %v4499
    %v4634 = vmul.f32 %v4500, %v4500
    %v4635 = vmul.f32 %v4501, %v4501
    %v4636 = vmul.f32 %v4502, %v4502
    %v4637 = vmul.f32 %v4503, %v4503
    %v4638 = vmul.f32 %v4504, %v4504
    %v4639 = vmul.f32 %v4505, %v4505
    %v4640 = vmul.f32 %v4506, %v4506
    %v4641 = vmul.f32 %v4507, %v4507
    %v4642 = vmul.f32 %v4508, %v4508
    %v4643 = vmul.f32 %v4509, %v4509
    %v4644 = vmul.f32 %v4510, %v4510
    %v4645 = vmul.f32 %v4511, %v4511
    %v4646 = vmul.f32 %v4512, %v4512
    %v4647 = vmul.f32 %v4513, %v4513
    %v4648 = vmul.f32 %v4514, %v4514
    %v4649 = vmul.f32 %v4515, %v4515
    %v4650 = vmul.f32 %v4516, %v4516
    %v4651 = vmul.f32 %v4517, %v4517
    %v4652 = vmul.f32 %v4518, %v4518
    %v4653 = vmul.f32 %v4519, %v4519
    %v4654 = vmul.f32 %v4520, %v4520
    %v4655 = vmul.f32 %v4521, %v4521
    %v4656 = vmul.f32 %v4522, %v4522
    %v4657 = vmul.f32 %v4523, %v4523
    %v4658 = vmul.f32 %v4524, %v4524
    %v4659 = vmul.f32 %v4525, %v4525
    %v4660 = vmul.f32 %v4526, %v4526
    %v4661 = vmul.f32 %v4527, %v4527
    %v4662 = vmul.f32 %v4528, %v4528
    %v4663 = vmul.f32 %v4529, %v4529
    %v4664 = vmul.f32 %v4530, %v4530
    %v4665 = vmul.f32 %v4531, %v4531
    %v4666 = vmul.f32 %v4532, %v4532
    %v4667 = vmul.f32 %v4533, %v4533
    %v4668 = vmul.f32 %v4534, %v4534
    %v4669 = vmul.f32 %v4535, %v4535
    %v4670 = vadd.f32 %v4606, %v4607
    %v4671 = vadd.f32 %v4670, %v4608
    %v4672 = vadd.f32 %v4671, %v4609
    %v4673 = vadd.f32 %v4672, %v4610
    %v4674 = vadd.f32 %v4673, %v4611
    %v4675 = vadd.f32 %v4674, %v4612
    %v4676 = vadd.f32 %v4675, %v4613
    %v4677 = vadd.f32 %v4676, %v4614
    %v4678 = vadd.f32 %v4677, %v4615
    %v4679 = vadd.f32 %v4678, %v4616
    %v4680 = vadd.f32 %v4679, %v4617
    %v4681 = vadd.f32 %v4680, %v4618
    %v4682 = vadd.f32 %v4681, %v4619
    %v4683 = vadd.f32 %v4682, %v4620
    %v4684 = vadd.f32 %v4683, %v4621
    %v4685 = vadd.f32 %v4684, %v4622
    %v4686 = vadd.f32 %v4685, %v4623
    %v4687 = vadd.f32 %v4686, %v4624
    %v4688 = vadd.f32 %v4687, %v4625
    %v4689 = vadd.f32 %v4688, %v4626
    %v4690 = vadd.f32 %v4689, %v4627
    %v4691 = vadd.f32 %v4690, %v4628
    %v4692 = vadd.f32 %v4691, %v4629
    %v4693 = vadd.f32 %v4692, %v4630
    %v4694 = vadd.f32 %v4693, %v4631
    %v4695 = vadd.f32 %v4694, %v4632
    %v4696 = vadd.f32 %v4695, %v4633
    %v4697 = vadd.f32 %v4696, %v4634
    %v4698 = vadd.f32 %v4697, %v4635
    %v4699 = vadd.f32 %v4698, %v4636
    %v4700 = vadd.f32 %v4699, %v4637
    %v4701 = vadd.f32 %v4700, %v4638
    %v4702 = vadd.f32 %v4701, %v4639
    %v4703 = vadd.f32 %v4702, %v4640
    %v4704 = vadd.f32 %v4703, %v4641
    %v4705 = vadd.f32 %v4704, %v4642
    %v4706 = vadd.f32 %v4705, %v4643
    %v4707 = vadd.f32 %v4706, %v4644
    %v4708 = vadd.f32 %v4707, %v4645
    %v4709 = vadd.f32 %v4708, %v4646
    %v4710 = vadd.f32 %v4709, %v4647
    %v4711 = vadd.f32 %v4710, %v4648
    %v4712 = vadd.f32 %v4711, %v4649
    %v4713 = vadd.f32 %v4712, %v4650
    %v4714 = vadd.f32 %v4713, %v4651
    %v4715 = vadd.f32 %v4714, %v4652
    %v4716 = vadd.f32 %v4715, %v4653
    %v4717 = vadd.f32 %v4716, %v4654
    %v4718 = vadd.f32 %v4717, %v4655
    %v4719 = vadd.f32 %v4718, %v4656
    %v4720 = vadd.f32 %v4719, %v4657
    %v4721 = vadd.f32 %v4720, %v4658
    %v4722 = vadd.f32 %v4721, %v4659
    %v4723 = vadd.f32 %v4722, %v4660
    %v4724 = vadd.f32 %v4723, %v4661
    %v4725 = vadd.f32 %v4724, %v4662
    %v4726 = vadd.f32 %v4725, %v4663
    %v4727 = vadd.f32 %v4726, %v4664
    %v4728 = vadd.f32 %v4727, %v4665
    %v4729 = vadd.f32 %v4728, %v4666
    %v4730 = vadd.f32 %v4729, %v4667
    %v4731 = vadd.f32 %v4730, %v4668
    %v4732 = vadd.f32 %v4731, %v4669
    %v4733 = vrot.slane %v4732, 4
    %v4734 = vadd.f32 %v4732, %v4733
    %v4735 = vrot.slane %v4734, 2
    %v4736 = vadd.f32 %v4734, %v4735
    %v4737 = vrot.slane %v4736, 1
    %v4738 = vadd.f32 %v4736, %v4737
    %v4739 = vmul.f32 %v4738, 0.001953125
    %v4740 = vmul.f32 %v4605, %v4605
    %v4741 = vsub.f32 %v4739, %v4740
    %v4742 = vmax.f32 %v4741, 0.0
    %v4743 = vsub.f32 %v4472, %v4605
    %v4744 = vsub.f32 %v4473, %v4605
    %v4745 = vsub.f32 %v4474, %v4605
    %v4746 = vsub.f32 %v4475, %v4605
    %v4747 = vsub.f32 %v4476, %v4605
    %v4748 = vsub.f32 %v4477, %v4605
    %v4749 = vsub.f32 %v4478, %v4605
    %v4750 = vsub.f32 %v4479, %v4605
    %v4751 = vsub.f32 %v4480, %v4605
    %v4752 = vsub.f32 %v4481, %v4605
    %v4753 = vsub.f32 %v4482, %v4605
    %v4754 = vsub.f32 %v4483, %v4605
    %v4755 = vsub.f32 %v4484, %v4605
    %v4756 = vsub.f32 %v4485, %v4605
    %v4757 = vsub.f32 %v4486, %v4605
    %v4758 = vsub.f32 %v4487, %v4605
    %v4759 = vsub.f32 %v4488, %v4605
    %v4760 = vsub.f32 %v4489, %v4605
    %v4761 = vsub.f32 %v4490, %v4605
    %v4762 = vsub.f32 %v4491, %v4605
    %v4763 = vsub.f32 %v4492, %v4605
    %v4764 = vsub.f32 %v4493, %v4605
    %v4765 = vsub.f32 %v4494, %v4605
    %v4766 = vsub.f32 %v4495, %v4605
    %v4767 = vsub.f32 %v4496, %v4605
    %v4768 = vsub.f32 %v4497, %v4605
    %v4769 = vsub.f32 %v4498, %v4605
    %v4770 = vsub.f32 %v4499, %v4605
    %v4771 = vsub.f32 %v4500, %v4605
    %v4772 = vsub.f32 %v4501, %v4605
    %v4773 = vsub.f32 %v4502, %v4605
    %v4774 = vsub.f32 %v4503, %v4605
    %v4775 = vsub.f32 %v4504, %v4605
    %v4776 = vsub.f32 %v4505, %v4605
    %v4777 = vsub.f32 %v4506, %v4605
    %v4778 = vsub.f32 %v4507, %v4605
    %v4779 = vsub.f32 %v4508, %v4605
    %v4780 = vsub.f32 %v4509, %v4605
    %v4781 = vsub.f32 %v4510, %v4605
    %v4782 = vsub.f32 %v4511, %v4605
    %v4783 = vsub.f32 %v4512, %v4605
    %v4784 = vsub.f32 %v4513, %v4605
    %v4785 = vsub.f32 %v4514, %v4605
    %v4786 = vsub.f32 %v4515, %v4605
    %v4787 = vsub.f32 %v4516, %v4605
    %v4788 = vsub.f32 %v4517, %v4605
    %v4789 = vsub.f32 %v4518, %v4605
    %v4790 = vsub.f32 %v4519, %v4605
    %v4791 = vsub.f32 %v4520, %v4605
    %v4792 = vsub.f32 %v4521, %v4605
    %v4793 = vsub.f32 %v4522, %v4605
    %v4794 = vsub.f32 %v4523, %v4605
    %v4795 = vsub.f32 %v4524, %v4605
    %v4796 = vsub.f32 %v4525, %v4605
    %v4797 = vsub.f32 %v4526, %v4605
    %v4798 = vsub.f32 %v4527, %v4605
    %v4799 = vsub.f32 %v4528, %v4605
    %v4800 = vsub.f32 %v4529, %v4605
    %v4801 = vsub.f32 %v4530, %v4605
    %v4802 = vsub.f32 %v4531, %v4605
    %v4803 = vsub.f32 %v4532, %v4605
    %v4804 = vsub.f32 %v4533, %v4605
    %v4805 = vsub.f32 %v4534, %v4605
    %v4806 = vsub.f32 %v4535, %v4605
    %v4807 = vadd.f32 %v4742, 1e-05
    %v4808 = vrsqrt.pop %v4807
    %v4809 = vmul.f32 %v4743, %v4808
    %v4810 = vmul.f32 %v4744, %v4808
    %v4811 = vmul.f32 %v4745, %v4808
    %v4812 = vmul.f32 %v4746, %v4808
    %v4813 = vmul.f32 %v4747, %v4808
    %v4814 = vmul.f32 %v4748, %v4808
    %v4815 = vmul.f32 %v4749, %v4808
    %v4816 = vmul.f32 %v4750, %v4808
    %v4817 = vmul.f32 %v4751, %v4808
    %v4818 = vmul.f32 %v4752, %v4808
    %v4819 = vmul.f32 %v4753, %v4808
    %v4820 = vmul.f32 %v4754, %v4808
    %v4821 = vmul.f32 %v4755, %v4808
    %v4822 = vmul.f32 %v4756, %v4808
    %v4823 = vmul.f32 %v4757, %v4808
    %v4824 = vmul.f32 %v4758, %v4808
    %v4825 = vmul.f32 %v4759, %v4808
    %v4826 = vmul.f32 %v4760, %v4808
    %v4827 = vmul.f32 %v4761, %v4808
    %v4828 = vmul.f32 %v4762, %v4808
    %v4829 = vmul.f32 %v4763, %v4808
    %v4830 = vmul.f32 %v4764, %v4808
    %v4831 = vmul.f32 %v4765, %v4808
    %v4832 = vmul.f32 %v4766, %v4808
    %v4833 = vmul.f32 %v4767, %v4808
    %v4834 = vmul.f32 %v4768, %v4808
    %v4835 = vmul.f32 %v4769, %v4808
    %v4836 = vmul.f32 %v4770, %v4808
    %v4837 = vmul.f32 %v4771, %v4808
    %v4838 = vmul.f32 %v4772, %v4808
    %v4839 = vmul.f32 %v4773, %v4808
    %v4840 = vmul.f32 %v4774, %v4808
    %v4841 = vmul.f32 %v4775, %v4808
    %v4842 = vmul.f32 %v4776, %v4808
    %v4843 = vmul.f32 %v4777, %v4808
    %v4844 = vmul.f32 %v4778, %v4808
    %v4845 = vmul.f32 %v4779, %v4808
    %v4846 = vmul.f32 %v4780, %v4808
    %v4847 = vmul.f32 %v4781, %v4808
    %v4848 = vmul.f32 %v4782, %v4808
    %v4849 = vmul.f32 %v4783, %v4808
    %v4850 = vmul.f32 %v4784, %v4808
    %v4851 = vmul.f32 %v4785, %v4808
    %v4852 = vmul.f32 %v4786, %v4808
    %v4853 = vmul.f32 %v4787, %v4808
    %v4854 = vmul.f32 %v4788, %v4808
    %v4855 = vmul.f32 %v4789, %v4808
    %v4856 = vmul.f32 %v4790, %v4808
    %v4857 = vmul.f32 %v4791, %v4808
    %v4858 = vmul.f32 %v4792, %v4808
    %v4859 = vmul.f32 %v4793, %v4808
    %v4860 = vmul.f32 %v4794, %v4808
    %v4861 = vmul.f32 %v4795, %v4808
    %v4862 = vmul.f32 %v4796, %v4808
    %v4863 = vmul.f32 %v4797, %v4808
    %v4864 = vmul.f32 %v4798, %v4808
    %v4865 = vmul.f32 %v4799, %v4808
    %v4866 = vmul.f32 %v4800, %v4808
    %v4867 = vmul.f32 %v4801, %v4808
    %v4868 = vmul.f32 %v4802, %v4808
    %v4869 = vmul.f32 %v4803, %v4808
    %v4870 = vmul.f32 %v4804, %v4808
    %v4871 = vmul.f32 %v4805, %v4808
    %v4872 = vmul.f32 %v4806, %v4808
    %v4873 = vld [vmem:[%s3] sm:$0x1]
    %v4875 = vlaneseq
    %v4876 = vshrl.u32 %v4875, 7
    %v4877 = vsub.s32 0, %v4876
    %v4878 = vrot.slane %v4873, %v4877
    %v4880 = vmul.f32 %v4809, %v4878
    %v4881 = vmul.f32 %v4810, %v4878
    %v4882 = vmul.f32 %v4811, %v4878
    %v4883 = vmul.f32 %v4812, %v4878
    %v4884 = vmul.f32 %v4813, %v4878
    %v4885 = vmul.f32 %v4814, %v4878
    %v4886 = vmul.f32 %v4815, %v4878
    %v4887 = vmul.f32 %v4816, %v4878
    %v4888 = vmul.f32 %v4817, %v4878
    %v4889 = vmul.f32 %v4818, %v4878
    %v4890 = vmul.f32 %v4819, %v4878
    %v4891 = vmul.f32 %v4820, %v4878
    %v4892 = vmul.f32 %v4821, %v4878
    %v4893 = vmul.f32 %v4822, %v4878
    %v4894 = vmul.f32 %v4823, %v4878
    %v4895 = vmul.f32 %v4824, %v4878
    %v4896 = vmul.f32 %v4825, %v4878
    %v4897 = vmul.f32 %v4826, %v4878
    %v4898 = vmul.f32 %v4827, %v4878
    %v4899 = vmul.f32 %v4828, %v4878
    %v4900 = vmul.f32 %v4829, %v4878
    %v4901 = vmul.f32 %v4830, %v4878
    %v4902 = vmul.f32 %v4831, %v4878
    %v4903 = vmul.f32 %v4832, %v4878
    %v4904 = vmul.f32 %v4833, %v4878
    %v4905 = vmul.f32 %v4834, %v4878
    %v4906 = vmul.f32 %v4835, %v4878
    %v4907 = vmul.f32 %v4836, %v4878
    %v4908 = vmul.f32 %v4837, %v4878
    %v4909 = vmul.f32 %v4838, %v4878
    %v4910 = vmul.f32 %v4839, %v4878
    %v4911 = vmul.f32 %v4840, %v4878
    %v4912 = vmul.f32 %v4841, %v4878
    %v4913 = vmul.f32 %v4842, %v4878
    %v4914 = vmul.f32 %v4843, %v4878
    %v4915 = vmul.f32 %v4844, %v4878
    %v4916 = vmul.f32 %v4845, %v4878
    %v4917 = vmul.f32 %v4846, %v4878
    %v4918 = vmul.f32 %v4847, %v4878
    %v4919 = vmul.f32 %v4848, %v4878
    %v4920 = vmul.f32 %v4849, %v4878
    %v4921 = vmul.f32 %v4850, %v4878
    %v4922 = vmul.f32 %v4851, %v4878
    %v4923 = vmul.f32 %v4852, %v4878
    %v4924 = vmul.f32 %v4853, %v4878
    %v4925 = vmul.f32 %v4854, %v4878
    %v4926 = vmul.f32 %v4855, %v4878
    %v4927 = vmul.f32 %v4856, %v4878
    %v4928 = vmul.f32 %v4857, %v4878
    %v4929 = vmul.f32 %v4858, %v4878
    %v4930 = vmul.f32 %v4859, %v4878
    %v4931 = vmul.f32 %v4860, %v4878
    %v4932 = vmul.f32 %v4861, %v4878
    %v4933 = vmul.f32 %v4862, %v4878
    %v4934 = vmul.f32 %v4863, %v4878
    %v4935 = vmul.f32 %v4864, %v4878
    %v4936 = vmul.f32 %v4865, %v4878
    %v4937 = vmul.f32 %v4866, %v4878
    %v4938 = vmul.f32 %v4867, %v4878
    %v4939 = vmul.f32 %v4868, %v4878
    %v4940 = vmul.f32 %v4869, %v4878
    %v4941 = vmul.f32 %v4870, %v4878
    %v4942 = vmul.f32 %v4871, %v4878
    %v4943 = vmul.f32 %v4872, %v4878
    %v4944 = vld [vmem:[%s4] sm:$0x1]
    %v4946 = vlaneseq
    %v4947 = vshrl.u32 %v4946, 7
    %v4948 = vsub.s32 0, %v4947
    %v4949 = vrot.slane %v4944, %v4948
    %v4951 = vadd.f32 %v4880, %v4949
    %v4952 = vadd.f32 %v4881, %v4949
    %v4953 = vadd.f32 %v4882, %v4949
    %v4954 = vadd.f32 %v4883, %v4949
    %v4955 = vadd.f32 %v4884, %v4949
    %v4956 = vadd.f32 %v4885, %v4949
    %v4957 = vadd.f32 %v4886, %v4949
    %v4958 = vadd.f32 %v4887, %v4949
    %v4959 = vadd.f32 %v4888, %v4949
    %v4960 = vadd.f32 %v4889, %v4949
    %v4961 = vadd.f32 %v4890, %v4949
    %v4962 = vadd.f32 %v4891, %v4949
    %v4963 = vadd.f32 %v4892, %v4949
    %v4964 = vadd.f32 %v4893, %v4949
    %v4965 = vadd.f32 %v4894, %v4949
    %v4966 = vadd.f32 %v4895, %v4949
    %v4967 = vadd.f32 %v4896, %v4949
    %v4968 = vadd.f32 %v4897, %v4949
    %v4969 = vadd.f32 %v4898, %v4949
    %v4970 = vadd.f32 %v4899, %v4949
    %v4971 = vadd.f32 %v4900, %v4949
    %v4972 = vadd.f32 %v4901, %v4949
    %v4973 = vadd.f32 %v4902, %v4949
    %v4974 = vadd.f32 %v4903, %v4949
    %v4975 = vadd.f32 %v4904, %v4949
    %v4976 = vadd.f32 %v4905, %v4949
    %v4977 = vadd.f32 %v4906, %v4949
    %v4978 = vadd.f32 %v4907, %v4949
    %v4979 = vadd.f32 %v4908, %v4949
    %v4980 = vadd.f32 %v4909, %v4949
    %v4981 = vadd.f32 %v4910, %v4949
    %v4982 = vadd.f32 %v4911, %v4949
    %v4983 = vadd.f32 %v4912, %v4949
    %v4984 = vadd.f32 %v4913, %v4949
    %v4985 = vadd.f32 %v4914, %v4949
    %v4986 = vadd.f32 %v4915, %v4949
    %v4987 = vadd.f32 %v4916, %v4949
    %v4988 = vadd.f32 %v4917, %v4949
    %v4989 = vadd.f32 %v4918, %v4949
    %v4990 = vadd.f32 %v4919, %v4949
    %v4991 = vadd.f32 %v4920, %v4949
    %v4992 = vadd.f32 %v4921, %v4949
    %v4993 = vadd.f32 %v4922, %v4949
    %v4994 = vadd.f32 %v4923, %v4949
    %v4995 = vadd.f32 %v4924, %v4949
    %v4996 = vadd.f32 %v4925, %v4949
    %v4997 = vadd.f32 %v4926, %v4949
    %v4998 = vadd.f32 %v4927, %v4949
    %v4999 = vadd.f32 %v4928, %v4949
    %v5000 = vadd.f32 %v4929, %v4949
    %v5001 = vadd.f32 %v4930, %v4949
    %v5002 = vadd.f32 %v4931, %v4949
    %v5003 = vadd.f32 %v4932, %v4949
    %v5004 = vadd.f32 %v4933, %v4949
    %v5005 = vadd.f32 %v4934, %v4949
    %v5006 = vadd.f32 %v4935, %v4949
    %v5007 = vadd.f32 %v4936, %v4949
    %v5008 = vadd.f32 %v4937, %v4949
    %v5009 = vadd.f32 %v4938, %v4949
    %v5010 = vadd.f32 %v4939, %v4949
    %v5011 = vadd.f32 %v4940, %v4949
    %v5012 = vadd.f32 %v4941, %v4949
    %v5013 = vadd.f32 %v4942, %v4949
    %v5014 = vadd.f32 %v4943, %v4949
    %v5015 = vmax.f32 %v4951, 0.0
    %v5016 = vmax.f32 %v4952, 0.0
    %v5017 = vmax.f32 %v4953, 0.0
    %v5018 = vmax.f32 %v4954, 0.0
    %v5019 = vmax.f32 %v4955, 0.0
    %v5020 = vmax.f32 %v4956, 0.0
    %v5021 = vmax.f32 %v4957, 0.0
    %v5022 = vmax.f32 %v4958, 0.0
    %v5023 = vmax.f32 %v4959, 0.0
    %v5024 = vmax.f32 %v4960, 0.0
    %v5025 = vmax.f32 %v4961, 0.0
    %v5026 = vmax.f32 %v4962, 0.0
    %v5027 = vmax.f32 %v4963, 0.0
    %v5028 = vmax.f32 %v4964, 0.0
    %v5029 = vmax.f32 %v4965, 0.0
    %v5030 = vmax.f32 %v4966, 0.0
    %v5031 = vmax.f32 %v4967, 0.0
    %v5032 = vmax.f32 %v4968, 0.0
    %v5033 = vmax.f32 %v4969, 0.0
    %v5034 = vmax.f32 %v4970, 0.0
    %v5035 = vmax.f32 %v4971, 0.0
    %v5036 = vmax.f32 %v4972, 0.0
    %v5037 = vmax.f32 %v4973, 0.0
    %v5038 = vmax.f32 %v4974, 0.0
    %v5039 = vmax.f32 %v4975, 0.0
    %v5040 = vmax.f32 %v4976, 0.0
    %v5041 = vmax.f32 %v4977, 0.0
    %v5042 = vmax.f32 %v4978, 0.0
    %v5043 = vmax.f32 %v4979, 0.0
    %v5044 = vmax.f32 %v4980, 0.0
    %v5045 = vmax.f32 %v4981, 0.0
    %v5046 = vmax.f32 %v4982, 0.0
    %v5047 = vmax.f32 %v4983, 0.0
    %v5048 = vmax.f32 %v4984, 0.0
    %v5049 = vmax.f32 %v4985, 0.0
    %v5050 = vmax.f32 %v4986, 0.0
    %v5051 = vmax.f32 %v4987, 0.0
    %v5052 = vmax.f32 %v4988, 0.0
    %v5053 = vmax.f32 %v4989, 0.0
    %v5054 = vmax.f32 %v4990, 0.0
    %v5055 = vmax.f32 %v4991, 0.0
    %v5056 = vmax.f32 %v4992, 0.0
    %v5057 = vmax.f32 %v4993, 0.0
    %v5058 = vmax.f32 %v4994, 0.0
    %v5059 = vmax.f32 %v4995, 0.0
    %v5060 = vmax.f32 %v4996, 0.0
    %v5061 = vmax.f32 %v4997, 0.0
    %v5062 = vmax.f32 %v4998, 0.0
    %v5063 = vmax.f32 %v4999, 0.0
    %v5064 = vmax.f32 %v5000, 0.0
    %v5065 = vmax.f32 %v5001, 0.0
    %v5066 = vmax.f32 %v5002, 0.0
    %v5067 = vmax.f32 %v5003, 0.0
    %v5068 = vmax.f32 %v5004, 0.0
    %v5069 = vmax.f32 %v5005, 0.0
    %v5070 = vmax.f32 %v5006, 0.0
    %v5071 = vmax.f32 %v5007, 0.0
    %v5072 = vmax.f32 %v5008, 0.0
    %v5073 = vmax.f32 %v5009, 0.0
    %v5074 = vmax.f32 %v5010, 0.0
    %v5075 = vmax.f32 %v5011, 0.0
    %v5076 = vmax.f32 %v5012, 0.0
    %v5077 = vmax.f32 %v5013, 0.0
    %v5078 = vmax.f32 %v5014, 0.0
    %5079 = vst [vmem:[%s472 + $0x1] sm:$0xff] %v5015
    %5080 = vst [vmem:[%s472 + $0x9] sm:$0xff] %v5016
    %5081 = vst [vmem:[%s472 + $0x19] sm:$0xff] %v5017
    %5082 = vst [vmem:[%s472 + $0x21] sm:$0xff] %v5018
    %5083 = vst [vmem:[%s472 + $0x31] sm:$0xff] %v5019
    %5084 = vst [vmem:[%s472 + $0x39] sm:$0xff] %v5020
    %5085 = vst [vmem:[%s472 + $0x49] sm:$0xff] %v5021
    %5086 = vst [vmem:[%s472 + $0x51] sm:$0xff] %v5022
    %5087 = vst [vmem:[%s472 + $0x61] sm:$0xff] %v5023
    %5088 = vst [vmem:[%s472 + $0x69] sm:$0xff] %v5024
    %5089 = vst [vmem:[%s472 + $0x79] sm:$0xff] %v5025
    %5090 = vst [vmem:[%s472 + $0x81] sm:$0xff] %v5026
    %5091 = vst [vmem:[%s472 + $0x91] sm:$0xff] %v5027
    %5092 = vst [vmem:[%s472 + $0x99] sm:$0xff] %v5028
    %5093 = vst [vmem:[%s472 + $0xa9] sm:$0xff] %v5029
    %5094 = vst [vmem:[%s472 + $0xb1] sm:$0xff] %v5030
    %5095 = vst [vmem:[%s472 + $0xc1] sm:$0xff] %v5031
    %5096 = vst [vmem:[%s472 + $0xc9] sm:$0xff] %v5032
    %5097 = vst [vmem:[%s472 + $0xd9] sm:$0xff] %v5033
    %5098 = vst [vmem:[%s472 + $0xe1] sm:$0xff] %v5034
    %5099 = vst [vmem:[%s472 + $0xf1] sm:$0xff] %v5035
    %5100 = vst [vmem:[%s472 + $0xf9] sm:$0xff] %v5036
    %5101 = vst [vmem:[%s472 + $0x109] sm:$0xff] %v5037
    %5102 = vst [vmem:[%s472 + $0x111] sm:$0xff] %v5038
    %5103 = vst [vmem:[%s472 + $0x121] sm:$0xff] %v5039
    %5104 = vst [vmem:[%s472 + $0x129] sm:$0xff] %v5040
    %5105 = vst [vmem:[%s472 + $0x139] sm:$0xff] %v5041
    %5106 = vst [vmem:[%s472 + $0x141] sm:$0xff] %v5042
    %5107 = vst [vmem:[%s472 + $0x151] sm:$0xff] %v5043
    %5108 = vst [vmem:[%s472 + $0x159] sm:$0xff] %v5044
    %5109 = vst [vmem:[%s472 + $0x169] sm:$0xff] %v5045
    %5110 = vst [vmem:[%s472 + $0x171] sm:$0xff] %v5046
    %5111 = vst [vmem:[%s472 + $0x1b1] sm:$0xff] %v5047
    %5112 = vst [vmem:[%s472 + $0x1b9] sm:$0xff] %v5048
    %5113 = vst [vmem:[%s472 + $0x1c9] sm:$0xff] %v5049
    %5114 = vst [vmem:[%s472 + $0x1d1] sm:$0xff] %v5050
    %5115 = vst [vmem:[%s472 + $0x1e1] sm:$0xff] %v5051
    %5116 = vst [vmem:[%s472 + $0x1e9] sm:$0xff] %v5052
    %5117 = vst [vmem:[%s472 + $0x1f9] sm:$0xff] %v5053
    %5118 = vst [vmem:[%s472 + $0x201] sm:$0xff] %v5054
    %5119 = vst [vmem:[%s472 + $0x211] sm:$0xff] %v5055
    %5120 = vst [vmem:[%s472 + $0x219] sm:$0xff] %v5056
    %5121 = vst [vmem:[%s472 + $0x229] sm:$0xff] %v5057
    %5122 = vst [vmem:[%s472 + $0x231] sm:$0xff] %v5058
    %5123 = vst [vmem:[%s472 + $0x241] sm:$0xff] %v5059
    %5124 = vst [vmem:[%s472 + $0x249] sm:$0xff] %v5060
    %5125 = vst [vmem:[%s472 + $0x259] sm:$0xff] %v5061
    %5126 = vst [vmem:[%s472 + $0x261] sm:$0xff] %v5062
    %5127 = vst [vmem:[%s472 + $0x271] sm:$0xff] %v5063
    %5128 = vst [vmem:[%s472 + $0x279] sm:$0xff] %v5064
    %5129 = vst [vmem:[%s472 + $0x289] sm:$0xff] %v5065
    %5130 = vst [vmem:[%s472 + $0x291] sm:$0xff] %v5066
    %5131 = vst [vmem:[%s472 + $0x2a1] sm:$0xff] %v5067
    %5132 = vst [vmem:[%s472 + $0x2a9] sm:$0xff] %v5068
    %5133 = vst [vmem:[%s472 + $0x2b9] sm:$0xff] %v5069
    %5134 = vst [vmem:[%s472 + $0x2c1] sm:$0xff] %v5070
    %5135 = vst [vmem:[%s472 + $0x2d1] sm:$0xff] %v5071
    %5136 = vst [vmem:[%s472 + $0x2d9] sm:$0xff] %v5072
    %5137 = vst [vmem:[%s472 + $0x2e9] sm:$0xff] %v5073
    %5138 = vst [vmem:[%s472 + $0x2f1] sm:$0xff] %v5074
    %5139 = vst [vmem:[%s472 + $0x301] sm:$0xff] %v5075
    %5140 = vst [vmem:[%s472 + $0x309] sm:$0xff] %v5076
    %5141 = vst [vmem:[%s472 + $0x319] sm:$0xff] %v5077
    %5142 = vst [vmem:[%s472 + $0x321] sm:$0xff] %v5078
    %s5143 = sshll.u32 %s539, 4
    %5144 = dma.done %s73, %s5143
    %v5145 = vld [vmem:[#allocation2] sm:$0xff]
    %v5146 = vld [vmem:[#allocation2 + $0x8] sm:$0xff]
    %v5147 = vld [vmem:[#allocation2 + $0x18] sm:$0xff]
    %v5148 = vld [vmem:[#allocation2 + $0x20] sm:$0xff]
    %v5149 = vld [vmem:[#allocation2 + $0x30] sm:$0xff]
    %v5150 = vld [vmem:[#allocation2 + $0x38] sm:$0xff]
    %v5151 = vld [vmem:[#allocation2 + $0x48] sm:$0xff]
    %v5152 = vld [vmem:[#allocation2 + $0x50] sm:$0xff]
    %v5153 = vld [vmem:[#allocation2 + $0x60] sm:$0xff]
    %v5154 = vld [vmem:[#allocation2 + $0x68] sm:$0xff]
    %v5155 = vld [vmem:[#allocation2 + $0x78] sm:$0xff]
    %v5156 = vld [vmem:[#allocation2 + $0x80] sm:$0xff]
    %v5157 = vld [vmem:[#allocation2 + $0x90] sm:$0xff]
    %v5158 = vld [vmem:[#allocation2 + $0x98] sm:$0xff]
    %v5159 = vld [vmem:[#allocation2 + $0xa8] sm:$0xff]
    %v5160 = vld [vmem:[#allocation2 + $0xb0] sm:$0xff]
    %v5161 = vld [vmem:[#allocation2 + $0xc0] sm:$0xff]
    %v5162 = vld [vmem:[#allocation2 + $0xc8] sm:$0xff]
    %v5163 = vld [vmem:[#allocation2 + $0xd8] sm:$0xff]
    %v5164 = vld [vmem:[#allocation2 + $0xe0] sm:$0xff]
    %v5165 = vld [vmem:[#allocation2 + $0xf0] sm:$0xff]
    %v5166 = vld [vmem:[#allocation2 + $0xf8] sm:$0xff]
    %v5167 = vld [vmem:[#allocation2 + $0x108] sm:$0xff]
    %v5168 = vld [vmem:[#allocation2 + $0x110] sm:$0xff]
    %v5169 = vld [vmem:[#allocation2 + $0x120] sm:$0xff]
    %v5170 = vld [vmem:[#allocation2 + $0x128] sm:$0xff]
    %v5171 = vld [vmem:[#allocation2 + $0x138] sm:$0xff]
    %v5172 = vld [vmem:[#allocation2 + $0x140] sm:$0xff]
    %v5173 = vld [vmem:[#allocation2 + $0x150] sm:$0xff]
    %v5174 = vld [vmem:[#allocation2 + $0x158] sm:$0xff]
    %v5175 = vld [vmem:[#allocation2 + $0x168] sm:$0xff]
    %v5176 = vld [vmem:[#allocation2 + $0x170] sm:$0xff]
    %v5177 = vld [vmem:[#allocation2 + $0x1b0] sm:$0xff]
    %v5178 = vld [vmem:[#allocation2 + $0x1b8] sm:$0xff]
    %v5179 = vld [vmem:[#allocation2 + $0x1c8] sm:$0xff]
    %v5180 = vld [vmem:[#allocation2 + $0x1d0] sm:$0xff]
    %v5181 = vld [vmem:[#allocation2 + $0x1e0] sm:$0xff]
    %v5182 = vld [vmem:[#allocation2 + $0x1e8] sm:$0xff]
    %v5183 = vld [vmem:[#allocation2 + $0x1f8] sm:$0xff]
    %v5184 = vld [vmem:[#allocation2 + $0x200] sm:$0xff]
    %v5185 = vld [vmem:[#allocation2 + $0x210] sm:$0xff]
    %v5186 = vld [vmem:[#allocation2 + $0x218] sm:$0xff]
    %v5187 = vld [vmem:[#allocation2 + $0x228] sm:$0xff]
    %v5188 = vld [vmem:[#allocation2 + $0x230] sm:$0xff]
    %v5189 = vld [vmem:[#allocation2 + $0x240] sm:$0xff]
    %v5190 = vld [vmem:[#allocation2 + $0x248] sm:$0xff]
    %v5191 = vld [vmem:[#allocation2 + $0x258] sm:$0xff]
    %v5192 = vld [vmem:[#allocation2 + $0x260] sm:$0xff]
    %v5193 = vld [vmem:[#allocation2 + $0x270] sm:$0xff]
    %v5194 = vld [vmem:[#allocation2 + $0x278] sm:$0xff]
    %v5195 = vld [vmem:[#allocation2 + $0x288] sm:$0xff]
    %v5196 = vld [vmem:[#allocation2 + $0x290] sm:$0xff]
    %v5197 = vld [vmem:[#allocation2 + $0x2a0] sm:$0xff]
    %v5198 = vld [vmem:[#allocation2 + $0x2a8] sm:$0xff]
    %v5199 = vld [vmem:[#allocation2 + $0x2b8] sm:$0xff]
    %v5200 = vld [vmem:[#allocation2 + $0x2c0] sm:$0xff]
    %v5201 = vld [vmem:[#allocation2 + $0x2d0] sm:$0xff]
    %v5202 = vld [vmem:[#allocation2 + $0x2d8] sm:$0xff]
    %v5203 = vld [vmem:[#allocation2 + $0x2e8] sm:$0xff]
    %v5204 = vld [vmem:[#allocation2 + $0x2f0] sm:$0xff]
    %v5205 = vld [vmem:[#allocation2 + $0x300] sm:$0xff]
    %v5206 = vld [vmem:[#allocation2 + $0x308] sm:$0xff]
    %v5207 = vld [vmem:[#allocation2 + $0x318] sm:$0xff]
    %v5208 = vld [vmem:[#allocation2 + $0x320] sm:$0xff]
    %v5209 = vpack.c.bf16 %v5146, %v5145
    %v5210 = vpack.c.bf16 %v5148, %v5147
    %v5211 = vpack.c.bf16 %v5150, %v5149
    %v5212 = vpack.c.bf16 %v5152, %v5151
    %v5213 = vpack.c.bf16 %v5154, %v5153
    %v5214 = vpack.c.bf16 %v5156, %v5155
    %v5215 = vpack.c.bf16 %v5158, %v5157
    %v5216 = vpack.c.bf16 %v5160, %v5159
    %v5217 = vpack.c.bf16 %v5162, %v5161
    %v5218 = vpack.c.bf16 %v5164, %v5163
    %v5219 = vpack.c.bf16 %v5166, %v5165
    %v5220 = vpack.c.bf16 %v5168, %v5167
    %v5221 = vpack.c.bf16 %v5170, %v5169
    %v5222 = vpack.c.bf16 %v5172, %v5171
    %v5223 = vpack.c.bf16 %v5174, %v5173
    %v5224 = vpack.c.bf16 %v5176, %v5175
    %v5225 = vpack.c.bf16 %v5178, %v5177
    %v5226 = vpack.c.bf16 %v5180, %v5179
    %v5227 = vpack.c.bf16 %v5182, %v5181
    %v5228 = vpack.c.bf16 %v5184, %v5183
    %v5229 = vpack.c.bf16 %v5186, %v5185
    %v5230 = vpack.c.bf16 %v5188, %v5187
    %v5231 = vpack.c.bf16 %v5190, %v5189
    %v5232 = vpack.c.bf16 %v5192, %v5191
    %v5233 = vpack.c.bf16 %v5194, %v5193
    %v5234 = vpack.c.bf16 %v5196, %v5195
    %v5235 = vpack.c.bf16 %v5198, %v5197
    %v5236 = vpack.c.bf16 %v5200, %v5199
    %v5237 = vpack.c.bf16 %v5202, %v5201
    %v5238 = vpack.c.bf16 %v5204, %v5203
    %v5239 = vpack.c.bf16 %v5206, %v5205
    %v5240 = vpack.c.bf16 %v5208, %v5207
    %v5241 = vld [vmem:[#allocation4] sm:$0xff]
    %v5242 = vld [vmem:[#allocation4 + $0x8] sm:$0xff]
    %v5243 = vld [vmem:[#allocation4 + $0x10] sm:$0xff]
    %v5244 = vld [vmem:[#allocation4 + $0x18] sm:$0xff]
    %v5245 = vld [vmem:[#allocation4 + $0x20] sm:$0xff]
    %v5246 = vld [vmem:[#allocation4 + $0x28] sm:$0xff]
    %v5247 = vld [vmem:[#allocation4 + $0x30] sm:$0xff]
    %v5248 = vld [vmem:[#allocation4 + $0x38] sm:$0xff]
    %v5249 = vld [vmem:[#allocation2 + $0x1] sm:$0xff]
    %v5250 = vld [vmem:[#allocation2 + $0x9] sm:$0xff]
    %v5251 = vld [vmem:[#allocation2 + $0x19] sm:$0xff]
    %v5252 = vld [vmem:[#allocation2 + $0x21] sm:$0xff]
    %v5253 = vld [vmem:[#allocation2 + $0x31] sm:$0xff]
    %v5254 = vld [vmem:[#allocation2 + $0x39] sm:$0xff]
    %v5255 = vld [vmem:[#allocation2 + $0x49] sm:$0xff]
    %v5256 = vld [vmem:[#allocation2 + $0x51] sm:$0xff]
    %v5257 = vld [vmem:[#allocation2 + $0x61] sm:$0xff]
    %v5258 = vld [vmem:[#allocation2 + $0x69] sm:$0xff]
    %v5259 = vld [vmem:[#allocation2 + $0x79] sm:$0xff]
    %v5260 = vld [vmem:[#allocation2 + $0x81] sm:$0xff]
    %v5261 = vld [vmem:[#allocation2 + $0x91] sm:$0xff]
    %v5262 = vld [vmem:[#allocation2 + $0x99] sm:$0xff]
    %v5263 = vld [vmem:[#allocation2 + $0xa9] sm:$0xff]
    %v5264 = vld [vmem:[#allocation2 + $0xb1] sm:$0xff]
    %v5265 = vld [vmem:[#allocation2 + $0xc1] sm:$0xff]
    %v5266 = vld [vmem:[#allocation2 + $0xc9] sm:$0xff]
    %v5267 = vld [vmem:[#allocation2 + $0xd9] sm:$0xff]
    %v5268 = vld [vmem:[#allocation2 + $0xe1] sm:$0xff]
    %v5269 = vld [vmem:[#allocation2 + $0xf1] sm:$0xff]
    %v5270 = vld [vmem:[#allocation2 + $0xf9] sm:$0xff]
    %v5271 = vld [vmem:[#allocation2 + $0x109] sm:$0xff]
    %v5272 = vld [vmem:[#allocation2 + $0x111] sm:$0xff]
    %v5273 = vld [vmem:[#allocation2 + $0x121] sm:$0xff]
    %v5274 = vld [vmem:[#allocation2 + $0x129] sm:$0xff]
    %v5275 = vld [vmem:[#allocation2 + $0x139] sm:$0xff]
    %v5276 = vld [vmem:[#allocation2 + $0x141] sm:$0xff]
    %v5277 = vld [vmem:[#allocation2 + $0x151] sm:$0xff]
    %v5278 = vld [vmem:[#allocation2 + $0x159] sm:$0xff]
    %v5279 = vld [vmem:[#allocation2 + $0x169] sm:$0xff]
    %v5280 = vld [vmem:[#allocation2 + $0x171] sm:$0xff]
    %v5281 = vld [vmem:[#allocation2 + $0x1b1] sm:$0xff]
    %v5282 = vld [vmem:[#allocation2 + $0x1b9] sm:$0xff]
    %v5283 = vld [vmem:[#allocation2 + $0x1c9] sm:$0xff]
    %v5284 = vld [vmem:[#allocation2 + $0x1d1] sm:$0xff]
    %v5285 = vld [vmem:[#allocation2 + $0x1e1] sm:$0xff]
    %v5286 = vld [vmem:[#allocation2 + $0x1e9] sm:$0xff]
    %v5287 = vld [vmem:[#allocation2 + $0x1f9] sm:$0xff]
    %v5288 = vld [vmem:[#allocation2 + $0x201] sm:$0xff]
    %v5289 = vld [vmem:[#allocation2 + $0x211] sm:$0xff]
    %v5290 = vld [vmem:[#allocation2 + $0x219] sm:$0xff]
    %v5291 = vld [vmem:[#allocation2 + $0x229] sm:$0xff]
    %v5292 = vld [vmem:[#allocation2 + $0x231] sm:$0xff]
    %v5293 = vld [vmem:[#allocation2 + $0x241] sm:$0xff]
    %v5294 = vld [vmem:[#allocation2 + $0x249] sm:$0xff]
    %v5295 = vld [vmem:[#allocation2 + $0x259] sm:$0xff]
    %v5296 = vld [vmem:[#allocation2 + $0x261] sm:$0xff]
    %v5297 = vld [vmem:[#allocation2 + $0x271] sm:$0xff]
    %v5298 = vld [vmem:[#allocation2 + $0x279] sm:$0xff]
    %v5299 = vld [vmem:[#allocation2 + $0x289] sm:$0xff]
    %v5300 = vld [vmem:[#allocation2 + $0x291] sm:$0xff]
    %v5301 = vld [vmem:[#allocation2 + $0x2a1] sm:$0xff]
    %v5302 = vld [vmem:[#allocation2 + $0x2a9] sm:$0xff]
    %v5303 = vld [vmem:[#allocation2 + $0x2b9] sm:$0xff]
    %v5304 = vld [vmem:[#allocation2 + $0x2c1] sm:$0xff]
    %v5305 = vld [vmem:[#allocation2 + $0x2d1] sm:$0xff]
    %v5306 = vld [vmem:[#allocation2 + $0x2d9] sm:$0xff]
    %v5307 = vld [vmem:[#allocation2 + $0x2e9] sm:$0xff]
    %v5308 = vld [vmem:[#allocation2 + $0x2f1] sm:$0xff]
    %v5309 = vld [vmem:[#allocation2 + $0x301] sm:$0xff]
    %v5310 = vld [vmem:[#allocation2 + $0x309] sm:$0xff]
    %v5311 = vld [vmem:[#allocation2 + $0x319] sm:$0xff]
    %v5312 = vld [vmem:[#allocation2 + $0x321] sm:$0xff]
    %v5313 = vpack.c.bf16 %v5250, %v5249
    %v5314 = vpack.c.bf16 %v5252, %v5251
    %v5315 = vpack.c.bf16 %v5254, %v5253
    %v5316 = vpack.c.bf16 %v5256, %v5255
    %v5317 = vpack.c.bf16 %v5258, %v5257
    %v5318 = vpack.c.bf16 %v5260, %v5259
    %v5319 = vpack.c.bf16 %v5262, %v5261
    %v5320 = vpack.c.bf16 %v5264, %v5263
    %v5321 = vpack.c.bf16 %v5266, %v5265
    %v5322 = vpack.c.bf16 %v5268, %v5267
    %v5323 = vpack.c.bf16 %v5270, %v5269
    %v5324 = vpack.c.bf16 %v5272, %v5271
    %v5325 = vpack.c.bf16 %v5274, %v5273
    %v5326 = vpack.c.bf16 %v5276, %v5275
    %v5327 = vpack.c.bf16 %v5278, %v5277
    %v5328 = vpack.c.bf16 %v5280, %v5279
    %v5329 = vpack.c.bf16 %v5282, %v5281
    %v5330 = vpack.c.bf16 %v5284, %v5283
    %v5331 = vpack.c.bf16 %v5286, %v5285
    %v5332 = vpack.c.bf16 %v5288, %v5287
    %v5333 = vpack.c.bf16 %v5290, %v5289
    %v5334 = vpack.c.bf16 %v5292, %v5291
    %v5335 = vpack.c.bf16 %v5294, %v5293
    %v5336 = vpack.c.bf16 %v5296, %v5295
    %v5337 = vpack.c.bf16 %v5298, %v5297
    %v5338 = vpack.c.bf16 %v5300, %v5299
    %v5339 = vpack.c.bf16 %v5302, %v5301
    %v5340 = vpack.c.bf16 %v5304, %v5303
    %v5341 = vpack.c.bf16 %v5306, %v5305
    %v5342 = vpack.c.bf16 %v5308, %v5307
    %v5343 = vpack.c.bf16 %v5310, %v5309
    %v5344 = vpack.c.bf16 %v5312, %v5311
    %s5345 = scalar_lea.vmem [#allocation4], 64
    %v5346 = vld [vmem:[%s5345] sm:$0xff]
    %v5347 = vld [vmem:[%s5345 + $0x8] sm:$0xff]
    %v5348 = vld [vmem:[%s5345 + $0x10] sm:$0xff]
    %v5349 = vld [vmem:[%s5345 + $0x18] sm:$0xff]
    %v5350 = vld [vmem:[%s5345 + $0x20] sm:$0xff]
    %v5351 = vld [vmem:[%s5345 + $0x28] sm:$0xff]
    %v5352 = vld [vmem:[%s5345 + $0x30] sm:$0xff]
    %v5353 = vld [vmem:[%s5345 + $0x38] sm:$0xff]
    %5354 = vmatprep.subr.bf16.mxu0 0
    %5355 = vmatpush1.bf16.msra.mxu0 %v5346
    %5356 = vmatprep.subr.bf16.mxu0 0
    %5357 = vmatpush1.bf16.msra.mxu0 %v5347
    %5358 = vmatprep.subr.bf16.mxu0 0
    %5359 = vmatpush1.bf16.msra.mxu0 %v5348
    %5360 = vmatprep.subr.bf16.mxu0 0
    %5361 = vmatpush1.bf16.msra.mxu0 %v5349
    %5362 = vmatprep.subr.bf16.mxu0 0
    %5363 = vmatpush1.bf16.msra.mxu0 %v5350
    %5364 = vmatprep.subr.bf16.mxu0 0
    %5365 = vmatpush1.bf16.msra.mxu0 %v5351
    %5366 = vmatprep.subr.bf16.mxu0 0
    %5367 = vmatpush1.bf16.msra.mxu0 %v5352
    %5368 = vmatprep.subr.bf16.mxu0 0
    %5369 = vmatpush1.bf16.msra.mxu0 %v5353
    %5370 = vmatprep.subr.bf16.mxu0 0
    %5371 = vmatpush1.bf16.msra.mxu0 0
    %5372 = vmatprep.subr.bf16.mxu0 0
    %5373 = vmatpush1.bf16.msra.mxu0 0
    %5374 = vmatprep.subr.bf16.mxu0 0
    %5375 = vmatpush1.bf16.msra.mxu0 0
    %5376 = vmatprep.subr.bf16.mxu0 0
    %5377 = vmatpush1.bf16.msra.mxu0 0
    %5378 = vmatprep.subr.bf16.mxu0 0
    %5379 = vmatpush1.bf16.msra.mxu0 0
    %5380 = vmatprep.subr.bf16.mxu0 0
    %5381 = vmatpush1.bf16.msra.mxu0 0
    %5382 = vmatprep.subr.bf16.mxu0 0
    %5383 = vmatpush1.bf16.msra.mxu0 0
    %5384 = vmatprep.subr.bf16.mxu0 0
    %5385 = vmatpush1.bf16.msra.mxu0 0
    %5386 = vmatprep.mubr.bf16.mxu0 0
    %5387 = vmatmul.mubr.bf16.gmra.mrb[0].mxu0 %v5313
    %v5388 = vpop.f32.mrb[0].mxu0
    %v5389 = vadd.f32 0.0, %v5388
    %v5390 = vpop.f32.mrb[0].mxu0
    %v5391 = vpop.f32.mrb[0].mxu0
    %v5392 = vadd.f32 0.0, %v5391
    %v5393 = vpop.f32.mrb[0].mxu0
    %5394 = vmatprep.mubr.bf16.mxu0 0
    %5395 = vmatmul.mubr.bf16.gmra.mrb[0].mxu0 %v5314
    %v5396 = vpop.f32.mrb[0].mxu0
    %v5397 = vadd.f32 0.0, %v5396
    %v5398 = vpop.f32.mrb[0].mxu0
    %v5399 = vpop.f32.mrb[0].mxu0
    %v5400 = vadd.f32 0.0, %v5399
    %v5401 = vpop.f32.mrb[0].mxu0
    %5402 = vmatprep.mubr.bf16.mxu0 0
    %5403 = vmatmul.mubr.bf16.gmra.mrb[0].mxu0 %v5315
    %v5404 = vpop.f32.mrb[0].mxu0
    %v5405 = vadd.f32 0.0, %v5404
    %v5406 = vpop.f32.mrb[0].mxu0
    %v5407 = vpop.f32.mrb[0].mxu0
    %v5408 = vadd.f32 0.0, %v5407
    %v5409 = vpop.f32.mrb[0].mxu0
    %5410 = vmatprep.mubr.bf16.mxu0 0
    %5411 = vmatmul.mubr.bf16.gmra.mrb[0].mxu0 %v5316
    %v5412 = vpop.f32.mrb[0].mxu0
    %v5413 = vadd.f32 0.0, %v5412
    %v5414 = vpop.f32.mrb[0].mxu0
    %v5415 = vpop.f32.mrb[0].mxu0
    %v5416 = vadd.f32 0.0, %v5415
    %v5417 = vpop.f32.mrb[0].mxu0
    %5418 = vmatprep.mubr.bf16.mxu0 0
    %5419 = vmatmul.mubr.bf16.gmra.mrb[0].mxu0 %v5317
    %v5420 = vpop.f32.mrb[0].mxu0
    %v5421 = vadd.f32 0.0, %v5420
    %v5422 = vpop.f32.mrb[0].mxu0
    %v5423 = vpop.f32.mrb[0].mxu0
    %v5424 = vadd.f32 0.0, %v5423
    %v5425 = vpop.f32.mrb[0].mxu0
    %5426 = vmatprep.mubr.bf16.mxu0 0
    %5427 = vmatmul.mubr.bf16.gmra.mrb[0].mxu0 %v5318
    %v5428 = vpop.f32.mrb[0].mxu0
    %v5429 = vadd.f32 0.0, %v5428
    %v5430 = vpop.f32.mrb[0].mxu0
    %v5431 = vpop.f32.mrb[0].mxu0
    %v5432 = vadd.f32 0.0, %v5431
    %v5433 = vpop.f32.mrb[0].mxu0
    %5434 = vmatprep.mubr.bf16.mxu0 0
    %5435 = vmatmul.mubr.bf16.gmra.mrb[0].mxu0 %v5319
    %v5436 = vpop.f32.mrb[0].mxu0
    %v5437 = vadd.f32 0.0, %v5436
    %v5438 = vpop.f32.mrb[0].mxu0
    %v5439 = vpop.f32.mrb[0].mxu0
    %v5440 = vadd.f32 0.0, %v5439
    %v5441 = vpop.f32.mrb[0].mxu0
    %5442 = vmatprep.mubr.bf16.mxu0 0
    %5443 = vmatmul.mubr.bf16.gmra.mrb[0].mxu0 %v5320
    %v5444 = vpop.f32.mrb[0].mxu0
    %v5445 = vadd.f32 0.0, %v5444
    %v5446 = vpop.f32.mrb[0].mxu0
    %v5447 = vpop.f32.mrb[0].mxu0
    %v5448 = vadd.f32 0.0, %v5447
    %v5449 = vpop.f32.mrb[0].mxu0
    %5450 = vmatprep.mubr.bf16.mxu0 0
    %5451 = vmatmul.mubr.bf16.gmra.mrb[0].mxu0 %v5321
    %v5452 = vpop.f32.mrb[0].mxu0
    %v5453 = vadd.f32 0.0, %v5452
    %v5454 = vpop.f32.mrb[0].mxu0
    %v5455 = vpop.f32.mrb[0].mxu0
    %v5456 = vadd.f32 0.0, %v5455
    %v5457 = vpop.f32.mrb[0].mxu0
    %5458 = vmatprep.mubr.bf16.mxu0 0
    %5459 = vmatmul.mubr.bf16.gmra.mrb[0].mxu0 %v5322
    %v5460 = vpop.f32.mrb[0].mxu0
    %v5461 = vadd.f32 0.0, %v5460
    %v5462 = vpop.f32.mrb[0].mxu0
    %v5463 = vpop.f32.mrb[0].mxu0
    %v5464 = vadd.f32 0.0, %v5463
    %v5465 = vpop.f32.mrb[0].mxu0
    %5466 = vmatprep.mubr.bf16.mxu0 0
    %5467 = vmatmul.mubr.bf16.gmra.mrb[0].mxu0 %v5323
    %v5468 = vpop.f32.mrb[0].mxu0
    %v5469 = vadd.f32 0.0, %v5468
    %v5470 = vpop.f32.mrb[0].mxu0
    %v5471 = vpop.f32.mrb[0].mxu0
    %v5472 = vadd.f32 0.0, %v5471
    %v5473 = vpop.f32.mrb[0].mxu0
    %5474 = vmatprep.mubr.bf16.mxu0 0
    %5475 = vmatmul.mubr.bf16.gmra.mrb[0].mxu0 %v5324
    %v5476 = vpop.f32.mrb[0].mxu0
    %v5477 = vadd.f32 0.0, %v5476
    %v5478 = vpop.f32.mrb[0].mxu0
    %v5479 = vpop.f32.mrb[0].mxu0
    %v5480 = vadd.f32 0.0, %v5479
    %v5481 = vpop.f32.mrb[0].mxu0
    %5482 = vmatprep.mubr.bf16.mxu0 0
    %5483 = vmatmul.mubr.bf16.gmra.mrb[0].mxu0 %v5325
    %v5484 = vpop.f32.mrb[0].mxu0
    %v5485 = vadd.f32 0.0, %v5484
    %v5486 = vpop.f32.mrb[0].mxu0
    %v5487 = vpop.f32.mrb[0].mxu0
    %v5488 = vadd.f32 0.0, %v5487
    %v5489 = vpop.f32.mrb[0].mxu0
    %5490 = vmatprep.mubr.bf16.mxu0 0
    %5491 = vmatmul.mubr.bf16.gmra.mrb[0].mxu0 %v5326
    %v5492 = vpop.f32.mrb[0].mxu0
    %v5493 = vadd.f32 0.0, %v5492
    %v5494 = vpop.f32.mrb[0].mxu0
    %v5495 = vpop.f32.mrb[0].mxu0
    %v5496 = vadd.f32 0.0, %v5495
    %v5497 = vpop.f32.mrb[0].mxu0
    %5498 = vmatprep.mubr.bf16.mxu0 0
    %5499 = vmatmul.mubr.bf16.gmra.mrb[0].mxu0 %v5327
    %v5500 = vpop.f32.mrb[0].mxu0
    %v5501 = vadd.f32 0.0, %v5500
    %v5502 = vpop.f32.mrb[0].mxu0
    %v5503 = vpop.f32.mrb[0].mxu0
    %v5504 = vadd.f32 0.0, %v5503
    %v5505 = vpop.f32.mrb[0].mxu0
    %5506 = vmatprep.mubr.bf16.mxu0 0
    %5507 = vmatmul.mubr.bf16.gmra.mrb[0].mxu0 %v5328
    %v5508 = vpop.f32.mrb[0].mxu0
    %v5509 = vadd.f32 0.0, %v5508
    %v5510 = vpop.f32.mrb[0].mxu0
    %v5511 = vpop.f32.mrb[0].mxu0
    %v5512 = vadd.f32 0.0, %v5511
    %v5513 = vpop.f32.mrb[0].mxu0
    %5514 = vmatprep.mubr.bf16.mxu0 0
    %5515 = vmatmul.mubr.bf16.gmra.mrb[0].mxu0 %v5329
    %v5516 = vpop.f32.mrb[0].mxu0
    %v5517 = vadd.f32 0.0, %v5516
    %v5518 = vpop.f32.mrb[0].mxu0
    %v5519 = vpop.f32.mrb[0].mxu0
    %v5520 = vadd.f32 0.0, %v5519
    %v5521 = vpop.f32.mrb[0].mxu0
    %5522 = vmatprep.mubr.bf16.mxu0 0
    %5523 = vmatmul.mubr.bf16.gmra.mrb[0].mxu0 %v5330
    %v5524 = vpop.f32.mrb[0].mxu0
    %v5525 = vadd.f32 0.0, %v5524
    %v5526 = vpop.f32.mrb[0].mxu0
    %v5527 = vpop.f32.mrb[0].mxu0
    %v5528 = vadd.f32 0.0, %v5527
    %v5529 = vpop.f32.mrb[0].mxu0
    %5530 = vmatprep.mubr.bf16.mxu0 0
    %5531 = vmatmul.mubr.bf16.gmra.mrb[0].mxu0 %v5331
    %v5532 = vpop.f32.mrb[0].mxu0
    %v5533 = vadd.f32 0.0, %v5532
    %v5534 = vpop.f32.mrb[0].mxu0
    %v5535 = vpop.f32.mrb[0].mxu0
    %v5536 = vadd.f32 0.0, %v5535
    %v5537 = vpop.f32.mrb[0].mxu0
    %5538 = vmatprep.mubr.bf16.mxu0 0
    %5539 = vmatmul.mubr.bf16.gmra.mrb[0].mxu0 %v5332
    %v5540 = vpop.f32.mrb[0].mxu0
    %v5541 = vadd.f32 0.0, %v5540
    %v5542 = vpop.f32.mrb[0].mxu0
    %v5543 = vpop.f32.mrb[0].mxu0
    %v5544 = vadd.f32 0.0, %v5543
    %v5545 = vpop.f32.mrb[0].mxu0
    %5546 = vmatprep.mubr.bf16.mxu0 0
    %5547 = vmatmul.mubr.bf16.gmra.mrb[0].mxu0 %v5333
    %v5548 = vpop.f32.mrb[0].mxu0
    %v5549 = vadd.f32 0.0, %v5548
    %v5550 = vpop.f32.mrb[0].mxu0
    %v5551 = vpop.f32.mrb[0].mxu0
    %v5552 = vadd.f32 0.0, %v5551
    %v5553 = vpop.f32.mrb[0].mxu0
    %5554 = vmatprep.mubr.bf16.mxu0 0
    %5555 = vmatmul.mubr.bf16.gmra.mrb[0].mxu0 %v5334
    %v5556 = vpop.f32.mrb[0].mxu0
    %v5557 = vadd.f32 0.0, %v5556
    %v5558 = vpop.f32.mrb[0].mxu0
    %v5559 = vpop.f32.mrb[0].mxu0
    %v5560 = vadd.f32 0.0, %v5559
    %v5561 = vpop.f32.mrb[0].mxu0
    %5562 = vmatprep.mubr.bf16.mxu0 0
    %5563 = vmatmul.mubr.bf16.gmra.mrb[0].mxu0 %v5335
    %v5564 = vpop.f32.mrb[0].mxu0
    %v5565 = vadd.f32 0.0, %v5564
    %v5566 = vpop.f32.mrb[0].mxu0
    %v5567 = vpop.f32.mrb[0].mxu0
    %v5568 = vadd.f32 0.0, %v5567
    %v5569 = vpop.f32.mrb[0].mxu0
    %5570 = vmatprep.mubr.bf16.mxu0 0
    %5571 = vmatmul.mubr.bf16.gmra.mrb[0].mxu0 %v5336
    %v5572 = vpop.f32.mrb[0].mxu0
    %v5573 = vadd.f32 0.0, %v5572
    %v5574 = vpop.f32.mrb[0].mxu0
    %v5575 = vpop.f32.mrb[0].mxu0
    %v5576 = vadd.f32 0.0, %v5575
    %v5577 = vpop.f32.mrb[0].mxu0
    %5578 = vmatprep.mubr.bf16.mxu0 0
    %5579 = vmatmul.mubr.bf16.gmra.mrb[0].mxu0 %v5337
    %v5580 = vpop.f32.mrb[0].mxu0
    %v5581 = vadd.f32 0.0, %v5580
    %v5582 = vpop.f32.mrb[0].mxu0
    %v5583 = vpop.f32.mrb[0].mxu0
    %v5584 = vadd.f32 0.0, %v5583
    %v5585 = vpop.f32.mrb[0].mxu0
    %5586 = vmatprep.mubr.bf16.mxu0 0
    %5587 = vmatmul.mubr.bf16.gmra.mrb[0].mxu0 %v5338
    %v5588 = vpop.f32.mrb[0].mxu0
    %v5589 = vadd.f32 0.0, %v5588
    %v5590 = vpop.f32.mrb[0].mxu0
    %v5591 = vpop.f32.mrb[0].mxu0
    %v5592 = vadd.f32 0.0, %v5591
    %v5593 = vpop.f32.mrb[0].mxu0
    %5594 = vmatprep.mubr.bf16.mxu0 0
    %5595 = vmatmul.mubr.bf16.gmra.mrb[0].mxu0 %v5339
    %v5596 = vpop.f32.mrb[0].mxu0
    %v5597 = vadd.f32 0.0, %v5596
    %v5598 = vpop.f32.mrb[0].mxu0
    %v5599 = vpop.f32.mrb[0].mxu0
    %v5600 = vadd.f32 0.0, %v5599
    %v5601 = vpop.f32.mrb[0].mxu0
    %5602 = vmatprep.mubr.bf16.mxu0 0
    %5603 = vmatmul.mubr.bf16.gmra.mrb[0].mxu0 %v5340
    %v5604 = vpop.f32.mrb[0].mxu0
    %v5605 = vadd.f32 0.0, %v5604
    %v5606 = vpop.f32.mrb[0].mxu0
    %v5607 = vpop.f32.mrb[0].mxu0
    %v5608 = vadd.f32 0.0, %v5607
    %v5609 = vpop.f32.mrb[0].mxu0
    %5610 = vmatprep.mubr.bf16.mxu0 0
    %5611 = vmatmul.mubr.bf16.gmra.mrb[0].mxu0 %v5341
    %v5612 = vpop.f32.mrb[0].mxu0
    %v5613 = vadd.f32 0.0, %v5612
    %v5614 = vpop.f32.mrb[0].mxu0
    %v5615 = vpop.f32.mrb[0].mxu0
    %v5616 = vadd.f32 0.0, %v5615
    %v5617 = vpop.f32.mrb[0].mxu0
    %5618 = vmatprep.mubr.bf16.mxu0 0
    %5619 = vmatmul.mubr.bf16.gmra.mrb[0].mxu0 %v5342
    %v5620 = vpop.f32.mrb[0].mxu0
    %v5621 = vadd.f32 0.0, %v5620
    %v5622 = vpop.f32.mrb[0].mxu0
    %v5623 = vpop.f32.mrb[0].mxu0
    %v5624 = vadd.f32 0.0, %v5623
    %v5625 = vpop.f32.mrb[0].mxu0
    %5626 = vmatprep.mubr.bf16.mxu0 0
    %5627 = vmatmul.mubr.bf16.gmra.mrb[0].mxu0 %v5343
    %v5628 = vpop.f32.mrb[0].mxu0
    %v5629 = vadd.f32 0.0, %v5628
    %v5630 = vpop.f32.mrb[0].mxu0
    %v5631 = vpop.f32.mrb[0].mxu0
    %v5632 = vadd.f32 0.0, %v5631
    %v5633 = vpop.f32.mrb[0].mxu0
    %5634 = vmatprep.mubr.bf16.mxu0 0
    %5635 = vmatmul.mubr.bf16.gmra.mrb[0].mxu0 %v5344
    %v5636 = vpop.f32.mrb[0].mxu0
    %v5637 = vadd.f32 0.0, %v5636
    %v5638 = vpop.f32.mrb[0].mxu0
    %v5639 = vpop.f32.mrb[0].mxu0
    %v5640 = vadd.f32 0.0, %v5639
    %v5641 = vpop.f32.mrb[0].mxu0
    %5642 = vdwg.mxu0
    %5643 = vmatprep.subr.bf16.mxu0 0
    %5644 = vmatpush1.bf16.msra.mxu0 %v5241
    %5645 = vmatprep.subr.bf16.mxu0 0
    %5646 = vmatpush1.bf16.msra.mxu0 %v5242
    %5647 = vmatprep.subr.bf16.mxu0 0
    %5648 = vmatpush1.bf16.msra.mxu0 %v5243
    %5649 = vmatprep.subr.bf16.mxu0 0
    %5650 = vmatpush1.bf16.msra.mxu0 %v5244
    %5651 = vmatprep.subr.bf16.mxu0 0
    %5652 = vmatpush1.bf16.msra.mxu0 %v5245
    %5653 = vmatprep.subr.bf16.mxu0 0
    %5654 = vmatpush1.bf16.msra.mxu0 %v5246
    %5655 = vmatprep.subr.bf16.mxu0 0
    %5656 = vmatpush1.bf16.msra.mxu0 %v5247
    %5657 = vmatprep.subr.bf16.mxu0 0
    %5658 = vmatpush1.bf16.msra.mxu0 %v5248
    %5659 = vmatprep.subr.bf16.mxu0 0
    %5660 = vmatpush1.bf16.msra.mxu0 0
    %5661 = vmatprep.subr.bf16.mxu0 0
    %5662 = vmatpush1.bf16.msra.mxu0 0
    %5663 = vmatprep.subr.bf16.mxu0 0
    %5664 = vmatpush1.bf16.msra.mxu0 0
    %5665 = vmatprep.subr.bf16.mxu0 0
    %5666 = vmatpush1.bf16.msra.mxu0 0
    %5667 = vmatprep.subr.bf16.mxu0 0
    %5668 = vmatpush1.bf16.msra.mxu0 0
    %5669 = vmatprep.subr.bf16.mxu0 0
    %5670 = vmatpush1.bf16.msra.mxu0 0
    %5671 = vmatprep.subr.bf16.mxu0 0
    %5672 = vmatpush1.bf16.msra.mxu0 0
    %5673 = vmatprep.subr.bf16.mxu0 0
    %5674 = vmatpush1.bf16.msra.mxu0 0
    %5675 = vmatprep.mubr.bf16.mxu0 0
    %5676 = vmatmul.mubr.bf16.gmra.mrb[0].mxu0 %v5209
    %v5677 = vpop.f32.mrb[0].mxu0
    %v5678 = vadd.f32 %v5389, %v5677
    %v5679 = vpop.f32.mrb[0].mxu0
    %v5680 = vpop.f32.mrb[0].mxu0
    %v5681 = vadd.f32 %v5392, %v5680
    %v5682 = vpop.f32.mrb[0].mxu0
    %5683 = vmatprep.mubr.bf16.mxu0 0
    %5684 = vmatmul.mubr.bf16.gmra.mrb[0].mxu0 %v5210
    %v5685 = vpop.f32.mrb[0].mxu0
    %v5686 = vadd.f32 %v5397, %v5685
    %v5687 = vpop.f32.mrb[0].mxu0
    %v5688 = vpop.f32.mrb[0].mxu0
    %v5689 = vadd.f32 %v5400, %v5688
    %v5690 = vpop.f32.mrb[0].mxu0
    %5691 = vmatprep.mubr.bf16.mxu0 0
    %5692 = vmatmul.mubr.bf16.gmra.mrb[0].mxu0 %v5211
    %v5693 = vpop.f32.mrb[0].mxu0
    %v5694 = vadd.f32 %v5405, %v5693
    %v5695 = vpop.f32.mrb[0].mxu0
    %v5696 = vpop.f32.mrb[0].mxu0
    %v5697 = vadd.f32 %v5408, %v5696
    %v5698 = vpop.f32.mrb[0].mxu0
    %5699 = vmatprep.mubr.bf16.mxu0 0
    %5700 = vmatmul.mubr.bf16.gmra.mrb[0].mxu0 %v5212
    %v5701 = vpop.f32.mrb[0].mxu0
    %v5702 = vadd.f32 %v5413, %v5701
    %v5703 = vpop.f32.mrb[0].mxu0
    %v5704 = vpop.f32.mrb[0].mxu0
    %v5705 = vadd.f32 %v5416, %v5704
    %v5706 = vpop.f32.mrb[0].mxu0
    %5707 = vmatprep.mubr.bf16.mxu0 0
    %5708 = vmatmul.mubr.bf16.gmra.mrb[0].mxu0 %v5213
    %v5709 = vpop.f32.mrb[0].mxu0
    %v5710 = vadd.f32 %v5421, %v5709
    %v5711 = vpop.f32.mrb[0].mxu0
    %v5712 = vpop.f32.mrb[0].mxu0
    %v5713 = vadd.f32 %v5424, %v5712
    %v5714 = vpop.f32.mrb[0].mxu0
    %5715 = vmatprep.mubr.bf16.mxu0 0
    %5716 = vmatmul.mubr.bf16.gmra.mrb[0].mxu0 %v5214
    %v5717 = vpop.f32.mrb[0].mxu0
    %v5718 = vadd.f32 %v5429, %v5717
    %v5719 = vpop.f32.mrb[0].mxu0
    %v5720 = vpop.f32.mrb[0].mxu0
    %v5721 = vadd.f32 %v5432, %v5720
    %v5722 = vpop.f32.mrb[0].mxu0
    %5723 = vmatprep.mubr.bf16.mxu0 0
    %5724 = vmatmul.mubr.bf16.gmra.mrb[0].mxu0 %v5215
    %v5725 = vpop.f32.mrb[0].mxu0
    %v5726 = vadd.f32 %v5437, %v5725
    %v5727 = vpop.f32.mrb[0].mxu0
    %v5728 = vpop.f32.mrb[0].mxu0
    %v5729 = vadd.f32 %v5440, %v5728
    %v5730 = vpop.f32.mrb[0].mxu0
    %5731 = vmatprep.mubr.bf16.mxu0 0
    %5732 = vmatmul.mubr.bf16.gmra.mrb[0].mxu0 %v5216
    %v5733 = vpop.f32.mrb[0].mxu0
    %v5734 = vadd.f32 %v5445, %v5733
    %v5735 = vpop.f32.mrb[0].mxu0
    %v5736 = vpop.f32.mrb[0].mxu0
    %v5737 = vadd.f32 %v5448, %v5736
    %v5738 = vpop.f32.mrb[0].mxu0
    %5739 = vmatprep.mubr.bf16.mxu0 0
    %5740 = vmatmul.mubr.bf16.gmra.mrb[0].mxu0 %v5217
    %v5741 = vpop.f32.mrb[0].mxu0
    %v5742 = vadd.f32 %v5453, %v5741
    %v5743 = vpop.f32.mrb[0].mxu0
    %v5744 = vpop.f32.mrb[0].mxu0
    %v5745 = vadd.f32 %v5456, %v5744
    %v5746 = vpop.f32.mrb[0].mxu0
    %5747 = vmatprep.mubr.bf16.mxu0 0
    %5748 = vmatmul.mubr.bf16.gmra.mrb[0].mxu0 %v5218
    %v5749 = vpop.f32.mrb[0].mxu0
    %v5750 = vadd.f32 %v5461, %v5749
    %v5751 = vpop.f32.mrb[0].mxu0
    %v5752 = vpop.f32.mrb[0].mxu0
    %v5753 = vadd.f32 %v5464, %v5752
    %v5754 = vpop.f32.mrb[0].mxu0
    %5755 = vmatprep.mubr.bf16.mxu0 0
    %5756 = vmatmul.mubr.bf16.gmra.mrb[0].mxu0 %v5219
    %v5757 = vpop.f32.mrb[0].mxu0
    %v5758 = vadd.f32 %v5469, %v5757
    %v5759 = vpop.f32.mrb[0].mxu0
    %v5760 = vpop.f32.mrb[0].mxu0
    %v5761 = vadd.f32 %v5472, %v5760
    %v5762 = vpop.f32.mrb[0].mxu0
    %5763 = vmatprep.mubr.bf16.mxu0 0
    %5764 = vmatmul.mubr.bf16.gmra.mrb[0].mxu0 %v5220
    %v5765 = vpop.f32.mrb[0].mxu0
    %v5766 = vadd.f32 %v5477, %v5765
    %v5767 = vpop.f32.mrb[0].mxu0
    %v5768 = vpop.f32.mrb[0].mxu0
    %v5769 = vadd.f32 %v5480, %v5768
    %v5770 = vpop.f32.mrb[0].mxu0
    %5771 = vmatprep.mubr.bf16.mxu0 0
    %5772 = vmatmul.mubr.bf16.gmra.mrb[0].mxu0 %v5221
    %v5773 = vpop.f32.mrb[0].mxu0
    %v5774 = vadd.f32 %v5485, %v5773
    %v5775 = vpop.f32.mrb[0].mxu0
    %v5776 = vpop.f32.mrb[0].mxu0
    %v5777 = vadd.f32 %v5488, %v5776
    %v5778 = vpop.f32.mrb[0].mxu0
    %5779 = vmatprep.mubr.bf16.mxu0 0
    %5780 = vmatmul.mubr.bf16.gmra.mrb[0].mxu0 %v5222
    %v5781 = vpop.f32.mrb[0].mxu0
    %v5782 = vadd.f32 %v5493, %v5781
    %v5783 = vpop.f32.mrb[0].mxu0
    %v5784 = vpop.f32.mrb[0].mxu0
    %v5785 = vadd.f32 %v5496, %v5784
    %v5786 = vpop.f32.mrb[0].mxu0
    %5787 = vmatprep.mubr.bf16.mxu0 0
    %5788 = vmatmul.mubr.bf16.gmra.mrb[0].mxu0 %v5223
    %v5789 = vpop.f32.mrb[0].mxu0
    %v5790 = vadd.f32 %v5501, %v5789
    %v5791 = vpop.f32.mrb[0].mxu0
    %v5792 = vpop.f32.mrb[0].mxu0
    %v5793 = vadd.f32 %v5504, %v5792
    %v5794 = vpop.f32.mrb[0].mxu0
    %5795 = vmatprep.mubr.bf16.mxu0 0
    %5796 = vmatmul.mubr.bf16.gmra.mrb[0].mxu0 %v5224
    %v5797 = vpop.f32.mrb[0].mxu0
    %v5798 = vadd.f32 %v5509, %v5797
    %v5799 = vpop.f32.mrb[0].mxu0
    %v5800 = vpop.f32.mrb[0].mxu0
    %v5801 = vadd.f32 %v5512, %v5800
    %v5802 = vpop.f32.mrb[0].mxu0
    %5803 = vmatprep.mubr.bf16.mxu0 0
    %5804 = vmatmul.mubr.bf16.gmra.mrb[0].mxu0 %v5225
    %v5805 = vpop.f32.mrb[0].mxu0
    %v5806 = vadd.f32 %v5517, %v5805
    %v5807 = vpop.f32.mrb[0].mxu0
    %v5808 = vpop.f32.mrb[0].mxu0
    %v5809 = vadd.f32 %v5520, %v5808
    %v5810 = vpop.f32.mrb[0].mxu0
    %5811 = vmatprep.mubr.bf16.mxu0 0
    %5812 = vmatmul.mubr.bf16.gmra.mrb[0].mxu0 %v5226
    %v5813 = vpop.f32.mrb[0].mxu0
    %v5814 = vadd.f32 %v5525, %v5813
    %v5815 = vpop.f32.mrb[0].mxu0
    %v5816 = vpop.f32.mrb[0].mxu0
    %v5817 = vadd.f32 %v5528, %v5816
    %v5818 = vpop.f32.mrb[0].mxu0
    %5819 = vmatprep.mubr.bf16.mxu0 0
    %5820 = vmatmul.mubr.bf16.gmra.mrb[0].mxu0 %v5227
    %v5821 = vpop.f32.mrb[0].mxu0
    %v5822 = vadd.f32 %v5533, %v5821
    %v5823 = vpop.f32.mrb[0].mxu0
    %v5824 = vpop.f32.mrb[0].mxu0
    %v5825 = vadd.f32 %v5536, %v5824
    %v5826 = vpop.f32.mrb[0].mxu0
    %5827 = vmatprep.mubr.bf16.mxu0 0
    %5828 = vmatmul.mubr.bf16.gmra.mrb[0].mxu0 %v5228
    %v5829 = vpop.f32.mrb[0].mxu0
    %v5830 = vadd.f32 %v5541, %v5829
    %v5831 = vpop.f32.mrb[0].mxu0
    %v5832 = vpop.f32.mrb[0].mxu0
    %v5833 = vadd.f32 %v5544, %v5832
    %v5834 = vpop.f32.mrb[0].mxu0
    %5835 = vmatprep.mubr.bf16.mxu0 0
    %5836 = vmatmul.mubr.bf16.gmra.mrb[0].mxu0 %v5229
    %v5837 = vpop.f32.mrb[0].mxu0
    %v5838 = vadd.f32 %v5549, %v5837
    %v5839 = vpop.f32.mrb[0].mxu0
    %v5840 = vpop.f32.mrb[0].mxu0
    %v5841 = vadd.f32 %v5552, %v5840
    %v5842 = vpop.f32.mrb[0].mxu0
    %5843 = vmatprep.mubr.bf16.mxu0 0
    %5844 = vmatmul.mubr.bf16.gmra.mrb[0].mxu0 %v5230
    %v5845 = vpop.f32.mrb[0].mxu0
    %v5846 = vadd.f32 %v5557, %v5845
    %v5847 = vpop.f32.mrb[0].mxu0
    %v5848 = vpop.f32.mrb[0].mxu0
    %v5849 = vadd.f32 %v5560, %v5848
    %v5850 = vpop.f32.mrb[0].mxu0
    %5851 = vmatprep.mubr.bf16.mxu0 0
    %5852 = vmatmul.mubr.bf16.gmra.mrb[0].mxu0 %v5231
    %v5853 = vpop.f32.mrb[0].mxu0
    %v5854 = vadd.f32 %v5565, %v5853
    %v5855 = vpop.f32.mrb[0].mxu0
    %v5856 = vpop.f32.mrb[0].mxu0
    %v5857 = vadd.f32 %v5568, %v5856
    %v5858 = vpop.f32.mrb[0].mxu0
    %5859 = vmatprep.mubr.bf16.mxu0 0
    %5860 = vmatmul.mubr.bf16.gmra.mrb[0].mxu0 %v5232
    %v5861 = vpop.f32.mrb[0].mxu0
    %v5862 = vadd.f32 %v5573, %v5861
    %v5863 = vpop.f32.mrb[0].mxu0
    %v5864 = vpop.f32.mrb[0].mxu0
    %v5865 = vadd.f32 %v5576, %v5864
    %v5866 = vpop.f32.mrb[0].mxu0
    %5867 = vmatprep.mubr.bf16.mxu0 0
    %5868 = vmatmul.mubr.bf16.gmra.mrb[0].mxu0 %v5233
    %v5869 = vpop.f32.mrb[0].mxu0
    %v5870 = vadd.f32 %v5581, %v5869
    %v5871 = vpop.f32.mrb[0].mxu0
    %v5872 = vpop.f32.mrb[0].mxu0
    %v5873 = vadd.f32 %v5584, %v5872
    %v5874 = vpop.f32.mrb[0].mxu0
    %5875 = vmatprep.mubr.bf16.mxu0 0
    %5876 = vmatmul.mubr.bf16.gmra.mrb[0].mxu0 %v5234
    %v5877 = vpop.f32.mrb[0].mxu0
    %v5878 = vadd.f32 %v5589, %v5877
    %v5879 = vpop.f32.mrb[0].mxu0
    %v5880 = vpop.f32.mrb[0].mxu0
    %v5881 = vadd.f32 %v5592, %v5880
    %v5882 = vpop.f32.mrb[0].mxu0
    %5883 = vmatprep.mubr.bf16.mxu0 0
    %5884 = vmatmul.mubr.bf16.gmra.mrb[0].mxu0 %v5235
    %v5885 = vpop.f32.mrb[0].mxu0
    %v5886 = vadd.f32 %v5597, %v5885
    %v5887 = vpop.f32.mrb[0].mxu0
    %v5888 = vpop.f32.mrb[0].mxu0
    %v5889 = vadd.f32 %v5600, %v5888
    %v5890 = vpop.f32.mrb[0].mxu0
    %5891 = vmatprep.mubr.bf16.mxu0 0
    %5892 = vmatmul.mubr.bf16.gmra.mrb[0].mxu0 %v5236
    %v5893 = vpop.f32.mrb[0].mxu0
    %v5894 = vadd.f32 %v5605, %v5893
    %v5895 = vpop.f32.mrb[0].mxu0
    %v5896 = vpop.f32.mrb[0].mxu0
    %v5897 = vadd.f32 %v5608, %v5896
    %v5898 = vpop.f32.mrb[0].mxu0
    %5899 = vmatprep.mubr.bf16.mxu0 0
    %5900 = vmatmul.mubr.bf16.gmra.mrb[0].mxu0 %v5237
    %v5901 = vpop.f32.mrb[0].mxu0
    %v5902 = vadd.f32 %v5613, %v5901
    %v5903 = vpop.f32.mrb[0].mxu0
    %v5904 = vpop.f32.mrb[0].mxu0
    %v5905 = vadd.f32 %v5616, %v5904
    %v5906 = vpop.f32.mrb[0].mxu0
    %5907 = vmatprep.mubr.bf16.mxu0 0
    %5908 = vmatmul.mubr.bf16.gmra.mrb[0].mxu0 %v5238
    %v5909 = vpop.f32.mrb[0].mxu0
    %v5910 = vadd.f32 %v5621, %v5909
    %v5911 = vpop.f32.mrb[0].mxu0
    %v5912 = vpop.f32.mrb[0].mxu0
    %v5913 = vadd.f32 %v5624, %v5912
    %v5914 = vpop.f32.mrb[0].mxu0
    %5915 = vmatprep.mubr.bf16.mxu0 0
    %5916 = vmatmul.mubr.bf16.gmra.mrb[0].mxu0 %v5239
    %v5917 = vpop.f32.mrb[0].mxu0
    %v5918 = vadd.f32 %v5629, %v5917
    %v5919 = vpop.f32.mrb[0].mxu0
    %v5920 = vpop.f32.mrb[0].mxu0
    %v5921 = vadd.f32 %v5632, %v5920
    %v5922 = vpop.f32.mrb[0].mxu0
    %5923 = vmatprep.mubr.bf16.mxu0 0
    %5924 = vmatmul.mubr.bf16.gmra.mrb[0].mxu0 %v5240
    %v5925 = vpop.f32.mrb[0].mxu0
    %v5926 = vadd.f32 %v5637, %v5925
    %v5927 = vpop.f32.mrb[0].mxu0
    %v5928 = vpop.f32.mrb[0].mxu0
    %v5929 = vadd.f32 %v5640, %v5928
    %v5930 = vpop.f32.mrb[0].mxu0
    %5931 = vdwg.mxu0
    %v5932 = vld [vmem:[#allocation2 + $0x2] sm:$0xff]
    %v5933 = vld [vmem:[#allocation2 + $0xa] sm:$0xff]
    %v5934 = vld [vmem:[#allocation2 + $0x1a] sm:$0xff]
    %v5935 = vld [vmem:[#allocation2 + $0x22] sm:$0xff]
    %v5936 = vld [vmem:[#allocation2 + $0x32] sm:$0xff]
    %v5937 = vld [vmem:[#allocation2 + $0x3a] sm:$0xff]
    %v5938 = vld [vmem:[#allocation2 + $0x4a] sm:$0xff]
    %v5939 = vld [vmem:[#allocation2 + $0x52] sm:$0xff]
    %v5940 = vld [vmem:[#allocation2 + $0x62] sm:$0xff]
    %v5941 = vld [vmem:[#allocation2 + $0x6a] sm:$0xff]
    %v5942 = vld [vmem:[#allocation2 + $0x7a] sm:$0xff]
    %v5943 = vld [vmem:[#allocation2 + $0x82] sm:$0xff]
    %v5944 = vld [vmem:[#allocation2 + $0x92] sm:$0xff]
    %v5945 = vld [vmem:[#allocation2 + $0x9a] sm:$0xff]
    %v5946 = vld [vmem:[#allocation2 + $0xaa] sm:$0xff]
    %v5947 = vld [vmem:[#allocation2 + $0xb2] sm:$0xff]
    %v5948 = vld [vmem:[#allocation2 + $0xc2] sm:$0xff]
    %v5949 = vld [vmem:[#allocation2 + $0xca] sm:$0xff]
    %v5950 = vld [vmem:[#allocation2 + $0xda] sm:$0xff]
    %v5951 = vld [vmem:[#allocation2 + $0xe2] sm:$0xff]
    %v5952 = vld [vmem:[#allocation2 + $0xf2] sm:$0xff]
    %v5953 = vld [vmem:[#allocation2 + $0xfa] sm:$0xff]
    %v5954 = vld [vmem:[#allocation2 + $0x10a] sm:$0xff]
    %v5955 = vld [vmem:[#allocation2 + $0x112] sm:$0xff]
    %v5956 = vld [vmem:[#allocation2 + $0x122] sm:$0xff]
    %v5957 = vld [vmem:[#allocation2 + $0x12a] sm:$0xff]
    %v5958 = vld [vmem:[#allocation2 + $0x13a] sm:$0xff]
    %v5959 = vld [vmem:[#allocation2 + $0x142] sm:$0xff]
    %v5960 = vld [vmem:[#allocation2 + $0x152] sm:$0xff]
    %v5961 = vld [vmem:[#allocation2 + $0x15a] sm:$0xff]
    %v5962 = vld [vmem:[#allocation2 + $0x16a] sm:$0xff]
    %v5963 = vld [vmem:[#allocation2 + $0x172] sm:$0xff]
    %v5964 = vld [vmem:[#allocation2 + $0x1b2] sm:$0xff]
    %v5965 = vld [vmem:[#allocation2 + $0x1ba] sm:$0xff]
    %v5966 = vld [vmem:[#allocation2 + $0x1ca] sm:$0xff]
    %v5967 = vld [vmem:[#allocation2 + $0x1d2] sm:$0xff]
    %v5968 = vld [vmem:[#allocation2 + $0x1e2] sm:$0xff]
    %v5969 = vld [vmem:[#allocation2 + $0x1ea] sm:$0xff]
    %v5970 = vld [vmem:[#allocation2 + $0x1fa] sm:$0xff]
    %v5971 = vld [vmem:[#allocation2 + $0x202] sm:$0xff]
    %v5972 = vld [vmem:[#allocation2 + $0x212] sm:$0xff]
    %v5973 = vld [vmem:[#allocation2 + $0x21a] sm:$0xff]
    %v5974 = vld [vmem:[#allocation2 + $0x22a] sm:$0xff]
    %v5975 = vld [vmem:[#allocation2 + $0x232] sm:$0xff]
    %v5976 = vld [vmem:[#allocation2 + $0x242] sm:$0xff]
    %v5977 = vld [vmem:[#allocation2 + $0x24a] sm:$0xff]
    %v5978 = vld [vmem:[#allocation2 + $0x25a] sm:$0xff]
    %v5979 = vld [vmem:[#allocation2 + $0x262] sm:$0xff]
    %v5980 = vld [vmem:[#allocation2 + $0x272] sm:$0xff]
    %v5981 = vld [vmem:[#allocation2 + $0x27a] sm:$0xff]
    %v5982 = vld [vmem:[#allocation2 + $0x28a] sm:$0xff]
    %v5983 = vld [vmem:[#allocation2 + $0x292] sm:$0xff]
    %v5984 = vld [vmem:[#allocation2 + $0x2a2] sm:$0xff]
    %v5985 = vld [vmem:[#allocation2 + $0x2aa] sm:$0xff]
    %v5986 = vld [vmem:[#allocation2 + $0x2ba] sm:$0xff]
    %v5987 = vld [vmem:[#allocation2 + $0x2c2] sm:$0xff]
    %v5988 = vld [vmem:[#allocation2 + $0x2d2] sm:$0xff]
    %v5989 = vld [vmem:[#allocation2 + $0x2da] sm:$0xff]
    %v5990 = vld [vmem:[#allocation2 + $0x2ea] sm:$0xff]
    %v5991 = vld [vmem:[#allocation2 + $0x2f2] sm:$0xff]
    %v5992 = vld [vmem:[#allocation2 + $0x302] sm:$0xff]
    %v5993 = vld [vmem:[#allocation2 + $0x30a] sm:$0xff]
    %v5994 = vld [vmem:[#allocation2 + $0x31a] sm:$0xff]
    %v5995 = vld [vmem:[#allocation2 + $0x322] sm:$0xff]
    %v5996 = vpack.c.bf16 %v5933, %v5932
    %v5997 = vpack.c.bf16 %v5935, %v5934
    %v5998 = vpack.c.bf16 %v5937, %v5936
    %v5999 = vpack.c.bf16 %v5939, %v5938
    %v6000 = vpack.c.bf16 %v5941, %v5940
    %v6001 = vpack.c.bf16 %v5943, %v5942
    %v6002 = vpack.c.bf16 %v5945, %v5944
    %v6003 = vpack.c.bf16 %v5947, %v5946
    %v6004 = vpack.c.bf16 %v5949, %v5948
    %v6005 = vpack.c.bf16 %v5951, %v5950
    %v6006 = vpack.c.bf16 %v5953, %v5952
    %v6007 = vpack.c.bf16 %v5955, %v5954
    %v6008 = vpack.c.bf16 %v5957, %v5956
    %v6009 = vpack.c.bf16 %v5959, %v5958
    %v6010 = vpack.c.bf16 %v5961, %v5960
    %v6011 = vpack.c.bf16 %v5963, %v5962
    %v6012 = vpack.c.bf16 %v5965, %v5964
    %v6013 = vpack.c.bf16 %v5967, %v5966
    %v6014 = vpack.c.bf16 %v5969, %v5968
    %v6015 = vpack.c.bf16 %v5971, %v5970
    %v6016 = vpack.c.bf16 %v5973, %v5972
    %v6017 = vpack.c.bf16 %v5975, %v5974
    %v6018 = vpack.c.bf16 %v5977, %v5976
    %v6019 = vpack.c.bf16 %v5979, %v5978
    %v6020 = vpack.c.bf16 %v5981, %v5980
    %v6021 = vpack.c.bf16 %v5983, %v5982
    %v6022 = vpack.c.bf16 %v5985, %v5984
    %v6023 = vpack.c.bf16 %v5987, %v5986
    %v6024 = vpack.c.bf16 %v5989, %v5988
    %v6025 = vpack.c.bf16 %v5991, %v5990
    %v6026 = vpack.c.bf16 %v5993, %v5992
    %v6027 = vpack.c.bf16 %v5995, %v5994
    %s6028 = scalar_lea.vmem [#allocation4], 128
    %v6029 = vld [vmem:[%s6028] sm:$0xff]
    %v6030 = vld [vmem:[%s6028 + $0x8] sm:$0xff]
    %v6031 = vld [vmem:[%s6028 + $0x10] sm:$0xff]
    %v6032 = vld [vmem:[%s6028 + $0x18] sm:$0xff]
    %v6033 = vld [vmem:[%s6028 + $0x20] sm:$0xff]
    %v6034 = vld [vmem:[%s6028 + $0x28] sm:$0xff]
    %v6035 = vld [vmem:[%s6028 + $0x30] sm:$0xff]
    %v6036 = vld [vmem:[%s6028 + $0x38] sm:$0xff]
    %6037 = vmatprep.subr.bf16.mxu0 0
    %6038 = vmatpush1.bf16.msra.mxu0 %v6029
    %6039 = vmatprep.subr.bf16.mxu0 0
    %6040 = vmatpush1.bf16.msra.mxu0 %v6030
    %6041 = vmatprep.subr.bf16.mxu0 0
    %6042 = vmatpush1.bf16.msra.mxu0 %v6031
    %6043 = vmatprep.subr.bf16.mxu0 0
    %6044 = vmatpush1.bf16.msra.mxu0 %v6032
    %6045 = vmatprep.subr.bf16.mxu0 0
    %6046 = vmatpush1.bf16.msra.mxu0 %v6033
    %6047 = vmatprep.subr.bf16.mxu0 0
    %6048 = vmatpush1.bf16.msra.mxu0 %v6034
    %6049 = vmatprep.subr.bf16.mxu0 0
    %6050 = vmatpush1.bf16.msra.mxu0 %v6035
    %6051 = vmatprep.subr.bf16.mxu0 0
    %6052 = vmatpush1.bf16.msra.mxu0 %v6036
    %6053 = vmatprep.subr.bf16.mxu0 0
    %6054 = vmatpush1.bf16.msra.mxu0 0
    %6055 = vmatprep.subr.bf16.mxu0 0
    %6056 = vmatpush1.bf16.msra.mxu0 0
    %6057 = vmatprep.subr.bf16.mxu0 0
    %6058 = vmatpush1.bf16.msra.mxu0 0
    %6059 = vmatprep.subr.bf16.mxu0 0
    %6060 = vmatpush1.bf16.msra.mxu0 0
    %6061 = vmatprep.subr.bf16.mxu0 0
    %6062 = vmatpush1.bf16.msra.mxu0 0
    %6063 = vmatprep.subr.bf16.mxu0 0
    %6064 = vmatpush1.bf16.msra.mxu0 0
    %6065 = vmatprep.subr.bf16.mxu0 0
    %6066 = vmatpush1.bf16.msra.mxu0 0
    %6067 = vmatprep.subr.bf16.mxu0 0
    %6068 = vmatpush1.bf16.msra.mxu0 0
    %6069 = vmatprep.mubr.bf16.mxu0 0
    %6070 = vmatmul.mubr.bf16.gmra.mrb[0].mxu0 %v5996
    %v6071 = vpop.f32.mrb[0].mxu0
    %v6072 = vadd.f32 0.0, %v6071
    %v6073 = vpop.f32.mrb[0].mxu0
    %v6074 = vpop.f32.mrb[0].mxu0
    %v6075 = vadd.f32 0.0, %v6074
    %v6076 = vpop.f32.mrb[0].mxu0
    %6077 = vmatprep.mubr.bf16.mxu0 0
    %6078 = vmatmul.mubr.bf16.gmra.mrb[0].mxu0 %v5997
    %v6079 = vpop.f32.mrb[0].mxu0
    %v6080 = vadd.f32 0.0, %v6079
    %v6081 = vpop.f32.mrb[0].mxu0
    %v6082 = vpop.f32.mrb[0].mxu0
    %v6083 = vadd.f32 0.0, %v6082
    %v6084 = vpop.f32.mrb[0].mxu0
    %6085 = vmatprep.mubr.bf16.mxu0 0
    %6086 = vmatmul.mubr.bf16.gmra.mrb[0].mxu0 %v5998
    %v6087 = vpop.f32.mrb[0].mxu0
    %v6088 = vadd.f32 0.0, %v6087
    %v6089 = vpop.f32.mrb[0].mxu0
    %v6090 = vpop.f32.mrb[0].mxu0
    %v6091 = vadd.f32 0.0, %v6090
    %v6092 = vpop.f32.mrb[0].mxu0
    %6093 = vmatprep.mubr.bf16.mxu0 0
    %6094 = vmatmul.mubr.bf16.gmra.mrb[0].mxu0 %v5999
    %v6095 = vpop.f32.mrb[0].mxu0
    %v6096 = vadd.f32 0.0, %v6095
    %v6097 = vpop.f32.mrb[0].mxu0
    %v6098 = vpop.f32.mrb[0].mxu0
    %v6099 = vadd.f32 0.0, %v6098
    %v6100 = vpop.f32.mrb[0].mxu0
    %6101 = vmatprep.mubr.bf16.mxu0 0
    %6102 = vmatmul.mubr.bf16.gmra.mrb[0].mxu0 %v6000
    %v6103 = vpop.f32.mrb[0].mxu0
    %v6104 = vadd.f32 0.0, %v6103
    %v6105 = vpop.f32.mrb[0].mxu0
    %v6106 = vpop.f32.mrb[0].mxu0
    %v6107 = vadd.f32 0.0, %v6106
    %v6108 = vpop.f32.mrb[0].mxu0
    %6109 = vmatprep.mubr.bf16.mxu0 0
    %6110 = vmatmul.mubr.bf16.gmra.mrb[0].mxu0 %v6001
    %v6111 = vpop.f32.mrb[0].mxu0
    %v6112 = vadd.f32 0.0, %v6111
    %v6113 = vpop.f32.mrb[0].mxu0
    %v6114 = vpop.f32.mrb[0].mxu0
    %v6115 = vadd.f32 0.0, %v6114
    %v6116 = vpop.f32.mrb[0].mxu0
    %6117 = vmatprep.mubr.bf16.mxu0 0
    %6118 = vmatmul.mubr.bf16.gmra.mrb[0].mxu0 %v6002
    %v6119 = vpop.f32.mrb[0].mxu0
    %v6120 = vadd.f32 0.0, %v6119
    %v6121 = vpop.f32.mrb[0].mxu0
    %v6122 = vpop.f32.mrb[0].mxu0
    %v6123 = vadd.f32 0.0, %v6122
    %v6124 = vpop.f32.mrb[0].mxu0
    %6125 = vmatprep.mubr.bf16.mxu0 0
    %6126 = vmatmul.mubr.bf16.gmra.mrb[0].mxu0 %v6003
    %v6127 = vpop.f32.mrb[0].mxu0
    %v6128 = vadd.f32 0.0, %v6127
    %v6129 = vpop.f32.mrb[0].mxu0
    %v6130 = vpop.f32.mrb[0].mxu0
    %v6131 = vadd.f32 0.0, %v6130
    %v6132 = vpop.f32.mrb[0].mxu0
    %6133 = vmatprep.mubr.bf16.mxu0 0
    %6134 = vmatmul.mubr.bf16.gmra.mrb[0].mxu0 %v6004
    %v6135 = vpop.f32.mrb[0].mxu0
    %v6136 = vadd.f32 0.0, %v6135
    %v6137 = vpop.f32.mrb[0].mxu0
    %v6138 = vpop.f32.mrb[0].mxu0
    %v6139 = vadd.f32 0.0, %v6138
    %v6140 = vpop.f32.mrb[0].mxu0
    %6141 = vmatprep.mubr.bf16.mxu0 0
    %6142 = vmatmul.mubr.bf16.gmra.mrb[0].mxu0 %v6005
    %v6143 = vpop.f32.mrb[0].mxu0
    %v6144 = vadd.f32 0.0, %v6143
    %v6145 = vpop.f32.mrb[0].mxu0
    %v6146 = vpop.f32.mrb[0].mxu0
    %v6147 = vadd.f32 0.0, %v6146
    %v6148 = vpop.f32.mrb[0].mxu0
    %6149 = vmatprep.mubr.bf16.mxu0 0
    %6150 = vmatmul.mubr.bf16.gmra.mrb[0].mxu0 %v6006
    %v6151 = vpop.f32.mrb[0].mxu0
    %v6152 = vadd.f32 0.0, %v6151
    %v6153 = vpop.f32.mrb[0].mxu0
    %v6154 = vpop.f32.mrb[0].mxu0
    %v6155 = vadd.f32 0.0, %v6154
    %v6156 = vpop.f32.mrb[0].mxu0
    %6157 = vmatprep.mubr.bf16.mxu0 0
    %6158 = vmatmul.mubr.bf16.gmra.mrb[0].mxu0 %v6007
    %v6159 = vpop.f32.mrb[0].mxu0
    %v6160 = vadd.f32 0.0, %v6159
    %v6161 = vpop.f32.mrb[0].mxu0
    %v6162 = vpop.f32.mrb[0].mxu0
    %v6163 = vadd.f32 0.0, %v6162
    %v6164 = vpop.f32.mrb[0].mxu0
    %6165 = vmatprep.mubr.bf16.mxu0 0
    %6166 = vmatmul.mubr.bf16.gmra.mrb[0].mxu0 %v6008
    %v6167 = vpop.f32.mrb[0].mxu0
    %v6168 = vadd.f32 0.0, %v6167
    %v6169 = vpop.f32.mrb[0].mxu0
    %v6170 = vpop.f32.mrb[0].mxu0
    %v6171 = vadd.f32 0.0, %v6170
    %v6172 = vpop.f32.mrb[0].mxu0
    %6173 = vmatprep.mubr.bf16.mxu0 0
    %6174 = vmatmul.mubr.bf16.gmra.mrb[0].mxu0 %v6009
    %v6175 = vpop.f32.mrb[0].mxu0
    %v6176 = vadd.f32 0.0, %v6175
    %v6177 = vpop.f32.mrb[0].mxu0
    %v6178 = vpop.f32.mrb[0].mxu0
    %v6179 = vadd.f32 0.0, %v6178
    %v6180 = vpop.f32.mrb[0].mxu0
    %6181 = vmatprep.mubr.bf16.mxu0 0
    %6182 = vmatmul.mubr.bf16.gmra.mrb[0].mxu0 %v6010
    %v6183 = vpop.f32.mrb[0].mxu0
    %v6184 = vadd.f32 0.0, %v6183
    %v6185 = vpop.f32.mrb[0].mxu0
    %v6186 = vpop.f32.mrb[0].mxu0
    %v6187 = vadd.f32 0.0, %v6186
    %v6188 = vpop.f32.mrb[0].mxu0
    %6189 = vmatprep.mubr.bf16.mxu0 0
    %6190 = vmatmul.mubr.bf16.gmra.mrb[0].mxu0 %v6011
    %v6191 = vpop.f32.mrb[0].mxu0
    %v6192 = vadd.f32 0.0, %v6191
    %v6193 = vpop.f32.mrb[0].mxu0
    %v6194 = vpop.f32.mrb[0].mxu0
    %v6195 = vadd.f32 0.0, %v6194
    %v6196 = vpop.f32.mrb[0].mxu0
    %6197 = vmatprep.mubr.bf16.mxu0 0
    %6198 = vmatmul.mubr.bf16.gmra.mrb[0].mxu0 %v6012
    %v6199 = vpop.f32.mrb[0].mxu0
    %v6200 = vadd.f32 0.0, %v6199
    %v6201 = vpop.f32.mrb[0].mxu0
    %v6202 = vpop.f32.mrb[0].mxu0
    %v6203 = vadd.f32 0.0, %v6202
    %v6204 = vpop.f32.mrb[0].mxu0
    %6205 = vmatprep.mubr.bf16.mxu0 0
    %6206 = vmatmul.mubr.bf16.gmra.mrb[0].mxu0 %v6013
    %v6207 = vpop.f32.mrb[0].mxu0
    %v6208 = vadd.f32 0.0, %v6207
    %v6209 = vpop.f32.mrb[0].mxu0
    %v6210 = vpop.f32.mrb[0].mxu0
    %v6211 = vadd.f32 0.0, %v6210
    %v6212 = vpop.f32.mrb[0].mxu0
    %6213 = vmatprep.mubr.bf16.mxu0 0
    %6214 = vmatmul.mubr.bf16.gmra.mrb[0].mxu0 %v6014
    %v6215 = vpop.f32.mrb[0].mxu0
    %v6216 = vadd.f32 0.0, %v6215
    %v6217 = vpop.f32.mrb[0].mxu0
    %v6218 = vpop.f32.mrb[0].mxu0
    %v6219 = vadd.f32 0.0, %v6218
    %v6220 = vpop.f32.mrb[0].mxu0
    %6221 = vmatprep.mubr.bf16.mxu0 0
    %6222 = vmatmul.mubr.bf16.gmra.mrb[0].mxu0 %v6015
    %v6223 = vpop.f32.mrb[0].mxu0
    %v6224 = vadd.f32 0.0, %v6223
    %v6225 = vpop.f32.mrb[0].mxu0
    %v6226 = vpop.f32.mrb[0].mxu0
    %v6227 = vadd.f32 0.0, %v6226
    %v6228 = vpop.f32.mrb[0].mxu0
    %6229 = vmatprep.mubr.bf16.mxu0 0
    %6230 = vmatmul.mubr.bf16.gmra.mrb[0].mxu0 %v6016
    %v6231 = vpop.f32.mrb[0].mxu0
    %v6232 = vadd.f32 0.0, %v6231
    %v6233 = vpop.f32.mrb[0].mxu0
    %v6234 = vpop.f32.mrb[0].mxu0
    %v6235 = vadd.f32 0.0, %v6234
    %v6236 = vpop.f32.mrb[0].mxu0
    %6237 = vmatprep.mubr.bf16.mxu0 0
    %6238 = vmatmul.mubr.bf16.gmra.mrb[0].mxu0 %v6017
    %v6239 = vpop.f32.mrb[0].mxu0
    %v6240 = vadd.f32 0.0, %v6239
    %v6241 = vpop.f32.mrb[0].mxu0
    %v6242 = vpop.f32.mrb[0].mxu0
    %v6243 = vadd.f32 0.0, %v6242
    %v6244 = vpop.f32.mrb[0].mxu0
    %6245 = vmatprep.mubr.bf16.mxu0 0
    %6246 = vmatmul.mubr.bf16.gmra.mrb[0].mxu0 %v6018
    %v6247 = vpop.f32.mrb[0].mxu0
    %v6248 = vadd.f32 0.0, %v6247
    %v6249 = vpop.f32.mrb[0].mxu0
    %v6250 = vpop.f32.mrb[0].mxu0
    %v6251 = vadd.f32 0.0, %v6250
    %v6252 = vpop.f32.mrb[0].mxu0
    %6253 = vmatprep.mubr.bf16.mxu0 0
    %6254 = vmatmul.mubr.bf16.gmra.mrb[0].mxu0 %v6019
    %v6255 = vpop.f32.mrb[0].mxu0
    %v6256 = vadd.f32 0.0, %v6255
    %v6257 = vpop.f32.mrb[0].mxu0
    %v6258 = vpop.f32.mrb[0].mxu0
    %v6259 = vadd.f32 0.0, %v6258
    %v6260 = vpop.f32.mrb[0].mxu0
    %6261 = vmatprep.mubr.bf16.mxu0 0
    %6262 = vmatmul.mubr.bf16.gmra.mrb[0].mxu0 %v6020
    %v6263 = vpop.f32.mrb[0].mxu0
    %v6264 = vadd.f32 0.0, %v6263
    %v6265 = vpop.f32.mrb[0].mxu0
    %v6266 = vpop.f32.mrb[0].mxu0
    %v6267 = vadd.f32 0.0, %v6266
    %v6268 = vpop.f32.mrb[0].mxu0
    %6269 = vmatprep.mubr.bf16.mxu0 0
    %6270 = vmatmul.mubr.bf16.gmra.mrb[0].mxu0 %v6021
    %v6271 = vpop.f32.mrb[0].mxu0
    %v6272 = vadd.f32 0.0, %v6271
    %v6273 = vpop.f32.mrb[0].mxu0
    %v6274 = vpop.f32.mrb[0].mxu0
    %v6275 = vadd.f32 0.0, %v6274
    %v6276 = vpop.f32.mrb[0].mxu0
    %6277 = vmatprep.mubr.bf16.mxu0 0
    %6278 = vmatmul.mubr.bf16.gmra.mrb[0].mxu0 %v6022
    %v6279 = vpop.f32.mrb[0].mxu0
    %v6280 = vadd.f32 0.0, %v6279
    %v6281 = vpop.f32.mrb[0].mxu0
    %v6282 = vpop.f32.mrb[0].mxu0
    %v6283 = vadd.f32 0.0, %v6282
    %v6284 = vpop.f32.mrb[0].mxu0
    %6285 = vmatprep.mubr.bf16.mxu0 0
    %6286 = vmatmul.mubr.bf16.gmra.mrb[0].mxu0 %v6023
    %v6287 = vpop.f32.mrb[0].mxu0
    %v6288 = vadd.f32 0.0, %v6287
    %v6289 = vpop.f32.mrb[0].mxu0
    %v6290 = vpop.f32.mrb[0].mxu0
    %v6291 = vadd.f32 0.0, %v6290
    %v6292 = vpop.f32.mrb[0].mxu0
    %6293 = vmatprep.mubr.bf16.mxu0 0
    %6294 = vmatmul.mubr.bf16.gmra.mrb[0].mxu0 %v6024
    %v6295 = vpop.f32.mrb[0].mxu0
    %v6296 = vadd.f32 0.0, %v6295
    %v6297 = vpop.f32.mrb[0].mxu0
    %v6298 = vpop.f32.mrb[0].mxu0
    %v6299 = vadd.f32 0.0, %v6298
    %v6300 = vpop.f32.mrb[0].mxu0
    %6301 = vmatprep.mubr.bf16.mxu0 0
    %6302 = vmatmul.mubr.bf16.gmra.mrb[0].mxu0 %v6025
    %v6303 = vpop.f32.mrb[0].mxu0
    %v6304 = vadd.f32 0.0, %v6303
    %v6305 = vpop.f32.mrb[0].mxu0
    %v6306 = vpop.f32.mrb[0].mxu0
    %v6307 = vadd.f32 0.0, %v6306
    %v6308 = vpop.f32.mrb[0].mxu0
    %6309 = vmatprep.mubr.bf16.mxu0 0
    %6310 = vmatmul.mubr.bf16.gmra.mrb[0].mxu0 %v6026
    %v6311 = vpop.f32.mrb[0].mxu0
    %v6312 = vadd.f32 0.0, %v6311
    %v6313 = vpop.f32.mrb[0].mxu0
    %v6314 = vpop.f32.mrb[0].mxu0
    %v6315 = vadd.f32 0.0, %v6314
    %v6316 = vpop.f32.mrb[0].mxu0
    %6317 = vmatprep.mubr.bf16.mxu0 0
    %6318 = vmatmul.mubr.bf16.gmra.mrb[0].mxu0 %v6027
    %v6319 = vpop.f32.mrb[0].mxu0
    %v6320 = vadd.f32 0.0, %v6319
    %v6321 = vpop.f32.mrb[0].mxu0
    %v6322 = vpop.f32.mrb[0].mxu0
    %v6323 = vadd.f32 0.0, %v6322
    %v6324 = vpop.f32.mrb[0].mxu0
    %6325 = vdwg.mxu0
    %v6326 = vadd.f32 %v5678, %v6072
    %v6327 = vadd.f32 %v5681, %v6075
    %v6328 = vadd.f32 %v5686, %v6080
    %v6329 = vadd.f32 %v5689, %v6083
    %v6330 = vadd.f32 %v5694, %v6088
    %v6331 = vadd.f32 %v5697, %v6091
    %v6332 = vadd.f32 %v5702, %v6096
    %v6333 = vadd.f32 %v5705, %v6099
    %v6334 = vadd.f32 %v5710, %v6104
    %v6335 = vadd.f32 %v5713, %v6107
    %v6336 = vadd.f32 %v5718, %v6112
    %v6337 = vadd.f32 %v5721, %v6115
    %v6338 = vadd.f32 %v5726, %v6120
    %v6339 = vadd.f32 %v5729, %v6123
    %v6340 = vadd.f32 %v5734, %v6128
    %v6341 = vadd.f32 %v5737, %v6131
    %v6342 = vadd.f32 %v5742, %v6136
    %v6343 = vadd.f32 %v5745, %v6139
    %v6344 = vadd.f32 %v5750, %v6144
    %v6345 = vadd.f32 %v5753, %v6147
    %v6346 = vadd.f32 %v5758, %v6152
    %v6347 = vadd.f32 %v5761, %v6155
    %v6348 = vadd.f32 %v5766, %v6160
    %v6349 = vadd.f32 %v5769, %v6163
    %v6350 = vadd.f32 %v5774, %v6168
    %v6351 = vadd.f32 %v5777, %v6171
    %v6352 = vadd.f32 %v5782, %v6176
    %v6353 = vadd.f32 %v5785, %v6179
    %v6354 = vadd.f32 %v5790, %v6184
    %v6355 = vadd.f32 %v5793, %v6187
    %v6356 = vadd.f32 %v5798, %v6192
    %v6357 = vadd.f32 %v5801, %v6195
    %v6358 = vadd.f32 %v5806, %v6200
    %v6359 = vadd.f32 %v5809, %v6203
    %v6360 = vadd.f32 %v5814, %v6208
    %v6361 = vadd.f32 %v5817, %v6211
    %v6362 = vadd.f32 %v5822, %v6216
    %v6363 = vadd.f32 %v5825, %v6219
    %v6364 = vadd.f32 %v5830, %v6224
    %v6365 = vadd.f32 %v5833, %v6227
    %v6366 = vadd.f32 %v5838, %v6232
    %v6367 = vadd.f32 %v5841, %v6235
    %v6368 = vadd.f32 %v5846, %v6240
    %v6369 = vadd.f32 %v5849, %v6243
    %v6370 = vadd.f32 %v5854, %v6248
    %v6371 = vadd.f32 %v5857, %v6251
    %v6372 = vadd.f32 %v5862, %v6256
    %v6373 = vadd.f32 %v5865, %v6259
    %v6374 = vadd.f32 %v5870, %v6264
    %v6375 = vadd.f32 %v5873, %v6267
    %v6376 = vadd.f32 %v5878, %v6272
    %v6377 = vadd.f32 %v5881, %v6275
    %v6378 = vadd.f32 %v5886, %v6280
    %v6379 = vadd.f32 %v5889, %v6283
    %v6380 = vadd.f32 %v5894, %v6288
    %v6381 = vadd.f32 %v5897, %v6291
    %v6382 = vadd.f32 %v5902, %v6296
    %v6383 = vadd.f32 %v5905, %v6299
    %v6384 = vadd.f32 %v5910, %v6304
    %v6385 = vadd.f32 %v5913, %v6307
    %v6386 = vadd.f32 %v5918, %v6312
    %v6387 = vadd.f32 %v5921, %v6315
    %v6388 = vadd.f32 %v5926, %v6320
    %v6389 = vadd.f32 %v5929, %v6323
    %v6390 = vld [vmem:[%s472] sm:$0xff]
    %v6391 = vld [vmem:[%s472 + $0x8] sm:$0xff]
    %v6392 = vld [vmem:[%s472 + $0x18] sm:$0xff]
    %v6393 = vld [vmem:[%s472 + $0x20] sm:$0xff]
    %v6394 = vld [vmem:[%s472 + $0x30] sm:$0xff]
    %v6395 = vld [vmem:[%s472 + $0x38] sm:$0xff]
    %v6396 = vld [vmem:[%s472 + $0x48] sm:$0xff]
    %v6397 = vld [vmem:[%s472 + $0x50] sm:$0xff]
    %v6398 = vld [vmem:[%s472 + $0x60] sm:$0xff]
    %v6399 = vld [vmem:[%s472 + $0x68] sm:$0xff]
    %v6400 = vld [vmem:[%s472 + $0x78] sm:$0xff]
    %v6401 = vld [vmem:[%s472 + $0x80] sm:$0xff]
    %v6402 = vld [vmem:[%s472 + $0x90] sm:$0xff]
    %v6403 = vld [vmem:[%s472 + $0x98] sm:$0xff]
    %v6404 = vld [vmem:[%s472 + $0xa8] sm:$0xff]
    %v6405 = vld [vmem:[%s472 + $0xb0] sm:$0xff]
    %v6406 = vld [vmem:[%s472 + $0xc0] sm:$0xff]
    %v6407 = vld [vmem:[%s472 + $0xc8] sm:$0xff]
    %v6408 = vld [vmem:[%s472 + $0xd8] sm:$0xff]
    %v6409 = vld [vmem:[%s472 + $0xe0] sm:$0xff]
    %v6410 = vld [vmem:[%s472 + $0xf0] sm:$0xff]
    %v6411 = vld [vmem:[%s472 + $0xf8] sm:$0xff]
    %v6412 = vld [vmem:[%s472 + $0x108] sm:$0xff]
    %v6413 = vld [vmem:[%s472 + $0x110] sm:$0xff]
    %v6414 = vld [vmem:[%s472 + $0x120] sm:$0xff]
    %v6415 = vld [vmem:[%s472 + $0x128] sm:$0xff]
    %v6416 = vld [vmem:[%s472 + $0x138] sm:$0xff]
    %v6417 = vld [vmem:[%s472 + $0x140] sm:$0xff]
    %v6418 = vld [vmem:[%s472 + $0x150] sm:$0xff]
    %v6419 = vld [vmem:[%s472 + $0x158] sm:$0xff]
    %v6420 = vld [vmem:[%s472 + $0x168] sm:$0xff]
    %v6421 = vld [vmem:[%s472 + $0x170] sm:$0xff]
    %v6422 = vld [vmem:[%s472 + $0x1b0] sm:$0xff]
    %v6423 = vld [vmem:[%s472 + $0x1b8] sm:$0xff]
    %v6424 = vld [vmem:[%s472 + $0x1c8] sm:$0xff]
    %v6425 = vld [vmem:[%s472 + $0x1d0] sm:$0xff]
    %v6426 = vld [vmem:[%s472 + $0x1e0] sm:$0xff]
    %v6427 = vld [vmem:[%s472 + $0x1e8] sm:$0xff]
    %v6428 = vld [vmem:[%s472 + $0x1f8] sm:$0xff]
    %v6429 = vld [vmem:[%s472 + $0x200] sm:$0xff]
    %v6430 = vld [vmem:[%s472 + $0x210] sm:$0xff]
    %v6431 = vld [vmem:[%s472 + $0x218] sm:$0xff]
    %v6432 = vld [vmem:[%s472 + $0x228] sm:$0xff]
    %v6433 = vld [vmem:[%s472 + $0x230] sm:$0xff]
    %v6434 = vld [vmem:[%s472 + $0x240] sm:$0xff]
    %v6435 = vld [vmem:[%s472 + $0x248] sm:$0xff]
    %v6436 = vld [vmem:[%s472 + $0x258] sm:$0xff]
    %v6437 = vld [vmem:[%s472 + $0x260] sm:$0xff]
    %v6438 = vld [vmem:[%s472 + $0x270] sm:$0xff]
    %v6439 = vld [vmem:[%s472 + $0x278] sm:$0xff]
    %v6440 = vld [vmem:[%s472 + $0x288] sm:$0xff]
    %v6441 = vld [vmem:[%s472 + $0x290] sm:$0xff]
    %v6442 = vld [vmem:[%s472 + $0x2a0] sm:$0xff]
    %v6443 = vld [vmem:[%s472 + $0x2a8] sm:$0xff]
    %v6444 = vld [vmem:[%s472 + $0x2b8] sm:$0xff]
    %v6445 = vld [vmem:[%s472 + $0x2c0] sm:$0xff]
    %v6446 = vld [vmem:[%s472 + $0x2d0] sm:$0xff]
    %v6447 = vld [vmem:[%s472 + $0x2d8] sm:$0xff]
    %v6448 = vld [vmem:[%s472 + $0x2e8] sm:$0xff]
    %v6449 = vld [vmem:[%s472 + $0x2f0] sm:$0xff]
    %v6450 = vld [vmem:[%s472 + $0x300] sm:$0xff]
    %v6451 = vld [vmem:[%s472 + $0x308] sm:$0xff]
    %v6452 = vld [vmem:[%s472 + $0x318] sm:$0xff]
    %v6453 = vld [vmem:[%s472 + $0x320] sm:$0xff]
    %v6454 = vpack.c.bf16 %v6391, %v6390
    %v6455 = vpack.c.bf16 %v6393, %v6392
    %v6456 = vpack.c.bf16 %v6395, %v6394
    %v6457 = vpack.c.bf16 %v6397, %v6396
    %v6458 = vpack.c.bf16 %v6399, %v6398
    %v6459 = vpack.c.bf16 %v6401, %v6400
    %v6460 = vpack.c.bf16 %v6403, %v6402
    %v6461 = vpack.c.bf16 %v6405, %v6404
    %v6462 = vpack.c.bf16 %v6407, %v6406
    %v6463 = vpack.c.bf16 %v6409, %v6408
    %v6464 = vpack.c.bf16 %v6411, %v6410
    %v6465 = vpack.c.bf16 %v6413, %v6412
    %v6466 = vpack.c.bf16 %v6415, %v6414
    %v6467 = vpack.c.bf16 %v6417, %v6416
    %v6468 = vpack.c.bf16 %v6419, %v6418
    %v6469 = vpack.c.bf16 %v6421, %v6420
    %v6470 = vpack.c.bf16 %v6423, %v6422
    %v6471 = vpack.c.bf16 %v6425, %v6424
    %v6472 = vpack.c.bf16 %v6427, %v6426
    %v6473 = vpack.c.bf16 %v6429, %v6428
    %v6474 = vpack.c.bf16 %v6431, %v6430
    %v6475 = vpack.c.bf16 %v6433, %v6432
    %v6476 = vpack.c.bf16 %v6435, %v6434
    %v6477 = vpack.c.bf16 %v6437, %v6436
    %v6478 = vpack.c.bf16 %v6439, %v6438
    %v6479 = vpack.c.bf16 %v6441, %v6440
    %v6480 = vpack.c.bf16 %v6443, %v6442
    %v6481 = vpack.c.bf16 %v6445, %v6444
    %v6482 = vpack.c.bf16 %v6447, %v6446
    %v6483 = vpack.c.bf16 %v6449, %v6448
    %v6484 = vpack.c.bf16 %v6451, %v6450
    %v6485 = vpack.c.bf16 %v6453, %v6452
    %s6486 = scalar_lea.vmem [#allocation4], 192
    %v6487 = vld [vmem:[%s6486] sm:$0xff]
    %v6488 = vld [vmem:[%s6486 + $0x8] sm:$0xff]
    %v6489 = vld [vmem:[%s6486 + $0x10] sm:$0xff]
    %v6490 = vld [vmem:[%s6486 + $0x18] sm:$0xff]
    %v6491 = vld [vmem:[%s6486 + $0x20] sm:$0xff]
    %v6492 = vld [vmem:[%s6486 + $0x28] sm:$0xff]
    %v6493 = vld [vmem:[%s6486 + $0x30] sm:$0xff]
    %v6494 = vld [vmem:[%s6486 + $0x38] sm:$0xff]
    %6495 = vmatprep.subr.bf16.mxu0 0
    %6496 = vmatpush1.bf16.msra.mxu0 %v6487
    %6497 = vmatprep.subr.bf16.mxu0 0
    %6498 = vmatpush1.bf16.msra.mxu0 %v6488
    %6499 = vmatprep.subr.bf16.mxu0 0
    %6500 = vmatpush1.bf16.msra.mxu0 %v6489
    %6501 = vmatprep.subr.bf16.mxu0 0
    %6502 = vmatpush1.bf16.msra.mxu0 %v6490
    %6503 = vmatprep.subr.bf16.mxu0 0
    %6504 = vmatpush1.bf16.msra.mxu0 %v6491
    %6505 = vmatprep.subr.bf16.mxu0 0
    %6506 = vmatpush1.bf16.msra.mxu0 %v6492
    %6507 = vmatprep.subr.bf16.mxu0 0
    %6508 = vmatpush1.bf16.msra.mxu0 %v6493
    %6509 = vmatprep.subr.bf16.mxu0 0
    %6510 = vmatpush1.bf16.msra.mxu0 %v6494
    %6511 = vmatprep.subr.bf16.mxu0 0
    %6512 = vmatpush1.bf16.msra.mxu0 0
    %6513 = vmatprep.subr.bf16.mxu0 0
    %6514 = vmatpush1.bf16.msra.mxu0 0
    %6515 = vmatprep.subr.bf16.mxu0 0
    %6516 = vmatpush1.bf16.msra.mxu0 0
    %6517 = vmatprep.subr.bf16.mxu0 0
    %6518 = vmatpush1.bf16.msra.mxu0 0
    %6519 = vmatprep.subr.bf16.mxu0 0
    %6520 = vmatpush1.bf16.msra.mxu0 0
    %6521 = vmatprep.subr.bf16.mxu0 0
    %6522 = vmatpush1.bf16.msra.mxu0 0
    %6523 = vmatprep.subr.bf16.mxu0 0
    %6524 = vmatpush1.bf16.msra.mxu0 0
    %6525 = vmatprep.subr.bf16.mxu0 0
    %6526 = vmatpush1.bf16.msra.mxu0 0
    %6527 = vmatprep.mubr.bf16.mxu0 0
    %6528 = vmatmul.mubr.bf16.gmra.mrb[0].mxu0 %v6454
    %v6529 = vpop.f32.mrb[0].mxu0
    %v6530 = vadd.f32 0.0, %v6529
    %v6531 = vpop.f32.mrb[0].mxu0
    %v6532 = vpop.f32.mrb[0].mxu0
    %v6533 = vadd.f32 0.0, %v6532
    %v6534 = vpop.f32.mrb[0].mxu0
    %6535 = vmatprep.mubr.bf16.mxu0 0
    %6536 = vmatmul.mubr.bf16.gmra.mrb[0].mxu0 %v6455
    %v6537 = vpop.f32.mrb[0].mxu0
    %v6538 = vadd.f32 0.0, %v6537
    %v6539 = vpop.f32.mrb[0].mxu0
    %v6540 = vpop.f32.mrb[0].mxu0
    %v6541 = vadd.f32 0.0, %v6540
    %v6542 = vpop.f32.mrb[0].mxu0
    %6543 = vmatprep.mubr.bf16.mxu0 0
    %6544 = vmatmul.mubr.bf16.gmra.mrb[0].mxu0 %v6456
    %v6545 = vpop.f32.mrb[0].mxu0
    %v6546 = vadd.f32 0.0, %v6545
    %v6547 = vpop.f32.mrb[0].mxu0
    %v6548 = vpop.f32.mrb[0].mxu0
    %v6549 = vadd.f32 0.0, %v6548
    %v6550 = vpop.f32.mrb[0].mxu0
    %6551 = vmatprep.mubr.bf16.mxu0 0
    %6552 = vmatmul.mubr.bf16.gmra.mrb[0].mxu0 %v6457
    %v6553 = vpop.f32.mrb[0].mxu0
    %v6554 = vadd.f32 0.0, %v6553
    %v6555 = vpop.f32.mrb[0].mxu0
    %v6556 = vpop.f32.mrb[0].mxu0
    %v6557 = vadd.f32 0.0, %v6556
    %v6558 = vpop.f32.mrb[0].mxu0
    %6559 = vmatprep.mubr.bf16.mxu0 0
    %6560 = vmatmul.mubr.bf16.gmra.mrb[0].mxu0 %v6458
    %v6561 = vpop.f32.mrb[0].mxu0
    %v6562 = vadd.f32 0.0, %v6561
    %v6563 = vpop.f32.mrb[0].mxu0
    %v6564 = vpop.f32.mrb[0].mxu0
    %v6565 = vadd.f32 0.0, %v6564
    %v6566 = vpop.f32.mrb[0].mxu0
    %6567 = vmatprep.mubr.bf16.mxu0 0
    %6568 = vmatmul.mubr.bf16.gmra.mrb[0].mxu0 %v6459
    %v6569 = vpop.f32.mrb[0].mxu0
    %v6570 = vadd.f32 0.0, %v6569
    %v6571 = vpop.f32.mrb[0].mxu0
    %v6572 = vpop.f32.mrb[0].mxu0
    %v6573 = vadd.f32 0.0, %v6572
    %v6574 = vpop.f32.mrb[0].mxu0
    %6575 = vmatprep.mubr.bf16.mxu0 0
    %6576 = vmatmul.mubr.bf16.gmra.mrb[0].mxu0 %v6460
    %v6577 = vpop.f32.mrb[0].mxu0
    %v6578 = vadd.f32 0.0, %v6577
    %v6579 = vpop.f32.mrb[0].mxu0
    %v6580 = vpop.f32.mrb[0].mxu0
    %v6581 = vadd.f32 0.0, %v6580
    %v6582 = vpop.f32.mrb[0].mxu0
    %6583 = vmatprep.mubr.bf16.mxu0 0
    %6584 = vmatmul.mubr.bf16.gmra.mrb[0].mxu0 %v6461
    %v6585 = vpop.f32.mrb[0].mxu0
    %v6586 = vadd.f32 0.0, %v6585
    %v6587 = vpop.f32.mrb[0].mxu0
    %v6588 = vpop.f32.mrb[0].mxu0
    %v6589 = vadd.f32 0.0, %v6588
    %v6590 = vpop.f32.mrb[0].mxu0
    %6591 = vmatprep.mubr.bf16.mxu0 0
    %6592 = vmatmul.mubr.bf16.gmra.mrb[0].mxu0 %v6462
    %v6593 = vpop.f32.mrb[0].mxu0
    %v6594 = vadd.f32 0.0, %v6593
    %v6595 = vpop.f32.mrb[0].mxu0
    %v6596 = vpop.f32.mrb[0].mxu0
    %v6597 = vadd.f32 0.0, %v6596
    %v6598 = vpop.f32.mrb[0].mxu0
    %6599 = vmatprep.mubr.bf16.mxu0 0
    %6600 = vmatmul.mubr.bf16.gmra.mrb[0].mxu0 %v6463
    %v6601 = vpop.f32.mrb[0].mxu0
    %v6602 = vadd.f32 0.0, %v6601
    %v6603 = vpop.f32.mrb[0].mxu0
    %v6604 = vpop.f32.mrb[0].mxu0
    %v6605 = vadd.f32 0.0, %v6604
    %v6606 = vpop.f32.mrb[0].mxu0
    %6607 = vmatprep.mubr.bf16.mxu0 0
    %6608 = vmatmul.mubr.bf16.gmra.mrb[0].mxu0 %v6464
    %v6609 = vpop.f32.mrb[0].mxu0
    %v6610 = vadd.f32 0.0, %v6609
    %v6611 = vpop.f32.mrb[0].mxu0
    %v6612 = vpop.f32.mrb[0].mxu0
    %v6613 = vadd.f32 0.0, %v6612
    %v6614 = vpop.f32.mrb[0].mxu0
    %6615 = vmatprep.mubr.bf16.mxu0 0
    %6616 = vmatmul.mubr.bf16.gmra.mrb[0].mxu0 %v6465
    %v6617 = vpop.f32.mrb[0].mxu0
    %v6618 = vadd.f32 0.0, %v6617
    %v6619 = vpop.f32.mrb[0].mxu0
    %v6620 = vpop.f32.mrb[0].mxu0
    %v6621 = vadd.f32 0.0, %v6620
    %v6622 = vpop.f32.mrb[0].mxu0
    %6623 = vmatprep.mubr.bf16.mxu0 0
    %6624 = vmatmul.mubr.bf16.gmra.mrb[0].mxu0 %v6466
    %v6625 = vpop.f32.mrb[0].mxu0
    %v6626 = vadd.f32 0.0, %v6625
    %v6627 = vpop.f32.mrb[0].mxu0
    %v6628 = vpop.f32.mrb[0].mxu0
    %v6629 = vadd.f32 0.0, %v6628
    %v6630 = vpop.f32.mrb[0].mxu0
    %6631 = vmatprep.mubr.bf16.mxu0 0
    %6632 = vmatmul.mubr.bf16.gmra.mrb[0].mxu0 %v6467
    %v6633 = vpop.f32.mrb[0].mxu0
    %v6634 = vadd.f32 0.0, %v6633
    %v6635 = vpop.f32.mrb[0].mxu0
    %v6636 = vpop.f32.mrb[0].mxu0
    %v6637 = vadd.f32 0.0, %v6636
    %v6638 = vpop.f32.mrb[0].mxu0
    %6639 = vmatprep.mubr.bf16.mxu0 0
    %6640 = vmatmul.mubr.bf16.gmra.mrb[0].mxu0 %v6468
    %v6641 = vpop.f32.mrb[0].mxu0
    %v6642 = vadd.f32 0.0, %v6641
    %v6643 = vpop.f32.mrb[0].mxu0
    %v6644 = vpop.f32.mrb[0].mxu0
    %v6645 = vadd.f32 0.0, %v6644
    %v6646 = vpop.f32.mrb[0].mxu0
    %6647 = vmatprep.mubr.bf16.mxu0 0
    %6648 = vmatmul.mubr.bf16.gmra.mrb[0].mxu0 %v6469
    %v6649 = vpop.f32.mrb[0].mxu0
    %v6650 = vadd.f32 0.0, %v6649
    %v6651 = vpop.f32.mrb[0].mxu0
    %v6652 = vpop.f32.mrb[0].mxu0
    %v6653 = vadd.f32 0.0, %v6652
    %v6654 = vpop.f32.mrb[0].mxu0
    %6655 = vmatprep.mubr.bf16.mxu0 0
    %6656 = vmatmul.mubr.bf16.gmra.mrb[0].mxu0 %v6470
    %v6657 = vpop.f32.mrb[0].mxu0
    %v6658 = vadd.f32 0.0, %v6657
    %v6659 = vpop.f32.mrb[0].mxu0
    %v6660 = vpop.f32.mrb[0].mxu0
    %v6661 = vadd.f32 0.0, %v6660
    %v6662 = vpop.f32.mrb[0].mxu0
    %6663 = vmatprep.mubr.bf16.mxu0 0
    %6664 = vmatmul.mubr.bf16.gmra.mrb[0].mxu0 %v6471
    %v6665 = vpop.f32.mrb[0].mxu0
    %v6666 = vadd.f32 0.0, %v6665
    %v6667 = vpop.f32.mrb[0].mxu0
    %v6668 = vpop.f32.mrb[0].mxu0
    %v6669 = vadd.f32 0.0, %v6668
    %v6670 = vpop.f32.mrb[0].mxu0
    %6671 = vmatprep.mubr.bf16.mxu0 0
    %6672 = vmatmul.mubr.bf16.gmra.mrb[0].mxu0 %v6472
    %v6673 = vpop.f32.mrb[0].mxu0
    %v6674 = vadd.f32 0.0, %v6673
    %v6675 = vpop.f32.mrb[0].mxu0
    %v6676 = vpop.f32.mrb[0].mxu0
    %v6677 = vadd.f32 0.0, %v6676
    %v6678 = vpop.f32.mrb[0].mxu0
    %6679 = vmatprep.mubr.bf16.mxu0 0
    %6680 = vmatmul.mubr.bf16.gmra.mrb[0].mxu0 %v6473
    %v6681 = vpop.f32.mrb[0].mxu0
    %v6682 = vadd.f32 0.0, %v6681
    %v6683 = vpop.f32.mrb[0].mxu0
    %v6684 = vpop.f32.mrb[0].mxu0
    %v6685 = vadd.f32 0.0, %v6684
    %v6686 = vpop.f32.mrb[0].mxu0
    %6687 = vmatprep.mubr.bf16.mxu0 0
    %6688 = vmatmul.mubr.bf16.gmra.mrb[0].mxu0 %v6474
    %v6689 = vpop.f32.mrb[0].mxu0
    %v6690 = vadd.f32 0.0, %v6689
    %v6691 = vpop.f32.mrb[0].mxu0
    %v6692 = vpop.f32.mrb[0].mxu0
    %v6693 = vadd.f32 0.0, %v6692
    %v6694 = vpop.f32.mrb[0].mxu0
    %6695 = vmatprep.mubr.bf16.mxu0 0
    %6696 = vmatmul.mubr.bf16.gmra.mrb[0].mxu0 %v6475
    %v6697 = vpop.f32.mrb[0].mxu0
    %v6698 = vadd.f32 0.0, %v6697
    %v6699 = vpop.f32.mrb[0].mxu0
    %v6700 = vpop.f32.mrb[0].mxu0
    %v6701 = vadd.f32 0.0, %v6700
    %v6702 = vpop.f32.mrb[0].mxu0
    %6703 = vmatprep.mubr.bf16.mxu0 0
    %6704 = vmatmul.mubr.bf16.gmra.mrb[0].mxu0 %v6476
    %v6705 = vpop.f32.mrb[0].mxu0
    %v6706 = vadd.f32 0.0, %v6705
    %v6707 = vpop.f32.mrb[0].mxu0
    %v6708 = vpop.f32.mrb[0].mxu0
    %v6709 = vadd.f32 0.0, %v6708
    %v6710 = vpop.f32.mrb[0].mxu0
    %6711 = vmatprep.mubr.bf16.mxu0 0
    %6712 = vmatmul.mubr.bf16.gmra.mrb[0].mxu0 %v6477
    %v6713 = vpop.f32.mrb[0].mxu0
    %v6714 = vadd.f32 0.0, %v6713
    %v6715 = vpop.f32.mrb[0].mxu0
    %v6716 = vpop.f32.mrb[0].mxu0
    %v6717 = vadd.f32 0.0, %v6716
    %v6718 = vpop.f32.mrb[0].mxu0
    %6719 = vmatprep.mubr.bf16.mxu0 0
    %6720 = vmatmul.mubr.bf16.gmra.mrb[0].mxu0 %v6478
    %v6721 = vpop.f32.mrb[0].mxu0
    %v6722 = vadd.f32 0.0, %v6721
    %v6723 = vpop.f32.mrb[0].mxu0
    %v6724 = vpop.f32.mrb[0].mxu0
    %v6725 = vadd.f32 0.0, %v6724
    %v6726 = vpop.f32.mrb[0].mxu0
    %6727 = vmatprep.mubr.bf16.mxu0 0
    %6728 = vmatmul.mubr.bf16.gmra.mrb[0].mxu0 %v6479
    %v6729 = vpop.f32.mrb[0].mxu0
    %v6730 = vadd.f32 0.0, %v6729
    %v6731 = vpop.f32.mrb[0].mxu0
    %v6732 = vpop.f32.mrb[0].mxu0
    %v6733 = vadd.f32 0.0, %v6732
    %v6734 = vpop.f32.mrb[0].mxu0
    %6735 = vmatprep.mubr.bf16.mxu0 0
    %6736 = vmatmul.mubr.bf16.gmra.mrb[0].mxu0 %v6480
    %v6737 = vpop.f32.mrb[0].mxu0
    %v6738 = vadd.f32 0.0, %v6737
    %v6739 = vpop.f32.mrb[0].mxu0
    %v6740 = vpop.f32.mrb[0].mxu0
    %v6741 = vadd.f32 0.0, %v6740
    %v6742 = vpop.f32.mrb[0].mxu0
    %6743 = vmatprep.mubr.bf16.mxu0 0
    %6744 = vmatmul.mubr.bf16.gmra.mrb[0].mxu0 %v6481
    %v6745 = vpop.f32.mrb[0].mxu0
    %v6746 = vadd.f32 0.0, %v6745
    %v6747 = vpop.f32.mrb[0].mxu0
    %v6748 = vpop.f32.mrb[0].mxu0
    %v6749 = vadd.f32 0.0, %v6748
    %v6750 = vpop.f32.mrb[0].mxu0
    %6751 = vmatprep.mubr.bf16.mxu0 0
    %6752 = vmatmul.mubr.bf16.gmra.mrb[0].mxu0 %v6482
    %v6753 = vpop.f32.mrb[0].mxu0
    %v6754 = vadd.f32 0.0, %v6753
    %v6755 = vpop.f32.mrb[0].mxu0
    %v6756 = vpop.f32.mrb[0].mxu0
    %v6757 = vadd.f32 0.0, %v6756
    %v6758 = vpop.f32.mrb[0].mxu0
    %6759 = vmatprep.mubr.bf16.mxu0 0
    %6760 = vmatmul.mubr.bf16.gmra.mrb[0].mxu0 %v6483
    %v6761 = vpop.f32.mrb[0].mxu0
    %v6762 = vadd.f32 0.0, %v6761
    %v6763 = vpop.f32.mrb[0].mxu0
    %v6764 = vpop.f32.mrb[0].mxu0
    %v6765 = vadd.f32 0.0, %v6764
    %v6766 = vpop.f32.mrb[0].mxu0
    %6767 = vmatprep.mubr.bf16.mxu0 0
    %6768 = vmatmul.mubr.bf16.gmra.mrb[0].mxu0 %v6484
    %v6769 = vpop.f32.mrb[0].mxu0
    %v6770 = vadd.f32 0.0, %v6769
    %v6771 = vpop.f32.mrb[0].mxu0
    %v6772 = vpop.f32.mrb[0].mxu0
    %v6773 = vadd.f32 0.0, %v6772
    %v6774 = vpop.f32.mrb[0].mxu0
    %6775 = vmatprep.mubr.bf16.mxu0 0
    %6776 = vmatmul.mubr.bf16.gmra.mrb[0].mxu0 %v6485
    %v6777 = vpop.f32.mrb[0].mxu0
    %v6778 = vadd.f32 0.0, %v6777
    %v6779 = vpop.f32.mrb[0].mxu0
    %v6780 = vpop.f32.mrb[0].mxu0
    %v6781 = vadd.f32 0.0, %v6780
    %v6782 = vpop.f32.mrb[0].mxu0
    %6783 = vdwg.mxu0
    %v6784 = vadd.f32 %v6326, %v6530
    %v6785 = vadd.f32 %v6327, %v6533
    %v6786 = vadd.f32 %v6328, %v6538
    %v6787 = vadd.f32 %v6329, %v6541
    %v6788 = vadd.f32 %v6330, %v6546
    %v6789 = vadd.f32 %v6331, %v6549
    %v6790 = vadd.f32 %v6332, %v6554
    %v6791 = vadd.f32 %v6333, %v6557
    %v6792 = vadd.f32 %v6334, %v6562
    %v6793 = vadd.f32 %v6335, %v6565
    %v6794 = vadd.f32 %v6336, %v6570
    %v6795 = vadd.f32 %v6337, %v6573
    %v6796 = vadd.f32 %v6338, %v6578
    %v6797 = vadd.f32 %v6339, %v6581
    %v6798 = vadd.f32 %v6340, %v6586
    %v6799 = vadd.f32 %v6341, %v6589
    %v6800 = vadd.f32 %v6342, %v6594
    %v6801 = vadd.f32 %v6343, %v6597
    %v6802 = vadd.f32 %v6344, %v6602
    %v6803 = vadd.f32 %v6345, %v6605
    %v6804 = vadd.f32 %v6346, %v6610
    %v6805 = vadd.f32 %v6347, %v6613
    %v6806 = vadd.f32 %v6348, %v6618
    %v6807 = vadd.f32 %v6349, %v6621
    %v6808 = vadd.f32 %v6350, %v6626
    %v6809 = vadd.f32 %v6351, %v6629
    %v6810 = vadd.f32 %v6352, %v6634
    %v6811 = vadd.f32 %v6353, %v6637
    %v6812 = vadd.f32 %v6354, %v6642
    %v6813 = vadd.f32 %v6355, %v6645
    %v6814 = vadd.f32 %v6356, %v6650
    %v6815 = vadd.f32 %v6357, %v6653
    %v6816 = vadd.f32 %v6358, %v6658
    %v6817 = vadd.f32 %v6359, %v6661
    %v6818 = vadd.f32 %v6360, %v6666
    %v6819 = vadd.f32 %v6361, %v6669
    %v6820 = vadd.f32 %v6362, %v6674
    %v6821 = vadd.f32 %v6363, %v6677
    %v6822 = vadd.f32 %v6364, %v6682
    %v6823 = vadd.f32 %v6365, %v6685
    %v6824 = vadd.f32 %v6366, %v6690
    %v6825 = vadd.f32 %v6367, %v6693
    %v6826 = vadd.f32 %v6368, %v6698
    %v6827 = vadd.f32 %v6369, %v6701
    %v6828 = vadd.f32 %v6370, %v6706
    %v6829 = vadd.f32 %v6371, %v6709
    %v6830 = vadd.f32 %v6372, %v6714
    %v6831 = vadd.f32 %v6373, %v6717
    %v6832 = vadd.f32 %v6374, %v6722
    %v6833 = vadd.f32 %v6375, %v6725
    %v6834 = vadd.f32 %v6376, %v6730
    %v6835 = vadd.f32 %v6377, %v6733
    %v6836 = vadd.f32 %v6378, %v6738
    %v6837 = vadd.f32 %v6379, %v6741
    %v6838 = vadd.f32 %v6380, %v6746
    %v6839 = vadd.f32 %v6381, %v6749
    %v6840 = vadd.f32 %v6382, %v6754
    %v6841 = vadd.f32 %v6383, %v6757
    %v6842 = vadd.f32 %v6384, %v6762
    %v6843 = vadd.f32 %v6385, %v6765
    %v6844 = vadd.f32 %v6386, %v6770
    %v6845 = vadd.f32 %v6387, %v6773
    %v6846 = vadd.f32 %v6388, %v6778
    %v6847 = vadd.f32 %v6389, %v6781
    %v6848 = vld [vmem:[%s472 + $0x1] sm:$0xff]
    %v6849 = vld [vmem:[%s472 + $0x9] sm:$0xff]
    %v6850 = vld [vmem:[%s472 + $0x19] sm:$0xff]
    %v6851 = vld [vmem:[%s472 + $0x21] sm:$0xff]
    %v6852 = vld [vmem:[%s472 + $0x31] sm:$0xff]
    %v6853 = vld [vmem:[%s472 + $0x39] sm:$0xff]
    %v6854 = vld [vmem:[%s472 + $0x49] sm:$0xff]
    %v6855 = vld [vmem:[%s472 + $0x51] sm:$0xff]
    %v6856 = vld [vmem:[%s472 + $0x61] sm:$0xff]
    %v6857 = vld [vmem:[%s472 + $0x69] sm:$0xff]
    %v6858 = vld [vmem:[%s472 + $0x79] sm:$0xff]
    %v6859 = vld [vmem:[%s472 + $0x81] sm:$0xff]
    %v6860 = vld [vmem:[%s472 + $0x91] sm:$0xff]
    %v6861 = vld [vmem:[%s472 + $0x99] sm:$0xff]
    %v6862 = vld [vmem:[%s472 + $0xa9] sm:$0xff]
    %v6863 = vld [vmem:[%s472 + $0xb1] sm:$0xff]
    %v6864 = vld [vmem:[%s472 + $0xc1] sm:$0xff]
    %v6865 = vld [vmem:[%s472 + $0xc9] sm:$0xff]
    %v6866 = vld [vmem:[%s472 + $0xd9] sm:$0xff]
    %v6867 = vld [vmem:[%s472 + $0xe1] sm:$0xff]
    %v6868 = vld [vmem:[%s472 + $0xf1] sm:$0xff]
    %v6869 = vld [vmem:[%s472 + $0xf9] sm:$0xff]
    %v6870 = vld [vmem:[%s472 + $0x109] sm:$0xff]
    %v6871 = vld [vmem:[%s472 + $0x111] sm:$0xff]
    %v6872 = vld [vmem:[%s472 + $0x121] sm:$0xff]
    %v6873 = vld [vmem:[%s472 + $0x129] sm:$0xff]
    %v6874 = vld [vmem:[%s472 + $0x139] sm:$0xff]
    %v6875 = vld [vmem:[%s472 + $0x141] sm:$0xff]
    %v6876 = vld [vmem:[%s472 + $0x151] sm:$0xff]
    %v6877 = vld [vmem:[%s472 + $0x159] sm:$0xff]
    %v6878 = vld [vmem:[%s472 + $0x169] sm:$0xff]
    %v6879 = vld [vmem:[%s472 + $0x171] sm:$0xff]
    %v6880 = vld [vmem:[%s472 + $0x1b1] sm:$0xff]
    %v6881 = vld [vmem:[%s472 + $0x1b9] sm:$0xff]
    %v6882 = vld [vmem:[%s472 + $0x1c9] sm:$0xff]
    %v6883 = vld [vmem:[%s472 + $0x1d1] sm:$0xff]
    %v6884 = vld [vmem:[%s472 + $0x1e1] sm:$0xff]
    %v6885 = vld [vmem:[%s472 + $0x1e9] sm:$0xff]
    %v6886 = vld [vmem:[%s472 + $0x1f9] sm:$0xff]
    %v6887 = vld [vmem:[%s472 + $0x201] sm:$0xff]
    %v6888 = vld [vmem:[%s472 + $0x211] sm:$0xff]
    %v6889 = vld [vmem:[%s472 + $0x219] sm:$0xff]
    %v6890 = vld [vmem:[%s472 + $0x229] sm:$0xff]
    %v6891 = vld [vmem:[%s472 + $0x231] sm:$0xff]
    %v6892 = vld [vmem:[%s472 + $0x241] sm:$0xff]
    %v6893 = vld [vmem:[%s472 + $0x249] sm:$0xff]
    %v6894 = vld [vmem:[%s472 + $0x259] sm:$0xff]
    %v6895 = vld [vmem:[%s472 + $0x261] sm:$0xff]
    %v6896 = vld [vmem:[%s472 + $0x271] sm:$0xff]
    %v6897 = vld [vmem:[%s472 + $0x279] sm:$0xff]
    %v6898 = vld [vmem:[%s472 + $0x289] sm:$0xff]
    %v6899 = vld [vmem:[%s472 + $0x291] sm:$0xff]
    %v6900 = vld [vmem:[%s472 + $0x2a1] sm:$0xff]
    %v6901 = vld [vmem:[%s472 + $0x2a9] sm:$0xff]
    %v6902 = vld [vmem:[%s472 + $0x2b9] sm:$0xff]
    %v6903 = vld [vmem:[%s472 + $0x2c1] sm:$0xff]
    %v6904 = vld [vmem:[%s472 + $0x2d1] sm:$0xff]
    %v6905 = vld [vmem:[%s472 + $0x2d9] sm:$0xff]
    %v6906 = vld [vmem:[%s472 + $0x2e9] sm:$0xff]
    %v6907 = vld [vmem:[%s472 + $0x2f1] sm:$0xff]
    %v6908 = vld [vmem:[%s472 + $0x301] sm:$0xff]
    %v6909 = vld [vmem:[%s472 + $0x309] sm:$0xff]
    %v6910 = vld [vmem:[%s472 + $0x319] sm:$0xff]
    %v6911 = vld [vmem:[%s472 + $0x321] sm:$0xff]
    %v6912 = vpack.c.bf16 %v6849, %v6848
    %v6913 = vpack.c.bf16 %v6851, %v6850
    %v6914 = vpack.c.bf16 %v6853, %v6852
    %v6915 = vpack.c.bf16 %v6855, %v6854
    %v6916 = vpack.c.bf16 %v6857, %v6856
    %v6917 = vpack.c.bf16 %v6859, %v6858
    %v6918 = vpack.c.bf16 %v6861, %v6860
    %v6919 = vpack.c.bf16 %v6863, %v6862
    %v6920 = vpack.c.bf16 %v6865, %v6864
    %v6921 = vpack.c.bf16 %v6867, %v6866
    %v6922 = vpack.c.bf16 %v6869, %v6868
    %v6923 = vpack.c.bf16 %v6871, %v6870
    %v6924 = vpack.c.bf16 %v6873, %v6872
    %v6925 = vpack.c.bf16 %v6875, %v6874
    %v6926 = vpack.c.bf16 %v6877, %v6876
    %v6927 = vpack.c.bf16 %v6879, %v6878
    %v6928 = vpack.c.bf16 %v6881, %v6880
    %v6929 = vpack.c.bf16 %v6883, %v6882
    %v6930 = vpack.c.bf16 %v6885, %v6884
    %v6931 = vpack.c.bf16 %v6887, %v6886
    %v6932 = vpack.c.bf16 %v6889, %v6888
    %v6933 = vpack.c.bf16 %v6891, %v6890
    %v6934 = vpack.c.bf16 %v6893, %v6892
    %v6935 = vpack.c.bf16 %v6895, %v6894
    %v6936 = vpack.c.bf16 %v6897, %v6896
    %v6937 = vpack.c.bf16 %v6899, %v6898
    %v6938 = vpack.c.bf16 %v6901, %v6900
    %v6939 = vpack.c.bf16 %v6903, %v6902
    %v6940 = vpack.c.bf16 %v6905, %v6904
    %v6941 = vpack.c.bf16 %v6907, %v6906
    %v6942 = vpack.c.bf16 %v6909, %v6908
    %v6943 = vpack.c.bf16 %v6911, %v6910
    %s6944 = scalar_lea.vmem [#allocation4], 256
    %v6945 = vld [vmem:[%s6944] sm:$0xff]
    %v6946 = vld [vmem:[%s6944 + $0x8] sm:$0xff]
    %v6947 = vld [vmem:[%s6944 + $0x10] sm:$0xff]
    %v6948 = vld [vmem:[%s6944 + $0x18] sm:$0xff]
    %v6949 = vld [vmem:[%s6944 + $0x20] sm:$0xff]
    %v6950 = vld [vmem:[%s6944 + $0x28] sm:$0xff]
    %v6951 = vld [vmem:[%s6944 + $0x30] sm:$0xff]
    %v6952 = vld [vmem:[%s6944 + $0x38] sm:$0xff]
    %6953 = vmatprep.subr.bf16.mxu0 0
    %6954 = vmatpush1.bf16.msra.mxu0 %v6945
    %6955 = vmatprep.subr.bf16.mxu0 0
    %6956 = vmatpush1.bf16.msra.mxu0 %v6946
    %6957 = vmatprep.subr.bf16.mxu0 0
    %6958 = vmatpush1.bf16.msra.mxu0 %v6947
    %6959 = vmatprep.subr.bf16.mxu0 0
    %6960 = vmatpush1.bf16.msra.mxu0 %v6948
    %6961 = vmatprep.subr.bf16.mxu0 0
    %6962 = vmatpush1.bf16.msra.mxu0 %v6949
    %6963 = vmatprep.subr.bf16.mxu0 0
    %6964 = vmatpush1.bf16.msra.mxu0 %v6950
    %6965 = vmatprep.subr.bf16.mxu0 0
    %6966 = vmatpush1.bf16.msra.mxu0 %v6951
    %6967 = vmatprep.subr.bf16.mxu0 0
    %6968 = vmatpush1.bf16.msra.mxu0 %v6952
    %6969 = vmatprep.subr.bf16.mxu0 0
    %6970 = vmatpush1.bf16.msra.mxu0 0
    %6971 = vmatprep.subr.bf16.mxu0 0
    %6972 = vmatpush1.bf16.msra.mxu0 0
    %6973 = vmatprep.subr.bf16.mxu0 0
    %6974 = vmatpush1.bf16.msra.mxu0 0
    %6975 = vmatprep.subr.bf16.mxu0 0
    %6976 = vmatpush1.bf16.msra.mxu0 0
    %6977 = vmatprep.subr.bf16.mxu0 0
    %6978 = vmatpush1.bf16.msra.mxu0 0
    %6979 = vmatprep.subr.bf16.mxu0 0
    %6980 = vmatpush1.bf16.msra.mxu0 0
    %6981 = vmatprep.subr.bf16.mxu0 0
    %6982 = vmatpush1.bf16.msra.mxu0 0
    %6983 = vmatprep.subr.bf16.mxu0 0
    %6984 = vmatpush1.bf16.msra.mxu0 0
    %6985 = vmatprep.mubr.bf16.mxu0 0
    %6986 = vmatmul.mubr.bf16.gmra.mrb[0].mxu0 %v6912
    %v6987 = vpop.f32.mrb[0].mxu0
    %v6988 = vadd.f32 0.0, %v6987
    %v6989 = vpop.f32.mrb[0].mxu0
    %v6990 = vpop.f32.mrb[0].mxu0
    %v6991 = vadd.f32 0.0, %v6990
    %v6992 = vpop.f32.mrb[0].mxu0
    %6993 = vmatprep.mubr.bf16.mxu0 0
    %6994 = vmatmul.mubr.bf16.gmra.mrb[0].mxu0 %v6913
    %v6995 = vpop.f32.mrb[0].mxu0
    %v6996 = vadd.f32 0.0, %v6995
    %v6997 = vpop.f32.mrb[0].mxu0
    %v6998 = vpop.f32.mrb[0].mxu0
    %v6999 = vadd.f32 0.0, %v6998
    %v7000 = vpop.f32.mrb[0].mxu0
    %7001 = vmatprep.mubr.bf16.mxu0 0
    %7002 = vmatmul.mubr.bf16.gmra.mrb[0].mxu0 %v6914
    %v7003 = vpop.f32.mrb[0].mxu0
    %v7004 = vadd.f32 0.0, %v7003
    %v7005 = vpop.f32.mrb[0].mxu0
    %v7006 = vpop.f32.mrb[0].mxu0
    %v7007 = vadd.f32 0.0, %v7006
    %v7008 = vpop.f32.mrb[0].mxu0
    %7009 = vmatprep.mubr.bf16.mxu0 0
    %7010 = vmatmul.mubr.bf16.gmra.mrb[0].mxu0 %v6915
    %v7011 = vpop.f32.mrb[0].mxu0
    %v7012 = vadd.f32 0.0, %v7011
    %v7013 = vpop.f32.mrb[0].mxu0
    %v7014 = vpop.f32.mrb[0].mxu0
    %v7015 = vadd.f32 0.0, %v7014
    %v7016 = vpop.f32.mrb[0].mxu0
    %7017 = vmatprep.mubr.bf16.mxu0 0
    %7018 = vmatmul.mubr.bf16.gmra.mrb[0].mxu0 %v6916
    %v7019 = vpop.f32.mrb[0].mxu0
    %v7020 = vadd.f32 0.0, %v7019
    %v7021 = vpop.f32.mrb[0].mxu0
    %v7022 = vpop.f32.mrb[0].mxu0
    %v7023 = vadd.f32 0.0, %v7022
    %v7024 = vpop.f32.mrb[0].mxu0
    %7025 = vmatprep.mubr.bf16.mxu0 0
    %7026 = vmatmul.mubr.bf16.gmra.mrb[0].mxu0 %v6917
    %v7027 = vpop.f32.mrb[0].mxu0
    %v7028 = vadd.f32 0.0, %v7027
    %v7029 = vpop.f32.mrb[0].mxu0
    %v7030 = vpop.f32.mrb[0].mxu0
    %v7031 = vadd.f32 0.0, %v7030
    %v7032 = vpop.f32.mrb[0].mxu0
    %7033 = vmatprep.mubr.bf16.mxu0 0
    %7034 = vmatmul.mubr.bf16.gmra.mrb[0].mxu0 %v6918
    %v7035 = vpop.f32.mrb[0].mxu0
    %v7036 = vadd.f32 0.0, %v7035
    %v7037 = vpop.f32.mrb[0].mxu0
    %v7038 = vpop.f32.mrb[0].mxu0
    %v7039 = vadd.f32 0.0, %v7038
    %v7040 = vpop.f32.mrb[0].mxu0
    %7041 = vmatprep.mubr.bf16.mxu0 0
    %7042 = vmatmul.mubr.bf16.gmra.mrb[0].mxu0 %v6919
    %v7043 = vpop.f32.mrb[0].mxu0
    %v7044 = vadd.f32 0.0, %v7043
    %v7045 = vpop.f32.mrb[0].mxu0
    %v7046 = vpop.f32.mrb[0].mxu0
    %v7047 = vadd.f32 0.0, %v7046
    %v7048 = vpop.f32.mrb[0].mxu0
    %7049 = vmatprep.mubr.bf16.mxu0 0
    %7050 = vmatmul.mubr.bf16.gmra.mrb[0].mxu0 %v6920
    %v7051 = vpop.f32.mrb[0].mxu0
    %v7052 = vadd.f32 0.0, %v7051
    %v7053 = vpop.f32.mrb[0].mxu0
    %v7054 = vpop.f32.mrb[0].mxu0
    %v7055 = vadd.f32 0.0, %v7054
    %v7056 = vpop.f32.mrb[0].mxu0
    %7057 = vmatprep.mubr.bf16.mxu0 0
    %7058 = vmatmul.mubr.bf16.gmra.mrb[0].mxu0 %v6921
    %v7059 = vpop.f32.mrb[0].mxu0
    %v7060 = vadd.f32 0.0, %v7059
    %v7061 = vpop.f32.mrb[0].mxu0
    %v7062 = vpop.f32.mrb[0].mxu0
    %v7063 = vadd.f32 0.0, %v7062
    %v7064 = vpop.f32.mrb[0].mxu0
    %7065 = vmatprep.mubr.bf16.mxu0 0
    %7066 = vmatmul.mubr.bf16.gmra.mrb[0].mxu0 %v6922
    %v7067 = vpop.f32.mrb[0].mxu0
    %v7068 = vadd.f32 0.0, %v7067
    %v7069 = vpop.f32.mrb[0].mxu0
    %v7070 = vpop.f32.mrb[0].mxu0
    %v7071 = vadd.f32 0.0, %v7070
    %v7072 = vpop.f32.mrb[0].mxu0
    %7073 = vmatprep.mubr.bf16.mxu0 0
    %7074 = vmatmul.mubr.bf16.gmra.mrb[0].mxu0 %v6923
    %v7075 = vpop.f32.mrb[0].mxu0
    %v7076 = vadd.f32 0.0, %v7075
    %v7077 = vpop.f32.mrb[0].mxu0
    %v7078 = vpop.f32.mrb[0].mxu0
    %v7079 = vadd.f32 0.0, %v7078
    %v7080 = vpop.f32.mrb[0].mxu0
    %7081 = vmatprep.mubr.bf16.mxu0 0
    %7082 = vmatmul.mubr.bf16.gmra.mrb[0].mxu0 %v6924
    %v7083 = vpop.f32.mrb[0].mxu0
    %v7084 = vadd.f32 0.0, %v7083
    %v7085 = vpop.f32.mrb[0].mxu0
    %v7086 = vpop.f32.mrb[0].mxu0
    %v7087 = vadd.f32 0.0, %v7086
    %v7088 = vpop.f32.mrb[0].mxu0
    %7089 = vmatprep.mubr.bf16.mxu0 0
    %7090 = vmatmul.mubr.bf16.gmra.mrb[0].mxu0 %v6925
    %v7091 = vpop.f32.mrb[0].mxu0
    %v7092 = vadd.f32 0.0, %v7091
    %v7093 = vpop.f32.mrb[0].mxu0
    %v7094 = vpop.f32.mrb[0].mxu0
    %v7095 = vadd.f32 0.0, %v7094
    %v7096 = vpop.f32.mrb[0].mxu0
    %7097 = vmatprep.mubr.bf16.mxu0 0
    %7098 = vmatmul.mubr.bf16.gmra.mrb[0].mxu0 %v6926
    %v7099 = vpop.f32.mrb[0].mxu0
    %v7100 = vadd.f32 0.0, %v7099
    %v7101 = vpop.f32.mrb[0].mxu0
    %v7102 = vpop.f32.mrb[0].mxu0
    %v7103 = vadd.f32 0.0, %v7102
    %v7104 = vpop.f32.mrb[0].mxu0
    %7105 = vmatprep.mubr.bf16.mxu0 0
    %7106 = vmatmul.mubr.bf16.gmra.mrb[0].mxu0 %v6927
    %v7107 = vpop.f32.mrb[0].mxu0
    %v7108 = vadd.f32 0.0, %v7107
    %v7109 = vpop.f32.mrb[0].mxu0
    %v7110 = vpop.f32.mrb[0].mxu0
    %v7111 = vadd.f32 0.0, %v7110
    %v7112 = vpop.f32.mrb[0].mxu0
    %7113 = vmatprep.mubr.bf16.mxu0 0
    %7114 = vmatmul.mubr.bf16.gmra.mrb[0].mxu0 %v6928
    %v7115 = vpop.f32.mrb[0].mxu0
    %v7116 = vadd.f32 0.0, %v7115
    %v7117 = vpop.f32.mrb[0].mxu0
    %v7118 = vpop.f32.mrb[0].mxu0
    %v7119 = vadd.f32 0.0, %v7118
    %v7120 = vpop.f32.mrb[0].mxu0
    %7121 = vmatprep.mubr.bf16.mxu0 0
    %7122 = vmatmul.mubr.bf16.gmra.mrb[0].mxu0 %v6929
    %v7123 = vpop.f32.mrb[0].mxu0
    %v7124 = vadd.f32 0.0, %v7123
    %v7125 = vpop.f32.mrb[0].mxu0
    %v7126 = vpop.f32.mrb[0].mxu0
    %v7127 = vadd.f32 0.0, %v7126
    %v7128 = vpop.f32.mrb[0].mxu0
    %7129 = vmatprep.mubr.bf16.mxu0 0
    %7130 = vmatmul.mubr.bf16.gmra.mrb[0].mxu0 %v6930
    %v7131 = vpop.f32.mrb[0].mxu0
    %v7132 = vadd.f32 0.0, %v7131
    %v7133 = vpop.f32.mrb[0].mxu0
    %v7134 = vpop.f32.mrb[0].mxu0
    %v7135 = vadd.f32 0.0, %v7134
    %v7136 = vpop.f32.mrb[0].mxu0
    %7137 = vmatprep.mubr.bf16.mxu0 0
    %7138 = vmatmul.mubr.bf16.gmra.mrb[0].mxu0 %v6931
    %v7139 = vpop.f32.mrb[0].mxu0
    %v7140 = vadd.f32 0.0, %v7139
    %v7141 = vpop.f32.mrb[0].mxu0
    %v7142 = vpop.f32.mrb[0].mxu0
    %v7143 = vadd.f32 0.0, %v7142
    %v7144 = vpop.f32.mrb[0].mxu0
    %7145 = vmatprep.mubr.bf16.mxu0 0
    %7146 = vmatmul.mubr.bf16.gmra.mrb[0].mxu0 %v6932
    %v7147 = vpop.f32.mrb[0].mxu0
    %v7148 = vadd.f32 0.0, %v7147
    %v7149 = vpop.f32.mrb[0].mxu0
    %v7150 = vpop.f32.mrb[0].mxu0
    %v7151 = vadd.f32 0.0, %v7150
    %v7152 = vpop.f32.mrb[0].mxu0
    %7153 = vmatprep.mubr.bf16.mxu0 0
    %7154 = vmatmul.mubr.bf16.gmra.mrb[0].mxu0 %v6933
    %v7155 = vpop.f32.mrb[0].mxu0
    %v7156 = vadd.f32 0.0, %v7155
    %v7157 = vpop.f32.mrb[0].mxu0
    %v7158 = vpop.f32.mrb[0].mxu0
    %v7159 = vadd.f32 0.0, %v7158
    %v7160 = vpop.f32.mrb[0].mxu0
    %7161 = vmatprep.mubr.bf16.mxu0 0
    %7162 = vmatmul.mubr.bf16.gmra.mrb[0].mxu0 %v6934
    %v7163 = vpop.f32.mrb[0].mxu0
    %v7164 = vadd.f32 0.0, %v7163
    %v7165 = vpop.f32.mrb[0].mxu0
    %v7166 = vpop.f32.mrb[0].mxu0
    %v7167 = vadd.f32 0.0, %v7166
    %v7168 = vpop.f32.mrb[0].mxu0
    %7169 = vmatprep.mubr.bf16.mxu0 0
    %7170 = vmatmul.mubr.bf16.gmra.mrb[0].mxu0 %v6935
    %v7171 = vpop.f32.mrb[0].mxu0
    %v7172 = vadd.f32 0.0, %v7171
    %v7173 = vpop.f32.mrb[0].mxu0
    %v7174 = vpop.f32.mrb[0].mxu0
    %v7175 = vadd.f32 0.0, %v7174
    %v7176 = vpop.f32.mrb[0].mxu0
    %7177 = vmatprep.mubr.bf16.mxu0 0
    %7178 = vmatmul.mubr.bf16.gmra.mrb[0].mxu0 %v6936
    %v7179 = vpop.f32.mrb[0].mxu0
    %v7180 = vadd.f32 0.0, %v7179
    %v7181 = vpop.f32.mrb[0].mxu0
    %v7182 = vpop.f32.mrb[0].mxu0
    %v7183 = vadd.f32 0.0, %v7182
    %v7184 = vpop.f32.mrb[0].mxu0
    %7185 = vmatprep.mubr.bf16.mxu0 0
    %7186 = vmatmul.mubr.bf16.gmra.mrb[0].mxu0 %v6937
    %v7187 = vpop.f32.mrb[0].mxu0
    %v7188 = vadd.f32 0.0, %v7187
    %v7189 = vpop.f32.mrb[0].mxu0
    %v7190 = vpop.f32.mrb[0].mxu0
    %v7191 = vadd.f32 0.0, %v7190
    %v7192 = vpop.f32.mrb[0].mxu0
    %7193 = vmatprep.mubr.bf16.mxu0 0
    %7194 = vmatmul.mubr.bf16.gmra.mrb[0].mxu0 %v6938
    %v7195 = vpop.f32.mrb[0].mxu0
    %v7196 = vadd.f32 0.0, %v7195
    %v7197 = vpop.f32.mrb[0].mxu0
    %v7198 = vpop.f32.mrb[0].mxu0
    %v7199 = vadd.f32 0.0, %v7198
    %v7200 = vpop.f32.mrb[0].mxu0
    %7201 = vmatprep.mubr.bf16.mxu0 0
    %7202 = vmatmul.mubr.bf16.gmra.mrb[0].mxu0 %v6939
    %v7203 = vpop.f32.mrb[0].mxu0
    %v7204 = vadd.f32 0.0, %v7203
    %v7205 = vpop.f32.mrb[0].mxu0
    %v7206 = vpop.f32.mrb[0].mxu0
    %v7207 = vadd.f32 0.0, %v7206
    %v7208 = vpop.f32.mrb[0].mxu0
    %7209 = vmatprep.mubr.bf16.mxu0 0
    %7210 = vmatmul.mubr.bf16.gmra.mrb[0].mxu0 %v6940
    %v7211 = vpop.f32.mrb[0].mxu0
    %v7212 = vadd.f32 0.0, %v7211
    %v7213 = vpop.f32.mrb[0].mxu0
    %v7214 = vpop.f32.mrb[0].mxu0
    %v7215 = vadd.f32 0.0, %v7214
    %v7216 = vpop.f32.mrb[0].mxu0
    %7217 = vmatprep.mubr.bf16.mxu0 0
    %7218 = vmatmul.mubr.bf16.gmra.mrb[0].mxu0 %v6941
    %v7219 = vpop.f32.mrb[0].mxu0
    %v7220 = vadd.f32 0.0, %v7219
    %v7221 = vpop.f32.mrb[0].mxu0
    %v7222 = vpop.f32.mrb[0].mxu0
    %v7223 = vadd.f32 0.0, %v7222
    %v7224 = vpop.f32.mrb[0].mxu0
    %7225 = vmatprep.mubr.bf16.mxu0 0
    %7226 = vmatmul.mubr.bf16.gmra.mrb[0].mxu0 %v6942
    %v7227 = vpop.f32.mrb[0].mxu0
    %v7228 = vadd.f32 0.0, %v7227
    %v7229 = vpop.f32.mrb[0].mxu0
    %v7230 = vpop.f32.mrb[0].mxu0
    %v7231 = vadd.f32 0.0, %v7230
    %v7232 = vpop.f32.mrb[0].mxu0
    %7233 = vmatprep.mubr.bf16.mxu0 0
    %7234 = vmatmul.mubr.bf16.gmra.mrb[0].mxu0 %v6943
    %v7235 = vpop.f32.mrb[0].mxu0
    %v7236 = vadd.f32 0.0, %v7235
    %v7237 = vpop.f32.mrb[0].mxu0
    %v7238 = vpop.f32.mrb[0].mxu0
    %v7239 = vadd.f32 0.0, %v7238
    %v7240 = vpop.f32.mrb[0].mxu0
    %7241 = vdwg.mxu0
    %v7242 = vadd.f32 %v6784, %v6988
    %v7243 = vadd.f32 %v6785, %v6991
    %v7244 = vadd.f32 %v6786, %v6996
    %v7245 = vadd.f32 %v6787, %v6999
    %v7246 = vadd.f32 %v6788, %v7004
    %v7247 = vadd.f32 %v6789, %v7007
    %v7248 = vadd.f32 %v6790, %v7012
    %v7249 = vadd.f32 %v6791, %v7015
    %v7250 = vadd.f32 %v6792, %v7020
    %v7251 = vadd.f32 %v6793, %v7023
    %v7252 = vadd.f32 %v6794, %v7028
    %v7253 = vadd.f32 %v6795, %v7031
    %v7254 = vadd.f32 %v6796, %v7036
    %v7255 = vadd.f32 %v6797, %v7039
    %v7256 = vadd.f32 %v6798, %v7044
    %v7257 = vadd.f32 %v6799, %v7047
    %v7258 = vadd.f32 %v6800, %v7052
    %v7259 = vadd.f32 %v6801, %v7055
    %v7260 = vadd.f32 %v6802, %v7060
    %v7261 = vadd.f32 %v6803, %v7063
    %v7262 = vadd.f32 %v6804, %v7068
    %v7263 = vadd.f32 %v6805, %v7071
    %v7264 = vadd.f32 %v6806, %v7076
    %v7265 = vadd.f32 %v6807, %v7079
    %v7266 = vadd.f32 %v6808, %v7084
    %v7267 = vadd.f32 %v6809, %v7087
    %v7268 = vadd.f32 %v6810, %v7092
    %v7269 = vadd.f32 %v6811, %v7095
    %v7270 = vadd.f32 %v6812, %v7100
    %v7271 = vadd.f32 %v6813, %v7103
    %v7272 = vadd.f32 %v6814, %v7108
    %v7273 = vadd.f32 %v6815, %v7111
    %v7274 = vadd.f32 %v6816, %v7116
    %v7275 = vadd.f32 %v6817, %v7119
    %v7276 = vadd.f32 %v6818, %v7124
    %v7277 = vadd.f32 %v6819, %v7127
    %v7278 = vadd.f32 %v6820, %v7132
    %v7279 = vadd.f32 %v6821, %v7135
    %v7280 = vadd.f32 %v6822, %v7140
    %v7281 = vadd.f32 %v6823, %v7143
    %v7282 = vadd.f32 %v6824, %v7148
    %v7283 = vadd.f32 %v6825, %v7151
    %v7284 = vadd.f32 %v6826, %v7156
    %v7285 = vadd.f32 %v6827, %v7159
    %v7286 = vadd.f32 %v6828, %v7164
    %v7287 = vadd.f32 %v6829, %v7167
    %v7288 = vadd.f32 %v6830, %v7172
    %v7289 = vadd.f32 %v6831, %v7175
    %v7290 = vadd.f32 %v6832, %v7180
    %v7291 = vadd.f32 %v6833, %v7183
    %v7292 = vadd.f32 %v6834, %v7188
    %v7293 = vadd.f32 %v6835, %v7191
    %v7294 = vadd.f32 %v6836, %v7196
    %v7295 = vadd.f32 %v6837, %v7199
    %v7296 = vadd.f32 %v6838, %v7204
    %v7297 = vadd.f32 %v6839, %v7207
    %v7298 = vadd.f32 %v6840, %v7212
    %v7299 = vadd.f32 %v6841, %v7215
    %v7300 = vadd.f32 %v6842, %v7220
    %v7301 = vadd.f32 %v6843, %v7223
    %v7302 = vadd.f32 %v6844, %v7228
    %v7303 = vadd.f32 %v6845, %v7231
    %v7304 = vadd.f32 %v6846, %v7236
    %v7305 = vadd.f32 %v6847, %v7239
    %v7306 = vld [vmem:[%s472 + $0x2] sm:$0xff]
    %v7307 = vld [vmem:[%s472 + $0xa] sm:$0xff]
    %v7308 = vld [vmem:[%s472 + $0x1a] sm:$0xff]
    %v7309 = vld [vmem:[%s472 + $0x22] sm:$0xff]
    %v7310 = vld [vmem:[%s472 + $0x32] sm:$0xff]
    %v7311 = vld [vmem:[%s472 + $0x3a] sm:$0xff]
    %v7312 = vld [vmem:[%s472 + $0x4a] sm:$0xff]
    %v7313 = vld [vmem:[%s472 + $0x52] sm:$0xff]
    %v7314 = vld [vmem:[%s472 + $0x62] sm:$0xff]
    %v7315 = vld [vmem:[%s472 + $0x6a] sm:$0xff]
    %v7316 = vld [vmem:[%s472 + $0x7a] sm:$0xff]
    %v7317 = vld [vmem:[%s472 + $0x82] sm:$0xff]
    %v7318 = vld [vmem:[%s472 + $0x92] sm:$0xff]
    %v7319 = vld [vmem:[%s472 + $0x9a] sm:$0xff]
    %v7320 = vld [vmem:[%s472 + $0xaa] sm:$0xff]
    %v7321 = vld [vmem:[%s472 + $0xb2] sm:$0xff]
    %v7322 = vld [vmem:[%s472 + $0xc2] sm:$0xff]
    %v7323 = vld [vmem:[%s472 + $0xca] sm:$0xff]
    %v7324 = vld [vmem:[%s472 + $0xda] sm:$0xff]
    %v7325 = vld [vmem:[%s472 + $0xe2] sm:$0xff]
    %v7326 = vld [vmem:[%s472 + $0xf2] sm:$0xff]
    %v7327 = vld [vmem:[%s472 + $0xfa] sm:$0xff]
    %v7328 = vld [vmem:[%s472 + $0x10a] sm:$0xff]
    %v7329 = vld [vmem:[%s472 + $0x112] sm:$0xff]
    %v7330 = vld [vmem:[%s472 + $0x122] sm:$0xff]
    %v7331 = vld [vmem:[%s472 + $0x12a] sm:$0xff]
    %v7332 = vld [vmem:[%s472 + $0x13a] sm:$0xff]
    %v7333 = vld [vmem:[%s472 + $0x142] sm:$0xff]
    %v7334 = vld [vmem:[%s472 + $0x152] sm:$0xff]
    %v7335 = vld [vmem:[%s472 + $0x15a] sm:$0xff]
    %v7336 = vld [vmem:[%s472 + $0x16a] sm:$0xff]
    %v7337 = vld [vmem:[%s472 + $0x172] sm:$0xff]
    %v7338 = vld [vmem:[%s472 + $0x1b2] sm:$0xff]
    %v7339 = vld [vmem:[%s472 + $0x1ba] sm:$0xff]
    %v7340 = vld [vmem:[%s472 + $0x1ca] sm:$0xff]
    %v7341 = vld [vmem:[%s472 + $0x1d2] sm:$0xff]
    %v7342 = vld [vmem:[%s472 + $0x1e2] sm:$0xff]
    %v7343 = vld [vmem:[%s472 + $0x1ea] sm:$0xff]
    %v7344 = vld [vmem:[%s472 + $0x1fa] sm:$0xff]
    %v7345 = vld [vmem:[%s472 + $0x202] sm:$0xff]
    %v7346 = vld [vmem:[%s472 + $0x212] sm:$0xff]
    %v7347 = vld [vmem:[%s472 + $0x21a] sm:$0xff]
    %v7348 = vld [vmem:[%s472 + $0x22a] sm:$0xff]
    %v7349 = vld [vmem:[%s472 + $0x232] sm:$0xff]
    %v7350 = vld [vmem:[%s472 + $0x242] sm:$0xff]
    %v7351 = vld [vmem:[%s472 + $0x24a] sm:$0xff]
    %v7352 = vld [vmem:[%s472 + $0x25a] sm:$0xff]
    %v7353 = vld [vmem:[%s472 + $0x262] sm:$0xff]
    %v7354 = vld [vmem:[%s472 + $0x272] sm:$0xff]
    %v7355 = vld [vmem:[%s472 + $0x27a] sm:$0xff]
    %v7356 = vld [vmem:[%s472 + $0x28a] sm:$0xff]
    %v7357 = vld [vmem:[%s472 + $0x292] sm:$0xff]
    %v7358 = vld [vmem:[%s472 + $0x2a2] sm:$0xff]
    %v7359 = vld [vmem:[%s472 + $0x2aa] sm:$0xff]
    %v7360 = vld [vmem:[%s472 + $0x2ba] sm:$0xff]
    %v7361 = vld [vmem:[%s472 + $0x2c2] sm:$0xff]
    %v7362 = vld [vmem:[%s472 + $0x2d2] sm:$0xff]
    %v7363 = vld [vmem:[%s472 + $0x2da] sm:$0xff]
    %v7364 = vld [vmem:[%s472 + $0x2ea] sm:$0xff]
    %v7365 = vld [vmem:[%s472 + $0x2f2] sm:$0xff]
    %v7366 = vld [vmem:[%s472 + $0x302] sm:$0xff]
    %v7367 = vld [vmem:[%s472 + $0x30a] sm:$0xff]
    %v7368 = vld [vmem:[%s472 + $0x31a] sm:$0xff]
    %v7369 = vld [vmem:[%s472 + $0x322] sm:$0xff]
    %v7370 = vpack.c.bf16 %v7307, %v7306
    %v7371 = vpack.c.bf16 %v7309, %v7308
    %v7372 = vpack.c.bf16 %v7311, %v7310
    %v7373 = vpack.c.bf16 %v7313, %v7312
    %v7374 = vpack.c.bf16 %v7315, %v7314
    %v7375 = vpack.c.bf16 %v7317, %v7316
    %v7376 = vpack.c.bf16 %v7319, %v7318
    %v7377 = vpack.c.bf16 %v7321, %v7320
    %v7378 = vpack.c.bf16 %v7323, %v7322
    %v7379 = vpack.c.bf16 %v7325, %v7324
    %v7380 = vpack.c.bf16 %v7327, %v7326
    %v7381 = vpack.c.bf16 %v7329, %v7328
    %v7382 = vpack.c.bf16 %v7331, %v7330
    %v7383 = vpack.c.bf16 %v7333, %v7332
    %v7384 = vpack.c.bf16 %v7335, %v7334
    %v7385 = vpack.c.bf16 %v7337, %v7336
    %v7386 = vpack.c.bf16 %v7339, %v7338
    %v7387 = vpack.c.bf16 %v7341, %v7340
    %v7388 = vpack.c.bf16 %v7343, %v7342
    %v7389 = vpack.c.bf16 %v7345, %v7344
    %v7390 = vpack.c.bf16 %v7347, %v7346
    %v7391 = vpack.c.bf16 %v7349, %v7348
    %v7392 = vpack.c.bf16 %v7351, %v7350
    %v7393 = vpack.c.bf16 %v7353, %v7352
    %v7394 = vpack.c.bf16 %v7355, %v7354
    %v7395 = vpack.c.bf16 %v7357, %v7356
    %v7396 = vpack.c.bf16 %v7359, %v7358
    %v7397 = vpack.c.bf16 %v7361, %v7360
    %v7398 = vpack.c.bf16 %v7363, %v7362
    %v7399 = vpack.c.bf16 %v7365, %v7364
    %v7400 = vpack.c.bf16 %v7367, %v7366
    %v7401 = vpack.c.bf16 %v7369, %v7368
    %s7402 = scalar_lea.vmem [#allocation4], 320
    %v7403 = vld [vmem:[%s7402] sm:$0xff]
    %v7404 = vld [vmem:[%s7402 + $0x8] sm:$0xff]
    %v7405 = vld [vmem:[%s7402 + $0x10] sm:$0xff]
    %v7406 = vld [vmem:[%s7402 + $0x18] sm:$0xff]
    %v7407 = vld [vmem:[%s7402 + $0x20] sm:$0xff]
    %v7408 = vld [vmem:[%s7402 + $0x28] sm:$0xff]
    %v7409 = vld [vmem:[%s7402 + $0x30] sm:$0xff]
    %v7410 = vld [vmem:[%s7402 + $0x38] sm:$0xff]
    %7411 = vmatprep.subr.bf16.mxu0 0
    %7412 = vmatpush1.bf16.msra.mxu0 %v7403
    %7413 = vmatprep.subr.bf16.mxu0 0
    %7414 = vmatpush1.bf16.msra.mxu0 %v7404
    %7415 = vmatprep.subr.bf16.mxu0 0
    %7416 = vmatpush1.bf16.msra.mxu0 %v7405
    %7417 = vmatprep.subr.bf16.mxu0 0
    %7418 = vmatpush1.bf16.msra.mxu0 %v7406
    %7419 = vmatprep.subr.bf16.mxu0 0
    %7420 = vmatpush1.bf16.msra.mxu0 %v7407
    %7421 = vmatprep.subr.bf16.mxu0 0
    %7422 = vmatpush1.bf16.msra.mxu0 %v7408
    %7423 = vmatprep.subr.bf16.mxu0 0
    %7424 = vmatpush1.bf16.msra.mxu0 %v7409
    %7425 = vmatprep.subr.bf16.mxu0 0
    %7426 = vmatpush1.bf16.msra.mxu0 %v7410
    %7427 = vmatprep.subr.bf16.mxu0 0
    %7428 = vmatpush1.bf16.msra.mxu0 0
    %7429 = vmatprep.subr.bf16.mxu0 0
    %7430 = vmatpush1.bf16.msra.mxu0 0
    %7431 = vmatprep.subr.bf16.mxu0 0
    %7432 = vmatpush1.bf16.msra.mxu0 0
    %7433 = vmatprep.subr.bf16.mxu0 0
    %7434 = vmatpush1.bf16.msra.mxu0 0
    %7435 = vmatprep.subr.bf16.mxu0 0
    %7436 = vmatpush1.bf16.msra.mxu0 0
    %7437 = vmatprep.subr.bf16.mxu0 0
    %7438 = vmatpush1.bf16.msra.mxu0 0
    %7439 = vmatprep.subr.bf16.mxu0 0
    %7440 = vmatpush1.bf16.msra.mxu0 0
    %7441 = vmatprep.subr.bf16.mxu0 0
    %7442 = vmatpush1.bf16.msra.mxu0 0
    %7443 = vmatprep.mubr.bf16.mxu0 0
    %7444 = vmatmul.mubr.bf16.gmra.mrb[0].mxu0 %v7370
    %v7445 = vpop.f32.mrb[0].mxu0
    %v7446 = vadd.f32 0.0, %v7445
    %v7447 = vpop.f32.mrb[0].mxu0
    %v7448 = vpop.f32.mrb[0].mxu0
    %v7449 = vadd.f32 0.0, %v7448
    %v7450 = vpop.f32.mrb[0].mxu0
    %7451 = vmatprep.mubr.bf16.mxu0 0
    %7452 = vmatmul.mubr.bf16.gmra.mrb[0].mxu0 %v7371
    %v7453 = vpop.f32.mrb[0].mxu0
    %v7454 = vadd.f32 0.0, %v7453
    %v7455 = vpop.f32.mrb[0].mxu0
    %v7456 = vpop.f32.mrb[0].mxu0
    %v7457 = vadd.f32 0.0, %v7456
    %v7458 = vpop.f32.mrb[0].mxu0
    %7459 = vmatprep.mubr.bf16.mxu0 0
    %7460 = vmatmul.mubr.bf16.gmra.mrb[0].mxu0 %v7372
    %v7461 = vpop.f32.mrb[0].mxu0
    %v7462 = vadd.f32 0.0, %v7461
    %v7463 = vpop.f32.mrb[0].mxu0
    %v7464 = vpop.f32.mrb[0].mxu0
    %v7465 = vadd.f32 0.0, %v7464
    %v7466 = vpop.f32.mrb[0].mxu0
    %7467 = vmatprep.mubr.bf16.mxu0 0
    %7468 = vmatmul.mubr.bf16.gmra.mrb[0].mxu0 %v7373
    %v7469 = vpop.f32.mrb[0].mxu0
    %v7470 = vadd.f32 0.0, %v7469
    %v7471 = vpop.f32.mrb[0].mxu0
    %v7472 = vpop.f32.mrb[0].mxu0
    %v7473 = vadd.f32 0.0, %v7472
    %v7474 = vpop.f32.mrb[0].mxu0
    %7475 = vmatprep.mubr.bf16.mxu0 0
    %7476 = vmatmul.mubr.bf16.gmra.mrb[0].mxu0 %v7374
    %v7477 = vpop.f32.mrb[0].mxu0
    %v7478 = vadd.f32 0.0, %v7477
    %v7479 = vpop.f32.mrb[0].mxu0
    %v7480 = vpop.f32.mrb[0].mxu0
    %v7481 = vadd.f32 0.0, %v7480
    %v7482 = vpop.f32.mrb[0].mxu0
    %7483 = vmatprep.mubr.bf16.mxu0 0
    %7484 = vmatmul.mubr.bf16.gmra.mrb[0].mxu0 %v7375
    %v7485 = vpop.f32.mrb[0].mxu0
    %v7486 = vadd.f32 0.0, %v7485
    %v7487 = vpop.f32.mrb[0].mxu0
    %v7488 = vpop.f32.mrb[0].mxu0
    %v7489 = vadd.f32 0.0, %v7488
    %v7490 = vpop.f32.mrb[0].mxu0
    %7491 = vmatprep.mubr.bf16.mxu0 0
    %7492 = vmatmul.mubr.bf16.gmra.mrb[0].mxu0 %v7376
    %v7493 = vpop.f32.mrb[0].mxu0
    %v7494 = vadd.f32 0.0, %v7493
    %v7495 = vpop.f32.mrb[0].mxu0
    %v7496 = vpop.f32.mrb[0].mxu0
    %v7497 = vadd.f32 0.0, %v7496
    %v7498 = vpop.f32.mrb[0].mxu0
    %7499 = vmatprep.mubr.bf16.mxu0 0
    %7500 = vmatmul.mubr.bf16.gmra.mrb[0].mxu0 %v7377
    %v7501 = vpop.f32.mrb[0].mxu0
    %v7502 = vadd.f32 0.0, %v7501
    %v7503 = vpop.f32.mrb[0].mxu0
    %v7504 = vpop.f32.mrb[0].mxu0
    %v7505 = vadd.f32 0.0, %v7504
    %v7506 = vpop.f32.mrb[0].mxu0
    %7507 = vmatprep.mubr.bf16.mxu0 0
    %7508 = vmatmul.mubr.bf16.gmra.mrb[0].mxu0 %v7378
    %v7509 = vpop.f32.mrb[0].mxu0
    %v7510 = vadd.f32 0.0, %v7509
    %v7511 = vpop.f32.mrb[0].mxu0
    %v7512 = vpop.f32.mrb[0].mxu0
    %v7513 = vadd.f32 0.0, %v7512
    %v7514 = vpop.f32.mrb[0].mxu0
    %7515 = vmatprep.mubr.bf16.mxu0 0
    %7516 = vmatmul.mubr.bf16.gmra.mrb[0].mxu0 %v7379
    %v7517 = vpop.f32.mrb[0].mxu0
    %v7518 = vadd.f32 0.0, %v7517
    %v7519 = vpop.f32.mrb[0].mxu0
    %v7520 = vpop.f32.mrb[0].mxu0
    %v7521 = vadd.f32 0.0, %v7520
    %v7522 = vpop.f32.mrb[0].mxu0
    %7523 = vmatprep.mubr.bf16.mxu0 0
    %7524 = vmatmul.mubr.bf16.gmra.mrb[0].mxu0 %v7380
    %v7525 = vpop.f32.mrb[0].mxu0
    %v7526 = vadd.f32 0.0, %v7525
    %v7527 = vpop.f32.mrb[0].mxu0
    %v7528 = vpop.f32.mrb[0].mxu0
    %v7529 = vadd.f32 0.0, %v7528
    %v7530 = vpop.f32.mrb[0].mxu0
    %7531 = vmatprep.mubr.bf16.mxu0 0
    %7532 = vmatmul.mubr.bf16.gmra.mrb[0].mxu0 %v7381
    %v7533 = vpop.f32.mrb[0].mxu0
    %v7534 = vadd.f32 0.0, %v7533
    %v7535 = vpop.f32.mrb[0].mxu0
    %v7536 = vpop.f32.mrb[0].mxu0
    %v7537 = vadd.f32 0.0, %v7536
    %v7538 = vpop.f32.mrb[0].mxu0
    %7539 = vmatprep.mubr.bf16.mxu0 0
    %7540 = vmatmul.mubr.bf16.gmra.mrb[0].mxu0 %v7382
    %v7541 = vpop.f32.mrb[0].mxu0
    %v7542 = vadd.f32 0.0, %v7541
    %v7543 = vpop.f32.mrb[0].mxu0
    %v7544 = vpop.f32.mrb[0].mxu0
    %v7545 = vadd.f32 0.0, %v7544
    %v7546 = vpop.f32.mrb[0].mxu0
    %7547 = vmatprep.mubr.bf16.mxu0 0
    %7548 = vmatmul.mubr.bf16.gmra.mrb[0].mxu0 %v7383
    %v7549 = vpop.f32.mrb[0].mxu0
    %v7550 = vadd.f32 0.0, %v7549
    %v7551 = vpop.f32.mrb[0].mxu0
    %v7552 = vpop.f32.mrb[0].mxu0
    %v7553 = vadd.f32 0.0, %v7552
    %v7554 = vpop.f32.mrb[0].mxu0
    %7555 = vmatprep.mubr.bf16.mxu0 0
    %7556 = vmatmul.mubr.bf16.gmra.mrb[0].mxu0 %v7384
    %v7557 = vpop.f32.mrb[0].mxu0
    %v7558 = vadd.f32 0.0, %v7557
    %v7559 = vpop.f32.mrb[0].mxu0
    %v7560 = vpop.f32.mrb[0].mxu0
    %v7561 = vadd.f32 0.0, %v7560
    %v7562 = vpop.f32.mrb[0].mxu0
    %7563 = vmatprep.mubr.bf16.mxu0 0
    %7564 = vmatmul.mubr.bf16.gmra.mrb[0].mxu0 %v7385
    %v7565 = vpop.f32.mrb[0].mxu0
    %v7566 = vadd.f32 0.0, %v7565
    %v7567 = vpop.f32.mrb[0].mxu0
    %v7568 = vpop.f32.mrb[0].mxu0
    %v7569 = vadd.f32 0.0, %v7568
    %v7570 = vpop.f32.mrb[0].mxu0
    %7571 = vmatprep.mubr.bf16.mxu0 0
    %7572 = vmatmul.mubr.bf16.gmra.mrb[0].mxu0 %v7386
    %v7573 = vpop.f32.mrb[0].mxu0
    %v7574 = vadd.f32 0.0, %v7573
    %v7575 = vpop.f32.mrb[0].mxu0
    %v7576 = vpop.f32.mrb[0].mxu0
    %v7577 = vadd.f32 0.0, %v7576
    %v7578 = vpop.f32.mrb[0].mxu0
    %7579 = vmatprep.mubr.bf16.mxu0 0
    %7580 = vmatmul.mubr.bf16.gmra.mrb[0].mxu0 %v7387
    %v7581 = vpop.f32.mrb[0].mxu0
    %v7582 = vadd.f32 0.0, %v7581
    %v7583 = vpop.f32.mrb[0].mxu0
    %v7584 = vpop.f32.mrb[0].mxu0
    %v7585 = vadd.f32 0.0, %v7584
    %v7586 = vpop.f32.mrb[0].mxu0
    %7587 = vmatprep.mubr.bf16.mxu0 0
    %7588 = vmatmul.mubr.bf16.gmra.mrb[0].mxu0 %v7388
    %v7589 = vpop.f32.mrb[0].mxu0
    %v7590 = vadd.f32 0.0, %v7589
    %v7591 = vpop.f32.mrb[0].mxu0
    %v7592 = vpop.f32.mrb[0].mxu0
    %v7593 = vadd.f32 0.0, %v7592
    %v7594 = vpop.f32.mrb[0].mxu0
    %7595 = vmatprep.mubr.bf16.mxu0 0
    %7596 = vmatmul.mubr.bf16.gmra.mrb[0].mxu0 %v7389
    %v7597 = vpop.f32.mrb[0].mxu0
    %v7598 = vadd.f32 0.0, %v7597
    %v7599 = vpop.f32.mrb[0].mxu0
    %v7600 = vpop.f32.mrb[0].mxu0
    %v7601 = vadd.f32 0.0, %v7600
    %v7602 = vpop.f32.mrb[0].mxu0
    %7603 = vmatprep.mubr.bf16.mxu0 0
    %7604 = vmatmul.mubr.bf16.gmra.mrb[0].mxu0 %v7390
    %v7605 = vpop.f32.mrb[0].mxu0
    %v7606 = vadd.f32 0.0, %v7605
    %v7607 = vpop.f32.mrb[0].mxu0
    %v7608 = vpop.f32.mrb[0].mxu0
    %v7609 = vadd.f32 0.0, %v7608
    %v7610 = vpop.f32.mrb[0].mxu0
    %7611 = vmatprep.mubr.bf16.mxu0 0
    %7612 = vmatmul.mubr.bf16.gmra.mrb[0].mxu0 %v7391
    %v7613 = vpop.f32.mrb[0].mxu0
    %v7614 = vadd.f32 0.0, %v7613
    %v7615 = vpop.f32.mrb[0].mxu0
    %v7616 = vpop.f32.mrb[0].mxu0
    %v7617 = vadd.f32 0.0, %v7616
    %v7618 = vpop.f32.mrb[0].mxu0
    %7619 = vmatprep.mubr.bf16.mxu0 0
    %7620 = vmatmul.mubr.bf16.gmra.mrb[0].mxu0 %v7392
    %v7621 = vpop.f32.mrb[0].mxu0
    %v7622 = vadd.f32 0.0, %v7621
    %v7623 = vpop.f32.mrb[0].mxu0
    %v7624 = vpop.f32.mrb[0].mxu0
    %v7625 = vadd.f32 0.0, %v7624
    %v7626 = vpop.f32.mrb[0].mxu0
    %7627 = vmatprep.mubr.bf16.mxu0 0
    %7628 = vmatmul.mubr.bf16.gmra.mrb[0].mxu0 %v7393
    %v7629 = vpop.f32.mrb[0].mxu0
    %v7630 = vadd.f32 0.0, %v7629
    %v7631 = vpop.f32.mrb[0].mxu0
    %v7632 = vpop.f32.mrb[0].mxu0
    %v7633 = vadd.f32 0.0, %v7632
    %v7634 = vpop.f32.mrb[0].mxu0
    %7635 = vmatprep.mubr.bf16.mxu0 0
    %7636 = vmatmul.mubr.bf16.gmra.mrb[0].mxu0 %v7394
    %v7637 = vpop.f32.mrb[0].mxu0
    %v7638 = vadd.f32 0.0, %v7637
    %v7639 = vpop.f32.mrb[0].mxu0
    %v7640 = vpop.f32.mrb[0].mxu0
    %v7641 = vadd.f32 0.0, %v7640
    %v7642 = vpop.f32.mrb[0].mxu0
    %7643 = vmatprep.mubr.bf16.mxu0 0
    %7644 = vmatmul.mubr.bf16.gmra.mrb[0].mxu0 %v7395
    %v7645 = vpop.f32.mrb[0].mxu0
    %v7646 = vadd.f32 0.0, %v7645
    %v7647 = vpop.f32.mrb[0].mxu0
    %v7648 = vpop.f32.mrb[0].mxu0
    %v7649 = vadd.f32 0.0, %v7648
    %v7650 = vpop.f32.mrb[0].mxu0
    %7651 = vmatprep.mubr.bf16.mxu0 0
    %7652 = vmatmul.mubr.bf16.gmra.mrb[0].mxu0 %v7396
    %v7653 = vpop.f32.mrb[0].mxu0
    %v7654 = vadd.f32 0.0, %v7653
    %v7655 = vpop.f32.mrb[0].mxu0
    %v7656 = vpop.f32.mrb[0].mxu0
    %v7657 = vadd.f32 0.0, %v7656
    %v7658 = vpop.f32.mrb[0].mxu0
    %7659 = vmatprep.mubr.bf16.mxu0 0
    %7660 = vmatmul.mubr.bf16.gmra.mrb[0].mxu0 %v7397
    %v7661 = vpop.f32.mrb[0].mxu0
    %v7662 = vadd.f32 0.0, %v7661
    %v7663 = vpop.f32.mrb[0].mxu0
    %v7664 = vpop.f32.mrb[0].mxu0
    %v7665 = vadd.f32 0.0, %v7664
    %v7666 = vpop.f32.mrb[0].mxu0
    %7667 = vmatprep.mubr.bf16.mxu0 0
    %7668 = vmatmul.mubr.bf16.gmra.mrb[0].mxu0 %v7398
    %v7669 = vpop.f32.mrb[0].mxu0
    %v7670 = vadd.f32 0.0, %v7669
    %v7671 = vpop.f32.mrb[0].mxu0
    %v7672 = vpop.f32.mrb[0].mxu0
    %v7673 = vadd.f32 0.0, %v7672
    %v7674 = vpop.f32.mrb[0].mxu0
    %7675 = vmatprep.mubr.bf16.mxu0 0
    %7676 = vmatmul.mubr.bf16.gmra.mrb[0].mxu0 %v7399
    %v7677 = vpop.f32.mrb[0].mxu0
    %v7678 = vadd.f32 0.0, %v7677
    %v7679 = vpop.f32.mrb[0].mxu0
    %v7680 = vpop.f32.mrb[0].mxu0
    %v7681 = vadd.f32 0.0, %v7680
    %v7682 = vpop.f32.mrb[0].mxu0
    %7683 = vmatprep.mubr.bf16.mxu0 0
    %7684 = vmatmul.mubr.bf16.gmra.mrb[0].mxu0 %v7400
    %v7685 = vpop.f32.mrb[0].mxu0
    %v7686 = vadd.f32 0.0, %v7685
    %v7687 = vpop.f32.mrb[0].mxu0
    %v7688 = vpop.f32.mrb[0].mxu0
    %v7689 = vadd.f32 0.0, %v7688
    %v7690 = vpop.f32.mrb[0].mxu0
    %7691 = vmatprep.mubr.bf16.mxu0 0
    %7692 = vmatmul.mubr.bf16.gmra.mrb[0].mxu0 %v7401
    %v7693 = vpop.f32.mrb[0].mxu0
    %v7694 = vadd.f32 0.0, %v7693
    %v7695 = vpop.f32.mrb[0].mxu0
    %v7696 = vpop.f32.mrb[0].mxu0
    %v7697 = vadd.f32 0.0, %v7696
    %v7698 = vpop.f32.mrb[0].mxu0
    %7699 = vdwg.mxu0
    %v7700 = vadd.f32 %v7242, %v7446
    %v7701 = vadd.f32 %v7243, %v7449
    %v7702 = vadd.f32 %v7244, %v7454
    %v7703 = vadd.f32 %v7245, %v7457
    %v7704 = vadd.f32 %v7246, %v7462
    %v7705 = vadd.f32 %v7247, %v7465
    %v7706 = vadd.f32 %v7248, %v7470
    %v7707 = vadd.f32 %v7249, %v7473
    %v7708 = vadd.f32 %v7250, %v7478
    %v7709 = vadd.f32 %v7251, %v7481
    %v7710 = vadd.f32 %v7252, %v7486
    %v7711 = vadd.f32 %v7253, %v7489
    %v7712 = vadd.f32 %v7254, %v7494
    %v7713 = vadd.f32 %v7255, %v7497
    %v7714 = vadd.f32 %v7256, %v7502
    %v7715 = vadd.f32 %v7257, %v7505
    %v7716 = vadd.f32 %v7258, %v7510
    %v7717 = vadd.f32 %v7259, %v7513
    %v7718 = vadd.f32 %v7260, %v7518
    %v7719 = vadd.f32 %v7261, %v7521
    %v7720 = vadd.f32 %v7262, %v7526
    %v7721 = vadd.f32 %v7263, %v7529
    %v7722 = vadd.f32 %v7264, %v7534
    %v7723 = vadd.f32 %v7265, %v7537
    %v7724 = vadd.f32 %v7266, %v7542
    %v7725 = vadd.f32 %v7267, %v7545
    %v7726 = vadd.f32 %v7268, %v7550
    %v7727 = vadd.f32 %v7269, %v7553
    %v7728 = vadd.f32 %v7270, %v7558
    %v7729 = vadd.f32 %v7271, %v7561
    %v7730 = vadd.f32 %v7272, %v7566
    %v7731 = vadd.f32 %v7273, %v7569
    %v7732 = vadd.f32 %v7274, %v7574
    %v7733 = vadd.f32 %v7275, %v7577
    %v7734 = vadd.f32 %v7276, %v7582
    %v7735 = vadd.f32 %v7277, %v7585
    %v7736 = vadd.f32 %v7278, %v7590
    %v7737 = vadd.f32 %v7279, %v7593
    %v7738 = vadd.f32 %v7280, %v7598
    %v7739 = vadd.f32 %v7281, %v7601
    %v7740 = vadd.f32 %v7282, %v7606
    %v7741 = vadd.f32 %v7283, %v7609
    %v7742 = vadd.f32 %v7284, %v7614
    %v7743 = vadd.f32 %v7285, %v7617
    %v7744 = vadd.f32 %v7286, %v7622
    %v7745 = vadd.f32 %v7287, %v7625
    %v7746 = vadd.f32 %v7288, %v7630
    %v7747 = vadd.f32 %v7289, %v7633
    %v7748 = vadd.f32 %v7290, %v7638
    %v7749 = vadd.f32 %v7291, %v7641
    %v7750 = vadd.f32 %v7292, %v7646
    %v7751 = vadd.f32 %v7293, %v7649
    %v7752 = vadd.f32 %v7294, %v7654
    %v7753 = vadd.f32 %v7295, %v7657
    %v7754 = vadd.f32 %v7296, %v7662
    %v7755 = vadd.f32 %v7297, %v7665
    %v7756 = vadd.f32 %v7298, %v7670
    %v7757 = vadd.f32 %v7299, %v7673
    %v7758 = vadd.f32 %v7300, %v7678
    %v7759 = vadd.f32 %v7301, %v7681
    %v7760 = vadd.f32 %v7302, %v7686
    %v7761 = vadd.f32 %v7303, %v7689
    %v7762 = vadd.f32 %v7304, %v7694
    %v7763 = vadd.f32 %v7305, %v7697
    %v7764 = vld [vmem:[%s3161] sm:$0xff]
    %v7765 = vld [vmem:[%s3161 + $0x8] sm:$0xff]
    %v7766 = vld [vmem:[%s3161 + $0x18] sm:$0xff]
    %v7767 = vld [vmem:[%s3161 + $0x20] sm:$0xff]
    %v7768 = vld [vmem:[%s3161 + $0x30] sm:$0xff]
    %v7769 = vld [vmem:[%s3161 + $0x38] sm:$0xff]
    %v7770 = vld [vmem:[%s3161 + $0x48] sm:$0xff]
    %v7771 = vld [vmem:[%s3161 + $0x50] sm:$0xff]
    %v7772 = vld [vmem:[%s3161 + $0x60] sm:$0xff]
    %v7773 = vld [vmem:[%s3161 + $0x68] sm:$0xff]
    %v7774 = vld [vmem:[%s3161 + $0x78] sm:$0xff]
    %v7775 = vld [vmem:[%s3161 + $0x80] sm:$0xff]
    %v7776 = vld [vmem:[%s3161 + $0x90] sm:$0xff]
    %v7777 = vld [vmem:[%s3161 + $0x98] sm:$0xff]
    %v7778 = vld [vmem:[%s3161 + $0xa8] sm:$0xff]
    %v7779 = vld [vmem:[%s3161 + $0xb0] sm:$0xff]
    %v7780 = vld [vmem:[%s3161 + $0xc0] sm:$0xff]
    %v7781 = vld [vmem:[%s3161 + $0xc8] sm:$0xff]
    %v7782 = vld [vmem:[%s3161 + $0xd8] sm:$0xff]
    %v7783 = vld [vmem:[%s3161 + $0xe0] sm:$0xff]
    %v7784 = vld [vmem:[%s3161 + $0xf0] sm:$0xff]
    %v7785 = vld [vmem:[%s3161 + $0xf8] sm:$0xff]
    %v7786 = vld [vmem:[%s3161 + $0x108] sm:$0xff]
    %v7787 = vld [vmem:[%s3161 + $0x110] sm:$0xff]
    %v7788 = vld [vmem:[%s3161 + $0x120] sm:$0xff]
    %v7789 = vld [vmem:[%s3161 + $0x128] sm:$0xff]
    %v7790 = vld [vmem:[%s3161 + $0x138] sm:$0xff]
    %v7791 = vld [vmem:[%s3161 + $0x140] sm:$0xff]
    %v7792 = vld [vmem:[%s3161 + $0x150] sm:$0xff]
    %v7793 = vld [vmem:[%s3161 + $0x158] sm:$0xff]
    %v7794 = vld [vmem:[%s3161 + $0x168] sm:$0xff]
    %v7795 = vld [vmem:[%s3161 + $0x170] sm:$0xff]
    %v7796 = vld [vmem:[%s3161 + $0x1b0] sm:$0xff]
    %v7797 = vld [vmem:[%s3161 + $0x1b8] sm:$0xff]
    %v7798 = vld [vmem:[%s3161 + $0x1c8] sm:$0xff]
    %v7799 = vld [vmem:[%s3161 + $0x1d0] sm:$0xff]
    %v7800 = vld [vmem:[%s3161 + $0x1e0] sm:$0xff]
    %v7801 = vld [vmem:[%s3161 + $0x1e8] sm:$0xff]
    %v7802 = vld [vmem:[%s3161 + $0x1f8] sm:$0xff]
    %v7803 = vld [vmem:[%s3161 + $0x200] sm:$0xff]
    %v7804 = vld [vmem:[%s3161 + $0x210] sm:$0xff]
    %v7805 = vld [vmem:[%s3161 + $0x218] sm:$0xff]
    %v7806 = vld [vmem:[%s3161 + $0x228] sm:$0xff]
    %v7807 = vld [vmem:[%s3161 + $0x230] sm:$0xff]
    %v7808 = vld [vmem:[%s3161 + $0x240] sm:$0xff]
    %v7809 = vld [vmem:[%s3161 + $0x248] sm:$0xff]
    %v7810 = vld [vmem:[%s3161 + $0x258] sm:$0xff]
    %v7811 = vld [vmem:[%s3161 + $0x260] sm:$0xff]
    %v7812 = vld [vmem:[%s3161 + $0x270] sm:$0xff]
    %v7813 = vld [vmem:[%s3161 + $0x278] sm:$0xff]
    %v7814 = vld [vmem:[%s3161 + $0x288] sm:$0xff]
    %v7815 = vld [vmem:[%s3161 + $0x290] sm:$0xff]
    %v7816 = vld [vmem:[%s3161 + $0x2a0] sm:$0xff]
    %v7817 = vld [vmem:[%s3161 + $0x2a8] sm:$0xff]
    %v7818 = vld [vmem:[%s3161 + $0x2b8] sm:$0xff]
    %v7819 = vld [vmem:[%s3161 + $0x2c0] sm:$0xff]
    %v7820 = vld [vmem:[%s3161 + $0x2d0] sm:$0xff]
    %v7821 = vld [vmem:[%s3161 + $0x2d8] sm:$0xff]
    %v7822 = vld [vmem:[%s3161 + $0x2e8] sm:$0xff]
    %v7823 = vld [vmem:[%s3161 + $0x2f0] sm:$0xff]
    %v7824 = vld [vmem:[%s3161 + $0x300] sm:$0xff]
    %v7825 = vld [vmem:[%s3161 + $0x308] sm:$0xff]
    %v7826 = vld [vmem:[%s3161 + $0x318] sm:$0xff]
    %v7827 = vld [vmem:[%s3161 + $0x320] sm:$0xff]
    %v7828 = vpack.c.bf16 %v7765, %v7764
    %v7829 = vpack.c.bf16 %v7767, %v7766
    %v7830 = vpack.c.bf16 %v7769, %v7768
    %v7831 = vpack.c.bf16 %v7771, %v7770
    %v7832 = vpack.c.bf16 %v7773, %v7772
    %v7833 = vpack.c.bf16 %v7775, %v7774
    %v7834 = vpack.c.bf16 %v7777, %v7776
    %v7835 = vpack.c.bf16 %v7779, %v7778
    %v7836 = vpack.c.bf16 %v7781, %v7780
    %v7837 = vpack.c.bf16 %v7783, %v7782
    %v7838 = vpack.c.bf16 %v7785, %v7784
    %v7839 = vpack.c.bf16 %v7787, %v7786
    %v7840 = vpack.c.bf16 %v7789, %v7788
    %v7841 = vpack.c.bf16 %v7791, %v7790
    %v7842 = vpack.c.bf16 %v7793, %v7792
    %v7843 = vpack.c.bf16 %v7795, %v7794
    %v7844 = vpack.c.bf16 %v7797, %v7796
    %v7845 = vpack.c.bf16 %v7799, %v7798
    %v7846 = vpack.c.bf16 %v7801, %v7800
    %v7847 = vpack.c.bf16 %v7803, %v7802
    %v7848 = vpack.c.bf16 %v7805, %v7804
    %v7849 = vpack.c.bf16 %v7807, %v7806
    %v7850 = vpack.c.bf16 %v7809, %v7808
    %v7851 = vpack.c.bf16 %v7811, %v7810
    %v7852 = vpack.c.bf16 %v7813, %v7812
    %v7853 = vpack.c.bf16 %v7815, %v7814
    %v7854 = vpack.c.bf16 %v7817, %v7816
    %v7855 = vpack.c.bf16 %v7819, %v7818
    %v7856 = vpack.c.bf16 %v7821, %v7820
    %v7857 = vpack.c.bf16 %v7823, %v7822
    %v7858 = vpack.c.bf16 %v7825, %v7824
    %v7859 = vpack.c.bf16 %v7827, %v7826
    %s7860 = scalar_lea.vmem [#allocation4], 384
    %v7861 = vld [vmem:[%s7860] sm:$0xff]
    %v7862 = vld [vmem:[%s7860 + $0x8] sm:$0xff]
    %v7863 = vld [vmem:[%s7860 + $0x10] sm:$0xff]
    %v7864 = vld [vmem:[%s7860 + $0x18] sm:$0xff]
    %v7865 = vld [vmem:[%s7860 + $0x20] sm:$0xff]
    %v7866 = vld [vmem:[%s7860 + $0x28] sm:$0xff]
    %v7867 = vld [vmem:[%s7860 + $0x30] sm:$0xff]
    %v7868 = vld [vmem:[%s7860 + $0x38] sm:$0xff]
    %7869 = vmatprep.subr.bf16.mxu0 0
    %7870 = vmatpush1.bf16.msra.mxu0 %v7861
    %7871 = vmatprep.subr.bf16.mxu0 0
    %7872 = vmatpush1.bf16.msra.mxu0 %v7862
    %7873 = vmatprep.subr.bf16.mxu0 0
    %7874 = vmatpush1.bf16.msra.mxu0 %v7863
    %7875 = vmatprep.subr.bf16.mxu0 0
    %7876 = vmatpush1.bf16.msra.mxu0 %v7864
    %7877 = vmatprep.subr.bf16.mxu0 0
    %7878 = vmatpush1.bf16.msra.mxu0 %v7865
    %7879 = vmatprep.subr.bf16.mxu0 0
    %7880 = vmatpush1.bf16.msra.mxu0 %v7866
    %7881 = vmatprep.subr.bf16.mxu0 0
    %7882 = vmatpush1.bf16.msra.mxu0 %v7867
    %7883 = vmatprep.subr.bf16.mxu0 0
    %7884 = vmatpush1.bf16.msra.mxu0 %v7868
    %7885 = vmatprep.subr.bf16.mxu0 0
    %7886 = vmatpush1.bf16.msra.mxu0 0
    %7887 = vmatprep.subr.bf16.mxu0 0
    %7888 = vmatpush1.bf16.msra.mxu0 0
    %7889 = vmatprep.subr.bf16.mxu0 0
    %7890 = vmatpush1.bf16.msra.mxu0 0
    %7891 = vmatprep.subr.bf16.mxu0 0
    %7892 = vmatpush1.bf16.msra.mxu0 0
    %7893 = vmatprep.subr.bf16.mxu0 0
    %7894 = vmatpush1.bf16.msra.mxu0 0
    %7895 = vmatprep.subr.bf16.mxu0 0
    %7896 = vmatpush1.bf16.msra.mxu0 0
    %7897 = vmatprep.subr.bf16.mxu0 0
    %7898 = vmatpush1.bf16.msra.mxu0 0
    %7899 = vmatprep.subr.bf16.mxu0 0
    %7900 = vmatpush1.bf16.msra.mxu0 0
    %7901 = vmatprep.mubr.bf16.mxu0 0
    %7902 = vmatmul.mubr.bf16.gmra.mrb[0].mxu0 %v7828
    %v7903 = vpop.f32.mrb[0].mxu0
    %v7904 = vadd.f32 0.0, %v7903
    %v7905 = vpop.f32.mrb[0].mxu0
    %v7906 = vpop.f32.mrb[0].mxu0
    %v7907 = vadd.f32 0.0, %v7906
    %v7908 = vpop.f32.mrb[0].mxu0
    %7909 = vmatprep.mubr.bf16.mxu0 0
    %7910 = vmatmul.mubr.bf16.gmra.mrb[0].mxu0 %v7829
    %v7911 = vpop.f32.mrb[0].mxu0
    %v7912 = vadd.f32 0.0, %v7911
    %v7913 = vpop.f32.mrb[0].mxu0
    %v7914 = vpop.f32.mrb[0].mxu0
    %v7915 = vadd.f32 0.0, %v7914
    %v7916 = vpop.f32.mrb[0].mxu0
    %7917 = vmatprep.mubr.bf16.mxu0 0
    %7918 = vmatmul.mubr.bf16.gmra.mrb[0].mxu0 %v7830
    %v7919 = vpop.f32.mrb[0].mxu0
    %v7920 = vadd.f32 0.0, %v7919
    %v7921 = vpop.f32.mrb[0].mxu0
    %v7922 = vpop.f32.mrb[0].mxu0
    %v7923 = vadd.f32 0.0, %v7922
    %v7924 = vpop.f32.mrb[0].mxu0
    %7925 = vmatprep.mubr.bf16.mxu0 0
    %7926 = vmatmul.mubr.bf16.gmra.mrb[0].mxu0 %v7831
    %v7927 = vpop.f32.mrb[0].mxu0
    %v7928 = vadd.f32 0.0, %v7927
    %v7929 = vpop.f32.mrb[0].mxu0
    %v7930 = vpop.f32.mrb[0].mxu0
    %v7931 = vadd.f32 0.0, %v7930
    %v7932 = vpop.f32.mrb[0].mxu0
    %7933 = vmatprep.mubr.bf16.mxu0 0
    %7934 = vmatmul.mubr.bf16.gmra.mrb[0].mxu0 %v7832
    %v7935 = vpop.f32.mrb[0].mxu0
    %v7936 = vadd.f32 0.0, %v7935
    %v7937 = vpop.f32.mrb[0].mxu0
    %v7938 = vpop.f32.mrb[0].mxu0
    %v7939 = vadd.f32 0.0, %v7938
    %v7940 = vpop.f32.mrb[0].mxu0
    %7941 = vmatprep.mubr.bf16.mxu0 0
    %7942 = vmatmul.mubr.bf16.gmra.mrb[0].mxu0 %v7833
    %v7943 = vpop.f32.mrb[0].mxu0
    %v7944 = vadd.f32 0.0, %v7943
    %v7945 = vpop.f32.mrb[0].mxu0
    %v7946 = vpop.f32.mrb[0].mxu0
    %v7947 = vadd.f32 0.0, %v7946
    %v7948 = vpop.f32.mrb[0].mxu0
    %7949 = vmatprep.mubr.bf16.mxu0 0
    %7950 = vmatmul.mubr.bf16.gmra.mrb[0].mxu0 %v7834
    %v7951 = vpop.f32.mrb[0].mxu0
    %v7952 = vadd.f32 0.0, %v7951
    %v7953 = vpop.f32.mrb[0].mxu0
    %v7954 = vpop.f32.mrb[0].mxu0
    %v7955 = vadd.f32 0.0, %v7954
    %v7956 = vpop.f32.mrb[0].mxu0
    %7957 = vmatprep.mubr.bf16.mxu0 0
    %7958 = vmatmul.mubr.bf16.gmra.mrb[0].mxu0 %v7835
    %v7959 = vpop.f32.mrb[0].mxu0
    %v7960 = vadd.f32 0.0, %v7959
    %v7961 = vpop.f32.mrb[0].mxu0
    %v7962 = vpop.f32.mrb[0].mxu0
    %v7963 = vadd.f32 0.0, %v7962
    %v7964 = vpop.f32.mrb[0].mxu0
    %7965 = vmatprep.mubr.bf16.mxu0 0
    %7966 = vmatmul.mubr.bf16.gmra.mrb[0].mxu0 %v7836
    %v7967 = vpop.f32.mrb[0].mxu0
    %v7968 = vadd.f32 0.0, %v7967
    %v7969 = vpop.f32.mrb[0].mxu0
    %v7970 = vpop.f32.mrb[0].mxu0
    %v7971 = vadd.f32 0.0, %v7970
    %v7972 = vpop.f32.mrb[0].mxu0
    %7973 = vmatprep.mubr.bf16.mxu0 0
    %7974 = vmatmul.mubr.bf16.gmra.mrb[0].mxu0 %v7837
    %v7975 = vpop.f32.mrb[0].mxu0
    %v7976 = vadd.f32 0.0, %v7975
    %v7977 = vpop.f32.mrb[0].mxu0
    %v7978 = vpop.f32.mrb[0].mxu0
    %v7979 = vadd.f32 0.0, %v7978
    %v7980 = vpop.f32.mrb[0].mxu0
    %7981 = vmatprep.mubr.bf16.mxu0 0
    %7982 = vmatmul.mubr.bf16.gmra.mrb[0].mxu0 %v7838
    %v7983 = vpop.f32.mrb[0].mxu0
    %v7984 = vadd.f32 0.0, %v7983
    %v7985 = vpop.f32.mrb[0].mxu0
    %v7986 = vpop.f32.mrb[0].mxu0
    %v7987 = vadd.f32 0.0, %v7986
    %v7988 = vpop.f32.mrb[0].mxu0
    %7989 = vmatprep.mubr.bf16.mxu0 0
    %7990 = vmatmul.mubr.bf16.gmra.mrb[0].mxu0 %v7839
    %v7991 = vpop.f32.mrb[0].mxu0
    %v7992 = vadd.f32 0.0, %v7991
    %v7993 = vpop.f32.mrb[0].mxu0
    %v7994 = vpop.f32.mrb[0].mxu0
    %v7995 = vadd.f32 0.0, %v7994
    %v7996 = vpop.f32.mrb[0].mxu0
    %7997 = vmatprep.mubr.bf16.mxu0 0
    %7998 = vmatmul.mubr.bf16.gmra.mrb[0].mxu0 %v7840
    %v7999 = vpop.f32.mrb[0].mxu0
    %v8000 = vadd.f32 0.0, %v7999
    %v8001 = vpop.f32.mrb[0].mxu0
    %v8002 = vpop.f32.mrb[0].mxu0
    %v8003 = vadd.f32 0.0, %v8002
    %v8004 = vpop.f32.mrb[0].mxu0
    %8005 = vmatprep.mubr.bf16.mxu0 0
    %8006 = vmatmul.mubr.bf16.gmra.mrb[0].mxu0 %v7841
    %v8007 = vpop.f32.mrb[0].mxu0
    %v8008 = vadd.f32 0.0, %v8007
    %v8009 = vpop.f32.mrb[0].mxu0
    %v8010 = vpop.f32.mrb[0].mxu0
    %v8011 = vadd.f32 0.0, %v8010
    %v8012 = vpop.f32.mrb[0].mxu0
    %8013 = vmatprep.mubr.bf16.mxu0 0
    %8014 = vmatmul.mubr.bf16.gmra.mrb[0].mxu0 %v7842
    %v8015 = vpop.f32.mrb[0].mxu0
    %v8016 = vadd.f32 0.0, %v8015
    %v8017 = vpop.f32.mrb[0].mxu0
    %v8018 = vpop.f32.mrb[0].mxu0
    %v8019 = vadd.f32 0.0, %v8018
    %v8020 = vpop.f32.mrb[0].mxu0
    %8021 = vmatprep.mubr.bf16.mxu0 0
    %8022 = vmatmul.mubr.bf16.gmra.mrb[0].mxu0 %v7843
    %v8023 = vpop.f32.mrb[0].mxu0
    %v8024 = vadd.f32 0.0, %v8023
    %v8025 = vpop.f32.mrb[0].mxu0
    %v8026 = vpop.f32.mrb[0].mxu0
    %v8027 = vadd.f32 0.0, %v8026
    %v8028 = vpop.f32.mrb[0].mxu0
    %8029 = vmatprep.mubr.bf16.mxu0 0
    %8030 = vmatmul.mubr.bf16.gmra.mrb[0].mxu0 %v7844
    %v8031 = vpop.f32.mrb[0].mxu0
    %v8032 = vadd.f32 0.0, %v8031
    %v8033 = vpop.f32.mrb[0].mxu0
    %v8034 = vpop.f32.mrb[0].mxu0
    %v8035 = vadd.f32 0.0, %v8034
    %v8036 = vpop.f32.mrb[0].mxu0
    %8037 = vmatprep.mubr.bf16.mxu0 0
    %8038 = vmatmul.mubr.bf16.gmra.mrb[0].mxu0 %v7845
    %v8039 = vpop.f32.mrb[0].mxu0
    %v8040 = vadd.f32 0.0, %v8039
    %v8041 = vpop.f32.mrb[0].mxu0
    %v8042 = vpop.f32.mrb[0].mxu0
    %v8043 = vadd.f32 0.0, %v8042
    %v8044 = vpop.f32.mrb[0].mxu0
    %8045 = vmatprep.mubr.bf16.mxu0 0
    %8046 = vmatmul.mubr.bf16.gmra.mrb[0].mxu0 %v7846
    %v8047 = vpop.f32.mrb[0].mxu0
    %v8048 = vadd.f32 0.0, %v8047
    %v8049 = vpop.f32.mrb[0].mxu0
    %v8050 = vpop.f32.mrb[0].mxu0
    %v8051 = vadd.f32 0.0, %v8050
    %v8052 = vpop.f32.mrb[0].mxu0
    %8053 = vmatprep.mubr.bf16.mxu0 0
    %8054 = vmatmul.mubr.bf16.gmra.mrb[0].mxu0 %v7847
    %v8055 = vpop.f32.mrb[0].mxu0
    %v8056 = vadd.f32 0.0, %v8055
    %v8057 = vpop.f32.mrb[0].mxu0
    %v8058 = vpop.f32.mrb[0].mxu0
    %v8059 = vadd.f32 0.0, %v8058
    %v8060 = vpop.f32.mrb[0].mxu0
    %8061 = vmatprep.mubr.bf16.mxu0 0
    %8062 = vmatmul.mubr.bf16.gmra.mrb[0].mxu0 %v7848
    %v8063 = vpop.f32.mrb[0].mxu0
    %v8064 = vadd.f32 0.0, %v8063
    %v8065 = vpop.f32.mrb[0].mxu0
    %v8066 = vpop.f32.mrb[0].mxu0
    %v8067 = vadd.f32 0.0, %v8066
    %v8068 = vpop.f32.mrb[0].mxu0
    %8069 = vmatprep.mubr.bf16.mxu0 0
    %8070 = vmatmul.mubr.bf16.gmra.mrb[0].mxu0 %v7849
    %v8071 = vpop.f32.mrb[0].mxu0
    %v8072 = vadd.f32 0.0, %v8071
    %v8073 = vpop.f32.mrb[0].mxu0
    %v8074 = vpop.f32.mrb[0].mxu0
    %v8075 = vadd.f32 0.0, %v8074
    %v8076 = vpop.f32.mrb[0].mxu0
    %8077 = vmatprep.mubr.bf16.mxu0 0
    %8078 = vmatmul.mubr.bf16.gmra.mrb[0].mxu0 %v7850
    %v8079 = vpop.f32.mrb[0].mxu0
    %v8080 = vadd.f32 0.0, %v8079
    %v8081 = vpop.f32.mrb[0].mxu0
    %v8082 = vpop.f32.mrb[0].mxu0
    %v8083 = vadd.f32 0.0, %v8082
    %v8084 = vpop.f32.mrb[0].mxu0
    %8085 = vmatprep.mubr.bf16.mxu0 0
    %8086 = vmatmul.mubr.bf16.gmra.mrb[0].mxu0 %v7851
    %v8087 = vpop.f32.mrb[0].mxu0
    %v8088 = vadd.f32 0.0, %v8087
    %v8089 = vpop.f32.mrb[0].mxu0
    %v8090 = vpop.f32.mrb[0].mxu0
    %v8091 = vadd.f32 0.0, %v8090
    %v8092 = vpop.f32.mrb[0].mxu0
    %8093 = vmatprep.mubr.bf16.mxu0 0
    %8094 = vmatmul.mubr.bf16.gmra.mrb[0].mxu0 %v7852
    %v8095 = vpop.f32.mrb[0].mxu0
    %v8096 = vadd.f32 0.0, %v8095
    %v8097 = vpop.f32.mrb[0].mxu0
    %v8098 = vpop.f32.mrb[0].mxu0
    %v8099 = vadd.f32 0.0, %v8098
    %v8100 = vpop.f32.mrb[0].mxu0
    %8101 = vmatprep.mubr.bf16.mxu0 0
    %8102 = vmatmul.mubr.bf16.gmra.mrb[0].mxu0 %v7853
    %v8103 = vpop.f32.mrb[0].mxu0
    %v8104 = vadd.f32 0.0, %v8103
    %v8105 = vpop.f32.mrb[0].mxu0
    %v8106 = vpop.f32.mrb[0].mxu0
    %v8107 = vadd.f32 0.0, %v8106
    %v8108 = vpop.f32.mrb[0].mxu0
    %8109 = vmatprep.mubr.bf16.mxu0 0
    %8110 = vmatmul.mubr.bf16.gmra.mrb[0].mxu0 %v7854
    %v8111 = vpop.f32.mrb[0].mxu0
    %v8112 = vadd.f32 0.0, %v8111
    %v8113 = vpop.f32.mrb[0].mxu0
    %v8114 = vpop.f32.mrb[0].mxu0
    %v8115 = vadd.f32 0.0, %v8114
    %v8116 = vpop.f32.mrb[0].mxu0
    %8117 = vmatprep.mubr.bf16.mxu0 0
    %8118 = vmatmul.mubr.bf16.gmra.mrb[0].mxu0 %v7855
    %v8119 = vpop.f32.mrb[0].mxu0
    %v8120 = vadd.f32 0.0, %v8119
    %v8121 = vpop.f32.mrb[0].mxu0
    %v8122 = vpop.f32.mrb[0].mxu0
    %v8123 = vadd.f32 0.0, %v8122
    %v8124 = vpop.f32.mrb[0].mxu0
    %8125 = vmatprep.mubr.bf16.mxu0 0
    %8126 = vmatmul.mubr.bf16.gmra.mrb[0].mxu0 %v7856
    %v8127 = vpop.f32.mrb[0].mxu0
    %v8128 = vadd.f32 0.0, %v8127
    %v8129 = vpop.f32.mrb[0].mxu0
    %v8130 = vpop.f32.mrb[0].mxu0
    %v8131 = vadd.f32 0.0, %v8130
    %v8132 = vpop.f32.mrb[0].mxu0
    %8133 = vmatprep.mubr.bf16.mxu0 0
    %8134 = vmatmul.mubr.bf16.gmra.mrb[0].mxu0 %v7857
    %v8135 = vpop.f32.mrb[0].mxu0
    %v8136 = vadd.f32 0.0, %v8135
    %v8137 = vpop.f32.mrb[0].mxu0
    %v8138 = vpop.f32.mrb[0].mxu0
    %v8139 = vadd.f32 0.0, %v8138
    %v8140 = vpop.f32.mrb[0].mxu0
    %8141 = vmatprep.mubr.bf16.mxu0 0
    %8142 = vmatmul.mubr.bf16.gmra.mrb[0].mxu0 %v7858
    %v8143 = vpop.f32.mrb[0].mxu0
    %v8144 = vadd.f32 0.0, %v8143
    %v8145 = vpop.f32.mrb[0].mxu0
    %v8146 = vpop.f32.mrb[0].mxu0
    %v8147 = vadd.f32 0.0, %v8146
    %v8148 = vpop.f32.mrb[0].mxu0
    %8149 = vmatprep.mubr.bf16.mxu0 0
    %8150 = vmatmul.mubr.bf16.gmra.mrb[0].mxu0 %v7859
    %v8151 = vpop.f32.mrb[0].mxu0
    %v8152 = vadd.f32 0.0, %v8151
    %v8153 = vpop.f32.mrb[0].mxu0
    %v8154 = vpop.f32.mrb[0].mxu0
    %v8155 = vadd.f32 0.0, %v8154
    %v8156 = vpop.f32.mrb[0].mxu0
    %8157 = vdwg.mxu0
    %v8158 = vadd.f32 %v7700, %v7904
    %v8159 = vadd.f32 %v7701, %v7907
    %v8160 = vadd.f32 %v7702, %v7912
    %v8161 = vadd.f32 %v7703, %v7915
    %v8162 = vadd.f32 %v7704, %v7920
    %v8163 = vadd.f32 %v7705, %v7923
    %v8164 = vadd.f32 %v7706, %v7928
    %v8165 = vadd.f32 %v7707, %v7931
    %v8166 = vadd.f32 %v7708, %v7936
    %v8167 = vadd.f32 %v7709, %v7939
    %v8168 = vadd.f32 %v7710, %v7944
    %v8169 = vadd.f32 %v7711, %v7947
    %v8170 = vadd.f32 %v7712, %v7952
    %v8171 = vadd.f32 %v7713, %v7955
    %v8172 = vadd.f32 %v7714, %v7960
    %v8173 = vadd.f32 %v7715, %v7963
    %v8174 = vadd.f32 %v7716, %v7968
    %v8175 = vadd.f32 %v7717, %v7971
    %v8176 = vadd.f32 %v7718, %v7976
    %v8177 = vadd.f32 %v7719, %v7979
    %v8178 = vadd.f32 %v7720, %v7984
    %v8179 = vadd.f32 %v7721, %v7987
    %v8180 = vadd.f32 %v7722, %v7992
    %v8181 = vadd.f32 %v7723, %v7995
    %v8182 = vadd.f32 %v7724, %v8000
    %v8183 = vadd.f32 %v7725, %v8003
    %v8184 = vadd.f32 %v7726, %v8008
    %v8185 = vadd.f32 %v7727, %v8011
    %v8186 = vadd.f32 %v7728, %v8016
    %v8187 = vadd.f32 %v7729, %v8019
    %v8188 = vadd.f32 %v7730, %v8024
    %v8189 = vadd.f32 %v7731, %v8027
    %v8190 = vadd.f32 %v7732, %v8032
    %v8191 = vadd.f32 %v7733, %v8035
    %v8192 = vadd.f32 %v7734, %v8040
    %v8193 = vadd.f32 %v7735, %v8043
    %v8194 = vadd.f32 %v7736, %v8048
    %v8195 = vadd.f32 %v7737, %v8051
    %v8196 = vadd.f32 %v7738, %v8056
    %v8197 = vadd.f32 %v7739, %v8059
    %v8198 = vadd.f32 %v7740, %v8064
    %v8199 = vadd.f32 %v7741, %v8067
    %v8200 = vadd.f32 %v7742, %v8072
    %v8201 = vadd.f32 %v7743, %v8075
    %v8202 = vadd.f32 %v7744, %v8080
    %v8203 = vadd.f32 %v7745, %v8083
    %v8204 = vadd.f32 %v7746, %v8088
    %v8205 = vadd.f32 %v7747, %v8091
    %v8206 = vadd.f32 %v7748, %v8096
    %v8207 = vadd.f32 %v7749, %v8099
    %v8208 = vadd.f32 %v7750, %v8104
    %v8209 = vadd.f32 %v7751, %v8107
    %v8210 = vadd.f32 %v7752, %v8112
    %v8211 = vadd.f32 %v7753, %v8115
    %v8212 = vadd.f32 %v7754, %v8120
    %v8213 = vadd.f32 %v7755, %v8123
    %v8214 = vadd.f32 %v7756, %v8128
    %v8215 = vadd.f32 %v7757, %v8131
    %v8216 = vadd.f32 %v7758, %v8136
    %v8217 = vadd.f32 %v7759, %v8139
    %v8218 = vadd.f32 %v7760, %v8144
    %v8219 = vadd.f32 %v7761, %v8147
    %v8220 = vadd.f32 %v7762, %v8152
    %v8221 = vadd.f32 %v7763, %v8155
    %v8222 = vld [vmem:[%s3161 + $0x1] sm:$0xff]
    %v8223 = vld [vmem:[%s3161 + $0x9] sm:$0xff]
    %v8224 = vld [vmem:[%s3161 + $0x19] sm:$0xff]
    %v8225 = vld [vmem:[%s3161 + $0x21] sm:$0xff]
    %v8226 = vld [vmem:[%s3161 + $0x31] sm:$0xff]
    %v8227 = vld [vmem:[%s3161 + $0x39] sm:$0xff]
    %v8228 = vld [vmem:[%s3161 + $0x49] sm:$0xff]
    %v8229 = vld [vmem:[%s3161 + $0x51] sm:$0xff]
    %v8230 = vld [vmem:[%s3161 + $0x61] sm:$0xff]
    %v8231 = vld [vmem:[%s3161 + $0x69] sm:$0xff]
    %v8232 = vld [vmem:[%s3161 + $0x79] sm:$0xff]
    %v8233 = vld [vmem:[%s3161 + $0x81] sm:$0xff]
    %v8234 = vld [vmem:[%s3161 + $0x91] sm:$0xff]
    %v8235 = vld [vmem:[%s3161 + $0x99] sm:$0xff]
    %v8236 = vld [vmem:[%s3161 + $0xa9] sm:$0xff]
    %v8237 = vld [vmem:[%s3161 + $0xb1] sm:$0xff]
    %v8238 = vld [vmem:[%s3161 + $0xc1] sm:$0xff]
    %v8239 = vld [vmem:[%s3161 + $0xc9] sm:$0xff]
    %v8240 = vld [vmem:[%s3161 + $0xd9] sm:$0xff]
    %v8241 = vld [vmem:[%s3161 + $0xe1] sm:$0xff]
    %v8242 = vld [vmem:[%s3161 + $0xf1] sm:$0xff]
    %v8243 = vld [vmem:[%s3161 + $0xf9] sm:$0xff]
    %v8244 = vld [vmem:[%s3161 + $0x109] sm:$0xff]
    %v8245 = vld [vmem:[%s3161 + $0x111] sm:$0xff]
    %v8246 = vld [vmem:[%s3161 + $0x121] sm:$0xff]
    %v8247 = vld [vmem:[%s3161 + $0x129] sm:$0xff]
    %v8248 = vld [vmem:[%s3161 + $0x139] sm:$0xff]
    %v8249 = vld [vmem:[%s3161 + $0x141] sm:$0xff]
    %v8250 = vld [vmem:[%s3161 + $0x151] sm:$0xff]
    %v8251 = vld [vmem:[%s3161 + $0x159] sm:$0xff]
    %v8252 = vld [vmem:[%s3161 + $0x169] sm:$0xff]
    %v8253 = vld [vmem:[%s3161 + $0x171] sm:$0xff]
    %v8254 = vld [vmem:[%s3161 + $0x1b1] sm:$0xff]
    %v8255 = vld [vmem:[%s3161 + $0x1b9] sm:$0xff]
    %v8256 = vld [vmem:[%s3161 + $0x1c9] sm:$0xff]
    %v8257 = vld [vmem:[%s3161 + $0x1d1] sm:$0xff]
    %v8258 = vld [vmem:[%s3161 + $0x1e1] sm:$0xff]
    %v8259 = vld [vmem:[%s3161 + $0x1e9] sm:$0xff]
    %v8260 = vld [vmem:[%s3161 + $0x1f9] sm:$0xff]
    %v8261 = vld [vmem:[%s3161 + $0x201] sm:$0xff]
    %v8262 = vld [vmem:[%s3161 + $0x211] sm:$0xff]
    %v8263 = vld [vmem:[%s3161 + $0x219] sm:$0xff]
    %v8264 = vld [vmem:[%s3161 + $0x229] sm:$0xff]
    %v8265 = vld [vmem:[%s3161 + $0x231] sm:$0xff]
    %v8266 = vld [vmem:[%s3161 + $0x241] sm:$0xff]
    %v8267 = vld [vmem:[%s3161 + $0x249] sm:$0xff]
    %v8268 = vld [vmem:[%s3161 + $0x259] sm:$0xff]
    %v8269 = vld [vmem:[%s3161 + $0x261] sm:$0xff]
    %v8270 = vld [vmem:[%s3161 + $0x271] sm:$0xff]
    %v8271 = vld [vmem:[%s3161 + $0x279] sm:$0xff]
    %v8272 = vld [vmem:[%s3161 + $0x289] sm:$0xff]
    %v8273 = vld [vmem:[%s3161 + $0x291] sm:$0xff]
    %v8274 = vld [vmem:[%s3161 + $0x2a1] sm:$0xff]
    %v8275 = vld [vmem:[%s3161 + $0x2a9] sm:$0xff]
    %v8276 = vld [vmem:[%s3161 + $0x2b9] sm:$0xff]
    %v8277 = vld [vmem:[%s3161 + $0x2c1] sm:$0xff]
    %v8278 = vld [vmem:[%s3161 + $0x2d1] sm:$0xff]
    %v8279 = vld [vmem:[%s3161 + $0x2d9] sm:$0xff]
    %v8280 = vld [vmem:[%s3161 + $0x2e9] sm:$0xff]
    %v8281 = vld [vmem:[%s3161 + $0x2f1] sm:$0xff]
    %v8282 = vld [vmem:[%s3161 + $0x301] sm:$0xff]
    %v8283 = vld [vmem:[%s3161 + $0x309] sm:$0xff]
    %v8284 = vld [vmem:[%s3161 + $0x319] sm:$0xff]
    %v8285 = vld [vmem:[%s3161 + $0x321] sm:$0xff]
    %v8286 = vpack.c.bf16 %v8223, %v8222
    %v8287 = vpack.c.bf16 %v8225, %v8224
    %v8288 = vpack.c.bf16 %v8227, %v8226
    %v8289 = vpack.c.bf16 %v8229, %v8228
    %v8290 = vpack.c.bf16 %v8231, %v8230
    %v8291 = vpack.c.bf16 %v8233, %v8232
    %v8292 = vpack.c.bf16 %v8235, %v8234
    %v8293 = vpack.c.bf16 %v8237, %v8236
    %v8294 = vpack.c.bf16 %v8239, %v8238
    %v8295 = vpack.c.bf16 %v8241, %v8240
    %v8296 = vpack.c.bf16 %v8243, %v8242
    %v8297 = vpack.c.bf16 %v8245, %v8244
    %v8298 = vpack.c.bf16 %v8247, %v8246
    %v8299 = vpack.c.bf16 %v8249, %v8248
    %v8300 = vpack.c.bf16 %v8251, %v8250
    %v8301 = vpack.c.bf16 %v8253, %v8252
    %v8302 = vpack.c.bf16 %v8255, %v8254
    %v8303 = vpack.c.bf16 %v8257, %v8256
    %v8304 = vpack.c.bf16 %v8259, %v8258
    %v8305 = vpack.c.bf16 %v8261, %v8260
    %v8306 = vpack.c.bf16 %v8263, %v8262
    %v8307 = vpack.c.bf16 %v8265, %v8264
    %v8308 = vpack.c.bf16 %v8267, %v8266
    %v8309 = vpack.c.bf16 %v8269, %v8268
    %v8310 = vpack.c.bf16 %v8271, %v8270
    %v8311 = vpack.c.bf16 %v8273, %v8272
    %v8312 = vpack.c.bf16 %v8275, %v8274
    %v8313 = vpack.c.bf16 %v8277, %v8276
    %v8314 = vpack.c.bf16 %v8279, %v8278
    %v8315 = vpack.c.bf16 %v8281, %v8280
    %v8316 = vpack.c.bf16 %v8283, %v8282
    %v8317 = vpack.c.bf16 %v8285, %v8284
    %s8318 = scalar_lea.vmem [#allocation4], 448
    %v8319 = vld [vmem:[%s8318] sm:$0xff]
    %v8320 = vld [vmem:[%s8318 + $0x8] sm:$0xff]
    %v8321 = vld [vmem:[%s8318 + $0x10] sm:$0xff]
    %v8322 = vld [vmem:[%s8318 + $0x18] sm:$0xff]
    %v8323 = vld [vmem:[%s8318 + $0x20] sm:$0xff]
    %v8324 = vld [vmem:[%s8318 + $0x28] sm:$0xff]
    %v8325 = vld [vmem:[%s8318 + $0x30] sm:$0xff]
    %v8326 = vld [vmem:[%s8318 + $0x38] sm:$0xff]
    %8327 = vmatprep.subr.bf16.mxu0 0
    %8328 = vmatpush1.bf16.msra.mxu0 %v8319
    %8329 = vmatprep.subr.bf16.mxu0 0
    %8330 = vmatpush1.bf16.msra.mxu0 %v8320
    %8331 = vmatprep.subr.bf16.mxu0 0
    %8332 = vmatpush1.bf16.msra.mxu0 %v8321
    %8333 = vmatprep.subr.bf16.mxu0 0
    %8334 = vmatpush1.bf16.msra.mxu0 %v8322
    %8335 = vmatprep.subr.bf16.mxu0 0
    %8336 = vmatpush1.bf16.msra.mxu0 %v8323
    %8337 = vmatprep.subr.bf16.mxu0 0
    %8338 = vmatpush1.bf16.msra.mxu0 %v8324
    %8339 = vmatprep.subr.bf16.mxu0 0
    %8340 = vmatpush1.bf16.msra.mxu0 %v8325
    %8341 = vmatprep.subr.bf16.mxu0 0
    %8342 = vmatpush1.bf16.msra.mxu0 %v8326
    %8343 = vmatprep.subr.bf16.mxu0 0
    %8344 = vmatpush1.bf16.msra.mxu0 0
    %8345 = vmatprep.subr.bf16.mxu0 0
    %8346 = vmatpush1.bf16.msra.mxu0 0
    %8347 = vmatprep.subr.bf16.mxu0 0
    %8348 = vmatpush1.bf16.msra.mxu0 0
    %8349 = vmatprep.subr.bf16.mxu0 0
    %8350 = vmatpush1.bf16.msra.mxu0 0
    %8351 = vmatprep.subr.bf16.mxu0 0
    %8352 = vmatpush1.bf16.msra.mxu0 0
    %8353 = vmatprep.subr.bf16.mxu0 0
    %8354 = vmatpush1.bf16.msra.mxu0 0
    %8355 = vmatprep.subr.bf16.mxu0 0
    %8356 = vmatpush1.bf16.msra.mxu0 0
    %8357 = vmatprep.subr.bf16.mxu0 0
    %8358 = vmatpush1.bf16.msra.mxu0 0
    %8359 = vmatprep.mubr.bf16.mxu0 0
    %8360 = vmatmul.mubr.bf16.gmra.mrb[0].mxu0 %v8286
    %v8361 = vpop.f32.mrb[0].mxu0
    %v8362 = vadd.f32 0.0, %v8361
    %v8363 = vpop.f32.mrb[0].mxu0
    %v8364 = vpop.f32.mrb[0].mxu0
    %v8365 = vadd.f32 0.0, %v8364
    %v8366 = vpop.f32.mrb[0].mxu0
    %8367 = vmatprep.mubr.bf16.mxu0 0
    %8368 = vmatmul.mubr.bf16.gmra.mrb[0].mxu0 %v8287
    %v8369 = vpop.f32.mrb[0].mxu0
    %v8370 = vadd.f32 0.0, %v8369
    %v8371 = vpop.f32.mrb[0].mxu0
    %v8372 = vpop.f32.mrb[0].mxu0
    %v8373 = vadd.f32 0.0, %v8372
    %v8374 = vpop.f32.mrb[0].mxu0
    %8375 = vmatprep.mubr.bf16.mxu0 0
    %8376 = vmatmul.mubr.bf16.gmra.mrb[0].mxu0 %v8288
    %v8377 = vpop.f32.mrb[0].mxu0
    %v8378 = vadd.f32 0.0, %v8377
    %v8379 = vpop.f32.mrb[0].mxu0
    %v8380 = vpop.f32.mrb[0].mxu0
    %v8381 = vadd.f32 0.0, %v8380
    %v8382 = vpop.f32.mrb[0].mxu0
    %8383 = vmatprep.mubr.bf16.mxu0 0
    %8384 = vmatmul.mubr.bf16.gmra.mrb[0].mxu0 %v8289
    %v8385 = vpop.f32.mrb[0].mxu0
    %v8386 = vadd.f32 0.0, %v8385
    %v8387 = vpop.f32.mrb[0].mxu0
    %v8388 = vpop.f32.mrb[0].mxu0
    %v8389 = vadd.f32 0.0, %v8388
    %v8390 = vpop.f32.mrb[0].mxu0
    %8391 = vmatprep.mubr.bf16.mxu0 0
    %8392 = vmatmul.mubr.bf16.gmra.mrb[0].mxu0 %v8290
    %v8393 = vpop.f32.mrb[0].mxu0
    %v8394 = vadd.f32 0.0, %v8393
    %v8395 = vpop.f32.mrb[0].mxu0
    %v8396 = vpop.f32.mrb[0].mxu0
    %v8397 = vadd.f32 0.0, %v8396
    %v8398 = vpop.f32.mrb[0].mxu0
    %8399 = vmatprep.mubr.bf16.mxu0 0
    %8400 = vmatmul.mubr.bf16.gmra.mrb[0].mxu0 %v8291
    %v8401 = vpop.f32.mrb[0].mxu0
    %v8402 = vadd.f32 0.0, %v8401
    %v8403 = vpop.f32.mrb[0].mxu0
    %v8404 = vpop.f32.mrb[0].mxu0
    %v8405 = vadd.f32 0.0, %v8404
    %v8406 = vpop.f32.mrb[0].mxu0
    %8407 = vmatprep.mubr.bf16.mxu0 0
    %8408 = vmatmul.mubr.bf16.gmra.mrb[0].mxu0 %v8292
    %v8409 = vpop.f32.mrb[0].mxu0
    %v8410 = vadd.f32 0.0, %v8409
    %v8411 = vpop.f32.mrb[0].mxu0
    %v8412 = vpop.f32.mrb[0].mxu0
    %v8413 = vadd.f32 0.0, %v8412
    %v8414 = vpop.f32.mrb[0].mxu0
    %8415 = vmatprep.mubr.bf16.mxu0 0
    %8416 = vmatmul.mubr.bf16.gmra.mrb[0].mxu0 %v8293
    %v8417 = vpop.f32.mrb[0].mxu0
    %v8418 = vadd.f32 0.0, %v8417
    %v8419 = vpop.f32.mrb[0].mxu0
    %v8420 = vpop.f32.mrb[0].mxu0
    %v8421 = vadd.f32 0.0, %v8420
    %v8422 = vpop.f32.mrb[0].mxu0
    %8423 = vmatprep.mubr.bf16.mxu0 0
    %8424 = vmatmul.mubr.bf16.gmra.mrb[0].mxu0 %v8294
    %v8425 = vpop.f32.mrb[0].mxu0
    %v8426 = vadd.f32 0.0, %v8425
    %v8427 = vpop.f32.mrb[0].mxu0
    %v8428 = vpop.f32.mrb[0].mxu0
    %v8429 = vadd.f32 0.0, %v8428
    %v8430 = vpop.f32.mrb[0].mxu0
    %8431 = vmatprep.mubr.bf16.mxu0 0
    %8432 = vmatmul.mubr.bf16.gmra.mrb[0].mxu0 %v8295
    %v8433 = vpop.f32.mrb[0].mxu0
    %v8434 = vadd.f32 0.0, %v8433
    %v8435 = vpop.f32.mrb[0].mxu0
    %v8436 = vpop.f32.mrb[0].mxu0
    %v8437 = vadd.f32 0.0, %v8436
    %v8438 = vpop.f32.mrb[0].mxu0
    %8439 = vmatprep.mubr.bf16.mxu0 0
    %8440 = vmatmul.mubr.bf16.gmra.mrb[0].mxu0 %v8296
    %v8441 = vpop.f32.mrb[0].mxu0
    %v8442 = vadd.f32 0.0, %v8441
    %v8443 = vpop.f32.mrb[0].mxu0
    %v8444 = vpop.f32.mrb[0].mxu0
    %v8445 = vadd.f32 0.0, %v8444
    %v8446 = vpop.f32.mrb[0].mxu0
    %8447 = vmatprep.mubr.bf16.mxu0 0
    %8448 = vmatmul.mubr.bf16.gmra.mrb[0].mxu0 %v8297
    %v8449 = vpop.f32.mrb[0].mxu0
    %v8450 = vadd.f32 0.0, %v8449
    %v8451 = vpop.f32.mrb[0].mxu0
    %v8452 = vpop.f32.mrb[0].mxu0
    %v8453 = vadd.f32 0.0, %v8452
    %v8454 = vpop.f32.mrb[0].mxu0
    %8455 = vmatprep.mubr.bf16.mxu0 0
    %8456 = vmatmul.mubr.bf16.gmra.mrb[0].mxu0 %v8298
    %v8457 = vpop.f32.mrb[0].mxu0
    %v8458 = vadd.f32 0.0, %v8457
    %v8459 = vpop.f32.mrb[0].mxu0
    %v8460 = vpop.f32.mrb[0].mxu0
    %v8461 = vadd.f32 0.0, %v8460
    %v8462 = vpop.f32.mrb[0].mxu0
    %8463 = vmatprep.mubr.bf16.mxu0 0
    %8464 = vmatmul.mubr.bf16.gmra.mrb[0].mxu0 %v8299
    %v8465 = vpop.f32.mrb[0].mxu0
    %v8466 = vadd.f32 0.0, %v8465
    %v8467 = vpop.f32.mrb[0].mxu0
    %v8468 = vpop.f32.mrb[0].mxu0
    %v8469 = vadd.f32 0.0, %v8468
    %v8470 = vpop.f32.mrb[0].mxu0
    %8471 = vmatprep.mubr.bf16.mxu0 0
    %8472 = vmatmul.mubr.bf16.gmra.mrb[0].mxu0 %v8300
    %v8473 = vpop.f32.mrb[0].mxu0
    %v8474 = vadd.f32 0.0, %v8473
    %v8475 = vpop.f32.mrb[0].mxu0
    %v8476 = vpop.f32.mrb[0].mxu0
    %v8477 = vadd.f32 0.0, %v8476
    %v8478 = vpop.f32.mrb[0].mxu0
    %8479 = vmatprep.mubr.bf16.mxu0 0
    %8480 = vmatmul.mubr.bf16.gmra.mrb[0].mxu0 %v8301
    %v8481 = vpop.f32.mrb[0].mxu0
    %v8482 = vadd.f32 0.0, %v8481
    %v8483 = vpop.f32.mrb[0].mxu0
    %v8484 = vpop.f32.mrb[0].mxu0
    %v8485 = vadd.f32 0.0, %v8484
    %v8486 = vpop.f32.mrb[0].mxu0
    %8487 = vmatprep.mubr.bf16.mxu0 0
    %8488 = vmatmul.mubr.bf16.gmra.mrb[0].mxu0 %v8302
    %v8489 = vpop.f32.mrb[0].mxu0
    %v8490 = vadd.f32 0.0, %v8489
    %v8491 = vpop.f32.mrb[0].mxu0
    %v8492 = vpop.f32.mrb[0].mxu0
    %v8493 = vadd.f32 0.0, %v8492
    %v8494 = vpop.f32.mrb[0].mxu0
    %8495 = vmatprep.mubr.bf16.mxu0 0
    %8496 = vmatmul.mubr.bf16.gmra.mrb[0].mxu0 %v8303
    %v8497 = vpop.f32.mrb[0].mxu0
    %v8498 = vadd.f32 0.0, %v8497
    %v8499 = vpop.f32.mrb[0].mxu0
    %v8500 = vpop.f32.mrb[0].mxu0
    %v8501 = vadd.f32 0.0, %v8500
    %v8502 = vpop.f32.mrb[0].mxu0
    %8503 = vmatprep.mubr.bf16.mxu0 0
    %8504 = vmatmul.mubr.bf16.gmra.mrb[0].mxu0 %v8304
    %v8505 = vpop.f32.mrb[0].mxu0
    %v8506 = vadd.f32 0.0, %v8505
    %v8507 = vpop.f32.mrb[0].mxu0
    %v8508 = vpop.f32.mrb[0].mxu0
    %v8509 = vadd.f32 0.0, %v8508
    %v8510 = vpop.f32.mrb[0].mxu0
    %8511 = vmatprep.mubr.bf16.mxu0 0
    %8512 = vmatmul.mubr.bf16.gmra.mrb[0].mxu0 %v8305
    %v8513 = vpop.f32.mrb[0].mxu0
    %v8514 = vadd.f32 0.0, %v8513
    %v8515 = vpop.f32.mrb[0].mxu0
    %v8516 = vpop.f32.mrb[0].mxu0
    %v8517 = vadd.f32 0.0, %v8516
    %v8518 = vpop.f32.mrb[0].mxu0
    %8519 = vmatprep.mubr.bf16.mxu0 0
    %8520 = vmatmul.mubr.bf16.gmra.mrb[0].mxu0 %v8306
    %v8521 = vpop.f32.mrb[0].mxu0
    %v8522 = vadd.f32 0.0, %v8521
    %v8523 = vpop.f32.mrb[0].mxu0
    %v8524 = vpop.f32.mrb[0].mxu0
    %v8525 = vadd.f32 0.0, %v8524
    %v8526 = vpop.f32.mrb[0].mxu0
    %8527 = vmatprep.mubr.bf16.mxu0 0
    %8528 = vmatmul.mubr.bf16.gmra.mrb[0].mxu0 %v8307
    %v8529 = vpop.f32.mrb[0].mxu0
    %v8530 = vadd.f32 0.0, %v8529
    %v8531 = vpop.f32.mrb[0].mxu0
    %v8532 = vpop.f32.mrb[0].mxu0
    %v8533 = vadd.f32 0.0, %v8532
    %v8534 = vpop.f32.mrb[0].mxu0
    %8535 = vmatprep.mubr.bf16.mxu0 0
    %8536 = vmatmul.mubr.bf16.gmra.mrb[0].mxu0 %v8308
    %v8537 = vpop.f32.mrb[0].mxu0
    %v8538 = vadd.f32 0.0, %v8537
    %v8539 = vpop.f32.mrb[0].mxu0
    %v8540 = vpop.f32.mrb[0].mxu0
    %v8541 = vadd.f32 0.0, %v8540
    %v8542 = vpop.f32.mrb[0].mxu0
    %8543 = vmatprep.mubr.bf16.mxu0 0
    %8544 = vmatmul.mubr.bf16.gmra.mrb[0].mxu0 %v8309
    %v8545 = vpop.f32.mrb[0].mxu0
    %v8546 = vadd.f32 0.0, %v8545
    %v8547 = vpop.f32.mrb[0].mxu0
    %v8548 = vpop.f32.mrb[0].mxu0
    %v8549 = vadd.f32 0.0, %v8548
    %v8550 = vpop.f32.mrb[0].mxu0
    %8551 = vmatprep.mubr.bf16.mxu0 0
    %8552 = vmatmul.mubr.bf16.gmra.mrb[0].mxu0 %v8310
    %v8553 = vpop.f32.mrb[0].mxu0
    %v8554 = vadd.f32 0.0, %v8553
    %v8555 = vpop.f32.mrb[0].mxu0
    %v8556 = vpop.f32.mrb[0].mxu0
    %v8557 = vadd.f32 0.0, %v8556
    %v8558 = vpop.f32.mrb[0].mxu0
    %8559 = vmatprep.mubr.bf16.mxu0 0
    %8560 = vmatmul.mubr.bf16.gmra.mrb[0].mxu0 %v8311
    %v8561 = vpop.f32.mrb[0].mxu0
    %v8562 = vadd.f32 0.0, %v8561
    %v8563 = vpop.f32.mrb[0].mxu0
    %v8564 = vpop.f32.mrb[0].mxu0
    %v8565 = vadd.f32 0.0, %v8564
    %v8566 = vpop.f32.mrb[0].mxu0
    %8567 = vmatprep.mubr.bf16.mxu0 0
    %8568 = vmatmul.mubr.bf16.gmra.mrb[0].mxu0 %v8312
    %v8569 = vpop.f32.mrb[0].mxu0
    %v8570 = vadd.f32 0.0, %v8569
    %v8571 = vpop.f32.mrb[0].mxu0
    %v8572 = vpop.f32.mrb[0].mxu0
    %v8573 = vadd.f32 0.0, %v8572
    %v8574 = vpop.f32.mrb[0].mxu0
    %8575 = vmatprep.mubr.bf16.mxu0 0
    %8576 = vmatmul.mubr.bf16.gmra.mrb[0].mxu0 %v8313
    %v8577 = vpop.f32.mrb[0].mxu0
    %v8578 = vadd.f32 0.0, %v8577
    %v8579 = vpop.f32.mrb[0].mxu0
    %v8580 = vpop.f32.mrb[0].mxu0
    %v8581 = vadd.f32 0.0, %v8580
    %v8582 = vpop.f32.mrb[0].mxu0
    %8583 = vmatprep.mubr.bf16.mxu0 0
    %8584 = vmatmul.mubr.bf16.gmra.mrb[0].mxu0 %v8314
    %v8585 = vpop.f32.mrb[0].mxu0
    %v8586 = vadd.f32 0.0, %v8585
    %v8587 = vpop.f32.mrb[0].mxu0
    %v8588 = vpop.f32.mrb[0].mxu0
    %v8589 = vadd.f32 0.0, %v8588
    %v8590 = vpop.f32.mrb[0].mxu0
    %8591 = vmatprep.mubr.bf16.mxu0 0
    %8592 = vmatmul.mubr.bf16.gmra.mrb[0].mxu0 %v8315
    %v8593 = vpop.f32.mrb[0].mxu0
    %v8594 = vadd.f32 0.0, %v8593
    %v8595 = vpop.f32.mrb[0].mxu0
    %v8596 = vpop.f32.mrb[0].mxu0
    %v8597 = vadd.f32 0.0, %v8596
    %v8598 = vpop.f32.mrb[0].mxu0
    %8599 = vmatprep.mubr.bf16.mxu0 0
    %8600 = vmatmul.mubr.bf16.gmra.mrb[0].mxu0 %v8316
    %v8601 = vpop.f32.mrb[0].mxu0
    %v8602 = vadd.f32 0.0, %v8601
    %v8603 = vpop.f32.mrb[0].mxu0
    %v8604 = vpop.f32.mrb[0].mxu0
    %v8605 = vadd.f32 0.0, %v8604
    %v8606 = vpop.f32.mrb[0].mxu0
    %8607 = vmatprep.mubr.bf16.mxu0 0
    %8608 = vmatmul.mubr.bf16.gmra.mrb[0].mxu0 %v8317
    %v8609 = vpop.f32.mrb[0].mxu0
    %v8610 = vadd.f32 0.0, %v8609
    %v8611 = vpop.f32.mrb[0].mxu0
    %v8612 = vpop.f32.mrb[0].mxu0
    %v8613 = vadd.f32 0.0, %v8612
    %v8614 = vpop.f32.mrb[0].mxu0
    %8615 = vdwg.mxu0
    %v8616 = vadd.f32 %v8158, %v8362
    %v8617 = vadd.f32 %v8159, %v8365
    %v8618 = vadd.f32 %v8160, %v8370
    %v8619 = vadd.f32 %v8161, %v8373
    %v8620 = vadd.f32 %v8162, %v8378
    %v8621 = vadd.f32 %v8163, %v8381
    %v8622 = vadd.f32 %v8164, %v8386
    %v8623 = vadd.f32 %v8165, %v8389
    %v8624 = vadd.f32 %v8166, %v8394
    %v8625 = vadd.f32 %v8167, %v8397
    %v8626 = vadd.f32 %v8168, %v8402
    %v8627 = vadd.f32 %v8169, %v8405
    %v8628 = vadd.f32 %v8170, %v8410
    %v8629 = vadd.f32 %v8171, %v8413
    %v8630 = vadd.f32 %v8172, %v8418
    %v8631 = vadd.f32 %v8173, %v8421
    %v8632 = vadd.f32 %v8174, %v8426
    %v8633 = vadd.f32 %v8175, %v8429
    %v8634 = vadd.f32 %v8176, %v8434
    %v8635 = vadd.f32 %v8177, %v8437
    %v8636 = vadd.f32 %v8178, %v8442
    %v8637 = vadd.f32 %v8179, %v8445
    %v8638 = vadd.f32 %v8180, %v8450
    %v8639 = vadd.f32 %v8181, %v8453
    %v8640 = vadd.f32 %v8182, %v8458
    %v8641 = vadd.f32 %v8183, %v8461
    %v8642 = vadd.f32 %v8184, %v8466
    %v8643 = vadd.f32 %v8185, %v8469
    %v8644 = vadd.f32 %v8186, %v8474
    %v8645 = vadd.f32 %v8187, %v8477
    %v8646 = vadd.f32 %v8188, %v8482
    %v8647 = vadd.f32 %v8189, %v8485
    %v8648 = vadd.f32 %v8190, %v8490
    %v8649 = vadd.f32 %v8191, %v8493
    %v8650 = vadd.f32 %v8192, %v8498
    %v8651 = vadd.f32 %v8193, %v8501
    %v8652 = vadd.f32 %v8194, %v8506
    %v8653 = vadd.f32 %v8195, %v8509
    %v8654 = vadd.f32 %v8196, %v8514
    %v8655 = vadd.f32 %v8197, %v8517
    %v8656 = vadd.f32 %v8198, %v8522
    %v8657 = vadd.f32 %v8199, %v8525
    %v8658 = vadd.f32 %v8200, %v8530
    %v8659 = vadd.f32 %v8201, %v8533
    %v8660 = vadd.f32 %v8202, %v8538
    %v8661 = vadd.f32 %v8203, %v8541
    %v8662 = vadd.f32 %v8204, %v8546
    %v8663 = vadd.f32 %v8205, %v8549
    %v8664 = vadd.f32 %v8206, %v8554
    %v8665 = vadd.f32 %v8207, %v8557
    %v8666 = vadd.f32 %v8208, %v8562
    %v8667 = vadd.f32 %v8209, %v8565
    %v8668 = vadd.f32 %v8210, %v8570
    %v8669 = vadd.f32 %v8211, %v8573
    %v8670 = vadd.f32 %v8212, %v8578
    %v8671 = vadd.f32 %v8213, %v8581
    %v8672 = vadd.f32 %v8214, %v8586
    %v8673 = vadd.f32 %v8215, %v8589
    %v8674 = vadd.f32 %v8216, %v8594
    %v8675 = vadd.f32 %v8217, %v8597
    %v8676 = vadd.f32 %v8218, %v8602
    %v8677 = vadd.f32 %v8219, %v8605
    %v8678 = vadd.f32 %v8220, %v8610
    %v8679 = vadd.f32 %v8221, %v8613
    %v8680 = vld [vmem:[%s3161 + $0x2] sm:$0xff]
    %v8681 = vld [vmem:[%s3161 + $0xa] sm:$0xff]
    %v8682 = vld [vmem:[%s3161 + $0x1a] sm:$0xff]
    %v8683 = vld [vmem:[%s3161 + $0x22] sm:$0xff]
    %v8684 = vld [vmem:[%s3161 + $0x32] sm:$0xff]
    %v8685 = vld [vmem:[%s3161 + $0x3a] sm:$0xff]
    %v8686 = vld [vmem:[%s3161 + $0x4a] sm:$0xff]
    %v8687 = vld [vmem:[%s3161 + $0x52] sm:$0xff]
    %v8688 = vld [vmem:[%s3161 + $0x62] sm:$0xff]
    %v8689 = vld [vmem:[%s3161 + $0x6a] sm:$0xff]
    %v8690 = vld [vmem:[%s3161 + $0x7a] sm:$0xff]
    %v8691 = vld [vmem:[%s3161 + $0x82] sm:$0xff]
    %v8692 = vld [vmem:[%s3161 + $0x92] sm:$0xff]
    %v8693 = vld [vmem:[%s3161 + $0x9a] sm:$0xff]
    %v8694 = vld [vmem:[%s3161 + $0xaa] sm:$0xff]
    %v8695 = vld [vmem:[%s3161 + $0xb2] sm:$0xff]
    %v8696 = vld [vmem:[%s3161 + $0xc2] sm:$0xff]
    %v8697 = vld [vmem:[%s3161 + $0xca] sm:$0xff]
    %v8698 = vld [vmem:[%s3161 + $0xda] sm:$0xff]
    %v8699 = vld [vmem:[%s3161 + $0xe2] sm:$0xff]
    %v8700 = vld [vmem:[%s3161 + $0xf2] sm:$0xff]
    %v8701 = vld [vmem:[%s3161 + $0xfa] sm:$0xff]
    %v8702 = vld [vmem:[%s3161 + $0x10a] sm:$0xff]
    %v8703 = vld [vmem:[%s3161 + $0x112] sm:$0xff]
    %v8704 = vld [vmem:[%s3161 + $0x122] sm:$0xff]
    %v8705 = vld [vmem:[%s3161 + $0x12a] sm:$0xff]
    %v8706 = vld [vmem:[%s3161 + $0x13a] sm:$0xff]
    %v8707 = vld [vmem:[%s3161 + $0x142] sm:$0xff]
    %v8708 = vld [vmem:[%s3161 + $0x152] sm:$0xff]
    %v8709 = vld [vmem:[%s3161 + $0x15a] sm:$0xff]
    %v8710 = vld [vmem:[%s3161 + $0x16a] sm:$0xff]
    %v8711 = vld [vmem:[%s3161 + $0x172] sm:$0xff]
    %v8712 = vld [vmem:[%s3161 + $0x1b2] sm:$0xff]
    %v8713 = vld [vmem:[%s3161 + $0x1ba] sm:$0xff]
    %v8714 = vld [vmem:[%s3161 + $0x1ca] sm:$0xff]
    %v8715 = vld [vmem:[%s3161 + $0x1d2] sm:$0xff]
    %v8716 = vld [vmem:[%s3161 + $0x1e2] sm:$0xff]
    %v8717 = vld [vmem:[%s3161 + $0x1ea] sm:$0xff]
    %v8718 = vld [vmem:[%s3161 + $0x1fa] sm:$0xff]
    %v8719 = vld [vmem:[%s3161 + $0x202] sm:$0xff]
    %v8720 = vld [vmem:[%s3161 + $0x212] sm:$0xff]
    %v8721 = vld [vmem:[%s3161 + $0x21a] sm:$0xff]
    %v8722 = vld [vmem:[%s3161 + $0x22a] sm:$0xff]
    %v8723 = vld [vmem:[%s3161 + $0x232] sm:$0xff]
    %v8724 = vld [vmem:[%s3161 + $0x242] sm:$0xff]
    %v8725 = vld [vmem:[%s3161 + $0x24a] sm:$0xff]
    %v8726 = vld [vmem:[%s3161 + $0x25a] sm:$0xff]
    %v8727 = vld [vmem:[%s3161 + $0x262] sm:$0xff]
    %v8728 = vld [vmem:[%s3161 + $0x272] sm:$0xff]
    %v8729 = vld [vmem:[%s3161 + $0x27a] sm:$0xff]
    %v8730 = vld [vmem:[%s3161 + $0x28a] sm:$0xff]
    %v8731 = vld [vmem:[%s3161 + $0x292] sm:$0xff]
    %v8732 = vld [vmem:[%s3161 + $0x2a2] sm:$0xff]
    %v8733 = vld [vmem:[%s3161 + $0x2aa] sm:$0xff]
    %v8734 = vld [vmem:[%s3161 + $0x2ba] sm:$0xff]
    %v8735 = vld [vmem:[%s3161 + $0x2c2] sm:$0xff]
    %v8736 = vld [vmem:[%s3161 + $0x2d2] sm:$0xff]
    %v8737 = vld [vmem:[%s3161 + $0x2da] sm:$0xff]
    %v8738 = vld [vmem:[%s3161 + $0x2ea] sm:$0xff]
    %v8739 = vld [vmem:[%s3161 + $0x2f2] sm:$0xff]
    %v8740 = vld [vmem:[%s3161 + $0x302] sm:$0xff]
    %v8741 = vld [vmem:[%s3161 + $0x30a] sm:$0xff]
    %v8742 = vld [vmem:[%s3161 + $0x31a] sm:$0xff]
    %v8743 = vld [vmem:[%s3161 + $0x322] sm:$0xff]
    %v8744 = vpack.c.bf16 %v8681, %v8680
    %v8745 = vpack.c.bf16 %v8683, %v8682
    %v8746 = vpack.c.bf16 %v8685, %v8684
    %v8747 = vpack.c.bf16 %v8687, %v8686
    %v8748 = vpack.c.bf16 %v8689, %v8688
    %v8749 = vpack.c.bf16 %v8691, %v8690
    %v8750 = vpack.c.bf16 %v8693, %v8692
    %v8751 = vpack.c.bf16 %v8695, %v8694
    %v8752 = vpack.c.bf16 %v8697, %v8696
    %v8753 = vpack.c.bf16 %v8699, %v8698
    %v8754 = vpack.c.bf16 %v8701, %v8700
    %v8755 = vpack.c.bf16 %v8703, %v8702
    %v8756 = vpack.c.bf16 %v8705, %v8704
    %v8757 = vpack.c.bf16 %v8707, %v8706
    %v8758 = vpack.c.bf16 %v8709, %v8708
    %v8759 = vpack.c.bf16 %v8711, %v8710
    %v8760 = vpack.c.bf16 %v8713, %v8712
    %v8761 = vpack.c.bf16 %v8715, %v8714
    %v8762 = vpack.c.bf16 %v8717, %v8716
    %v8763 = vpack.c.bf16 %v8719, %v8718
    %v8764 = vpack.c.bf16 %v8721, %v8720
    %v8765 = vpack.c.bf16 %v8723, %v8722
    %v8766 = vpack.c.bf16 %v8725, %v8724
    %v8767 = vpack.c.bf16 %v8727, %v8726
    %v8768 = vpack.c.bf16 %v8729, %v8728
    %v8769 = vpack.c.bf16 %v8731, %v8730
    %v8770 = vpack.c.bf16 %v8733, %v8732
    %v8771 = vpack.c.bf16 %v8735, %v8734
    %v8772 = vpack.c.bf16 %v8737, %v8736
    %v8773 = vpack.c.bf16 %v8739, %v8738
    %v8774 = vpack.c.bf16 %v8741, %v8740
    %v8775 = vpack.c.bf16 %v8743, %v8742
    %s8776 = scalar_lea.vmem [#allocation4], 512
    %v8777 = vld [vmem:[%s8776] sm:$0xff]
    %v8778 = vld [vmem:[%s8776 + $0x8] sm:$0xff]
    %v8779 = vld [vmem:[%s8776 + $0x10] sm:$0xff]
    %v8780 = vld [vmem:[%s8776 + $0x18] sm:$0xff]
    %v8781 = vld [vmem:[%s8776 + $0x20] sm:$0xff]
    %v8782 = vld [vmem:[%s8776 + $0x28] sm:$0xff]
    %v8783 = vld [vmem:[%s8776 + $0x30] sm:$0xff]
    %v8784 = vld [vmem:[%s8776 + $0x38] sm:$0xff]
    %8785 = vmatprep.subr.bf16.mxu0 0
    %8786 = vmatpush1.bf16.msra.mxu0 %v8777
    %8787 = vmatprep.subr.bf16.mxu0 0
    %8788 = vmatpush1.bf16.msra.mxu0 %v8778
    %8789 = vmatprep.subr.bf16.mxu0 0
    %8790 = vmatpush1.bf16.msra.mxu0 %v8779
    %8791 = vmatprep.subr.bf16.mxu0 0
    %8792 = vmatpush1.bf16.msra.mxu0 %v8780
    %8793 = vmatprep.subr.bf16.mxu0 0
    %8794 = vmatpush1.bf16.msra.mxu0 %v8781
    %8795 = vmatprep.subr.bf16.mxu0 0
    %8796 = vmatpush1.bf16.msra.mxu0 %v8782
    %8797 = vmatprep.subr.bf16.mxu0 0
    %8798 = vmatpush1.bf16.msra.mxu0 %v8783
    %8799 = vmatprep.subr.bf16.mxu0 0
    %8800 = vmatpush1.bf16.msra.mxu0 %v8784
    %8801 = vmatprep.subr.bf16.mxu0 0
    %8802 = vmatpush1.bf16.msra.mxu0 0
    %8803 = vmatprep.subr.bf16.mxu0 0
    %8804 = vmatpush1.bf16.msra.mxu0 0
    %8805 = vmatprep.subr.bf16.mxu0 0
    %8806 = vmatpush1.bf16.msra.mxu0 0
    %8807 = vmatprep.subr.bf16.mxu0 0
    %8808 = vmatpush1.bf16.msra.mxu0 0
    %8809 = vmatprep.subr.bf16.mxu0 0
    %8810 = vmatpush1.bf16.msra.mxu0 0
    %8811 = vmatprep.subr.bf16.mxu0 0
    %8812 = vmatpush1.bf16.msra.mxu0 0
    %8813 = vmatprep.subr.bf16.mxu0 0
    %8814 = vmatpush1.bf16.msra.mxu0 0
    %8815 = vmatprep.subr.bf16.mxu0 0
    %8816 = vmatpush1.bf16.msra.mxu0 0
    %8817 = vmatprep.mubr.bf16.mxu0 0
    %8818 = vmatmul.mubr.bf16.gmra.mrb[0].mxu0 %v8744
    %v8819 = vpop.f32.mrb[0].mxu0
    %v8820 = vadd.f32 0.0, %v8819
    %v8821 = vpop.f32.mrb[0].mxu0
    %v8822 = vpop.f32.mrb[0].mxu0
    %v8823 = vadd.f32 0.0, %v8822
    %v8824 = vpop.f32.mrb[0].mxu0
    %8825 = vmatprep.mubr.bf16.mxu0 0
    %8826 = vmatmul.mubr.bf16.gmra.mrb[0].mxu0 %v8745
    %v8827 = vpop.f32.mrb[0].mxu0
    %v8828 = vadd.f32 0.0, %v8827
    %v8829 = vpop.f32.mrb[0].mxu0
    %v8830 = vpop.f32.mrb[0].mxu0
    %v8831 = vadd.f32 0.0, %v8830
    %v8832 = vpop.f32.mrb[0].mxu0
    %8833 = vmatprep.mubr.bf16.mxu0 0
    %8834 = vmatmul.mubr.bf16.gmra.mrb[0].mxu0 %v8746
    %v8835 = vpop.f32.mrb[0].mxu0
    %v8836 = vadd.f32 0.0, %v8835
    %v8837 = vpop.f32.mrb[0].mxu0
    %v8838 = vpop.f32.mrb[0].mxu0
    %v8839 = vadd.f32 0.0, %v8838
    %v8840 = vpop.f32.mrb[0].mxu0
    %8841 = vmatprep.mubr.bf16.mxu0 0
    %8842 = vmatmul.mubr.bf16.gmra.mrb[0].mxu0 %v8747
    %v8843 = vpop.f32.mrb[0].mxu0
    %v8844 = vadd.f32 0.0, %v8843
    %v8845 = vpop.f32.mrb[0].mxu0
    %v8846 = vpop.f32.mrb[0].mxu0
    %v8847 = vadd.f32 0.0, %v8846
    %v8848 = vpop.f32.mrb[0].mxu0
    %8849 = vmatprep.mubr.bf16.mxu0 0
    %8850 = vmatmul.mubr.bf16.gmra.mrb[0].mxu0 %v8748
    %v8851 = vpop.f32.mrb[0].mxu0
    %v8852 = vadd.f32 0.0, %v8851
    %v8853 = vpop.f32.mrb[0].mxu0
    %v8854 = vpop.f32.mrb[0].mxu0
    %v8855 = vadd.f32 0.0, %v8854
    %v8856 = vpop.f32.mrb[0].mxu0
    %8857 = vmatprep.mubr.bf16.mxu0 0
    %8858 = vmatmul.mubr.bf16.gmra.mrb[0].mxu0 %v8749
    %v8859 = vpop.f32.mrb[0].mxu0
    %v8860 = vadd.f32 0.0, %v8859
    %v8861 = vpop.f32.mrb[0].mxu0
    %v8862 = vpop.f32.mrb[0].mxu0
    %v8863 = vadd.f32 0.0, %v8862
    %v8864 = vpop.f32.mrb[0].mxu0
    %8865 = vmatprep.mubr.bf16.mxu0 0
    %8866 = vmatmul.mubr.bf16.gmra.mrb[0].mxu0 %v8750
    %v8867 = vpop.f32.mrb[0].mxu0
    %v8868 = vadd.f32 0.0, %v8867
    %v8869 = vpop.f32.mrb[0].mxu0
    %v8870 = vpop.f32.mrb[0].mxu0
    %v8871 = vadd.f32 0.0, %v8870
    %v8872 = vpop.f32.mrb[0].mxu0
    %8873 = vmatprep.mubr.bf16.mxu0 0
    %8874 = vmatmul.mubr.bf16.gmra.mrb[0].mxu0 %v8751
    %v8875 = vpop.f32.mrb[0].mxu0
    %v8876 = vadd.f32 0.0, %v8875
    %v8877 = vpop.f32.mrb[0].mxu0
    %v8878 = vpop.f32.mrb[0].mxu0
    %v8879 = vadd.f32 0.0, %v8878
    %v8880 = vpop.f32.mrb[0].mxu0
    %8881 = vmatprep.mubr.bf16.mxu0 0
    %8882 = vmatmul.mubr.bf16.gmra.mrb[0].mxu0 %v8752
    %v8883 = vpop.f32.mrb[0].mxu0
    %v8884 = vadd.f32 0.0, %v8883
    %v8885 = vpop.f32.mrb[0].mxu0
    %v8886 = vpop.f32.mrb[0].mxu0
    %v8887 = vadd.f32 0.0, %v8886
    %v8888 = vpop.f32.mrb[0].mxu0
    %8889 = vmatprep.mubr.bf16.mxu0 0
    %8890 = vmatmul.mubr.bf16.gmra.mrb[0].mxu0 %v8753
    %v8891 = vpop.f32.mrb[0].mxu0
    %v8892 = vadd.f32 0.0, %v8891
    %v8893 = vpop.f32.mrb[0].mxu0
    %v8894 = vpop.f32.mrb[0].mxu0
    %v8895 = vadd.f32 0.0, %v8894
    %v8896 = vpop.f32.mrb[0].mxu0
    %8897 = vmatprep.mubr.bf16.mxu0 0
    %8898 = vmatmul.mubr.bf16.gmra.mrb[0].mxu0 %v8754
    %v8899 = vpop.f32.mrb[0].mxu0
    %v8900 = vadd.f32 0.0, %v8899
    %v8901 = vpop.f32.mrb[0].mxu0
    %v8902 = vpop.f32.mrb[0].mxu0
    %v8903 = vadd.f32 0.0, %v8902
    %v8904 = vpop.f32.mrb[0].mxu0
    %8905 = vmatprep.mubr.bf16.mxu0 0
    %8906 = vmatmul.mubr.bf16.gmra.mrb[0].mxu0 %v8755
    %v8907 = vpop.f32.mrb[0].mxu0
    %v8908 = vadd.f32 0.0, %v8907
    %v8909 = vpop.f32.mrb[0].mxu0
    %v8910 = vpop.f32.mrb[0].mxu0
    %v8911 = vadd.f32 0.0, %v8910
    %v8912 = vpop.f32.mrb[0].mxu0
    %8913 = vmatprep.mubr.bf16.mxu0 0
    %8914 = vmatmul.mubr.bf16.gmra.mrb[0].mxu0 %v8756
    %v8915 = vpop.f32.mrb[0].mxu0
    %v8916 = vadd.f32 0.0, %v8915
    %v8917 = vpop.f32.mrb[0].mxu0
    %v8918 = vpop.f32.mrb[0].mxu0
    %v8919 = vadd.f32 0.0, %v8918
    %v8920 = vpop.f32.mrb[0].mxu0
    %8921 = vmatprep.mubr.bf16.mxu0 0
    %8922 = vmatmul.mubr.bf16.gmra.mrb[0].mxu0 %v8757
    %v8923 = vpop.f32.mrb[0].mxu0
    %v8924 = vadd.f32 0.0, %v8923
    %v8925 = vpop.f32.mrb[0].mxu0
    %v8926 = vpop.f32.mrb[0].mxu0
    %v8927 = vadd.f32 0.0, %v8926
    %v8928 = vpop.f32.mrb[0].mxu0
    %8929 = vmatprep.mubr.bf16.mxu0 0
    %8930 = vmatmul.mubr.bf16.gmra.mrb[0].mxu0 %v8758
    %v8931 = vpop.f32.mrb[0].mxu0
    %v8932 = vadd.f32 0.0, %v8931
    %v8933 = vpop.f32.mrb[0].mxu0
    %v8934 = vpop.f32.mrb[0].mxu0
    %v8935 = vadd.f32 0.0, %v8934
    %v8936 = vpop.f32.mrb[0].mxu0
    %8937 = vmatprep.mubr.bf16.mxu0 0
    %8938 = vmatmul.mubr.bf16.gmra.mrb[0].mxu0 %v8759
    %v8939 = vpop.f32.mrb[0].mxu0
    %v8940 = vadd.f32 0.0, %v8939
    %v8941 = vpop.f32.mrb[0].mxu0
    %v8942 = vpop.f32.mrb[0].mxu0
    %v8943 = vadd.f32 0.0, %v8942
    %v8944 = vpop.f32.mrb[0].mxu0
    %8945 = vmatprep.mubr.bf16.mxu0 0
    %8946 = vmatmul.mubr.bf16.gmra.mrb[0].mxu0 %v8760
    %v8947 = vpop.f32.mrb[0].mxu0
    %v8948 = vadd.f32 0.0, %v8947
    %v8949 = vpop.f32.mrb[0].mxu0
    %v8950 = vpop.f32.mrb[0].mxu0
    %v8951 = vadd.f32 0.0, %v8950
    %v8952 = vpop.f32.mrb[0].mxu0
    %8953 = vmatprep.mubr.bf16.mxu0 0
    %8954 = vmatmul.mubr.bf16.gmra.mrb[0].mxu0 %v8761
    %v8955 = vpop.f32.mrb[0].mxu0
    %v8956 = vadd.f32 0.0, %v8955
    %v8957 = vpop.f32.mrb[0].mxu0
    %v8958 = vpop.f32.mrb[0].mxu0
    %v8959 = vadd.f32 0.0, %v8958
    %v8960 = vpop.f32.mrb[0].mxu0
    %8961 = vmatprep.mubr.bf16.mxu0 0
    %8962 = vmatmul.mubr.bf16.gmra.mrb[0].mxu0 %v8762
    %v8963 = vpop.f32.mrb[0].mxu0
    %v8964 = vadd.f32 0.0, %v8963
    %v8965 = vpop.f32.mrb[0].mxu0
    %v8966 = vpop.f32.mrb[0].mxu0
    %v8967 = vadd.f32 0.0, %v8966
    %v8968 = vpop.f32.mrb[0].mxu0
    %8969 = vmatprep.mubr.bf16.mxu0 0
    %8970 = vmatmul.mubr.bf16.gmra.mrb[0].mxu0 %v8763
    %v8971 = vpop.f32.mrb[0].mxu0
    %v8972 = vadd.f32 0.0, %v8971
    %v8973 = vpop.f32.mrb[0].mxu0
    %v8974 = vpop.f32.mrb[0].mxu0
    %v8975 = vadd.f32 0.0, %v8974
    %v8976 = vpop.f32.mrb[0].mxu0
    %8977 = vmatprep.mubr.bf16.mxu0 0
    %8978 = vmatmul.mubr.bf16.gmra.mrb[0].mxu0 %v8764
    %v8979 = vpop.f32.mrb[0].mxu0
    %v8980 = vadd.f32 0.0, %v8979
    %v8981 = vpop.f32.mrb[0].mxu0
    %v8982 = vpop.f32.mrb[0].mxu0
    %v8983 = vadd.f32 0.0, %v8982
    %v8984 = vpop.f32.mrb[0].mxu0
    %8985 = vmatprep.mubr.bf16.mxu0 0
    %8986 = vmatmul.mubr.bf16.gmra.mrb[0].mxu0 %v8765
    %v8987 = vpop.f32.mrb[0].mxu0
    %v8988 = vadd.f32 0.0, %v8987
    %v8989 = vpop.f32.mrb[0].mxu0
    %v8990 = vpop.f32.mrb[0].mxu0
    %v8991 = vadd.f32 0.0, %v8990
    %v8992 = vpop.f32.mrb[0].mxu0
    %8993 = vmatprep.mubr.bf16.mxu0 0
    %8994 = vmatmul.mubr.bf16.gmra.mrb[0].mxu0 %v8766
    %v8995 = vpop.f32.mrb[0].mxu0
    %v8996 = vadd.f32 0.0, %v8995
    %v8997 = vpop.f32.mrb[0].mxu0
    %v8998 = vpop.f32.mrb[0].mxu0
    %v8999 = vadd.f32 0.0, %v8998
    %v9000 = vpop.f32.mrb[0].mxu0
    %9001 = vmatprep.mubr.bf16.mxu0 0
    %9002 = vmatmul.mubr.bf16.gmra.mrb[0].mxu0 %v8767
    %v9003 = vpop.f32.mrb[0].mxu0
    %v9004 = vadd.f32 0.0, %v9003
    %v9005 = vpop.f32.mrb[0].mxu0
    %v9006 = vpop.f32.mrb[0].mxu0
    %v9007 = vadd.f32 0.0, %v9006
    %v9008 = vpop.f32.mrb[0].mxu0
    %9009 = vmatprep.mubr.bf16.mxu0 0
    %9010 = vmatmul.mubr.bf16.gmra.mrb[0].mxu0 %v8768
    %v9011 = vpop.f32.mrb[0].mxu0
    %v9012 = vadd.f32 0.0, %v9011
    %v9013 = vpop.f32.mrb[0].mxu0
    %v9014 = vpop.f32.mrb[0].mxu0
    %v9015 = vadd.f32 0.0, %v9014
    %v9016 = vpop.f32.mrb[0].mxu0
    %9017 = vmatprep.mubr.bf16.mxu0 0
    %9018 = vmatmul.mubr.bf16.gmra.mrb[0].mxu0 %v8769
    %v9019 = vpop.f32.mrb[0].mxu0
    %v9020 = vadd.f32 0.0, %v9019
    %v9021 = vpop.f32.mrb[0].mxu0
    %v9022 = vpop.f32.mrb[0].mxu0
    %v9023 = vadd.f32 0.0, %v9022
    %v9024 = vpop.f32.mrb[0].mxu0
    %9025 = vmatprep.mubr.bf16.mxu0 0
    %9026 = vmatmul.mubr.bf16.gmra.mrb[0].mxu0 %v8770
    %v9027 = vpop.f32.mrb[0].mxu0
    %v9028 = vadd.f32 0.0, %v9027
    %v9029 = vpop.f32.mrb[0].mxu0
    %v9030 = vpop.f32.mrb[0].mxu0
    %v9031 = vadd.f32 0.0, %v9030
    %v9032 = vpop.f32.mrb[0].mxu0
    %9033 = vmatprep.mubr.bf16.mxu0 0
    %9034 = vmatmul.mubr.bf16.gmra.mrb[0].mxu0 %v8771
    %v9035 = vpop.f32.mrb[0].mxu0
    %v9036 = vadd.f32 0.0, %v9035
    %v9037 = vpop.f32.mrb[0].mxu0
    %v9038 = vpop.f32.mrb[0].mxu0
    %v9039 = vadd.f32 0.0, %v9038
    %v9040 = vpop.f32.mrb[0].mxu0
    %9041 = vmatprep.mubr.bf16.mxu0 0
    %9042 = vmatmul.mubr.bf16.gmra.mrb[0].mxu0 %v8772
    %v9043 = vpop.f32.mrb[0].mxu0
    %v9044 = vadd.f32 0.0, %v9043
    %v9045 = vpop.f32.mrb[0].mxu0
    %v9046 = vpop.f32.mrb[0].mxu0
    %v9047 = vadd.f32 0.0, %v9046
    %v9048 = vpop.f32.mrb[0].mxu0
    %9049 = vmatprep.mubr.bf16.mxu0 0
    %9050 = vmatmul.mubr.bf16.gmra.mrb[0].mxu0 %v8773
    %v9051 = vpop.f32.mrb[0].mxu0
    %v9052 = vadd.f32 0.0, %v9051
    %v9053 = vpop.f32.mrb[0].mxu0
    %v9054 = vpop.f32.mrb[0].mxu0
    %v9055 = vadd.f32 0.0, %v9054
    %v9056 = vpop.f32.mrb[0].mxu0
    %9057 = vmatprep.mubr.bf16.mxu0 0
    %9058 = vmatmul.mubr.bf16.gmra.mrb[0].mxu0 %v8774
    %v9059 = vpop.f32.mrb[0].mxu0
    %v9060 = vadd.f32 0.0, %v9059
    %v9061 = vpop.f32.mrb[0].mxu0
    %v9062 = vpop.f32.mrb[0].mxu0
    %v9063 = vadd.f32 0.0, %v9062
    %v9064 = vpop.f32.mrb[0].mxu0
    %9065 = vmatprep.mubr.bf16.mxu0 0
    %9066 = vmatmul.mubr.bf16.gmra.mrb[0].mxu0 %v8775
    %v9067 = vpop.f32.mrb[0].mxu0
    %v9068 = vadd.f32 0.0, %v9067
    %v9069 = vpop.f32.mrb[0].mxu0
    %v9070 = vpop.f32.mrb[0].mxu0
    %v9071 = vadd.f32 0.0, %v9070
    %v9072 = vpop.f32.mrb[0].mxu0
    %9073 = vdwg.mxu0
    %v9074 = vadd.f32 %v8616, %v8820
    %v9075 = vadd.f32 %v8617, %v8823
    %v9076 = vadd.f32 %v8618, %v8828
    %v9077 = vadd.f32 %v8619, %v8831
    %v9078 = vadd.f32 %v8620, %v8836
    %v9079 = vadd.f32 %v8621, %v8839
    %v9080 = vadd.f32 %v8622, %v8844
    %v9081 = vadd.f32 %v8623, %v8847
    %v9082 = vadd.f32 %v8624, %v8852
    %v9083 = vadd.f32 %v8625, %v8855
    %v9084 = vadd.f32 %v8626, %v8860
    %v9085 = vadd.f32 %v8627, %v8863
    %v9086 = vadd.f32 %v8628, %v8868
    %v9087 = vadd.f32 %v8629, %v8871
    %v9088 = vadd.f32 %v8630, %v8876
    %v9089 = vadd.f32 %v8631, %v8879
    %v9090 = vadd.f32 %v8632, %v8884
    %v9091 = vadd.f32 %v8633, %v8887
    %v9092 = vadd.f32 %v8634, %v8892
    %v9093 = vadd.f32 %v8635, %v8895
    %v9094 = vadd.f32 %v8636, %v8900
    %v9095 = vadd.f32 %v8637, %v8903
    %v9096 = vadd.f32 %v8638, %v8908
    %v9097 = vadd.f32 %v8639, %v8911
    %v9098 = vadd.f32 %v8640, %v8916
    %v9099 = vadd.f32 %v8641, %v8919
    %v9100 = vadd.f32 %v8642, %v8924
    %v9101 = vadd.f32 %v8643, %v8927
    %v9102 = vadd.f32 %v8644, %v8932
    %v9103 = vadd.f32 %v8645, %v8935
    %v9104 = vadd.f32 %v8646, %v8940
    %v9105 = vadd.f32 %v8647, %v8943
    %v9106 = vadd.f32 %v8648, %v8948
    %v9107 = vadd.f32 %v8649, %v8951
    %v9108 = vadd.f32 %v8650, %v8956
    %v9109 = vadd.f32 %v8651, %v8959
    %v9110 = vadd.f32 %v8652, %v8964
    %v9111 = vadd.f32 %v8653, %v8967
    %v9112 = vadd.f32 %v8654, %v8972
    %v9113 = vadd.f32 %v8655, %v8975
    %v9114 = vadd.f32 %v8656, %v8980
    %v9115 = vadd.f32 %v8657, %v8983
    %v9116 = vadd.f32 %v8658, %v8988
    %v9117 = vadd.f32 %v8659, %v8991
    %v9118 = vadd.f32 %v8660, %v8996
    %v9119 = vadd.f32 %v8661, %v8999
    %v9120 = vadd.f32 %v8662, %v9004
    %v9121 = vadd.f32 %v8663, %v9007
    %v9122 = vadd.f32 %v8664, %v9012
    %v9123 = vadd.f32 %v8665, %v9015
    %v9124 = vadd.f32 %v8666, %v9020
    %v9125 = vadd.f32 %v8667, %v9023
    %v9126 = vadd.f32 %v8668, %v9028
    %v9127 = vadd.f32 %v8669, %v9031
    %v9128 = vadd.f32 %v8670, %v9036
    %v9129 = vadd.f32 %v8671, %v9039
    %v9130 = vadd.f32 %v8672, %v9044
    %v9131 = vadd.f32 %v8673, %v9047
    %v9132 = vadd.f32 %v8674, %v9052
    %v9133 = vadd.f32 %v8675, %v9055
    %v9134 = vadd.f32 %v8676, %v9060
    %v9135 = vadd.f32 %v8677, %v9063
    %v9136 = vadd.f32 %v8678, %v9068
    %v9137 = vadd.f32 %v8679, %v9071
    %v9138 = vadd.f32 %v9074, %v9075
    %v9139 = vadd.f32 %v9138, %v9076
    %v9140 = vadd.f32 %v9139, %v9077
    %v9141 = vadd.f32 %v9140, %v9078
    %v9142 = vadd.f32 %v9141, %v9079
    %v9143 = vadd.f32 %v9142, %v9080
    %v9144 = vadd.f32 %v9143, %v9081
    %v9145 = vadd.f32 %v9144, %v9082
    %v9146 = vadd.f32 %v9145, %v9083
    %v9147 = vadd.f32 %v9146, %v9084
    %v9148 = vadd.f32 %v9147, %v9085
    %v9149 = vadd.f32 %v9148, %v9086
    %v9150 = vadd.f32 %v9149, %v9087
    %v9151 = vadd.f32 %v9150, %v9088
    %v9152 = vadd.f32 %v9151, %v9089
    %v9153 = vadd.f32 %v9152, %v9090
    %v9154 = vadd.f32 %v9153, %v9091
    %v9155 = vadd.f32 %v9154, %v9092
    %v9156 = vadd.f32 %v9155, %v9093
    %v9157 = vadd.f32 %v9156, %v9094
    %v9158 = vadd.f32 %v9157, %v9095
    %v9159 = vadd.f32 %v9158, %v9096
    %v9160 = vadd.f32 %v9159, %v9097
    %v9161 = vadd.f32 %v9160, %v9098
    %v9162 = vadd.f32 %v9161, %v9099
    %v9163 = vadd.f32 %v9162, %v9100
    %v9164 = vadd.f32 %v9163, %v9101
    %v9165 = vadd.f32 %v9164, %v9102
    %v9166 = vadd.f32 %v9165, %v9103
    %v9167 = vadd.f32 %v9166, %v9104
    %v9168 = vadd.f32 %v9167, %v9105
    %v9169 = vadd.f32 %v9168, %v9106
    %v9170 = vadd.f32 %v9169, %v9107
    %v9171 = vadd.f32 %v9170, %v9108
    %v9172 = vadd.f32 %v9171, %v9109
    %v9173 = vadd.f32 %v9172, %v9110
    %v9174 = vadd.f32 %v9173, %v9111
    %v9175 = vadd.f32 %v9174, %v9112
    %v9176 = vadd.f32 %v9175, %v9113
    %v9177 = vadd.f32 %v9176, %v9114
    %v9178 = vadd.f32 %v9177, %v9115
    %v9179 = vadd.f32 %v9178, %v9116
    %v9180 = vadd.f32 %v9179, %v9117
    %v9181 = vadd.f32 %v9180, %v9118
    %v9182 = vadd.f32 %v9181, %v9119
    %v9183 = vadd.f32 %v9182, %v9120
    %v9184 = vadd.f32 %v9183, %v9121
    %v9185 = vadd.f32 %v9184, %v9122
    %v9186 = vadd.f32 %v9185, %v9123
    %v9187 = vadd.f32 %v9186, %v9124
    %v9188 = vadd.f32 %v9187, %v9125
    %v9189 = vadd.f32 %v9188, %v9126
    %v9190 = vadd.f32 %v9189, %v9127
    %v9191 = vadd.f32 %v9190, %v9128
    %v9192 = vadd.f32 %v9191, %v9129
    %v9193 = vadd.f32 %v9192, %v9130
    %v9194 = vadd.f32 %v9193, %v9131
    %v9195 = vadd.f32 %v9194, %v9132
    %v9196 = vadd.f32 %v9195, %v9133
    %v9197 = vadd.f32 %v9196, %v9134
    %v9198 = vadd.f32 %v9197, %v9135
    %v9199 = vadd.f32 %v9198, %v9136
    %v9200 = vadd.f32 %v9199, %v9137
    %v9201 = vrot.slane %v9200, 4
    %v9202 = vadd.f32 %v9200, %v9201
    %v9203 = vrot.slane %v9202, 2
    %v9204 = vadd.f32 %v9202, %v9203
    %v9205 = vrot.slane %v9204, 1
    %v9206 = vadd.f32 %v9204, %v9205
    %v9207 = vmul.f32 %v9206, 0.001953125
    %v9208 = vmul.f32 %v9074, %v9074
    %v9209 = vmul.f32 %v9075, %v9075
    %v9210 = vmul.f32 %v9076, %v9076
    %v9211 = vmul.f32 %v9077, %v9077
    %v9212 = vmul.f32 %v9078, %v9078
    %v9213 = vmul.f32 %v9079, %v9079
    %v9214 = vmul.f32 %v9080, %v9080
    %v9215 = vmul.f32 %v9081, %v9081
    %v9216 = vmul.f32 %v9082, %v9082
    %v9217 = vmul.f32 %v9083, %v9083
    %v9218 = vmul.f32 %v9084, %v9084
    %v9219 = vmul.f32 %v9085, %v9085
    %v9220 = vmul.f32 %v9086, %v9086
    %v9221 = vmul.f32 %v9087, %v9087
    %v9222 = vmul.f32 %v9088, %v9088
    %v9223 = vmul.f32 %v9089, %v9089
    %v9224 = vmul.f32 %v9090, %v9090
    %v9225 = vmul.f32 %v9091, %v9091
    %v9226 = vmul.f32 %v9092, %v9092
    %v9227 = vmul.f32 %v9093, %v9093
    %v9228 = vmul.f32 %v9094, %v9094
    %v9229 = vmul.f32 %v9095, %v9095
    %v9230 = vmul.f32 %v9096, %v9096
    %v9231 = vmul.f32 %v9097, %v9097
    %v9232 = vmul.f32 %v9098, %v9098
    %v9233 = vmul.f32 %v9099, %v9099
    %v9234 = vmul.f32 %v9100, %v9100
    %v9235 = vmul.f32 %v9101, %v9101
    %v9236 = vmul.f32 %v9102, %v9102
    %v9237 = vmul.f32 %v9103, %v9103
    %v9238 = vmul.f32 %v9104, %v9104
    %v9239 = vmul.f32 %v9105, %v9105
    %v9240 = vmul.f32 %v9106, %v9106
    %v9241 = vmul.f32 %v9107, %v9107
    %v9242 = vmul.f32 %v9108, %v9108
    %v9243 = vmul.f32 %v9109, %v9109
    %v9244 = vmul.f32 %v9110, %v9110
    %v9245 = vmul.f32 %v9111, %v9111
    %v9246 = vmul.f32 %v9112, %v9112
    %v9247 = vmul.f32 %v9113, %v9113
    %v9248 = vmul.f32 %v9114, %v9114
    %v9249 = vmul.f32 %v9115, %v9115
    %v9250 = vmul.f32 %v9116, %v9116
    %v9251 = vmul.f32 %v9117, %v9117
    %v9252 = vmul.f32 %v9118, %v9118
    %v9253 = vmul.f32 %v9119, %v9119
    %v9254 = vmul.f32 %v9120, %v9120
    %v9255 = vmul.f32 %v9121, %v9121
    %v9256 = vmul.f32 %v9122, %v9122
    %v9257 = vmul.f32 %v9123, %v9123
    %v9258 = vmul.f32 %v9124, %v9124
    %v9259 = vmul.f32 %v9125, %v9125
    %v9260 = vmul.f32 %v9126, %v9126
    %v9261 = vmul.f32 %v9127, %v9127
    %v9262 = vmul.f32 %v9128, %v9128
    %v9263 = vmul.f32 %v9129, %v9129
    %v9264 = vmul.f32 %v9130, %v9130
    %v9265 = vmul.f32 %v9131, %v9131
    %v9266 = vmul.f32 %v9132, %v9132
    %v9267 = vmul.f32 %v9133, %v9133
    %v9268 = vmul.f32 %v9134, %v9134
    %v9269 = vmul.f32 %v9135, %v9135
    %v9270 = vmul.f32 %v9136, %v9136
    %v9271 = vmul.f32 %v9137, %v9137
    %v9272 = vadd.f32 %v9208, %v9209
    %v9273 = vadd.f32 %v9272, %v9210
    %v9274 = vadd.f32 %v9273, %v9211
    %v9275 = vadd.f32 %v9274, %v9212
    %v9276 = vadd.f32 %v9275, %v9213
    %v9277 = vadd.f32 %v9276, %v9214
    %v9278 = vadd.f32 %v9277, %v9215
    %v9279 = vadd.f32 %v9278, %v9216
    %v9280 = vadd.f32 %v9279, %v9217
    %v9281 = vadd.f32 %v9280, %v9218
    %v9282 = vadd.f32 %v9281, %v9219
    %v9283 = vadd.f32 %v9282, %v9220
    %v9284 = vadd.f32 %v9283, %v9221
    %v9285 = vadd.f32 %v9284, %v9222
    %v9286 = vadd.f32 %v9285, %v9223
    %v9287 = vadd.f32 %v9286, %v9224
    %v9288 = vadd.f32 %v9287, %v9225
    %v9289 = vadd.f32 %v9288, %v9226
    %v9290 = vadd.f32 %v9289, %v9227
    %v9291 = vadd.f32 %v9290, %v9228
    %v9292 = vadd.f32 %v9291, %v9229
    %v9293 = vadd.f32 %v9292, %v9230
    %v9294 = vadd.f32 %v9293, %v9231
    %v9295 = vadd.f32 %v9294, %v9232
    %v9296 = vadd.f32 %v9295, %v9233
    %v9297 = vadd.f32 %v9296, %v9234
    %v9298 = vadd.f32 %v9297, %v9235
    %v9299 = vadd.f32 %v9298, %v9236
    %v9300 = vadd.f32 %v9299, %v9237
    %v9301 = vadd.f32 %v9300, %v9238
    %v9302 = vadd.f32 %v9301, %v9239
    %v9303 = vadd.f32 %v9302, %v9240
    %v9304 = vadd.f32 %v9303, %v9241
    %v9305 = vadd.f32 %v9304, %v9242
    %v9306 = vadd.f32 %v9305, %v9243
    %v9307 = vadd.f32 %v9306, %v9244
    %v9308 = vadd.f32 %v9307, %v9245
    %v9309 = vadd.f32 %v9308, %v9246
    %v9310 = vadd.f32 %v9309, %v9247
    %v9311 = vadd.f32 %v9310, %v9248
    %v9312 = vadd.f32 %v9311, %v9249
    %v9313 = vadd.f32 %v9312, %v9250
    %v9314 = vadd.f32 %v9313, %v9251
    %v9315 = vadd.f32 %v9314, %v9252
    %v9316 = vadd.f32 %v9315, %v9253
    %v9317 = vadd.f32 %v9316, %v9254
    %v9318 = vadd.f32 %v9317, %v9255
    %v9319 = vadd.f32 %v9318, %v9256
    %v9320 = vadd.f32 %v9319, %v9257
    %v9321 = vadd.f32 %v9320, %v9258
    %v9322 = vadd.f32 %v9321, %v9259
    %v9323 = vadd.f32 %v9322, %v9260
    %v9324 = vadd.f32 %v9323, %v9261
    %v9325 = vadd.f32 %v9324, %v9262
    %v9326 = vadd.f32 %v9325, %v9263
    %v9327 = vadd.f32 %v9326, %v9264
    %v9328 = vadd.f32 %v9327, %v9265
    %v9329 = vadd.f32 %v9328, %v9266
    %v9330 = vadd.f32 %v9329, %v9267
    %v9331 = vadd.f32 %v9330, %v9268
    %v9332 = vadd.f32 %v9331, %v9269
    %v9333 = vadd.f32 %v9332, %v9270
    %v9334 = vadd.f32 %v9333, %v9271
    %v9335 = vrot.slane %v9334, 4
    %v9336 = vadd.f32 %v9334, %v9335
    %v9337 = vrot.slane %v9336, 2
    %v9338 = vadd.f32 %v9336, %v9337
    %v9339 = vrot.slane %v9338, 1
    %v9340 = vadd.f32 %v9338, %v9339
    %v9341 = vmul.f32 %v9340, 0.001953125
    %v9342 = vmul.f32 %v9207, %v9207
    %v9343 = vsub.f32 %v9341, %v9342
    %v9344 = vmax.f32 %v9343, 0.0
    %v9345 = vsub.f32 %v9074, %v9207
    %v9346 = vsub.f32 %v9075, %v9207
    %v9347 = vsub.f32 %v9076, %v9207
    %v9348 = vsub.f32 %v9077, %v9207
    %v9349 = vsub.f32 %v9078, %v9207
    %v9350 = vsub.f32 %v9079, %v9207
    %v9351 = vsub.f32 %v9080, %v9207
    %v9352 = vsub.f32 %v9081, %v9207
    %v9353 = vsub.f32 %v9082, %v9207
    %v9354 = vsub.f32 %v9083, %v9207
    %v9355 = vsub.f32 %v9084, %v9207
    %v9356 = vsub.f32 %v9085, %v9207
    %v9357 = vsub.f32 %v9086, %v9207
    %v9358 = vsub.f32 %v9087, %v9207
    %v9359 = vsub.f32 %v9088, %v9207
    %v9360 = vsub.f32 %v9089, %v9207
    %v9361 = vsub.f32 %v9090, %v9207
    %v9362 = vsub.f32 %v9091, %v9207
    %v9363 = vsub.f32 %v9092, %v9207
    %v9364 = vsub.f32 %v9093, %v9207
    %v9365 = vsub.f32 %v9094, %v9207
    %v9366 = vsub.f32 %v9095, %v9207
    %v9367 = vsub.f32 %v9096, %v9207
    %v9368 = vsub.f32 %v9097, %v9207
    %v9369 = vsub.f32 %v9098, %v9207
    %v9370 = vsub.f32 %v9099, %v9207
    %v9371 = vsub.f32 %v9100, %v9207
    %v9372 = vsub.f32 %v9101, %v9207
    %v9373 = vsub.f32 %v9102, %v9207
    %v9374 = vsub.f32 %v9103, %v9207
    %v9375 = vsub.f32 %v9104, %v9207
    %v9376 = vsub.f32 %v9105, %v9207
    %v9377 = vsub.f32 %v9106, %v9207
    %v9378 = vsub.f32 %v9107, %v9207
    %v9379 = vsub.f32 %v9108, %v9207
    %v9380 = vsub.f32 %v9109, %v9207
    %v9381 = vsub.f32 %v9110, %v9207
    %v9382 = vsub.f32 %v9111, %v9207
    %v9383 = vsub.f32 %v9112, %v9207
    %v9384 = vsub.f32 %v9113, %v9207
    %v9385 = vsub.f32 %v9114, %v9207
    %v9386 = vsub.f32 %v9115, %v9207
    %v9387 = vsub.f32 %v9116, %v9207
    %v9388 = vsub.f32 %v9117, %v9207
    %v9389 = vsub.f32 %v9118, %v9207
    %v9390 = vsub.f32 %v9119, %v9207
    %v9391 = vsub.f32 %v9120, %v9207
    %v9392 = vsub.f32 %v9121, %v9207
    %v9393 = vsub.f32 %v9122, %v9207
    %v9394 = vsub.f32 %v9123, %v9207
    %v9395 = vsub.f32 %v9124, %v9207
    %v9396 = vsub.f32 %v9125, %v9207
    %v9397 = vsub.f32 %v9126, %v9207
    %v9398 = vsub.f32 %v9127, %v9207
    %v9399 = vsub.f32 %v9128, %v9207
    %v9400 = vsub.f32 %v9129, %v9207
    %v9401 = vsub.f32 %v9130, %v9207
    %v9402 = vsub.f32 %v9131, %v9207
    %v9403 = vsub.f32 %v9132, %v9207
    %v9404 = vsub.f32 %v9133, %v9207
    %v9405 = vsub.f32 %v9134, %v9207
    %v9406 = vsub.f32 %v9135, %v9207
    %v9407 = vsub.f32 %v9136, %v9207
    %v9408 = vsub.f32 %v9137, %v9207
    %v9409 = vadd.f32 %v9344, 1e-05
    %v9410 = vrsqrt.pop %v9409
    %v9411 = vmul.f32 %v9345, %v9410
    %v9412 = vmul.f32 %v9346, %v9410
    %v9413 = vmul.f32 %v9347, %v9410
    %v9414 = vmul.f32 %v9348, %v9410
    %v9415 = vmul.f32 %v9349, %v9410
    %v9416 = vmul.f32 %v9350, %v9410
    %v9417 = vmul.f32 %v9351, %v9410
    %v9418 = vmul.f32 %v9352, %v9410
    %v9419 = vmul.f32 %v9353, %v9410
    %v9420 = vmul.f32 %v9354, %v9410
    %v9421 = vmul.f32 %v9355, %v9410
    %v9422 = vmul.f32 %v9356, %v9410
    %v9423 = vmul.f32 %v9357, %v9410
    %v9424 = vmul.f32 %v9358, %v9410
    %v9425 = vmul.f32 %v9359, %v9410
    %v9426 = vmul.f32 %v9360, %v9410
    %v9427 = vmul.f32 %v9361, %v9410
    %v9428 = vmul.f32 %v9362, %v9410
    %v9429 = vmul.f32 %v9363, %v9410
    %v9430 = vmul.f32 %v9364, %v9410
    %v9431 = vmul.f32 %v9365, %v9410
    %v9432 = vmul.f32 %v9366, %v9410
    %v9433 = vmul.f32 %v9367, %v9410
    %v9434 = vmul.f32 %v9368, %v9410
    %v9435 = vmul.f32 %v9369, %v9410
    %v9436 = vmul.f32 %v9370, %v9410
    %v9437 = vmul.f32 %v9371, %v9410
    %v9438 = vmul.f32 %v9372, %v9410
    %v9439 = vmul.f32 %v9373, %v9410
    %v9440 = vmul.f32 %v9374, %v9410
    %v9441 = vmul.f32 %v9375, %v9410
    %v9442 = vmul.f32 %v9376, %v9410
    %v9443 = vmul.f32 %v9377, %v9410
    %v9444 = vmul.f32 %v9378, %v9410
    %v9445 = vmul.f32 %v9379, %v9410
    %v9446 = vmul.f32 %v9380, %v9410
    %v9447 = vmul.f32 %v9381, %v9410
    %v9448 = vmul.f32 %v9382, %v9410
    %v9449 = vmul.f32 %v9383, %v9410
    %v9450 = vmul.f32 %v9384, %v9410
    %v9451 = vmul.f32 %v9385, %v9410
    %v9452 = vmul.f32 %v9386, %v9410
    %v9453 = vmul.f32 %v9387, %v9410
    %v9454 = vmul.f32 %v9388, %v9410
    %v9455 = vmul.f32 %v9389, %v9410
    %v9456 = vmul.f32 %v9390, %v9410
    %v9457 = vmul.f32 %v9391, %v9410
    %v9458 = vmul.f32 %v9392, %v9410
    %v9459 = vmul.f32 %v9393, %v9410
    %v9460 = vmul.f32 %v9394, %v9410
    %v9461 = vmul.f32 %v9395, %v9410
    %v9462 = vmul.f32 %v9396, %v9410
    %v9463 = vmul.f32 %v9397, %v9410
    %v9464 = vmul.f32 %v9398, %v9410
    %v9465 = vmul.f32 %v9399, %v9410
    %v9466 = vmul.f32 %v9400, %v9410
    %v9467 = vmul.f32 %v9401, %v9410
    %v9468 = vmul.f32 %v9402, %v9410
    %v9469 = vmul.f32 %v9403, %v9410
    %v9470 = vmul.f32 %v9404, %v9410
    %v9471 = vmul.f32 %v9405, %v9410
    %v9472 = vmul.f32 %v9406, %v9410
    %v9473 = vmul.f32 %v9407, %v9410
    %v9474 = vmul.f32 %v9408, %v9410
    %v9475 = vld [vmem:[#allocation9] sm:$0x1]
    %v9477 = vlaneseq
    %v9478 = vshrl.u32 %v9477, 7
    %v9479 = vsub.s32 0, %v9478
    %v9480 = vrot.slane %v9475, %v9479
    %v9482 = vmul.f32 %v9411, %v9480
    %v9483 = vmul.f32 %v9412, %v9480
    %v9484 = vmul.f32 %v9413, %v9480
    %v9485 = vmul.f32 %v9414, %v9480
    %v9486 = vmul.f32 %v9415, %v9480
    %v9487 = vmul.f32 %v9416, %v9480
    %v9488 = vmul.f32 %v9417, %v9480
    %v9489 = vmul.f32 %v9418, %v9480
    %v9490 = vmul.f32 %v9419, %v9480
    %v9491 = vmul.f32 %v9420, %v9480
    %v9492 = vmul.f32 %v9421, %v9480
    %v9493 = vmul.f32 %v9422, %v9480
    %v9494 = vmul.f32 %v9423, %v9480
    %v9495 = vmul.f32 %v9424, %v9480
    %v9496 = vmul.f32 %v9425, %v9480
    %v9497 = vmul.f32 %v9426, %v9480
    %v9498 = vmul.f32 %v9427, %v9480
    %v9499 = vmul.f32 %v9428, %v9480
    %v9500 = vmul.f32 %v9429, %v9480
    %v9501 = vmul.f32 %v9430, %v9480
    %v9502 = vmul.f32 %v9431, %v9480
    %v9503 = vmul.f32 %v9432, %v9480
    %v9504 = vmul.f32 %v9433, %v9480
    %v9505 = vmul.f32 %v9434, %v9480
    %v9506 = vmul.f32 %v9435, %v9480
    %v9507 = vmul.f32 %v9436, %v9480
    %v9508 = vmul.f32 %v9437, %v9480
    %v9509 = vmul.f32 %v9438, %v9480
    %v9510 = vmul.f32 %v9439, %v9480
    %v9511 = vmul.f32 %v9440, %v9480
    %v9512 = vmul.f32 %v9441, %v9480
    %v9513 = vmul.f32 %v9442, %v9480
    %v9514 = vmul.f32 %v9443, %v9480
    %v9515 = vmul.f32 %v9444, %v9480
    %v9516 = vmul.f32 %v9445, %v9480
    %v9517 = vmul.f32 %v9446, %v9480
    %v9518 = vmul.f32 %v9447, %v9480
    %v9519 = vmul.f32 %v9448, %v9480
    %v9520 = vmul.f32 %v9449, %v9480
    %v9521 = vmul.f32 %v9450, %v9480
    %v9522 = vmul.f32 %v9451, %v9480
    %v9523 = vmul.f32 %v9452, %v9480
    %v9524 = vmul.f32 %v9453, %v9480
    %v9525 = vmul.f32 %v9454, %v9480
    %v9526 = vmul.f32 %v9455, %v9480
    %v9527 = vmul.f32 %v9456, %v9480
    %v9528 = vmul.f32 %v9457, %v9480
    %v9529 = vmul.f32 %v9458, %v9480
    %v9530 = vmul.f32 %v9459, %v9480
    %v9531 = vmul.f32 %v9460, %v9480
    %v9532 = vmul.f32 %v9461, %v9480
    %v9533 = vmul.f32 %v9462, %v9480
    %v9534 = vmul.f32 %v9463, %v9480
    %v9535 = vmul.f32 %v9464, %v9480
    %v9536 = vmul.f32 %v9465, %v9480
    %v9537 = vmul.f32 %v9466, %v9480
    %v9538 = vmul.f32 %v9467, %v9480
    %v9539 = vmul.f32 %v9468, %v9480
    %v9540 = vmul.f32 %v9469, %v9480
    %v9541 = vmul.f32 %v9470, %v9480
    %v9542 = vmul.f32 %v9471, %v9480
    %v9543 = vmul.f32 %v9472, %v9480
    %v9544 = vmul.f32 %v9473, %v9480
    %v9545 = vmul.f32 %v9474, %v9480
    %v9546 = vld [vmem:[%s6] sm:$0x1]
    %v9548 = vlaneseq
    %v9549 = vshrl.u32 %v9548, 7
    %v9550 = vsub.s32 0, %v9549
    %v9551 = vrot.slane %v9546, %v9550
    %v9553 = vadd.f32 %v9482, %v9551
    %v9554 = vadd.f32 %v9483, %v9551
    %v9555 = vadd.f32 %v9484, %v9551
    %v9556 = vadd.f32 %v9485, %v9551
    %v9557 = vadd.f32 %v9486, %v9551
    %v9558 = vadd.f32 %v9487, %v9551
    %v9559 = vadd.f32 %v9488, %v9551
    %v9560 = vadd.f32 %v9489, %v9551
    %v9561 = vadd.f32 %v9490, %v9551
    %v9562 = vadd.f32 %v9491, %v9551
    %v9563 = vadd.f32 %v9492, %v9551
    %v9564 = vadd.f32 %v9493, %v9551
    %v9565 = vadd.f32 %v9494, %v9551
    %v9566 = vadd.f32 %v9495, %v9551
    %v9567 = vadd.f32 %v9496, %v9551
    %v9568 = vadd.f32 %v9497, %v9551
    %v9569 = vadd.f32 %v9498, %v9551
    %v9570 = vadd.f32 %v9499, %v9551
    %v9571 = vadd.f32 %v9500, %v9551
    %v9572 = vadd.f32 %v9501, %v9551
    %v9573 = vadd.f32 %v9502, %v9551
    %v9574 = vadd.f32 %v9503, %v9551
    %v9575 = vadd.f32 %v9504, %v9551
    %v9576 = vadd.f32 %v9505, %v9551
    %v9577 = vadd.f32 %v9506, %v9551
    %v9578 = vadd.f32 %v9507, %v9551
    %v9579 = vadd.f32 %v9508, %v9551
    %v9580 = vadd.f32 %v9509, %v9551
    %v9581 = vadd.f32 %v9510, %v9551
    %v9582 = vadd.f32 %v9511, %v9551
    %v9583 = vadd.f32 %v9512, %v9551
    %v9584 = vadd.f32 %v9513, %v9551
    %v9585 = vadd.f32 %v9514, %v9551
    %v9586 = vadd.f32 %v9515, %v9551
    %v9587 = vadd.f32 %v9516, %v9551
    %v9588 = vadd.f32 %v9517, %v9551
    %v9589 = vadd.f32 %v9518, %v9551
    %v9590 = vadd.f32 %v9519, %v9551
    %v9591 = vadd.f32 %v9520, %v9551
    %v9592 = vadd.f32 %v9521, %v9551
    %v9593 = vadd.f32 %v9522, %v9551
    %v9594 = vadd.f32 %v9523, %v9551
    %v9595 = vadd.f32 %v9524, %v9551
    %v9596 = vadd.f32 %v9525, %v9551
    %v9597 = vadd.f32 %v9526, %v9551
    %v9598 = vadd.f32 %v9527, %v9551
    %v9599 = vadd.f32 %v9528, %v9551
    %v9600 = vadd.f32 %v9529, %v9551
    %v9601 = vadd.f32 %v9530, %v9551
    %v9602 = vadd.f32 %v9531, %v9551
    %v9603 = vadd.f32 %v9532, %v9551
    %v9604 = vadd.f32 %v9533, %v9551
    %v9605 = vadd.f32 %v9534, %v9551
    %v9606 = vadd.f32 %v9535, %v9551
    %v9607 = vadd.f32 %v9536, %v9551
    %v9608 = vadd.f32 %v9537, %v9551
    %v9609 = vadd.f32 %v9538, %v9551
    %v9610 = vadd.f32 %v9539, %v9551
    %v9611 = vadd.f32 %v9540, %v9551
    %v9612 = vadd.f32 %v9541, %v9551
    %v9613 = vadd.f32 %v9542, %v9551
    %v9614 = vadd.f32 %v9543, %v9551
    %v9615 = vadd.f32 %v9544, %v9551
    %v9616 = vadd.f32 %v9545, %v9551
    %v9617 = vld [vmem:[#allocation6] sm:$0xff]
    %v9618 = vld [vmem:[#allocation6 + $0x8] sm:$0xff]
    %v9619 = vld [vmem:[#allocation6 + $0x10] sm:$0xff]
    %v9620 = vld [vmem:[#allocation6 + $0x18] sm:$0xff]
    %v9621 = vld [vmem:[#allocation6 + $0x20] sm:$0xff]
    %v9622 = vld [vmem:[#allocation6 + $0x28] sm:$0xff]
    %v9623 = vld [vmem:[#allocation6 + $0x30] sm:$0xff]
    %v9624 = vld [vmem:[#allocation6 + $0x38] sm:$0xff]
    %v9625 = vld [vmem:[#allocation6 + $0x40] sm:$0xff]
    %v9626 = vld [vmem:[#allocation6 + $0x48] sm:$0xff]
    %v9627 = vld [vmem:[#allocation6 + $0x50] sm:$0xff]
    %v9628 = vld [vmem:[#allocation6 + $0x58] sm:$0xff]
    %v9629 = vld [vmem:[#allocation6 + $0x60] sm:$0xff]
    %v9630 = vld [vmem:[#allocation6 + $0x68] sm:$0xff]
    %v9631 = vld [vmem:[#allocation6 + $0x70] sm:$0xff]
    %v9632 = vld [vmem:[#allocation6 + $0x78] sm:$0xff]
    %v9633 = vld [vmem:[#allocation6 + $0x80] sm:$0xff]
    %v9634 = vld [vmem:[#allocation6 + $0x88] sm:$0xff]
    %v9635 = vld [vmem:[#allocation6 + $0x90] sm:$0xff]
    %v9636 = vld [vmem:[#allocation6 + $0x98] sm:$0xff]
    %v9637 = vld [vmem:[#allocation6 + $0xa0] sm:$0xff]
    %v9638 = vld [vmem:[#allocation6 + $0xa8] sm:$0xff]
    %v9639 = vld [vmem:[#allocation6 + $0xb0] sm:$0xff]
    %v9640 = vld [vmem:[#allocation6 + $0xb8] sm:$0xff]
    %v9641 = vld [vmem:[#allocation6 + $0xc0] sm:$0xff]
    %v9642 = vld [vmem:[#allocation6 + $0xc8] sm:$0xff]
    %v9643 = vld [vmem:[#allocation6 + $0xd0] sm:$0xff]
    %v9644 = vld [vmem:[#allocation6 + $0xd8] sm:$0xff]
    %v9645 = vld [vmem:[#allocation6 + $0xe0] sm:$0xff]
    %v9646 = vld [vmem:[#allocation6 + $0xe8] sm:$0xff]
    %v9647 = vld [vmem:[#allocation6 + $0xf0] sm:$0xff]
    %v9648 = vld [vmem:[#allocation6 + $0xf8] sm:$0xff]
    %v9649 = vld [vmem:[#allocation6 + $0x100] sm:$0xff]
    %v9650 = vld [vmem:[#allocation6 + $0x108] sm:$0xff]
    %v9651 = vld [vmem:[#allocation6 + $0x110] sm:$0xff]
    %v9652 = vld [vmem:[#allocation6 + $0x118] sm:$0xff]
    %v9653 = vld [vmem:[#allocation6 + $0x120] sm:$0xff]
    %v9654 = vld [vmem:[#allocation6 + $0x128] sm:$0xff]
    %v9655 = vld [vmem:[#allocation6 + $0x130] sm:$0xff]
    %v9656 = vld [vmem:[#allocation6 + $0x138] sm:$0xff]
    %v9657 = vld [vmem:[#allocation6 + $0x140] sm:$0xff]
    %v9658 = vld [vmem:[#allocation6 + $0x148] sm:$0xff]
    %v9659 = vld [vmem:[#allocation6 + $0x150] sm:$0xff]
    %v9660 = vld [vmem:[#allocation6 + $0x158] sm:$0xff]
    %v9661 = vld [vmem:[#allocation6 + $0x160] sm:$0xff]
    %v9662 = vld [vmem:[#allocation6 + $0x168] sm:$0xff]
    %v9663 = vld [vmem:[#allocation6 + $0x170] sm:$0xff]
    %v9664 = vld [vmem:[#allocation6 + $0x178] sm:$0xff]
    %v9665 = vld [vmem:[#allocation6 + $0x180] sm:$0xff]
    %v9666 = vld [vmem:[#allocation6 + $0x188] sm:$0xff]
    %v9667 = vld [vmem:[#allocation6 + $0x190] sm:$0xff]
    %v9668 = vld [vmem:[#allocation6 + $0x198] sm:$0xff]
    %v9669 = vld [vmem:[#allocation6 + $0x1a0] sm:$0xff]
    %v9670 = vld [vmem:[#allocation6 + $0x1a8] sm:$0xff]
    %v9671 = vld [vmem:[#allocation6 + $0x1b0] sm:$0xff]
    %v9672 = vld [vmem:[#allocation6 + $0x1b8] sm:$0xff]
    %v9673 = vld [vmem:[#allocation6 + $0x1c0] sm:$0xff]
    %v9674 = vld [vmem:[#allocation6 + $0x1c8] sm:$0xff]
    %v9675 = vld [vmem:[#allocation6 + $0x1d0] sm:$0xff]
    %v9676 = vld [vmem:[#allocation6 + $0x1d8] sm:$0xff]
    %v9677 = vld [vmem:[#allocation6 + $0x1e0] sm:$0xff]
    %v9678 = vld [vmem:[#allocation6 + $0x1e8] sm:$0xff]
    %v9679 = vld [vmem:[#allocation6 + $0x1f0] sm:$0xff]
    %v9680 = vld [vmem:[#allocation6 + $0x1f8] sm:$0xff]
    %v9681 = vadd.f32 %v9553, %v9617
    %v9682 = vadd.f32 %v9554, %v9618
    %v9683 = vadd.f32 %v9555, %v9619
    %v9684 = vadd.f32 %v9556, %v9620
    %v9685 = vadd.f32 %v9557, %v9621
    %v9686 = vadd.f32 %v9558, %v9622
    %v9687 = vadd.f32 %v9559, %v9623
    %v9688 = vadd.f32 %v9560, %v9624
    %v9689 = vadd.f32 %v9561, %v9625
    %v9690 = vadd.f32 %v9562, %v9626
    %v9691 = vadd.f32 %v9563, %v9627
    %v9692 = vadd.f32 %v9564, %v9628
    %v9693 = vadd.f32 %v9565, %v9629
    %v9694 = vadd.f32 %v9566, %v9630
    %v9695 = vadd.f32 %v9567, %v9631
    %v9696 = vadd.f32 %v9568, %v9632
    %v9697 = vadd.f32 %v9569, %v9633
    %v9698 = vadd.f32 %v9570, %v9634
    %v9699 = vadd.f32 %v9571, %v9635
    %v9700 = vadd.f32 %v9572, %v9636
    %v9701 = vadd.f32 %v9573, %v9637
    %v9702 = vadd.f32 %v9574, %v9638
    %v9703 = vadd.f32 %v9575, %v9639
    %v9704 = vadd.f32 %v9576, %v9640
    %v9705 = vadd.f32 %v9577, %v9641
    %v9706 = vadd.f32 %v9578, %v9642
    %v9707 = vadd.f32 %v9579, %v9643
    %v9708 = vadd.f32 %v9580, %v9644
    %v9709 = vadd.f32 %v9581, %v9645
    %v9710 = vadd.f32 %v9582, %v9646
    %v9711 = vadd.f32 %v9583, %v9647
    %v9712 = vadd.f32 %v9584, %v9648
    %v9713 = vadd.f32 %v9585, %v9649
    %v9714 = vadd.f32 %v9586, %v9650
    %v9715 = vadd.f32 %v9587, %v9651
    %v9716 = vadd.f32 %v9588, %v9652
    %v9717 = vadd.f32 %v9589, %v9653
    %v9718 = vadd.f32 %v9590, %v9654
    %v9719 = vadd.f32 %v9591, %v9655
    %v9720 = vadd.f32 %v9592, %v9656
    %v9721 = vadd.f32 %v9593, %v9657
    %v9722 = vadd.f32 %v9594, %v9658
    %v9723 = vadd.f32 %v9595, %v9659
    %v9724 = vadd.f32 %v9596, %v9660
    %v9725 = vadd.f32 %v9597, %v9661
    %v9726 = vadd.f32 %v9598, %v9662
    %v9727 = vadd.f32 %v9599, %v9663
    %v9728 = vadd.f32 %v9600, %v9664
    %v9729 = vadd.f32 %v9601, %v9665
    %v9730 = vadd.f32 %v9602, %v9666
    %v9731 = vadd.f32 %v9603, %v9667
    %v9732 = vadd.f32 %v9604, %v9668
    %v9733 = vadd.f32 %v9605, %v9669
    %v9734 = vadd.f32 %v9606, %v9670
    %v9735 = vadd.f32 %v9607, %v9671
    %v9736 = vadd.f32 %v9608, %v9672
    %v9737 = vadd.f32 %v9609, %v9673
    %v9738 = vadd.f32 %v9610, %v9674
    %v9739 = vadd.f32 %v9611, %v9675
    %v9740 = vadd.f32 %v9612, %v9676
    %v9741 = vadd.f32 %v9613, %v9677
    %v9742 = vadd.f32 %v9614, %v9678
    %v9743 = vadd.f32 %v9615, %v9679
    %v9744 = vadd.f32 %v9616, %v9680
    %9745 = vst [vmem:[#allocation11] sm:$0xff] %v9681
    %9746 = vst [vmem:[#allocation11 + $0x8] sm:$0xff] %v9682
    %9747 = vst [vmem:[#allocation11 + $0x10] sm:$0xff] %v9683
    %9748 = vst [vmem:[#allocation11 + $0x18] sm:$0xff] %v9684
    %9749 = vst [vmem:[#allocation11 + $0x20] sm:$0xff] %v9685
    %9750 = vst [vmem:[#allocation11 + $0x28] sm:$0xff] %v9686
    %9751 = vst [vmem:[#allocation11 + $0x30] sm:$0xff] %v9687
    %9752 = vst [vmem:[#allocation11 + $0x38] sm:$0xff] %v9688
    %9753 = vst [vmem:[#allocation11 + $0x40] sm:$0xff] %v9689
    %9754 = vst [vmem:[#allocation11 + $0x48] sm:$0xff] %v9690
    %9755 = vst [vmem:[#allocation11 + $0x50] sm:$0xff] %v9691
    %9756 = vst [vmem:[#allocation11 + $0x58] sm:$0xff] %v9692
    %9757 = vst [vmem:[#allocation11 + $0x60] sm:$0xff] %v9693
    %9758 = vst [vmem:[#allocation11 + $0x68] sm:$0xff] %v9694
    %9759 = vst [vmem:[#allocation11 + $0x70] sm:$0xff] %v9695
    %9760 = vst [vmem:[#allocation11 + $0x78] sm:$0xff] %v9696
    %9761 = vst [vmem:[#allocation11 + $0x80] sm:$0xff] %v9697
    %9762 = vst [vmem:[#allocation11 + $0x88] sm:$0xff] %v9698
    %9763 = vst [vmem:[#allocation11 + $0x90] sm:$0xff] %v9699
    %9764 = vst [vmem:[#allocation11 + $0x98] sm:$0xff] %v9700
    %9765 = vst [vmem:[#allocation11 + $0xa0] sm:$0xff] %v9701
    %9766 = vst [vmem:[#allocation11 + $0xa8] sm:$0xff] %v9702
    %9767 = vst [vmem:[#allocation11 + $0xb0] sm:$0xff] %v9703
    %9768 = vst [vmem:[#allocation11 + $0xb8] sm:$0xff] %v9704
    %9769 = vst [vmem:[#allocation11 + $0xc0] sm:$0xff] %v9705
    %9770 = vst [vmem:[#allocation11 + $0xc8] sm:$0xff] %v9706
    %9771 = vst [vmem:[#allocation11 + $0xd0] sm:$0xff] %v9707
    %9772 = vst [vmem:[#allocation11 + $0xd8] sm:$0xff] %v9708
    %9773 = vst [vmem:[#allocation11 + $0xe0] sm:$0xff] %v9709
    %9774 = vst [vmem:[#allocation11 + $0xe8] sm:$0xff] %v9710
    %9775 = vst [vmem:[#allocation11 + $0xf0] sm:$0xff] %v9711
    %9776 = vst [vmem:[#allocation11 + $0xf8] sm:$0xff] %v9712
    %9777 = vst [vmem:[#allocation11 + $0x100] sm:$0xff] %v9713
    %9778 = vst [vmem:[#allocation11 + $0x108] sm:$0xff] %v9714
    %9779 = vst [vmem:[#allocation11 + $0x110] sm:$0xff] %v9715
    %9780 = vst [vmem:[#allocation11 + $0x118] sm:$0xff] %v9716
    %9781 = vst [vmem:[#allocation11 + $0x120] sm:$0xff] %v9717
    %9782 = vst [vmem:[#allocation11 + $0x128] sm:$0xff] %v9718
    %9783 = vst [vmem:[#allocation11 + $0x130] sm:$0xff] %v9719
    %9784 = vst [vmem:[#allocation11 + $0x138] sm:$0xff] %v9720
    %9785 = vst [vmem:[#allocation11 + $0x140] sm:$0xff] %v9721
    %9786 = vst [vmem:[#allocation11 + $0x148] sm:$0xff] %v9722
    %9787 = vst [vmem:[#allocation11 + $0x150] sm:$0xff] %v9723
    %9788 = vst [vmem:[#allocation11 + $0x158] sm:$0xff] %v9724
    %9789 = vst [vmem:[#allocation11 + $0x160] sm:$0xff] %v9725
    %9790 = vst [vmem:[#allocation11 + $0x168] sm:$0xff] %v9726
    %9791 = vst [vmem:[#allocation11 + $0x170] sm:$0xff] %v9727
    %9792 = vst [vmem:[#allocation11 + $0x178] sm:$0xff] %v9728
    %9793 = vst [vmem:[#allocation11 + $0x180] sm:$0xff] %v9729
    %9794 = vst [vmem:[#allocation11 + $0x188] sm:$0xff] %v9730
    %9795 = vst [vmem:[#allocation11 + $0x190] sm:$0xff] %v9731
    %9796 = vst [vmem:[#allocation11 + $0x198] sm:$0xff] %v9732
    %9797 = vst [vmem:[#allocation11 + $0x1a0] sm:$0xff] %v9733
    %9798 = vst [vmem:[#allocation11 + $0x1a8] sm:$0xff] %v9734
    %9799 = vst [vmem:[#allocation11 + $0x1b0] sm:$0xff] %v9735
    %9800 = vst [vmem:[#allocation11 + $0x1b8] sm:$0xff] %v9736
    %9801 = vst [vmem:[#allocation11 + $0x1c0] sm:$0xff] %v9737
    %9802 = vst [vmem:[#allocation11 + $0x1c8] sm:$0xff] %v9738
    %9803 = vst [vmem:[#allocation11 + $0x1d0] sm:$0xff] %v9739
    %9804 = vst [vmem:[#allocation11 + $0x1d8] sm:$0xff] %v9740
    %9805 = vst [vmem:[#allocation11 + $0x1e0] sm:$0xff] %v9741
    %9806 = vst [vmem:[#allocation11 + $0x1e8] sm:$0xff] %v9742
    %9807 = vst [vmem:[#allocation11 + $0x1f0] sm:$0xff] %v9743
    %9808 = vst [vmem:[#allocation11 + $0x1f8] sm:$0xff] %v9744
    // Predicated region
    $region54: #{tpu_custom_call.1} parent=1 // pred_check
      _
    $region55: #{tpu_custom_call.1} parent=1 // pred_check_branch
      %9810 = sbr.rel (0) target = $region57
    $region56: #{tpu_custom_call.1} parent=1 // pred_region
      %s9812 = ssub.s32 8192, 8192
      %9813 = vsyncadd [#allocation8], %s9812
      %s9814 = sshll.u32 [#allocation11], 4
      %s9815 = int_to_ptr.vmem [resolvable:$true] %s9814
      %9820 = dma.vmem_to_hbm [thread:$0]  %s9815, 8192, %s11, [#allocation8], 128, 128, 8
    $region57: #{tpu_custom_call.1} parent=1 // pred_fallthru
      _
    // Predicated region
    $region58: #{tpu_custom_call.1} parent=1 // pred_check
      _
    $region59: #{tpu_custom_call.1} parent=1 // pred_check_branch
      %9822 = sbr.rel (0) target = $region61
    $region60: #{tpu_custom_call.1} parent=1 // pred_region
      %9823 = dma.done [#allocation8], 8192
    $region61: #{tpu_custom_call.1} parent=1 // pred_fallthru
      _
    %9824 = vsyncpa [#allocation7], 1
    %9825 = vsyncpa [#allocation10], 1
    %9826 = vsyncpa [#allocation8], 1
  %9827 = vsyncmov [#allocation5]
  %s9828 = vpop.sfrf %9827
  %p9829 = scmp.eq.s32.totalorder %s9828, 0
  %p9830 = pneg %p9829
  %9832 = shalt.err (%p9830)
  %s9833 = scalar_lea.sflag [#allocation5], 1
  %9834 = vsyncmov %s9833
  %s9835 = vpop.sfrf %9834
  %p9836 = scmp.eq.s32.totalorder %s9835, 0
  %p9837 = pneg %p9836
  %9839 = shalt.err (%p9837)

</llo_original>
